<compile_context>
chip_gen: v7x
topology: tpu7x:2x2x1
jax: 0.10.0
libtpu: 0.0.40
codegen_flags: <defaults>
</compile_context>

<pallas_src>
import numpy as np
import jax
import jax.numpy as jnp
from jax import lax
from jax.experimental import pallas as pl
from jax.experimental.pallas import tpu as pltpu


# ----------------------------------------------------------------------------
# Fused kernel: RefineResidual + final 1x1 conv + bilinear upsample,
# one batch element per grid step.
# ----------------------------------------------------------------------------
def dfn_head_kernel(x_ref, w1_ref, w2_ref, bnb_ref, w3_ref, w4_ref,
                    b4_ref, up_ref, o_ref, pad, t_col):
    Hp2, Wp, Cm = pad.shape          # Wp = W + 16; interior lives at cols [8, 8+W)
    H, W = Hp2 - 2, Wp - 16
    HW = H * W
    K_SLOT = t_col.shape[1] // 9     # 128: lane-aligned im2col slot per tap
    f32 = jnp.float32
    bf16 = jnp.bfloat16

    # Clear only the halo cells the 3x3 taps can read outside the interior.
    # All clears are sublane-aligned (8-wide column bands / full rows); the
    # interior is fully overwritten before every read.
    pad[0:1, :, :] = jnp.zeros((1, Wp, Cm), f32)
    pad[H + 1:H + 2, :, :] = jnp.zeros((1, Wp, Cm), f32)
    pad[:, 0:8, :] = jnp.zeros((Hp2, 8, Cm), f32)
    pad[:, W + 8:W + 16, :] = jnp.zeros((Hp2, 8, Cm), f32)

    # One full-tile, unmasked memset per image: guarantees lanes [Cm, 128) of
    # every 128-wide tap slot are exactly 0.0 (stale VMEM may hold NaN/Inf and
    # 0 * NaN = NaN in the MXU accumulate).  Reused by both 3x3 convs.
    t_col[...] = jnp.zeros_like(t_col)

    # conv_1x1 (no bias): contract Cin on dim 0 of both operands
    # (transposed-LHS matmul -> no explicit relayout of the activation).
    a = lax.dot_general(x_ref[0].astype(f32), w1_ref[...],
                        (((0,), (0,)), ((), ())),
                        preferred_element_type=f32)              # (HW, Cm)

    def conv3x3(v, w_ref):
        # Zero-padded 3x3 conv as ONE im2col matmul (HW, 9*128) @ (9*128, Cm).
        # Interior write starts at sublane offset 8 -> aligned, unrotated.
        pad[1:H + 1, 8:8 + W, :] = v.reshape(H, W, Cm)
        for k in range(9):
            dy, dx = divmod(k, 3)
            # Tap slot starts at a lane multiple of 128 -> no lane rotation.
            t_col[:, k * K_SLOT:k * K_SLOT + Cm] = (
                pad[dy:dy + H, 7 + dx:7 + dx + W, :].reshape(HW, Cm))
        return jnp.dot(t_col[...], w_ref[...], preferred_element_type=f32)

    # ConvBnRelu: 3x3 conv (BN scale folded into w2 host-side) + shift + ReLU.
    b = jnp.maximum(conv3x3(a, w2_ref) + bnb_ref[...], 0.0)
    # conv_refine: second 3x3 conv (no bias) + residual (has_relu=False).
    r = conv3x3(b, w3_ref) + a
    # Final 1x1 conv (with bias): (HW, Cm) @ (Cm, Cout).
    y = jnp.dot(r, w4_ref[...], preferred_element_type=f32) + b4_ref[...]

    # Fused bilinear upsample (align_corners=True) against the precomputed
    # kron(A_h, A_w)^T matrix, stored bf16.  y is fed as a bf16 hi/lo split so
    # the f32 accuracy of y is preserved; accumulation is f32.  Output stays
    # lane-dense: (Cout, Ho*Wo).
    y_hi = y.astype(bf16)
    y_lo = (y - y_hi.astype(f32)).astype(bf16)
    dn = (((0,), (0,)), ((), ()))            # contract the HW axis of both
    out = (lax.dot_general(y_hi, up_ref[...], dn, preferred_element_type=f32) +
           lax.dot_general(y_lo, up_ref[...], dn, preferred_element_type=f32))
    o_ref[0] = out.astype(o_ref.dtype)


def dfn_head_pallas(x_flat, p):
    N, Cin, HW = x_flat.shape
    Cm = p["w1"].shape[1]
    Cout = p["w4"].shape[1]
    Kp = p["w2"].shape[0]                 # 9 * 128 (lane-aligned im2col K)
    HoWo = p["upT"].shape[1]
    H, W = p["hw"]
    assert Cm <= 128 and Kp == 9 * 128
    return pl.pallas_call(
        dfn_head_kernel,
        out_shape=jax.ShapeDtypeStruct((N, Cout, HoWo), jnp.float32),
        grid_spec=pltpu.PrefetchScalarGridSpec(
            num_scalar_prefetch=0,
            grid=(N,),
            in_specs=[
                pl.BlockSpec((1, Cin, HW), lambda n: (n, 0, 0)),
                pl.BlockSpec((Cin, Cm), lambda n: (0, 0)),
                pl.BlockSpec((Kp, Cm), lambda n: (0, 0)),
                pl.BlockSpec((1, Cm), lambda n: (0, 0)),
                pl.BlockSpec((Kp, Cm), lambda n: (0, 0)),
                pl.BlockSpec((Cm, Cout), lambda n: (0, 0)),
                pl.BlockSpec((1, Cout), lambda n: (0, 0)),
                pl.BlockSpec((HW, HoWo), lambda n: (0, 0)),
            ],
            out_specs=pl.BlockSpec((1, Cout, HoWo), lambda n: (n, 0, 0)),
            scratch_shapes=[
                pltpu.VMEM((H + 2, W + 16, Cm), jnp.float32),   # padded activation
                pltpu.VMEM((H * W, Kp), jnp.float32),           # im2col taps
            ],
        ),
        # ~3 MiB of VMEM at these sizes — fits every generation comfortably.
        # TODO(synk): for large H/W add an H-band grid axis (1-row halo) so the
        # scratch stays within v7x's 64 MiB VMEM and both TCs pipeline at N=1.
        compiler_params=pltpu.CompilerParams(
            dimension_semantics=("parallel",),
            vmem_limit_bytes=32 * 1024 * 1024),
    )(x_flat, p["w1"], p["w2"], p["bn_shift"], p["w3"], p["w4"], p["b4"],
      p["upT"])


def dfn_head_forward(x_nchw, params):
    """NCHW in, NCHW out.  Wrapper is reshape-only (no XLA transposes)."""
    N, Cin, H, W = x_nchw.shape
    Ho, Wo = params["out_hw"]
    x_flat = x_nchw.reshape(N, Cin, H * W)          # free reshape
    out = dfn_head_pallas(x_flat, params)           # (N, Cout, Ho*Wo)
    return out.reshape(N, -1, Ho, Wo)               # free reshape -> NCHW


def bilinear_matrix(n_in, n_out):
    """Interpolation matrix matching F.interpolate(mode='bilinear', align_corners=True)."""
    M = np.zeros((n_out, n_in), np.float32)
    o = np.arange(n_out)
    src = o * (n_in - 1) / (n_out - 1) if n_out > 1 else np.zeros(n_out)
    i0 = np.clip(np.floor(src).astype(np.int64), 0, n_in - 1)
    i1 = np.minimum(i0 + 1, n_in - 1)
    frac = (src - i0).astype(np.float32)
    M[o, i0] += 1.0 - frac
    M[o, i1] += frac
    return M


def pack_3x3_weights(w_oihw, col_scale=None):
    """OIHW 3x3 weights -> lane-aligned im2col weights (9*128, Cout).
    Rows [Cin, 128) of every 128-wide tap slot are zero-filled so the padded
    im2col lanes contribute nothing.  Optional per-output-channel scale folds
    the BatchNorm multiplier into the weights."""
    co, ci = w_oihw.shape[0], w_oihw.shape[1]
    w = jnp.transpose(w_oihw, (2, 3, 1, 0)).reshape(9, ci, co)   # (k, ci, co)
    if col_scale is not None:
        w = w * col_scale[None, None, :]
    wp = jnp.zeros((9, 128, co), jnp.float32).at[:, :ci, :].set(w)
    return wp.reshape(9 * 128, co)


# ----------------------------------------------------------------------------
# Pure-JAX reference (NCHW, same math) for verification.
# ----------------------------------------------------------------------------
def ref_forward(x, tp, A_h, A_w, eps=1e-5):
    hp = lax.Precision.HIGHEST
    dn = ('NCHW', 'OIHW', 'NCHW')
    a = lax.conv_general_dilated(x, tp['w1_t'], (1, 1), 'VALID',
                                 dimension_numbers=dn, precision=hp)
    t = lax.conv_general_dilated(a, tp['w2_t'], (1, 1), ((1, 1), (1, 1)),
                                 dimension_numbers=dn, precision=hp)
    s = (tp['gamma'] / jnp.sqrt(tp['rvar'] + eps))[None, :, None, None]
    t = (t - tp['rmean'][None, :, None, None]) * s + tp['beta'][None, :, None, None]
    t = jnp.maximum(t, 0.0)
    t = lax.conv_general_dilated(t, tp['w3_t'], (1, 1), ((1, 1), (1, 1)),
                                 dimension_numbers=dn, precision=hp)
    r = t + a
    y = lax.conv_general_dilated(r, tp['w4_t'], (1, 1), 'VALID',
                                 dimension_numbers=dn, precision=hp)
    y = y + tp['b4'][None, :, None, None]
    up = jnp.einsum('oh,nchw->ncow', A_h, y, precision=hp)
    up = jnp.einsum('pw,ncow->ncop', A_w, up, precision=hp)
    return up


if __name__ == "__main__":
    N, in_planes, out_planes, H, W, scale = 2, 4, 4, 16, 16, 2
    Cm = out_planes * 9          # 36
    Cout = out_planes            # 4
    Ho, Wo = H * scale, W * scale
    eps = 1e-5

    key = jax.random.PRNGKey(0)
    ks = jax.random.split(key, 10)
    # PyTorch-shaped (OIHW) parameters, deterministic init.
    w1_t = jax.random.normal(ks[0], (Cm, in_planes, 1, 1), jnp.float32) / np.sqrt(in_planes)
    w2_t = jax.random.normal(ks[1], (Cm, Cm, 3, 3), jnp.float32) / np.sqrt(Cm * 9)
    w3_t = jax.random.normal(ks[2], (Cm, Cm, 3, 3), jnp.float32) / np.sqrt(Cm * 9)
    w4_t = jax.random.normal(ks[3], (Cout, Cm, 1, 1), jnp.float32) / np.sqrt(Cm)
    b4 = 0.1 * jax.random.normal(ks[4], (Cout,), jnp.float32)
    gamma = 1.0 + 0.1 * jax.random.normal(ks[5], (Cm,), jnp.float32)
    beta = 0.1 * jax.random.normal(ks[6], (Cm,), jnp.float32)
    rmean = 0.1 * jax.random.normal(ks[7], (Cm,), jnp.float32)
    rvar = jnp.abs(jax.random.normal(ks[8], (Cm,), jnp.float32)) + 0.5
    x_nchw = jax.random.normal(ks[9], (N, in_planes, H, W), jnp.float32)

    # Convert torch OIHW weights to the kernel layouts (host-side, one-time).
    bn_sc = gamma / jnp.sqrt(rvar + eps)
    A_h = bilinear_matrix(H, Ho)
    A_w = bilinear_matrix(W, Wo)
    params = {
        "w1": jnp.transpose(w1_t[:, :, 0, 0], (1, 0)),              # (Cin, Cm)
        "w2": pack_3x3_weights(w2_t, col_scale=bn_sc),              # (9*128, Cm), BN scale folded
        "w3": pack_3x3_weights(w3_t),                               # (9*128, Cm)
        "w4": jnp.transpose(w4_t[:, :, 0, 0], (1, 0)),              # (Cm, Cout)
        "b4": b4.reshape(1, Cout),
        "bn_shift": (beta - rmean * bn_sc).reshape(1, Cm),
        "upT": jnp.asarray(np.kron(A_h, A_w).T).astype(jnp.bfloat16),  # (H*W, Ho*Wo)
        "hw": (H, W),
        "out_hw": (Ho, Wo),
    }

    out = dfn_head_forward(x_nchw, params)
    out = jax.block_until_ready(out)
    assert out.shape == (N, Cout, Ho, Wo), out.shape

    tp = {'w1_t': w1_t, 'w2_t': w2_t, 'w3_t': w3_t, 'w4_t': w4_t, 'b4': b4,
          'gamma': gamma, 'beta': beta, 'rmean': rmean, 'rvar': rvar}
    ref = jax.block_until_ready(
        ref_forward(x_nchw, tp, jnp.asarray(A_h), jnp.asarray(A_w), eps))
    # Error budget: f32 path ~1e-5; bf16-quantised upsample weights add at most
    # ~2^-9 * max|y| (~8e-3 worst case) — comfortably inside 2e-2.
    err = float(jnp.max(jnp.abs(out - ref)))
    assert err < 2e-2, f"max abs err too large: {err}"
    print("KERNEL_OK")
</pallas_src>

<mosaic_0001>
module attributes {stable_mosaic.version = 11 : i64} {
  func.func @dfn_head_kernel(%arg0: i32, %arg1: memref<1x4x256xf32, #tpu.memory_space<vmem>>, %arg2: memref<4x36xf32, #tpu.memory_space<vmem>>, %arg3: memref<1152x36xf32, #tpu.memory_space<vmem>>, %arg4: memref<1x36xf32, #tpu.memory_space<vmem>>, %arg5: memref<1152x36xf32, #tpu.memory_space<vmem>>, %arg6: memref<36x4xf32, #tpu.memory_space<vmem>>, %arg7: memref<1x4xf32, #tpu.memory_space<vmem>>, %arg8: memref<256x1024xbf16, #tpu.memory_space<vmem>>, %arg9: memref<1x4x1024xf32, #tpu.memory_space<vmem>>, %arg10: memref<18x32x36xf32, #tpu.memory_space<vmem>>, %arg11: memref<256x1152xf32, #tpu.memory_space<vmem>>) attributes {dimension_semantics = [#tpu.dimension_semantics<parallel>], iteration_bounds = array<i64: 2>, scalar_prefetch = 0 : i64, scratch_operands = 2 : i64, tpu.core_type = #tpu.core_type<tc>, window_params = [{transform_indices = @transform_0, window_bounds = array<i64: 1, 4, 256>}, {pipeline_mode = #tpu.pipeline_mode<synchronous>, transform_indices = @transform_1, window_bounds = array<i64: 4, 36>}, {pipeline_mode = #tpu.pipeline_mode<synchronous>, transform_indices = @transform_2, window_bounds = array<i64: 1152, 36>}, {pipeline_mode = #tpu.pipeline_mode<synchronous>, transform_indices = @transform_3, window_bounds = array<i64: 1, 36>}, {pipeline_mode = #tpu.pipeline_mode<synchronous>, transform_indices = @transform_4, window_bounds = array<i64: 1152, 36>}, {pipeline_mode = #tpu.pipeline_mode<synchronous>, transform_indices = @transform_5, window_bounds = array<i64: 36, 4>}, {pipeline_mode = #tpu.pipeline_mode<synchronous>, transform_indices = @transform_6, window_bounds = array<i64: 1, 4>}, {pipeline_mode = #tpu.pipeline_mode<synchronous>, transform_indices = @transform_7, window_bounds = array<i64: 256, 1024>}, {transform_indices = @transform_8, window_bounds = array<i64: 1, 4, 1024>}]} {
    %cst = arith.constant 0.000000e+00 : f32
    %0 = vector.broadcast %cst : f32 to vector<1x32x36xf32>
    %c0 = arith.constant 0 : index
    %c0_0 = arith.constant 0 : index
    %c0_1 = arith.constant 0 : index
    %1 = vector.load %arg10[%c0, %c0_0, %c0_1] : memref<18x32x36xf32, #tpu.memory_space<vmem>>, vector<1x32x36xf32>
    tpu.vector_store %arg10[%c0, %c0_0, %c0_1], %0 {strides = array<i32>} : memref<18x32x36xf32, #tpu.memory_space<vmem>>, vector<1x32x36xf32>,
    %cst_2 = arith.constant 0.000000e+00 : f32
    %2 = vector.broadcast %cst_2 : f32 to vector<1x32x36xf32>
    %c17 = arith.constant 17 : index
    %c0_3 = arith.constant 0 : index
    %c0_4 = arith.constant 0 : index
    %3 = vector.load %arg10[%c17, %c0_3, %c0_4] : memref<18x32x36xf32, #tpu.memory_space<vmem>>, vector<1x32x36xf32>
    tpu.vector_store %arg10[%c17, %c0_3, %c0_4], %2 {strides = array<i32>} : memref<18x32x36xf32, #tpu.memory_space<vmem>>, vector<1x32x36xf32>,
    %cst_5 = arith.constant 0.000000e+00 : f32
    %4 = vector.broadcast %cst_5 : f32 to vector<18x8x36xf32>
    %c0_6 = arith.constant 0 : index
    %c0_7 = arith.constant 0 : index
    %c0_8 = arith.constant 0 : index
    %5 = vector.load %arg10[%c0_6, %c0_7, %c0_8] : memref<18x32x36xf32, #tpu.memory_space<vmem>>, vector<18x8x36xf32>
    tpu.vector_store %arg10[%c0_6, %c0_7, %c0_8], %4 {strides = array<i32>} : memref<18x32x36xf32, #tpu.memory_space<vmem>>, vector<18x8x36xf32>,
    %cst_9 = arith.constant 0.000000e+00 : f32
    %6 = vector.broadcast %cst_9 : f32 to vector<18x8x36xf32>
    %c0_10 = arith.constant 0 : index
    %c24 = arith.constant 24 : index
    %c0_11 = arith.constant 0 : index
    %7 = vector.load %arg10[%c0_10, %c24, %c0_11] : memref<18x32x36xf32, #tpu.memory_space<vmem>>, vector<18x8x36xf32>
    tpu.vector_store %arg10[%c0_10, %c24, %c0_11], %6 {strides = array<i32>} : memref<18x32x36xf32, #tpu.memory_space<vmem>>, vector<18x8x36xf32>,
    %cst_12 = arith.constant 0.000000e+00 : f32
    %8 = vector.broadcast %cst_12 : f32 to vector<256x1152xf32>
    %c0_13 = arith.constant 0 : index
    %c0_14 = arith.constant 0 : index
    %9 = vector.load %arg11[%c0_13, %c0_14] : memref<256x1152xf32, #tpu.memory_space<vmem>>, vector<256x1152xf32>
    tpu.vector_store %arg11[%c0_13, %c0_14], %8 {strides = array<i32>} : memref<256x1152xf32, #tpu.memory_space<vmem>>, vector<256x1152xf32>,
    %c0_15 = arith.constant 0 : index
    %c0_16 = arith.constant 0 : index
    %c0_17 = arith.constant 0 : index
    %10 = vector.load %arg1[%c0_15, %c0_16, %c0_17] : memref<1x4x256xf32, #tpu.memory_space<vmem>>, vector<1x4x256xf32>
    %11 = vector.shape_cast %10 : vector<1x4x256xf32> to vector<4x256xf32>
    %c0_18 = arith.constant 0 : index
    %c0_19 = arith.constant 0 : index
    %12 = vector.load %arg2[%c0_18, %c0_19] : memref<4x36xf32, #tpu.memory_space<vmem>>, vector<4x36xf32>
    %cst_20 = arith.constant dense<0.000000e+00> : vector<256x36xf32>
    %13 = tpu.matmul %11, %12, %cst_20 {dimension_numbers = #tpu.dot_dimension_numbers<[0], [0], [1], [1], [0, 1, 1, 1], [], []>} : vector<4x256xf32>, vector<4x36xf32>, vector<256x36xf32> -> vector<256x36xf32>
    %14 = vector.shape_cast %13 : vector<256x36xf32> to vector<16x16x36xf32>
    %c1 = arith.constant 1 : index
    %c8 = arith.constant 8 : index
    %c0_21 = arith.constant 0 : index
    %15 = vector.load %arg10[%c1, %c8, %c0_21] : memref<18x32x36xf32, #tpu.memory_space<vmem>>, vector<16x16x36xf32>
    tpu.vector_store %arg10[%c1, %c8, %c0_21], %14 {strides = array<i32>} : memref<18x32x36xf32, #tpu.memory_space<vmem>>, vector<16x16x36xf32>,
    %c0_22 = arith.constant 0 : index
    %c7 = arith.constant 7 : index
    %c0_23 = arith.constant 0 : index
    %16 = vector.load %arg10[%c0_22, %c7, %c0_23] : memref<18x32x36xf32, #tpu.memory_space<vmem>>, vector<16x16x36xf32>
    %17 = vector.shape_cast %16 : vector<16x16x36xf32> to vector<256x36xf32>
    %c0_24 = arith.constant 0 : index
    %c0_25 = arith.constant 0 : index
    %18 = vector.load %arg11[%c0_24, %c0_25] : memref<256x1152xf32, #tpu.memory_space<vmem>>, vector<256x36xf32>
    tpu.vector_store %arg11[%c0_24, %c0_25], %17 {strides = array<i32>} : memref<256x1152xf32, #tpu.memory_space<vmem>>, vector<256x36xf32>,
    %c0_26 = arith.constant 0 : index
    %c8_27 = arith.constant 8 : index
    %c0_28 = arith.constant 0 : index
    %19 = vector.load %arg10[%c0_26, %c8_27, %c0_28] : memref<18x32x36xf32, #tpu.memory_space<vmem>>, vector<16x16x36xf32>
    %20 = vector.shape_cast %19 : vector<16x16x36xf32> to vector<256x36xf32>
    %c0_29 = arith.constant 0 : index
    %c128 = arith.constant 128 : index
    %21 = vector.load %arg11[%c0_29, %c128] : memref<256x1152xf32, #tpu.memory_space<vmem>>, vector<256x36xf32>
    tpu.vector_store %arg11[%c0_29, %c128], %20 {strides = array<i32>} : memref<256x1152xf32, #tpu.memory_space<vmem>>, vector<256x36xf32>,
    %c0_30 = arith.constant 0 : index
    %c9 = arith.constant 9 : index
    %c0_31 = arith.constant 0 : index
    %22 = vector.load %arg10[%c0_30, %c9, %c0_31] : memref<18x32x36xf32, #tpu.memory_space<vmem>>, vector<16x16x36xf32>
    %23 = vector.shape_cast %22 : vector<16x16x36xf32> to vector<256x36xf32>
    %c0_32 = arith.constant 0 : index
    %c256 = arith.constant 256 : index
    %24 = vector.load %arg11[%c0_32, %c256] : memref<256x1152xf32, #tpu.memory_space<vmem>>, vector<256x36xf32>
    tpu.vector_store %arg11[%c0_32, %c256], %23 {strides = array<i32>} : memref<256x1152xf32, #tpu.memory_space<vmem>>, vector<256x36xf32>,
    %c1_33 = arith.constant 1 : index
    %c7_34 = arith.constant 7 : index
    %c0_35 = arith.constant 0 : index
    %25 = vector.load %arg10[%c1_33, %c7_34, %c0_35] : memref<18x32x36xf32, #tpu.memory_space<vmem>>, vector<16x16x36xf32>
    %26 = vector.shape_cast %25 : vector<16x16x36xf32> to vector<256x36xf32>
    %c0_36 = arith.constant 0 : index
    %c384 = arith.constant 384 : index
    %27 = vector.load %arg11[%c0_36, %c384] : memref<256x1152xf32, #tpu.memory_space<vmem>>, vector<256x36xf32>
    tpu.vector_store %arg11[%c0_36, %c384], %26 {strides = array<i32>} : memref<256x1152xf32, #tpu.memory_space<vmem>>, vector<256x36xf32>,
    %c1_37 = arith.constant 1 : index
    %c8_38 = arith.constant 8 : index
    %c0_39 = arith.constant 0 : index
    %28 = vector.load %arg10[%c1_37, %c8_38, %c0_39] : memref<18x32x36xf32, #tpu.memory_space<vmem>>, vector<16x16x36xf32>
    %29 = vector.shape_cast %28 : vector<16x16x36xf32> to vector<256x36xf32>
    %c0_40 = arith.constant 0 : index
    %c512 = arith.constant 512 : index
    %30 = vector.load %arg11[%c0_40, %c512] : memref<256x1152xf32, #tpu.memory_space<vmem>>, vector<256x36xf32>
    tpu.vector_store %arg11[%c0_40, %c512], %29 {strides = array<i32>} : memref<256x1152xf32, #tpu.memory_space<vmem>>, vector<256x36xf32>,
    %c1_41 = arith.constant 1 : index
    %c9_42 = arith.constant 9 : index
    %c0_43 = arith.constant 0 : index
    %31 = vector.load %arg10[%c1_41, %c9_42, %c0_43] : memref<18x32x36xf32, #tpu.memory_space<vmem>>, vector<16x16x36xf32>
    %32 = vector.shape_cast %31 : vector<16x16x36xf32> to vector<256x36xf32>
    %c0_44 = arith.constant 0 : index
    %c640 = arith.constant 640 : index
    %33 = vector.load %arg11[%c0_44, %c640] : memref<256x1152xf32, #tpu.memory_space<vmem>>, vector<256x36xf32>
    tpu.vector_store %arg11[%c0_44, %c640], %32 {strides = array<i32>} : memref<256x1152xf32, #tpu.memory_space<vmem>>, vector<256x36xf32>,
    %c2 = arith.constant 2 : index
    %c7_45 = arith.constant 7 : index
    %c0_46 = arith.constant 0 : index
    %34 = vector.load %arg10[%c2, %c7_45, %c0_46] : memref<18x32x36xf32, #tpu.memory_space<vmem>>, vector<16x16x36xf32>
    %35 = vector.shape_cast %34 : vector<16x16x36xf32> to vector<256x36xf32>
    %c0_47 = arith.constant 0 : index
    %c768 = arith.constant 768 : index
    %36 = vector.load %arg11[%c0_47, %c768] : memref<256x1152xf32, #tpu.memory_space<vmem>>, vector<256x36xf32>
    tpu.vector_store %arg11[%c0_47, %c768], %35 {strides = array<i32>} : memref<256x1152xf32, #tpu.memory_space<vmem>>, vector<256x36xf32>,
    %c2_48 = arith.constant 2 : index
    %c8_49 = arith.constant 8 : index
    %c0_50 = arith.constant 0 : index
    %37 = vector.load %arg10[%c2_48, %c8_49, %c0_50] : memref<18x32x36xf32, #tpu.memory_space<vmem>>, vector<16x16x36xf32>
    %38 = vector.shape_cast %37 : vector<16x16x36xf32> to vector<256x36xf32>
    %c0_51 = arith.constant 0 : index
    %c896 = arith.constant 896 : index
    %39 = vector.load %arg11[%c0_51, %c896] : memref<256x1152xf32, #tpu.memory_space<vmem>>, vector<256x36xf32>
    tpu.vector_store %arg11[%c0_51, %c896], %38 {strides = array<i32>} : memref<256x1152xf32, #tpu.memory_space<vmem>>, vector<256x36xf32>,
    %c2_52 = arith.constant 2 : index
    %c9_53 = arith.constant 9 : index
    %c0_54 = arith.constant 0 : index
    %40 = vector.load %arg10[%c2_52, %c9_53, %c0_54] : memref<18x32x36xf32, #tpu.memory_space<vmem>>, vector<16x16x36xf32>
    %41 = vector.shape_cast %40 : vector<16x16x36xf32> to vector<256x36xf32>
    %c0_55 = arith.constant 0 : index
    %c1024 = arith.constant 1024 : index
    %42 = vector.load %arg11[%c0_55, %c1024] : memref<256x1152xf32, #tpu.memory_space<vmem>>, vector<256x36xf32>
    tpu.vector_store %arg11[%c0_55, %c1024], %41 {strides = array<i32>} : memref<256x1152xf32, #tpu.memory_space<vmem>>, vector<256x36xf32>,
    %c0_56 = arith.constant 0 : index
    %c0_57 = arith.constant 0 : index
    %43 = vector.load %arg11[%c0_56, %c0_57] : memref<256x1152xf32, #tpu.memory_space<vmem>>, vector<256x1152xf32>
    %c0_58 = arith.constant 0 : index
    %c0_59 = arith.constant 0 : index
    %44 = vector.load %arg3[%c0_58, %c0_59] : memref<1152x36xf32, #tpu.memory_space<vmem>>, vector<1152x36xf32>
    %cst_60 = arith.constant dense<0.000000e+00> : vector<256x36xf32>
    %45 = tpu.matmul %43, %44, %cst_60 {dimension_numbers = #tpu.dot_dimension_numbers<[1], [0], [0], [1], [0, 0, 1, 1], [], []>} : vector<256x1152xf32>, vector<1152x36xf32>, vector<256x36xf32> -> vector<256x36xf32>
    %c0_61 = arith.constant 0 : index
    %c0_62 = arith.constant 0 : index
    %46 = vector.load %arg4[%c0_61, %c0_62] : memref<1x36xf32, #tpu.memory_space<vmem>>, vector<1x36xf32>
    %47 = vector.broadcast %46 : vector<1x36xf32> to vector<256x36xf32>
    %48 = arith.addf %45, %47 : vector<256x36xf32>
    %cst_63 = arith.constant 0.000000e+00 : f32
    %49 = vector.broadcast %cst_63 : f32 to vector<256x36xf32>
    %50 = arith.maximumf %48, %49 : vector<256x36xf32>
    %51 = vector.shape_cast %50 : vector<256x36xf32> to vector<16x16x36xf32>
    %c1_64 = arith.constant 1 : index
    %c8_65 = arith.constant 8 : index
    %c0_66 = arith.constant 0 : index
    %52 = vector.load %arg10[%c1_64, %c8_65, %c0_66] : memref<18x32x36xf32, #tpu.memory_space<vmem>>, vector<16x16x36xf32>
    tpu.vector_store %arg10[%c1_64, %c8_65, %c0_66], %51 {strides = array<i32>} : memref<18x32x36xf32, #tpu.memory_space<vmem>>, vector<16x16x36xf32>,
    %c0_67 = arith.constant 0 : index
    %c7_68 = arith.constant 7 : index
    %c0_69 = arith.constant 0 : index
    %53 = vector.load %arg10[%c0_67, %c7_68, %c0_69] : memref<18x32x36xf32, #tpu.memory_space<vmem>>, vector<16x16x36xf32>
    %54 = vector.shape_cast %53 : vector<16x16x36xf32> to vector<256x36xf32>
    %c0_70 = arith.constant 0 : index
    %c0_71 = arith.constant 0 : index
    %55 = vector.load %arg11[%c0_70, %c0_71] : memref<256x1152xf32, #tpu.memory_space<vmem>>, vector<256x36xf32>
    tpu.vector_store %arg11[%c0_70, %c0_71], %54 {strides = array<i32>} : memref<256x1152xf32, #tpu.memory_space<vmem>>, vector<256x36xf32>,
    %c0_72 = arith.constant 0 : index
    %c8_73 = arith.constant 8 : index
    %c0_74 = arith.constant 0 : index
    %56 = vector.load %arg10[%c0_72, %c8_73, %c0_74] : memref<18x32x36xf32, #tpu.memory_space<vmem>>, vector<16x16x36xf32>
    %57 = vector.shape_cast %56 : vector<16x16x36xf32> to vector<256x36xf32>
    %c0_75 = arith.constant 0 : index
    %c128_76 = arith.constant 128 : index
    %58 = vector.load %arg11[%c0_75, %c128_76] : memref<256x1152xf32, #tpu.memory_space<vmem>>, vector<256x36xf32>
    tpu.vector_store %arg11[%c0_75, %c128_76], %57 {strides = array<i32>} : memref<256x1152xf32, #tpu.memory_space<vmem>>, vector<256x36xf32>,
    %c0_77 = arith.constant 0 : index
    %c9_78 = arith.constant 9 : index
    %c0_79 = arith.constant 0 : index
    %59 = vector.load %arg10[%c0_77, %c9_78, %c0_79] : memref<18x32x36xf32, #tpu.memory_space<vmem>>, vector<16x16x36xf32>
    %60 = vector.shape_cast %59 : vector<16x16x36xf32> to vector<256x36xf32>
    %c0_80 = arith.constant 0 : index
    %c256_81 = arith.constant 256 : index
    %61 = vector.load %arg11[%c0_80, %c256_81] : memref<256x1152xf32, #tpu.memory_space<vmem>>, vector<256x36xf32>
    tpu.vector_store %arg11[%c0_80, %c256_81], %60 {strides = array<i32>} : memref<256x1152xf32, #tpu.memory_space<vmem>>, vector<256x36xf32>,
    %c1_82 = arith.constant 1 : index
    %c7_83 = arith.constant 7 : index
    %c0_84 = arith.constant 0 : index
    %62 = vector.load %arg10[%c1_82, %c7_83, %c0_84] : memref<18x32x36xf32, #tpu.memory_space<vmem>>, vector<16x16x36xf32>
    %63 = vector.shape_cast %62 : vector<16x16x36xf32> to vector<256x36xf32>
    %c0_85 = arith.constant 0 : index
    %c384_86 = arith.constant 384 : index
    %64 = vector.load %arg11[%c0_85, %c384_86] : memref<256x1152xf32, #tpu.memory_space<vmem>>, vector<256x36xf32>
    tpu.vector_store %arg11[%c0_85, %c384_86], %63 {strides = array<i32>} : memref<256x1152xf32, #tpu.memory_space<vmem>>, vector<256x36xf32>,
    %c1_87 = arith.constant 1 : index
    %c8_88 = arith.constant 8 : index
    %c0_89 = arith.constant 0 : index
    %65 = vector.load %arg10[%c1_87, %c8_88, %c0_89] : memref<18x32x36xf32, #tpu.memory_space<vmem>>, vector<16x16x36xf32>
    %66 = vector.shape_cast %65 : vector<16x16x36xf32> to vector<256x36xf32>
    %c0_90 = arith.constant 0 : index
    %c512_91 = arith.constant 512 : index
    %67 = vector.load %arg11[%c0_90, %c512_91] : memref<256x1152xf32, #tpu.memory_space<vmem>>, vector<256x36xf32>
    tpu.vector_store %arg11[%c0_90, %c512_91], %66 {strides = array<i32>} : memref<256x1152xf32, #tpu.memory_space<vmem>>, vector<256x36xf32>,
    %c1_92 = arith.constant 1 : index
    %c9_93 = arith.constant 9 : index
    %c0_94 = arith.constant 0 : index
    %68 = vector.load %arg10[%c1_92, %c9_93, %c0_94] : memref<18x32x36xf32, #tpu.memory_space<vmem>>, vector<16x16x36xf32>
    %69 = vector.shape_cast %68 : vector<16x16x36xf32> to vector<256x36xf32>
    %c0_95 = arith.constant 0 : index
    %c640_96 = arith.constant 640 : index
    %70 = vector.load %arg11[%c0_95, %c640_96] : memref<256x1152xf32, #tpu.memory_space<vmem>>, vector<256x36xf32>
    tpu.vector_store %arg11[%c0_95, %c640_96], %69 {strides = array<i32>} : memref<256x1152xf32, #tpu.memory_space<vmem>>, vector<256x36xf32>,
    %c2_97 = arith.constant 2 : index
    %c7_98 = arith.constant 7 : index
    %c0_99 = arith.constant 0 : index
    %71 = vector.load %arg10[%c2_97, %c7_98, %c0_99] : memref<18x32x36xf32, #tpu.memory_space<vmem>>, vector<16x16x36xf32>
    %72 = vector.shape_cast %71 : vector<16x16x36xf32> to vector<256x36xf32>
    %c0_100 = arith.constant 0 : index
    %c768_101 = arith.constant 768 : index
    %73 = vector.load %arg11[%c0_100, %c768_101] : memref<256x1152xf32, #tpu.memory_space<vmem>>, vector<256x36xf32>
    tpu.vector_store %arg11[%c0_100, %c768_101], %72 {strides = array<i32>} : memref<256x1152xf32, #tpu.memory_space<vmem>>, vector<256x36xf32>,
    %c2_102 = arith.constant 2 : index
    %c8_103 = arith.constant 8 : index
    %c0_104 = arith.constant 0 : index
    %74 = vector.load %arg10[%c2_102, %c8_103, %c0_104] : memref<18x32x36xf32, #tpu.memory_space<vmem>>, vector<16x16x36xf32>
    %75 = vector.shape_cast %74 : vector<16x16x36xf32> to vector<256x36xf32>
    %c0_105 = arith.constant 0 : index
    %c896_106 = arith.constant 896 : index
    %76 = vector.load %arg11[%c0_105, %c896_106] : memref<256x1152xf32, #tpu.memory_space<vmem>>, vector<256x36xf32>
    tpu.vector_store %arg11[%c0_105, %c896_106], %75 {strides = array<i32>} : memref<256x1152xf32, #tpu.memory_space<vmem>>, vector<256x36xf32>,
    %c2_107 = arith.constant 2 : index
    %c9_108 = arith.constant 9 : index
    %c0_109 = arith.constant 0 : index
    %77 = vector.load %arg10[%c2_107, %c9_108, %c0_109] : memref<18x32x36xf32, #tpu.memory_space<vmem>>, vector<16x16x36xf32>
    %78 = vector.shape_cast %77 : vector<16x16x36xf32> to vector<256x36xf32>
    %c0_110 = arith.constant 0 : index
    %c1024_111 = arith.constant 1024 : index
    %79 = vector.load %arg11[%c0_110, %c1024_111] : memref<256x1152xf32, #tpu.memory_space<vmem>>, vector<256x36xf32>
    tpu.vector_store %arg11[%c0_110, %c1024_111], %78 {strides = array<i32>} : memref<256x1152xf32, #tpu.memory_space<vmem>>, vector<256x36xf32>,
    %c0_112 = arith.constant 0 : index
    %c0_113 = arith.constant 0 : index
    %80 = vector.load %arg11[%c0_112, %c0_113] : memref<256x1152xf32, #tpu.memory_space<vmem>>, vector<256x1152xf32>
    %c0_114 = arith.constant 0 : index
    %c0_115 = arith.constant 0 : index
    %81 = vector.load %arg5[%c0_114, %c0_115] : memref<1152x36xf32, #tpu.memory_space<vmem>>, vector<1152x36xf32>
    %cst_116 = arith.constant dense<0.000000e+00> : vector<256x36xf32>
    %82 = tpu.matmul %80, %81, %cst_116 {dimension_numbers = #tpu.dot_dimension_numbers<[1], [0], [0], [1], [0, 0, 1, 1], [], []>} : vector<256x1152xf32>, vector<1152x36xf32>, vector<256x36xf32> -> vector<256x36xf32>
    %83 = arith.addf %82, %13 : vector<256x36xf32>
    %c0_117 = arith.constant 0 : index
    %c0_118 = arith.constant 0 : index
    %84 = vector.load %arg6[%c0_117, %c0_118] : memref<36x4xf32, #tpu.memory_space<vmem>>, vector<36x4xf32>
    %cst_119 = arith.constant dense<0.000000e+00> : vector<256x4xf32>
    %85 = tpu.matmul %83, %84, %cst_119 {dimension_numbers = #tpu.dot_dimension_numbers<[1], [0], [0], [1], [0, 0, 1, 1], [], []>} : vector<256x36xf32>, vector<36x4xf32>, vector<256x4xf32> -> vector<256x4xf32>
    %c0_120 = arith.constant 0 : index
    %c0_121 = arith.constant 0 : index
    %86 = vector.load %arg7[%c0_120, %c0_121] : memref<1x4xf32, #tpu.memory_space<vmem>>, vector<1x4xf32>
    %87 = vector.broadcast %86 : vector<1x4xf32> to vector<256x4xf32>
    %88 = arith.addf %85, %87 : vector<256x4xf32>
    %89 = arith.truncf %88 : vector<256x4xf32> to vector<256x4xbf16>
    %90 = arith.extf %89 : vector<256x4xbf16> to vector<256x4xf32>
    %91 = arith.subf %88, %90 : vector<256x4xf32>
    %92 = arith.truncf %91 : vector<256x4xf32> to vector<256x4xbf16>
    %c0_122 = arith.constant 0 : index
    %c0_123 = arith.constant 0 : index
    %93 = vector.load %arg8[%c0_122, %c0_123] : memref<256x1024xbf16, #tpu.memory_space<vmem>>, vector<256x1024xbf16>
    %cst_124 = arith.constant dense<0.000000e+00> : vector<4x1024xf32>
    %94 = tpu.matmul %89, %93, %cst_124 {dimension_numbers = #tpu.dot_dimension_numbers<[0], [0], [1], [1], [0, 1, 1, 1], [], []>} : vector<256x4xbf16>, vector<256x1024xbf16>, vector<4x1024xf32> -> vector<4x1024xf32>
    %c0_125 = arith.constant 0 : index
    %c0_126 = arith.constant 0 : index
    %95 = vector.load %arg8[%c0_125, %c0_126] : memref<256x1024xbf16, #tpu.memory_space<vmem>>, vector<256x1024xbf16>
    %cst_127 = arith.constant dense<0.000000e+00> : vector<4x1024xf32>
    %96 = tpu.matmul %92, %95, %cst_127 {dimension_numbers = #tpu.dot_dimension_numbers<[0], [0], [1], [1], [0, 1, 1, 1], [], []>} : vector<256x4xbf16>, vector<256x1024xbf16>, vector<4x1024xf32> -> vector<4x1024xf32>
    %97 = arith.addf %94, %96 : vector<4x1024xf32>
    %c0_128 = arith.constant 0 : index
    %c0_129 = arith.constant 0 : index
    %c0_130 = arith.constant 0 : index
    %98 = vector.load %arg9[%c0_128, %c0_129, %c0_130] : memref<1x4x1024xf32, #tpu.memory_space<vmem>>, vector<1x4x1024xf32>
    %99 = vector.shape_cast %98 : vector<1x4x1024xf32> to vector<4x1024xf32>
    %100 = vector.shape_cast %97 : vector<4x1024xf32> to vector<1x4x1024xf32>
    tpu.vector_store %arg9[%c0_128, %c0_129, %c0_130], %100 {strides = array<i32>} : memref<1x4x1024xf32, #tpu.memory_space<vmem>>, vector<1x4x1024xf32>,
    return
  }
  func.func @transform_0(%arg0: i32) -> (i32, i32, i32) {
    %c0_i32 = arith.constant 0 : i32
    %c0_i32_0 = arith.constant 0 : i32
    %c0_i32_1 = arith.constant 0 : i32
    return %arg0, %c0_i32, %c0_i32_0 : i32, i32, i32
  }
  func.func @transform_1(%arg0: i32) -> (i32, i32) {
    %c0_i32 = arith.constant 0 : i32
    %c0_i32_0 = arith.constant 0 : i32
    %c0_i32_1 = arith.constant 0 : i32
    return %c0_i32, %c0_i32_0 : i32, i32
  }
  func.func @transform_2(%arg0: i32) -> (i32, i32) {
    %c0_i32 = arith.constant 0 : i32
    %c0_i32_0 = arith.constant 0 : i32
    %c0_i32_1 = arith.constant 0 : i32
    return %c0_i32, %c0_i32_0 : i32, i32
  }
  func.func @transform_3(%arg0: i32) -> (i32, i32) {
    %c0_i32 = arith.constant 0 : i32
    %c0_i32_0 = arith.constant 0 : i32
    %c0_i32_1 = arith.constant 0 : i32
    return %c0_i32, %c0_i32_0 : i32, i32
  }
  func.func @transform_4(%arg0: i32) -> (i32, i32) {
    %c0_i32 = arith.constant 0 : i32
    %c0_i32_0 = arith.constant 0 : i32
    %c0_i32_1 = arith.constant 0 : i32
    return %c0_i32, %c0_i32_0 : i32, i32
  }
  func.func @transform_5(%arg0: i32) -> (i32, i32) {
    %c0_i32 = arith.constant 0 : i32
    %c0_i32_0 = arith.constant 0 : i32
    %c0_i32_1 = arith.constant 0 : i32
    return %c0_i32, %c0_i32_0 : i32, i32
  }
  func.func @transform_6(%arg0: i32) -> (i32, i32) {
    %c0_i32 = arith.constant 0 : i32
    %c0_i32_0 = arith.constant 0 : i32
    %c0_i32_1 = arith.constant 0 : i32
    return %c0_i32, %c0_i32_0 : i32, i32
  }
  func.func @transform_7(%arg0: i32) -> (i32, i32) {
    %c0_i32 = arith.constant 0 : i32
    %c0_i32_0 = arith.constant 0 : i32
    %c0_i32_1 = arith.constant 0 : i32
    return %c0_i32, %c0_i32_0 : i32, i32
  }
  func.func @transform_8(%arg0: i32) -> (i32, i32, i32) {
    %c0_i32 = arith.constant 0 : i32
    %c0_i32_0 = arith.constant 0 : i32
    %c0_i32_1 = arith.constant 0 : i32
    return %arg0, %c0_i32, %c0_i32_0 : i32, i32, i32
  }
}

</mosaic_0001>

<llo_original>
// kernel: tpu_custom_call.1
$region0: #{tpu_custom_call.1}
  #allocation0 [shape = 'u32[]', space=smem, size = 0x4, offset = 0x4, fixed_abs, tag = 'smem constant byte address 0x4 - core index']
  #allocation1 [shape = 'u32[144,128]{1,0:T(1,128)}', space=vmem, size = 0x12000, scoped, tag = 'internal scratch']
  #allocation2 [shape = 'f32[18,32,36]{2,1,0:T(8,128)}', space=vmem, size = 0x48000, scoped, tag = 'scratch operand']
  #allocation3 [shape = 'f32[256,1152]{1,0:T(8,128)}', space=vmem, size = 0x120000, scoped, tag = 'scratch operand']
  %s0 = inlined_call_operand.vmem [shape: f32[2,4,256], index: 0, kind: input, shape index: {}]
  %s1 = inlined_call_operand.vmem [shape: f32[4,36], index: 1, kind: input, shape index: {}]
  %s2 = inlined_call_operand.vmem [shape: f32[1152,36], index: 2, kind: input, shape index: {}]
  %s3 = inlined_call_operand.vmem [shape: f32[1,36], index: 3, kind: input, shape index: {}]
  %s4 = inlined_call_operand.vmem [shape: f32[1152,36], index: 4, kind: input, shape index: {}]
  %s5 = inlined_call_operand.vmem [shape: f32[36,4], index: 5, kind: input, shape index: {}]
  %s6 = inlined_call_operand.vmem [shape: f32[1,4], index: 6, kind: input, shape index: {}]
  %s7 = inlined_call_operand.vmem [shape: bf16[256,1024], index: 7, kind: input, shape index: {}]
  %s8 = inlined_call_operand.hbm [shape: f32[2,4,1024], index: 8, kind: output, shape index: {}]
  %s9 = sld [smem:[#allocation0]]
  $region65: #{tpu_custom_call.1} parent=0
    _
  %s11 = ssub.s32 1, %s9
  %s12 = scalar_select 0, %s11, %s9
  $region1: #{tpu_custom_call.1} parent=0
    #allocation4 [shape = 'u8[32768]{0}', space=vmem, size = 0x8000, scoped, tag = 'output window, operand 0']
    #allocation5 [shape = 's32[2]{0}', space=sflag, size = 0x8, scoped, tag = 'scoped memory for tpu_custom_call.1']
    %13 = vsyncpa [#allocation5], 0
    %s14 = scalar_lea.sflag [#allocation5], 1
    %15 = vsyncpa %s14, 0
    loop: start=0, step=1, limit=4
    $region2: #{tpu_custom_call.1} parent=1 // loop_pre_header
      _
    $region3: #{tpu_custom_call.1} parent=1 // loop_header
      %s17 = sphi 0, %s21
      %p18 = scmp.ge.s32.totalorder %s17, 4
      %s27 = sphi 0, %s29
      %s30 = sphi 0, %s27
      %s31 = sphi 0, %s30
      %s47 = sphi 0, %s31
      %s51 = sphi 0, %s51
      %s53 = sphi 0, %s51
      %s54 = sphi 0, %s53
      %s68 = sphi 0, %s54
      %s72 = sphi 0, %s72
      %s74 = sphi 0, %s72
      %s75 = sphi 0, %s74
      %s89 = sphi 0, %s75
      %s93 = sphi 0, %s93
      %s95 = sphi 0, %s93
      %s96 = sphi 0, %s95
      %s110 = sphi 0, %s96
      %s114 = sphi 0, %s114
      %s116 = sphi 0, %s114
      %s117 = sphi 0, %s116
      %s131 = sphi 0, %s117
      %s135 = sphi 0, %s135
      %s137 = sphi 0, %s135
      %s138 = sphi 0, %s137
      %s152 = sphi 0, %s138
      %s156 = sphi 0, %s156
      %s158 = sphi 0, %s156
      %s159 = sphi 0, %s158
      %s173 = sphi 0, %s159
      %s177 = sphi 0, %s177
      %s179 = sphi 0, %s177
      %s180 = sphi 0, %s179
      %s194 = sphi 0, %s180
      %s200 = sphi 0, %s202
      %s203 = sphi 0, %s200
      %s204 = sphi 0, %s203
      %s220 = sphi 0, %s204
    $region4: #{tpu_custom_call.1} parent=1 // loop_header_branch
      %20 = sbr.rel (%p18) target = $region8
    $region5: #{tpu_custom_call.1} parent=1 // loop_body
      %s22 = ssub.s32 %s17, 1
      %s23 = ssub.s32 %s17, 2
      %s24 = sadd.s32 %s17, 1
      %s25 = ssub.s32 %s17, %s24
      %p26 = scmp.eq.s32.totalorder %s25, 0
      %s28 = sadd.s32 %s27, 1
      %s29 = scalar_select %p26, %s27, %s28
      %p32 = pneg %p26
      %p33 = scmp.eq.s32.totalorder %s17, 1
      %p34 = por %p32, %p33
      %p35 = scmp.ne.s32.totalorder %s27, %s30
      %p36 = scmp.eq.s32.totalorder %s17, 0
      %p37 = por %p35, %p36
      %p38 = scmp.ne.s32.totalorder %s27, %s30
      %p39 = scmp.eq.s32.totalorder %s22, 1
      %p40 = por %p38, %p39
      %p41 = scmp.ne.s32.totalorder %s30, %s31
      %p42 = scmp.eq.s32.totalorder %s22, 0
      %p43 = por %p41, %p42
      %p44 = scmp.ne.s32.totalorder %s30, %s31
      %p45 = scmp.eq.s32.totalorder %s23, 1
      %p46 = por %p44, %p45
      %p48 = scmp.ne.s32.totalorder %s31, %s47
      %p49 = scmp.eq.s32.totalorder %s23, 0
      %p50 = por %p48, %p49
      %s52 = sadd.s32 %s51, 1
      %p55 = scmp.eq.s32.totalorder %s17, 1
      %p56 = scmp.ne.s32.totalorder %s51, %s53
      %p57 = scmp.eq.s32.totalorder %s17, 0
      %p58 = por %p56, %p57
      %p59 = scmp.ne.s32.totalorder %s51, %s53
      %p60 = scmp.eq.s32.totalorder %s22, 1
      %p61 = por %p59, %p60
      %p62 = scmp.ne.s32.totalorder %s53, %s54
      %p63 = scmp.eq.s32.totalorder %s22, 0
      %p64 = por %p62, %p63
      %p65 = scmp.ne.s32.totalorder %s53, %s54
      %p66 = scmp.eq.s32.totalorder %s23, 1
      %p67 = por %p65, %p66
      %p69 = scmp.ne.s32.totalorder %s54, %s68
      %p70 = scmp.eq.s32.totalorder %s23, 0
      %p71 = por %p69, %p70
      %s73 = sadd.s32 %s72, 1
      %p76 = scmp.eq.s32.totalorder %s17, 1
      %p77 = scmp.ne.s32.totalorder %s72, %s74
      %p78 = scmp.eq.s32.totalorder %s17, 0
      %p79 = por %p77, %p78
      %p80 = scmp.ne.s32.totalorder %s72, %s74
      %p81 = scmp.eq.s32.totalorder %s22, 1
      %p82 = por %p80, %p81
      %p83 = scmp.ne.s32.totalorder %s74, %s75
      %p84 = scmp.eq.s32.totalorder %s22, 0
      %p85 = por %p83, %p84
      %p86 = scmp.ne.s32.totalorder %s74, %s75
      %p87 = scmp.eq.s32.totalorder %s23, 1
      %p88 = por %p86, %p87
      %p90 = scmp.ne.s32.totalorder %s75, %s89
      %p91 = scmp.eq.s32.totalorder %s23, 0
      %p92 = por %p90, %p91
      %s94 = sadd.s32 %s93, 1
      %p97 = scmp.eq.s32.totalorder %s17, 1
      %p98 = scmp.ne.s32.totalorder %s93, %s95
      %p99 = scmp.eq.s32.totalorder %s17, 0
      %p100 = por %p98, %p99
      %p101 = scmp.ne.s32.totalorder %s93, %s95
      %p102 = scmp.eq.s32.totalorder %s22, 1
      %p103 = por %p101, %p102
      %p104 = scmp.ne.s32.totalorder %s95, %s96
      %p105 = scmp.eq.s32.totalorder %s22, 0
      %p106 = por %p104, %p105
      %p107 = scmp.ne.s32.totalorder %s95, %s96
      %p108 = scmp.eq.s32.totalorder %s23, 1
      %p109 = por %p107, %p108
      %p111 = scmp.ne.s32.totalorder %s96, %s110
      %p112 = scmp.eq.s32.totalorder %s23, 0
      %p113 = por %p111, %p112
      %s115 = sadd.s32 %s114, 1
      %p118 = scmp.eq.s32.totalorder %s17, 1
      %p119 = scmp.ne.s32.totalorder %s114, %s116
      %p120 = scmp.eq.s32.totalorder %s17, 0
      %p121 = por %p119, %p120
      %p122 = scmp.ne.s32.totalorder %s114, %s116
      %p123 = scmp.eq.s32.totalorder %s22, 1
      %p124 = por %p122, %p123
      %p125 = scmp.ne.s32.totalorder %s116, %s117
      %p126 = scmp.eq.s32.totalorder %s22, 0
      %p127 = por %p125, %p126
      %p128 = scmp.ne.s32.totalorder %s116, %s117
      %p129 = scmp.eq.s32.totalorder %s23, 1
      %p130 = por %p128, %p129
      %p132 = scmp.ne.s32.totalorder %s117, %s131
      %p133 = scmp.eq.s32.totalorder %s23, 0
      %p134 = por %p132, %p133
      %s136 = sadd.s32 %s135, 1
      %p139 = scmp.eq.s32.totalorder %s17, 1
      %p140 = scmp.ne.s32.totalorder %s135, %s137
      %p141 = scmp.eq.s32.totalorder %s17, 0
      %p142 = por %p140, %p141
      %p143 = scmp.ne.s32.totalorder %s135, %s137
      %p144 = scmp.eq.s32.totalorder %s22, 1
      %p145 = por %p143, %p144
      %p146 = scmp.ne.s32.totalorder %s137, %s138
      %p147 = scmp.eq.s32.totalorder %s22, 0
      %p148 = por %p146, %p147
      %p149 = scmp.ne.s32.totalorder %s137, %s138
      %p150 = scmp.eq.s32.totalorder %s23, 1
      %p151 = por %p149, %p150
      %p153 = scmp.ne.s32.totalorder %s138, %s152
      %p154 = scmp.eq.s32.totalorder %s23, 0
      %p155 = por %p153, %p154
      %s157 = sadd.s32 %s156, 1
      %p160 = scmp.eq.s32.totalorder %s17, 1
      %p161 = scmp.ne.s32.totalorder %s156, %s158
      %p162 = scmp.eq.s32.totalorder %s17, 0
      %p163 = por %p161, %p162
      %p164 = scmp.ne.s32.totalorder %s156, %s158
      %p165 = scmp.eq.s32.totalorder %s22, 1
      %p166 = por %p164, %p165
      %p167 = scmp.ne.s32.totalorder %s158, %s159
      %p168 = scmp.eq.s32.totalorder %s22, 0
      %p169 = por %p167, %p168
      %p170 = scmp.ne.s32.totalorder %s158, %s159
      %p171 = scmp.eq.s32.totalorder %s23, 1
      %p172 = por %p170, %p171
      %p174 = scmp.ne.s32.totalorder %s159, %s173
      %p175 = scmp.eq.s32.totalorder %s23, 0
      %p176 = por %p174, %p175
      %s178 = sadd.s32 %s177, 1
      %p181 = scmp.eq.s32.totalorder %s17, 1
      %p182 = scmp.ne.s32.totalorder %s177, %s179
      %p183 = scmp.eq.s32.totalorder %s17, 0
      %p184 = por %p182, %p183
      %p185 = scmp.ne.s32.totalorder %s177, %s179
      %p186 = scmp.eq.s32.totalorder %s22, 1
      %p187 = por %p185, %p186
      %p188 = scmp.ne.s32.totalorder %s179, %s180
      %p189 = scmp.eq.s32.totalorder %s22, 0
      %p190 = por %p188, %p189
      %p191 = scmp.ne.s32.totalorder %s179, %s180
      %p192 = scmp.eq.s32.totalorder %s23, 1
      %p193 = por %p191, %p192
      %p195 = scmp.ne.s32.totalorder %s180, %s194
      %p196 = scmp.eq.s32.totalorder %s23, 0
      %p197 = por %p195, %p196
      %s198 = ssub.s32 %s17, %s24
      %p199 = scmp.eq.s32.totalorder %s198, 0
      %s201 = sadd.s32 %s200, 1
      %s202 = scalar_select %p199, %s200, %s201
      %p205 = pneg %p199
      %p206 = scmp.eq.s32.totalorder %s17, 1
      %p207 = por %p205, %p206
      %p208 = scmp.ne.s32.totalorder %s200, %s203
      %p209 = scmp.eq.s32.totalorder %s17, 0
      %p210 = por %p208, %p209
      %p211 = scmp.ne.s32.totalorder %s200, %s203
      %p212 = scmp.eq.s32.totalorder %s22, 1
      %p213 = por %p211, %p212
      %p214 = scmp.ne.s32.totalorder %s203, %s204
      %p215 = scmp.eq.s32.totalorder %s22, 0
      %p216 = por %p214, %p215
      %p217 = scmp.ne.s32.totalorder %s203, %s204
      %p218 = scmp.eq.s32.totalorder %s23, 1
      %p219 = por %p217, %p218
      %p221 = scmp.ne.s32.totalorder %s204, %s220
      %p222 = scmp.eq.s32.totalorder %s23, 0
      %p223 = por %p221, %p222
      %p224 = scmp.le.s32.totalorder 1, %s17
      %p225 = scmp.lt.s32.totalorder %s17, 3
      %p226 = pnand %p224, %p225
      %p227 = pneg %p226
      // Predicated region
      $region9: #{tpu_custom_call.1} parent=5 // pred_check
        _
      $region10: #{tpu_custom_call.1} parent=5 // pred_check_branch
        %229 = sbr.rel (%p226) target = $region12
      $region11: #{tpu_custom_call.1} parent=5 // pred_region
        %s230 = ssub.s32 %s17, 1
        // Predicated region
        $region13: #{tpu_custom_call.1} parent=11 // pred_check
          %p231 = pneg %p64
        $region14: #{tpu_custom_call.1} parent=11 // pred_check_branch
          %233 = sbr.rel (%p231) target = $region16
        $region15: #{tpu_custom_call.1} parent=11 // pred_region
          _
        $region16: #{tpu_custom_call.1} parent=11 // pred_fallthru
          _
        // Predicated region
        $region17: #{tpu_custom_call.1} parent=11 // pred_check
          %p234 = pneg %p85
        $region18: #{tpu_custom_call.1} parent=11 // pred_check_branch
          %236 = sbr.rel (%p234) target = $region20
        $region19: #{tpu_custom_call.1} parent=11 // pred_region
          _
        $region20: #{tpu_custom_call.1} parent=11 // pred_fallthru
          _
        // Predicated region
        $region21: #{tpu_custom_call.1} parent=11 // pred_check
          %p237 = pneg %p106
        $region22: #{tpu_custom_call.1} parent=11 // pred_check_branch
          %239 = sbr.rel (%p237) target = $region24
        $region23: #{tpu_custom_call.1} parent=11 // pred_region
          _
        $region24: #{tpu_custom_call.1} parent=11 // pred_fallthru
          _
        // Predicated region
        $region25: #{tpu_custom_call.1} parent=11 // pred_check
          %p240 = pneg %p127
        $region26: #{tpu_custom_call.1} parent=11 // pred_check_branch
          %242 = sbr.rel (%p240) target = $region28
        $region27: #{tpu_custom_call.1} parent=11 // pred_region
          _
        $region28: #{tpu_custom_call.1} parent=11 // pred_fallthru
          _
        // Predicated region
        $region29: #{tpu_custom_call.1} parent=11 // pred_check
          %p243 = pneg %p148
        $region30: #{tpu_custom_call.1} parent=11 // pred_check_branch
          %245 = sbr.rel (%p243) target = $region32
        $region31: #{tpu_custom_call.1} parent=11 // pred_region
          _
        $region32: #{tpu_custom_call.1} parent=11 // pred_fallthru
          _
        // Predicated region
        $region33: #{tpu_custom_call.1} parent=11 // pred_check
          %p246 = pneg %p169
        $region34: #{tpu_custom_call.1} parent=11 // pred_check_branch
          %248 = sbr.rel (%p246) target = $region36
        $region35: #{tpu_custom_call.1} parent=11 // pred_region
          _
        $region36: #{tpu_custom_call.1} parent=11 // pred_fallthru
          _
        // Predicated region
        $region37: #{tpu_custom_call.1} parent=11 // pred_check
          %p249 = pneg %p190
        $region38: #{tpu_custom_call.1} parent=11 // pred_check_branch
          %251 = sbr.rel (%p249) target = $region40
        $region39: #{tpu_custom_call.1} parent=11 // pred_region
          _
        $region40: #{tpu_custom_call.1} parent=11 // pred_fallthru
          _
      $region12: #{tpu_custom_call.1} parent=5 // pred_fallthru
        _
      %p252 = scmp.lt.s32.totalorder %s17, 2
      // Predicated region
      $region41: #{tpu_custom_call.1} parent=5 // pred_check
        %p253 = pneg %p252
      $region42: #{tpu_custom_call.1} parent=5 // pred_check_branch
        %255 = sbr.rel (%p253) target = $region44
      $region43: #{tpu_custom_call.1} parent=5 // pred_region
        // Predicated region
        $region45: #{tpu_custom_call.1} parent=43 // pred_check
          %p256 = pneg %p37
        $region46: #{tpu_custom_call.1} parent=43 // pred_check_branch
          %258 = sbr.rel (%p256) target = $region48
        $region47: #{tpu_custom_call.1} parent=43 // pred_region
          %p259 = scmp.lt.s32.totalorder %s17, 1
          %s260 = scalar_select %p259, %s17, 1
          %s261 = smul.addr %s260, 2
          %s262 = smul.addr %s261, 4
          %s263 = scalar_lea.vmem %s0, %s262
        $region48: #{tpu_custom_call.1} parent=43 // pred_fallthru
          _
      $region44: #{tpu_custom_call.1} parent=5 // pred_fallthru
        _
      %p264 = scmp.le.s32.totalorder 1, %s17
      %p265 = scmp.lt.s32.totalorder %s17, 3
      %p266 = pnand %p264, %p265
      %p267 = pneg %p266
      // Predicated region
      $region49: #{tpu_custom_call.1} parent=5 // pred_check
        _
      $region50: #{tpu_custom_call.1} parent=5 // pred_check_branch
        %269 = sbr.rel (%p266) target = $region52
      $region51: #{tpu_custom_call.1} parent=5 // pred_region
        %s270 = ssub.s32 %s17, 1
        %p271 = scmp.lt.s32.totalorder %s22, 1
        %s272 = scalar_select %p271, %s22, 1
        %s273 = smul.addr %s272, 2
        %s274 = smul.addr %s273, 4
        %s275 = scalar_lea.vmem %s0, %s274
        %p276 = pneg %p43
        %p277 = pneg %p40
        %p278 = pneg %p64
        %p279 = pneg %p61
        %p280 = pneg %p85
        %p281 = pneg %p82
        %p282 = pneg %p106
        %p283 = pneg %p103
        %p284 = pneg %p127
        %p285 = pneg %p124
        %p286 = pneg %p148
        %p287 = pneg %p145
        %p288 = pneg %p169
        %p289 = pneg %p166
        %p290 = pneg %p190
        %p291 = pneg %p187
        %p292 = pneg %p216
        %p293 = pneg %p213
        %s294 = sand.u32 %s203, 1
        %s295 = scalar_lea.sflag [#allocation5], %s294
        %s296 = sand.u32 %s203, 1
        %s297 = smul.addr %s296, 32
        %s298 = scalar_lea.vmem [#allocation4], %s297
        %p299 = scmp.lt.s32.totalorder %s22, 1
        %s300 = scalar_select %p299, %s22, 1
        %s301 = smul.addr %s300, 2
        %s302 = smul.addr %s301, 4
        %s303 = scalar_lea.vmem %s0, %s302
        %vm304 = vcmask 293888
        %305 = vst.msk [vmem:[#allocation2] sm:$0xff] %vm304, 0.0
        %306 = vst.msk [vmem:[#allocation2 + $0x8] sm:$0xff] %vm304, 0.0
        %307 = vst.msk [vmem:[#allocation2 + $0x10] sm:$0xff] %vm304, 0.0
        %308 = vst.msk [vmem:[#allocation2 + $0x18] sm:$0xff] %vm304, 0.0
        %s309 = scalar_lea.vmem [#allocation2], 544
        %310 = vst.msk [vmem:[%s309] sm:$0xff] %vm304, 0.0
        %311 = vst.msk [vmem:[%s309 + $0x8] sm:$0xff] %vm304, 0.0
        %312 = vst.msk [vmem:[%s309 + $0x10] sm:$0xff] %vm304, 0.0
        %313 = vst.msk [vmem:[%s309 + $0x18] sm:$0xff] %vm304, 0.0
        %314 = vst.msk [vmem:[#allocation2] sm:$0xff] %vm304, 0.0
        %315 = vst.msk [vmem:[#allocation2 + $0x20] sm:$0xff] %vm304, 0.0
        %316 = vst.msk [vmem:[#allocation2 + $0x40] sm:$0xff] %vm304, 0.0
        %317 = vst.msk [vmem:[#allocation2 + $0x60] sm:$0xff] %vm304, 0.0
        %318 = vst.msk [vmem:[#allocation2 + $0x80] sm:$0xff] %vm304, 0.0
        %319 = vst.msk [vmem:[#allocation2 + $0xa0] sm:$0xff] %vm304, 0.0
        %320 = vst.msk [vmem:[#allocation2 + $0xc0] sm:$0xff] %vm304, 0.0
        %321 = vst.msk [vmem:[#allocation2 + $0xe0] sm:$0xff] %vm304, 0.0
        %322 = vst.msk [vmem:[#allocation2 + $0x100] sm:$0xff] %vm304, 0.0
        %323 = vst.msk [vmem:[#allocation2 + $0x120] sm:$0xff] %vm304, 0.0
        %324 = vst.msk [vmem:[#allocation2 + $0x140] sm:$0xff] %vm304, 0.0
        %325 = vst.msk [vmem:[#allocation2 + $0x160] sm:$0xff] %vm304, 0.0
        %326 = vst.msk [vmem:[#allocation2 + $0x180] sm:$0xff] %vm304, 0.0
        %327 = vst.msk [vmem:[#allocation2 + $0x1a0] sm:$0xff] %vm304, 0.0
        %328 = vst.msk [vmem:[#allocation2 + $0x1c0] sm:$0xff] %vm304, 0.0
        %329 = vst.msk [vmem:[#allocation2 + $0x1e0] sm:$0xff] %vm304, 0.0
        %330 = vst.msk [vmem:[#allocation2 + $0x200] sm:$0xff] %vm304, 0.0
        %331 = vst.msk [vmem:[#allocation2 + $0x220] sm:$0xff] %vm304, 0.0
        %332 = vst.msk [vmem:[#allocation2 + $0x18] sm:$0xff] %vm304, 0.0
        %333 = vst.msk [vmem:[#allocation2 + $0x38] sm:$0xff] %vm304, 0.0
        %334 = vst.msk [vmem:[#allocation2 + $0x58] sm:$0xff] %vm304, 0.0
        %335 = vst.msk [vmem:[#allocation2 + $0x78] sm:$0xff] %vm304, 0.0
        %336 = vst.msk [vmem:[#allocation2 + $0x98] sm:$0xff] %vm304, 0.0
        %337 = vst.msk [vmem:[#allocation2 + $0xb8] sm:$0xff] %vm304, 0.0
        %338 = vst.msk [vmem:[#allocation2 + $0xd8] sm:$0xff] %vm304, 0.0
        %339 = vst.msk [vmem:[#allocation2 + $0xf8] sm:$0xff] %vm304, 0.0
        %340 = vst.msk [vmem:[#allocation2 + $0x118] sm:$0xff] %vm304, 0.0
        %341 = vst.msk [vmem:[#allocation2 + $0x138] sm:$0xff] %vm304, 0.0
        %342 = vst.msk [vmem:[#allocation2 + $0x158] sm:$0xff] %vm304, 0.0
        %343 = vst.msk [vmem:[#allocation2 + $0x178] sm:$0xff] %vm304, 0.0
        %344 = vst.msk [vmem:[#allocation2 + $0x198] sm:$0xff] %vm304, 0.0
        %345 = vst.msk [vmem:[#allocation2 + $0x1b8] sm:$0xff] %vm304, 0.0
        %346 = vst.msk [vmem:[#allocation2 + $0x1d8] sm:$0xff] %vm304, 0.0
        %347 = vst.msk [vmem:[#allocation2 + $0x1f8] sm:$0xff] %vm304, 0.0
        %348 = vst.msk [vmem:[#allocation2 + $0x218] sm:$0xff] %vm304, 0.0
        %349 = vst.msk [vmem:[#allocation2 + $0x238] sm:$0xff] %vm304, 0.0
        %350 = vst [vmem:[#allocation3] sm:$0xff] 0.0
        %351 = vst [vmem:[#allocation3 + $0x8] sm:$0xff] 0.0
        %352 = vst [vmem:[#allocation3 + $0x10] sm:$0xff] 0.0
        %353 = vst [vmem:[#allocation3 + $0x18] sm:$0xff] 0.0
        %354 = vst [vmem:[#allocation3 + $0x20] sm:$0xff] 0.0
        %355 = vst [vmem:[#allocation3 + $0x28] sm:$0xff] 0.0
        %356 = vst [vmem:[#allocation3 + $0x30] sm:$0xff] 0.0
        %357 = vst [vmem:[#allocation3 + $0x38] sm:$0xff] 0.0
        %358 = vst [vmem:[#allocation3 + $0x40] sm:$0xff] 0.0
        %359 = vst [vmem:[#allocation3 + $0x48] sm:$0xff] 0.0
        %360 = vst [vmem:[#allocation3 + $0x50] sm:$0xff] 0.0
        %361 = vst [vmem:[#allocation3 + $0x58] sm:$0xff] 0.0
        %362 = vst [vmem:[#allocation3 + $0x60] sm:$0xff] 0.0
        %363 = vst [vmem:[#allocation3 + $0x68] sm:$0xff] 0.0
        %364 = vst [vmem:[#allocation3 + $0x70] sm:$0xff] 0.0
        %365 = vst [vmem:[#allocation3 + $0x78] sm:$0xff] 0.0
        %366 = vst [vmem:[#allocation3 + $0x80] sm:$0xff] 0.0
        %367 = vst [vmem:[#allocation3 + $0x88] sm:$0xff] 0.0
        %368 = vst [vmem:[#allocation3 + $0x90] sm:$0xff] 0.0
        %369 = vst [vmem:[#allocation3 + $0x98] sm:$0xff] 0.0
        %370 = vst [vmem:[#allocation3 + $0xa0] sm:$0xff] 0.0
        %371 = vst [vmem:[#allocation3 + $0xa8] sm:$0xff] 0.0
        %372 = vst [vmem:[#allocation3 + $0xb0] sm:$0xff] 0.0
        %373 = vst [vmem:[#allocation3 + $0xb8] sm:$0xff] 0.0
        %374 = vst [vmem:[#allocation3 + $0xc0] sm:$0xff] 0.0
        %375 = vst [vmem:[#allocation3 + $0xc8] sm:$0xff] 0.0
        %376 = vst [vmem:[#allocation3 + $0xd0] sm:$0xff] 0.0
        %377 = vst [vmem:[#allocation3 + $0xd8] sm:$0xff] 0.0
        %378 = vst [vmem:[#allocation3 + $0xe0] sm:$0xff] 0.0
        %379 = vst [vmem:[#allocation3 + $0xe8] sm:$0xff] 0.0
        %380 = vst [vmem:[#allocation3 + $0xf0] sm:$0xff] 0.0
        %381 = vst [vmem:[#allocation3 + $0xf8] sm:$0xff] 0.0
        %382 = vst [vmem:[#allocation3 + $0x100] sm:$0xff] 0.0
        %383 = vst [vmem:[#allocation3 + $0x108] sm:$0xff] 0.0
        %384 = vst [vmem:[#allocation3 + $0x110] sm:$0xff] 0.0
        %385 = vst [vmem:[#allocation3 + $0x118] sm:$0xff] 0.0
        %386 = vst [vmem:[#allocation3 + $0x120] sm:$0xff] 0.0
        %387 = vst [vmem:[#allocation3 + $0x128] sm:$0xff] 0.0
        %388 = vst [vmem:[#allocation3 + $0x130] sm:$0xff] 0.0
        %389 = vst [vmem:[#allocation3 + $0x138] sm:$0xff] 0.0
        %390 = vst [vmem:[#allocation3 + $0x140] sm:$0xff] 0.0
        %391 = vst [vmem:[#allocation3 + $0x148] sm:$0xff] 0.0
        %392 = vst [vmem:[#allocation3 + $0x150] sm:$0xff] 0.0
        %393 = vst [vmem:[#allocation3 + $0x158] sm:$0xff] 0.0
        %394 = vst [vmem:[#allocation3 + $0x160] sm:$0xff] 0.0
        %395 = vst [vmem:[#allocation3 + $0x168] sm:$0xff] 0.0
        %396 = vst [vmem:[#allocation3 + $0x170] sm:$0xff] 0.0
        %397 = vst [vmem:[#allocation3 + $0x178] sm:$0xff] 0.0
        %398 = vst [vmem:[#allocation3 + $0x180] sm:$0xff] 0.0
        %399 = vst [vmem:[#allocation3 + $0x188] sm:$0xff] 0.0
        %400 = vst [vmem:[#allocation3 + $0x190] sm:$0xff] 0.0
        %401 = vst [vmem:[#allocation3 + $0x198] sm:$0xff] 0.0
        %402 = vst [vmem:[#allocation3 + $0x1a0] sm:$0xff] 0.0
        %403 = vst [vmem:[#allocation3 + $0x1a8] sm:$0xff] 0.0
        %404 = vst [vmem:[#allocation3 + $0x1b0] sm:$0xff] 0.0
        %405 = vst [vmem:[#allocation3 + $0x1b8] sm:$0xff] 0.0
        %406 = vst [vmem:[#allocation3 + $0x1c0] sm:$0xff] 0.0
        %407 = vst [vmem:[#allocation3 + $0x1c8] sm:$0xff] 0.0
        %408 = vst [vmem:[#allocation3 + $0x1d0] sm:$0xff] 0.0
        %409 = vst [vmem:[#allocation3 + $0x1d8] sm:$0xff] 0.0
        %410 = vst [vmem:[#allocation3 + $0x1e0] sm:$0xff] 0.0
        %411 = vst [vmem:[#allocation3 + $0x1e8] sm:$0xff] 0.0
        %412 = vst [vmem:[#allocation3 + $0x1f0] sm:$0xff] 0.0
        %413 = vst [vmem:[#allocation3 + $0x1f8] sm:$0xff] 0.0
        %414 = vst [vmem:[#allocation3 + $0x200] sm:$0xff] 0.0
        %415 = vst [vmem:[#allocation3 + $0x208] sm:$0xff] 0.0
        %416 = vst [vmem:[#allocation3 + $0x210] sm:$0xff] 0.0
        %417 = vst [vmem:[#allocation3 + $0x218] sm:$0xff] 0.0
        %418 = vst [vmem:[#allocation3 + $0x220] sm:$0xff] 0.0
        %419 = vst [vmem:[#allocation3 + $0x228] sm:$0xff] 0.0
        %420 = vst [vmem:[#allocation3 + $0x230] sm:$0xff] 0.0
        %421 = vst [vmem:[#allocation3 + $0x238] sm:$0xff] 0.0
        %422 = vst [vmem:[#allocation3 + $0x240] sm:$0xff] 0.0
        %423 = vst [vmem:[#allocation3 + $0x248] sm:$0xff] 0.0
        %424 = vst [vmem:[#allocation3 + $0x250] sm:$0xff] 0.0
        %425 = vst [vmem:[#allocation3 + $0x258] sm:$0xff] 0.0
        %426 = vst [vmem:[#allocation3 + $0x260] sm:$0xff] 0.0
        %427 = vst [vmem:[#allocation3 + $0x268] sm:$0xff] 0.0
        %428 = vst [vmem:[#allocation3 + $0x270] sm:$0xff] 0.0
        %429 = vst [vmem:[#allocation3 + $0x278] sm:$0xff] 0.0
        %430 = vst [vmem:[#allocation3 + $0x280] sm:$0xff] 0.0
        %431 = vst [vmem:[#allocation3 + $0x288] sm:$0xff] 0.0
        %432 = vst [vmem:[#allocation3 + $0x290] sm:$0xff] 0.0
        %433 = vst [vmem:[#allocation3 + $0x298] sm:$0xff] 0.0
        %434 = vst [vmem:[#allocation3 + $0x2a0] sm:$0xff] 0.0
        %435 = vst [vmem:[#allocation3 + $0x2a8] sm:$0xff] 0.0
        %436 = vst [vmem:[#allocation3 + $0x2b0] sm:$0xff] 0.0
        %437 = vst [vmem:[#allocation3 + $0x2b8] sm:$0xff] 0.0
        %438 = vst [vmem:[#allocation3 + $0x2c0] sm:$0xff] 0.0
        %439 = vst [vmem:[#allocation3 + $0x2c8] sm:$0xff] 0.0
        %440 = vst [vmem:[#allocation3 + $0x2d0] sm:$0xff] 0.0
        %441 = vst [vmem:[#allocation3 + $0x2d8] sm:$0xff] 0.0
        %442 = vst [vmem:[#allocation3 + $0x2e0] sm:$0xff] 0.0
        %443 = vst [vmem:[#allocation3 + $0x2e8] sm:$0xff] 0.0
        %444 = vst [vmem:[#allocation3 + $0x2f0] sm:$0xff] 0.0
        %445 = vst [vmem:[#allocation3 + $0x2f8] sm:$0xff] 0.0
        %446 = vst [vmem:[#allocation3 + $0x300] sm:$0xff] 0.0
        %447 = vst [vmem:[#allocation3 + $0x308] sm:$0xff] 0.0
        %448 = vst [vmem:[#allocation3 + $0x310] sm:$0xff] 0.0
        %449 = vst [vmem:[#allocation3 + $0x318] sm:$0xff] 0.0
        %450 = vst [vmem:[#allocation3 + $0x320] sm:$0xff] 0.0
        %451 = vst [vmem:[#allocation3 + $0x328] sm:$0xff] 0.0
        %452 = vst [vmem:[#allocation3 + $0x330] sm:$0xff] 0.0
        %453 = vst [vmem:[#allocation3 + $0x338] sm:$0xff] 0.0
        %454 = vst [vmem:[#allocation3 + $0x340] sm:$0xff] 0.0
        %455 = vst [vmem:[#allocation3 + $0x348] sm:$0xff] 0.0
        %456 = vst [vmem:[#allocation3 + $0x350] sm:$0xff] 0.0
        %457 = vst [vmem:[#allocation3 + $0x358] sm:$0xff] 0.0
        %458 = vst [vmem:[#allocation3 + $0x360] sm:$0xff] 0.0
        %459 = vst [vmem:[#allocation3 + $0x368] sm:$0xff] 0.0
        %460 = vst [vmem:[#allocation3 + $0x370] sm:$0xff] 0.0
        %461 = vst [vmem:[#allocation3 + $0x378] sm:$0xff] 0.0
        %462 = vst [vmem:[#allocation3 + $0x380] sm:$0xff] 0.0
        %463 = vst [vmem:[#allocation3 + $0x388] sm:$0xff] 0.0
        %464 = vst [vmem:[#allocation3 + $0x390] sm:$0xff] 0.0
        %465 = vst [vmem:[#allocation3 + $0x398] sm:$0xff] 0.0
        %466 = vst [vmem:[#allocation3 + $0x3a0] sm:$0xff] 0.0
        %467 = vst [vmem:[#allocation3 + $0x3a8] sm:$0xff] 0.0
        %468 = vst [vmem:[#allocation3 + $0x3b0] sm:$0xff] 0.0
        %469 = vst [vmem:[#allocation3 + $0x3b8] sm:$0xff] 0.0
        %470 = vst [vmem:[#allocation3 + $0x3c0] sm:$0xff] 0.0
        %471 = vst [vmem:[#allocation3 + $0x3c8] sm:$0xff] 0.0
        %472 = vst [vmem:[#allocation3 + $0x3d0] sm:$0xff] 0.0
        %473 = vst [vmem:[#allocation3 + $0x3d8] sm:$0xff] 0.0
        %474 = vst [vmem:[#allocation3 + $0x3e0] sm:$0xff] 0.0
        %475 = vst [vmem:[#allocation3 + $0x3e8] sm:$0xff] 0.0
        %476 = vst [vmem:[#allocation3 + $0x3f0] sm:$0xff] 0.0
        %477 = vst [vmem:[#allocation3 + $0x3f8] sm:$0xff] 0.0
        %478 = vst [vmem:[#allocation3 + $0x400] sm:$0xff] 0.0
        %479 = vst [vmem:[#allocation3 + $0x408] sm:$0xff] 0.0
        %480 = vst [vmem:[#allocation3 + $0x410] sm:$0xff] 0.0
        %481 = vst [vmem:[#allocation3 + $0x418] sm:$0xff] 0.0
        %482 = vst [vmem:[#allocation3 + $0x420] sm:$0xff] 0.0
        %483 = vst [vmem:[#allocation3 + $0x428] sm:$0xff] 0.0
        %484 = vst [vmem:[#allocation3 + $0x430] sm:$0xff] 0.0
        %485 = vst [vmem:[#allocation3 + $0x438] sm:$0xff] 0.0
        %486 = vst [vmem:[#allocation3 + $0x440] sm:$0xff] 0.0
        %487 = vst [vmem:[#allocation3 + $0x448] sm:$0xff] 0.0
        %488 = vst [vmem:[#allocation3 + $0x450] sm:$0xff] 0.0
        %489 = vst [vmem:[#allocation3 + $0x458] sm:$0xff] 0.0
        %490 = vst [vmem:[#allocation3 + $0x460] sm:$0xff] 0.0
        %491 = vst [vmem:[#allocation3 + $0x468] sm:$0xff] 0.0
        %492 = vst [vmem:[#allocation3 + $0x470] sm:$0xff] 0.0
        %493 = vst [vmem:[#allocation3 + $0x478] sm:$0xff] 0.0
        %494 = vst [vmem:[#allocation3 + $0x480] sm:$0xff] 0.0
        %495 = vst [vmem:[#allocation3 + $0x488] sm:$0xff] 0.0
        %496 = vst [vmem:[#allocation3 + $0x490] sm:$0xff] 0.0
        %497 = vst [vmem:[#allocation3 + $0x498] sm:$0xff] 0.0
        %498 = vst [vmem:[#allocation3 + $0x4a0] sm:$0xff] 0.0
        %499 = vst [vmem:[#allocation3 + $0x4a8] sm:$0xff] 0.0
        %500 = vst [vmem:[#allocation3 + $0x4b0] sm:$0xff] 0.0
        %501 = vst [vmem:[#allocation3 + $0x4b8] sm:$0xff] 0.0
        %502 = vst [vmem:[#allocation3 + $0x4c0] sm:$0xff] 0.0
        %503 = vst [vmem:[#allocation3 + $0x4c8] sm:$0xff] 0.0
        %504 = vst [vmem:[#allocation3 + $0x4d0] sm:$0xff] 0.0
        %505 = vst [vmem:[#allocation3 + $0x4d8] sm:$0xff] 0.0
        %506 = vst [vmem:[#allocation3 + $0x4e0] sm:$0xff] 0.0
        %507 = vst [vmem:[#allocation3 + $0x4e8] sm:$0xff] 0.0
        %508 = vst [vmem:[#allocation3 + $0x4f0] sm:$0xff] 0.0
        %509 = vst [vmem:[#allocation3 + $0x4f8] sm:$0xff] 0.0
        %510 = vst [vmem:[#allocation3 + $0x500] sm:$0xff] 0.0
        %511 = vst [vmem:[#allocation3 + $0x508] sm:$0xff] 0.0
        %512 = vst [vmem:[#allocation3 + $0x510] sm:$0xff] 0.0
        %513 = vst [vmem:[#allocation3 + $0x518] sm:$0xff] 0.0
        %514 = vst [vmem:[#allocation3 + $0x520] sm:$0xff] 0.0
        %515 = vst [vmem:[#allocation3 + $0x528] sm:$0xff] 0.0
        %516 = vst [vmem:[#allocation3 + $0x530] sm:$0xff] 0.0
        %517 = vst [vmem:[#allocation3 + $0x538] sm:$0xff] 0.0
        %518 = vst [vmem:[#allocation3 + $0x540] sm:$0xff] 0.0
        %519 = vst [vmem:[#allocation3 + $0x548] sm:$0xff] 0.0
        %520 = vst [vmem:[#allocation3 + $0x550] sm:$0xff] 0.0
        %521 = vst [vmem:[#allocation3 + $0x558] sm:$0xff] 0.0
        %522 = vst [vmem:[#allocation3 + $0x560] sm:$0xff] 0.0
        %523 = vst [vmem:[#allocation3 + $0x568] sm:$0xff] 0.0
        %524 = vst [vmem:[#allocation3 + $0x570] sm:$0xff] 0.0
        %525 = vst [vmem:[#allocation3 + $0x578] sm:$0xff] 0.0
        %526 = vst [vmem:[#allocation3 + $0x580] sm:$0xff] 0.0
        %527 = vst [vmem:[#allocation3 + $0x588] sm:$0xff] 0.0
        %528 = vst [vmem:[#allocation3 + $0x590] sm:$0xff] 0.0
        %529 = vst [vmem:[#allocation3 + $0x598] sm:$0xff] 0.0
        %530 = vst [vmem:[#allocation3 + $0x5a0] sm:$0xff] 0.0
        %531 = vst [vmem:[#allocation3 + $0x5a8] sm:$0xff] 0.0
        %532 = vst [vmem:[#allocation3 + $0x5b0] sm:$0xff] 0.0
        %533 = vst [vmem:[#allocation3 + $0x5b8] sm:$0xff] 0.0
        %534 = vst [vmem:[#allocation3 + $0x5c0] sm:$0xff] 0.0
        %535 = vst [vmem:[#allocation3 + $0x5c8] sm:$0xff] 0.0
        %536 = vst [vmem:[#allocation3 + $0x5d0] sm:$0xff] 0.0
        %537 = vst [vmem:[#allocation3 + $0x5d8] sm:$0xff] 0.0
        %538 = vst [vmem:[#allocation3 + $0x5e0] sm:$0xff] 0.0
        %539 = vst [vmem:[#allocation3 + $0x5e8] sm:$0xff] 0.0
        %540 = vst [vmem:[#allocation3 + $0x5f0] sm:$0xff] 0.0
        %541 = vst [vmem:[#allocation3 + $0x5f8] sm:$0xff] 0.0
        %542 = vst [vmem:[#allocation3 + $0x600] sm:$0xff] 0.0
        %543 = vst [vmem:[#allocation3 + $0x608] sm:$0xff] 0.0
        %544 = vst [vmem:[#allocation3 + $0x610] sm:$0xff] 0.0
        %545 = vst [vmem:[#allocation3 + $0x618] sm:$0xff] 0.0
        %546 = vst [vmem:[#allocation3 + $0x620] sm:$0xff] 0.0
        %547 = vst [vmem:[#allocation3 + $0x628] sm:$0xff] 0.0
        %548 = vst [vmem:[#allocation3 + $0x630] sm:$0xff] 0.0
        %549 = vst [vmem:[#allocation3 + $0x638] sm:$0xff] 0.0
        %550 = vst [vmem:[#allocation3 + $0x640] sm:$0xff] 0.0
        %551 = vst [vmem:[#allocation3 + $0x648] sm:$0xff] 0.0
        %552 = vst [vmem:[#allocation3 + $0x650] sm:$0xff] 0.0
        %553 = vst [vmem:[#allocation3 + $0x658] sm:$0xff] 0.0
        %554 = vst [vmem:[#allocation3 + $0x660] sm:$0xff] 0.0
        %555 = vst [vmem:[#allocation3 + $0x668] sm:$0xff] 0.0
        %556 = vst [vmem:[#allocation3 + $0x670] sm:$0xff] 0.0
        %557 = vst [vmem:[#allocation3 + $0x678] sm:$0xff] 0.0
        %558 = vst [vmem:[#allocation3 + $0x680] sm:$0xff] 0.0
        %559 = vst [vmem:[#allocation3 + $0x688] sm:$0xff] 0.0
        %560 = vst [vmem:[#allocation3 + $0x690] sm:$0xff] 0.0
        %561 = vst [vmem:[#allocation3 + $0x698] sm:$0xff] 0.0
        %562 = vst [vmem:[#allocation3 + $0x6a0] sm:$0xff] 0.0
        %563 = vst [vmem:[#allocation3 + $0x6a8] sm:$0xff] 0.0
        %564 = vst [vmem:[#allocation3 + $0x6b0] sm:$0xff] 0.0
        %565 = vst [vmem:[#allocation3 + $0x6b8] sm:$0xff] 0.0
        %566 = vst [vmem:[#allocation3 + $0x6c0] sm:$0xff] 0.0
        %567 = vst [vmem:[#allocation3 + $0x6c8] sm:$0xff] 0.0
        %568 = vst [vmem:[#allocation3 + $0x6d0] sm:$0xff] 0.0
        %569 = vst [vmem:[#allocation3 + $0x6d8] sm:$0xff] 0.0
        %570 = vst [vmem:[#allocation3 + $0x6e0] sm:$0xff] 0.0
        %571 = vst [vmem:[#allocation3 + $0x6e8] sm:$0xff] 0.0
        %572 = vst [vmem:[#allocation3 + $0x6f0] sm:$0xff] 0.0
        %573 = vst [vmem:[#allocation3 + $0x6f8] sm:$0xff] 0.0
        %574 = vst [vmem:[#allocation3 + $0x700] sm:$0xff] 0.0
        %575 = vst [vmem:[#allocation3 + $0x708] sm:$0xff] 0.0
        %576 = vst [vmem:[#allocation3 + $0x710] sm:$0xff] 0.0
        %577 = vst [vmem:[#allocation3 + $0x718] sm:$0xff] 0.0
        %578 = vst [vmem:[#allocation3 + $0x720] sm:$0xff] 0.0
        %579 = vst [vmem:[#allocation3 + $0x728] sm:$0xff] 0.0
        %580 = vst [vmem:[#allocation3 + $0x730] sm:$0xff] 0.0
        %581 = vst [vmem:[#allocation3 + $0x738] sm:$0xff] 0.0
        %582 = vst [vmem:[#allocation3 + $0x740] sm:$0xff] 0.0
        %583 = vst [vmem:[#allocation3 + $0x748] sm:$0xff] 0.0
        %584 = vst [vmem:[#allocation3 + $0x750] sm:$0xff] 0.0
        %585 = vst [vmem:[#allocation3 + $0x758] sm:$0xff] 0.0
        %586 = vst [vmem:[#allocation3 + $0x760] sm:$0xff] 0.0
        %587 = vst [vmem:[#allocation3 + $0x768] sm:$0xff] 0.0
        %588 = vst [vmem:[#allocation3 + $0x770] sm:$0xff] 0.0
        %589 = vst [vmem:[#allocation3 + $0x778] sm:$0xff] 0.0
        %590 = vst [vmem:[#allocation3 + $0x780] sm:$0xff] 0.0
        %591 = vst [vmem:[#allocation3 + $0x788] sm:$0xff] 0.0
        %592 = vst [vmem:[#allocation3 + $0x790] sm:$0xff] 0.0
        %593 = vst [vmem:[#allocation3 + $0x798] sm:$0xff] 0.0
        %594 = vst [vmem:[#allocation3 + $0x7a0] sm:$0xff] 0.0
        %595 = vst [vmem:[#allocation3 + $0x7a8] sm:$0xff] 0.0
        %596 = vst [vmem:[#allocation3 + $0x7b0] sm:$0xff] 0.0
        %597 = vst [vmem:[#allocation3 + $0x7b8] sm:$0xff] 0.0
        %598 = vst [vmem:[#allocation3 + $0x7c0] sm:$0xff] 0.0
        %599 = vst [vmem:[#allocation3 + $0x7c8] sm:$0xff] 0.0
        %600 = vst [vmem:[#allocation3 + $0x7d0] sm:$0xff] 0.0
        %601 = vst [vmem:[#allocation3 + $0x7d8] sm:$0xff] 0.0
        %602 = vst [vmem:[#allocation3 + $0x7e0] sm:$0xff] 0.0
        %603 = vst [vmem:[#allocation3 + $0x7e8] sm:$0xff] 0.0
        %604 = vst [vmem:[#allocation3 + $0x7f0] sm:$0xff] 0.0
        %605 = vst [vmem:[#allocation3 + $0x7f8] sm:$0xff] 0.0
        %606 = vst [vmem:[#allocation3 + $0x800] sm:$0xff] 0.0
        %607 = vst [vmem:[#allocation3 + $0x808] sm:$0xff] 0.0
        %608 = vst [vmem:[#allocation3 + $0x810] sm:$0xff] 0.0
        %609 = vst [vmem:[#allocation3 + $0x818] sm:$0xff] 0.0
        %610 = vst [vmem:[#allocation3 + $0x820] sm:$0xff] 0.0
        %611 = vst [vmem:[#allocation3 + $0x828] sm:$0xff] 0.0
        %612 = vst [vmem:[#allocation3 + $0x830] sm:$0xff] 0.0
        %613 = vst [vmem:[#allocation3 + $0x838] sm:$0xff] 0.0
        %614 = vst [vmem:[#allocation3 + $0x840] sm:$0xff] 0.0
        %615 = vst [vmem:[#allocation3 + $0x848] sm:$0xff] 0.0
        %616 = vst [vmem:[#allocation3 + $0x850] sm:$0xff] 0.0
        %617 = vst [vmem:[#allocation3 + $0x858] sm:$0xff] 0.0
        %618 = vst [vmem:[#allocation3 + $0x860] sm:$0xff] 0.0
        %619 = vst [vmem:[#allocation3 + $0x868] sm:$0xff] 0.0
        %620 = vst [vmem:[#allocation3 + $0x870] sm:$0xff] 0.0
        %621 = vst [vmem:[#allocation3 + $0x878] sm:$0xff] 0.0
        %622 = vst [vmem:[#allocation3 + $0x880] sm:$0xff] 0.0
        %623 = vst [vmem:[#allocation3 + $0x888] sm:$0xff] 0.0
        %624 = vst [vmem:[#allocation3 + $0x890] sm:$0xff] 0.0
        %625 = vst [vmem:[#allocation3 + $0x898] sm:$0xff] 0.0
        %626 = vst [vmem:[#allocation3 + $0x8a0] sm:$0xff] 0.0
        %627 = vst [vmem:[#allocation3 + $0x8a8] sm:$0xff] 0.0
        %628 = vst [vmem:[#allocation3 + $0x8b0] sm:$0xff] 0.0
        %629 = vst [vmem:[#allocation3 + $0x8b8] sm:$0xff] 0.0
        %630 = vst [vmem:[#allocation3 + $0x8c0] sm:$0xff] 0.0
        %631 = vst [vmem:[#allocation3 + $0x8c8] sm:$0xff] 0.0
        %632 = vst [vmem:[#allocation3 + $0x8d0] sm:$0xff] 0.0
        %633 = vst [vmem:[#allocation3 + $0x8d8] sm:$0xff] 0.0
        %634 = vst [vmem:[#allocation3 + $0x8e0] sm:$0xff] 0.0
        %635 = vst [vmem:[#allocation3 + $0x8e8] sm:$0xff] 0.0
        %636 = vst [vmem:[#allocation3 + $0x8f0] sm:$0xff] 0.0
        %637 = vst [vmem:[#allocation3 + $0x8f8] sm:$0xff] 0.0
        %v638 = vld [vmem:[%s303] sm:$0xff]
        %v639 = vld [vmem:[%s1] sm:$0xf]
        %v641 = vcombine.high %v638, %v638
        %643 = vxpose.xlu0.b32.start [1/16] %v638, 128
        %644 = vxpose.xlu0.b32.cont [2/16] 0.0, 128
        %645 = vxpose.xlu0.b32.cont [3/16] 0.0, 128
        %646 = vxpose.xlu0.b32.cont [4/16] 0.0, 128
        %647 = vxpose.xlu0.b32.cont [5/16] 0.0, 128
        %648 = vxpose.xlu0.b32.cont [6/16] 0.0, 128
        %649 = vxpose.xlu0.b32.cont [7/16] 0.0, 128
        %650 = vxpose.xlu0.b32.cont [8/16] 0.0, 128
        %651 = vxpose.xlu0.b32.cont [9/16] 0.0, 128
        %652 = vxpose.xlu0.b32.cont [10/16] 0.0, 128
        %653 = vxpose.xlu0.b32.cont [11/16] 0.0, 128
        %654 = vxpose.xlu0.b32.cont [12/16] 0.0, 128
        %655 = vxpose.xlu0.b32.cont [13/16] 0.0, 128
        %656 = vxpose.xlu0.b32.cont [14/16] 0.0, 128
        %657 = vxpose.xlu0.b32.cont [15/16] 0.0, 128
        %658 = vxpose.xlu0.b32.end [16/16] 0.0, 128
        %v659 = vpop.trf.xlu0
        %v660 = vpop.trf.xlu0
        %v661 = vpop.trf.xlu0
        %v662 = vpop.trf.xlu0
        %v663 = vpop.trf.xlu0
        %v664 = vpop.trf.xlu0
        %v665 = vpop.trf.xlu0
        %v666 = vpop.trf.xlu0
        %v667 = vpop.trf.xlu0
        %v668 = vpop.trf.xlu0
        %v669 = vpop.trf.xlu0
        %v670 = vpop.trf.xlu0
        %v671 = vpop.trf.xlu0
        %v672 = vpop.trf.xlu0
        %v673 = vpop.trf.xlu0
        %v674 = vpop.trf.xlu0
        %675 = vxpose.xlu0.b32.start [1/16] %v641, 128
        %676 = vxpose.xlu0.b32.cont [2/16] 0.0, 128
        %677 = vxpose.xlu0.b32.cont [3/16] 0.0, 128
        %678 = vxpose.xlu0.b32.cont [4/16] 0.0, 128
        %679 = vxpose.xlu0.b32.cont [5/16] 0.0, 128
        %680 = vxpose.xlu0.b32.cont [6/16] 0.0, 128
        %681 = vxpose.xlu0.b32.cont [7/16] 0.0, 128
        %682 = vxpose.xlu0.b32.cont [8/16] 0.0, 128
        %683 = vxpose.xlu0.b32.cont [9/16] 0.0, 128
        %684 = vxpose.xlu0.b32.cont [10/16] 0.0, 128
        %685 = vxpose.xlu0.b32.cont [11/16] 0.0, 128
        %686 = vxpose.xlu0.b32.cont [12/16] 0.0, 128
        %687 = vxpose.xlu0.b32.cont [13/16] 0.0, 128
        %688 = vxpose.xlu0.b32.cont [14/16] 0.0, 128
        %689 = vxpose.xlu0.b32.cont [15/16] 0.0, 128
        %690 = vxpose.xlu0.b32.end [16/16] 0.0, 128
        %v691 = vpop.trf.xlu0
        %v692 = vpop.trf.xlu0
        %v693 = vpop.trf.xlu0
        %v694 = vpop.trf.xlu0
        %v695 = vpop.trf.xlu0
        %v696 = vpop.trf.xlu0
        %v697 = vpop.trf.xlu0
        %v698 = vpop.trf.xlu0
        %v699 = vpop.trf.xlu0
        %v700 = vpop.trf.xlu0
        %v701 = vpop.trf.xlu0
        %v702 = vpop.trf.xlu0
        %v703 = vpop.trf.xlu0
        %v704 = vpop.trf.xlu0
        %v705 = vpop.trf.xlu0
        %v706 = vpop.trf.xlu0
        %vm707 = vcmask 31744
        %v709 = vsel %vm707, %v659, 0
        %v712 = vsel %vm707, %v660, 0
        %v715 = vsel %vm707, %v661, 0
        %v718 = vsel %vm707, %v662, 0
        %v721 = vsel %vm707, %v663, 0
        %v724 = vsel %vm707, %v664, 0
        %v727 = vsel %vm707, %v665, 0
        %v730 = vsel %vm707, %v666, 0
        %v733 = vsel %vm707, %v667, 0
        %v736 = vsel %vm707, %v668, 0
        %v739 = vsel %vm707, %v669, 0
        %v742 = vsel %vm707, %v670, 0
        %v745 = vsel %vm707, %v671, 0
        %v748 = vsel %vm707, %v672, 0
        %v751 = vsel %vm707, %v673, 0
        %v754 = vsel %vm707, %v674, 0
        %v757 = vsel %vm707, %v691, 0
        %v760 = vsel %vm707, %v692, 0
        %v763 = vsel %vm707, %v693, 0
        %v766 = vsel %vm707, %v694, 0
        %v769 = vsel %vm707, %v695, 0
        %v772 = vsel %vm707, %v696, 0
        %v775 = vsel %vm707, %v697, 0
        %v778 = vsel %vm707, %v698, 0
        %v781 = vsel %vm707, %v699, 0
        %v784 = vsel %vm707, %v700, 0
        %v787 = vsel %vm707, %v701, 0
        %v790 = vsel %vm707, %v702, 0
        %v793 = vsel %vm707, %v703, 0
        %v796 = vsel %vm707, %v704, 0
        %v799 = vsel %vm707, %v705, 0
        %v802 = vsel %vm707, %v706, 0
        %vm804 = vcmask 1043456
        %v806 = vsel %vm804, %v639, 0
        %808 = vmatprep.subr.mxu0 0.0
        %809 = vmatpush1.msra.mxu0 %v806
        %810 = vmatprep.subr.mxu0 0.0
        %811 = vmatpush1.msra.mxu0 0.0
        %812 = vmatprep.subr.mxu0 0.0
        %813 = vmatpush1.msra.mxu0 0.0
        %814 = vmatprep.subr.mxu0 0.0
        %815 = vmatpush1.msra.mxu0 0.0
        %816 = vmatprep.subr.mxu0 0.0
        %817 = vmatpush1.msra.mxu0 0.0
        %818 = vmatprep.subr.mxu0 0.0
        %819 = vmatpush1.msra.mxu0 0.0
        %820 = vmatprep.subr.mxu0 0.0
        %821 = vmatpush1.msra.mxu0 0.0
        %822 = vmatprep.subr.mxu0 0.0
        %823 = vmatpush1.msra.mxu0 0.0
        %824 = vmatprep.subr.mxu0 0.0
        %825 = vmatpush1.msra.mxu0 0.0
        %826 = vmatprep.subr.mxu0 0.0
        %827 = vmatpush1.msra.mxu0 0.0
        %828 = vmatprep.subr.mxu0 0.0
        %829 = vmatpush1.msra.mxu0 0.0
        %830 = vmatprep.subr.mxu0 0.0
        %831 = vmatpush1.msra.mxu0 0.0
        %832 = vmatprep.subr.mxu0 0.0
        %833 = vmatpush1.msra.mxu0 0.0
        %834 = vmatprep.subr.mxu0 0.0
        %835 = vmatpush1.msra.mxu0 0.0
        %836 = vmatprep.subr.mxu0 0.0
        %837 = vmatpush1.msra.mxu0 0.0
        %838 = vmatprep.subr.mxu0 0.0
        %839 = vmatpush1.msra.mxu0 0.0
        %840 = vmatprep.subr.mxu0 0.0
        %841 = vmatpush1.msra.mxu0 0.0
        %842 = vmatprep.subr.mxu0 0.0
        %843 = vmatpush1.msra.mxu0 0.0
        %844 = vmatprep.subr.mxu0 0.0
        %845 = vmatpush1.msra.mxu0 0.0
        %846 = vmatprep.subr.mxu0 0.0
        %847 = vmatpush1.msra.mxu0 0.0
        %848 = vmatprep.subr.mxu0 0.0
        %849 = vmatpush1.msra.mxu0 0.0
        %850 = vmatprep.subr.mxu0 0.0
        %851 = vmatpush1.msra.mxu0 0.0
        %852 = vmatprep.subr.mxu0 0.0
        %853 = vmatpush1.msra.mxu0 0.0
        %854 = vmatprep.subr.mxu0 0.0
        %855 = vmatpush1.msra.mxu0 0.0
        %856 = vmatprep.subr.mxu0 0.0
        %857 = vmatpush1.msra.mxu0 0.0
        %858 = vmatprep.subr.mxu0 0.0
        %859 = vmatpush1.msra.mxu0 0.0
        %860 = vmatprep.subr.mxu0 0.0
        %861 = vmatpush1.msra.mxu0 0.0
        %862 = vmatprep.subr.mxu0 0.0
        %863 = vmatpush1.msra.mxu0 0.0
        %864 = vmatprep.subr.mxu0 0.0
        %865 = vmatpush1.msra.mxu0 0.0
        %866 = vmatprep.subr.mxu0 0.0
        %867 = vmatpush1.msra.mxu0 0.0
        %868 = vmatprep.subr.mxu0 0.0
        %869 = vmatpush1.msra.mxu0 0.0
        %870 = vmatprep.subr.mxu0 0.0
        %871 = vmatpush1.msra.mxu0 0.0
        %872 = vmatprep.mubr.f32.mxu0 0.0
        %873 = vmatmul.mubr.f32.gmra.mrb[0].mxu0 %v709
        %v874 = vpop.f32.mrb[0].mxu0
        %v875 = vadd.f32 0.0, %v874
        %v876 = vpop.f32.mrb[0].mxu0
        %877 = vmatprep.mubr.f32.mxu0 0.0
        %878 = vmatmul.mubr.f32.gmra.mrb[0].mxu0 %v712
        %v879 = vpop.f32.mrb[0].mxu0
        %v880 = vadd.f32 0.0, %v879
        %v881 = vpop.f32.mrb[0].mxu0
        %882 = vmatprep.mubr.f32.mxu0 0.0
        %883 = vmatmul.mubr.f32.gmra.mrb[0].mxu0 %v715
        %v884 = vpop.f32.mrb[0].mxu0
        %v885 = vadd.f32 0.0, %v884
        %v886 = vpop.f32.mrb[0].mxu0
        %887 = vmatprep.mubr.f32.mxu0 0.0
        %888 = vmatmul.mubr.f32.gmra.mrb[0].mxu0 %v718
        %v889 = vpop.f32.mrb[0].mxu0
        %v890 = vadd.f32 0.0, %v889
        %v891 = vpop.f32.mrb[0].mxu0
        %892 = vmatprep.mubr.f32.mxu0 0.0
        %893 = vmatmul.mubr.f32.gmra.mrb[0].mxu0 %v721
        %v894 = vpop.f32.mrb[0].mxu0
        %v895 = vadd.f32 0.0, %v894
        %v896 = vpop.f32.mrb[0].mxu0
        %897 = vmatprep.mubr.f32.mxu0 0.0
        %898 = vmatmul.mubr.f32.gmra.mrb[0].mxu0 %v724
        %v899 = vpop.f32.mrb[0].mxu0
        %v900 = vadd.f32 0.0, %v899
        %v901 = vpop.f32.mrb[0].mxu0
        %902 = vmatprep.mubr.f32.mxu0 0.0
        %903 = vmatmul.mubr.f32.gmra.mrb[0].mxu0 %v727
        %v904 = vpop.f32.mrb[0].mxu0
        %v905 = vadd.f32 0.0, %v904
        %v906 = vpop.f32.mrb[0].mxu0
        %907 = vmatprep.mubr.f32.mxu0 0.0
        %908 = vmatmul.mubr.f32.gmra.mrb[0].mxu0 %v730
        %v909 = vpop.f32.mrb[0].mxu0
        %v910 = vadd.f32 0.0, %v909
        %v911 = vpop.f32.mrb[0].mxu0
        %912 = vmatprep.mubr.f32.mxu0 0.0
        %913 = vmatmul.mubr.f32.gmra.mrb[0].mxu0 %v733
        %v914 = vpop.f32.mrb[0].mxu0
        %v915 = vadd.f32 0.0, %v914
        %v916 = vpop.f32.mrb[0].mxu0
        %917 = vmatprep.mubr.f32.mxu0 0.0
        %918 = vmatmul.mubr.f32.gmra.mrb[0].mxu0 %v736
        %v919 = vpop.f32.mrb[0].mxu0
        %v920 = vadd.f32 0.0, %v919
        %v921 = vpop.f32.mrb[0].mxu0
        %922 = vmatprep.mubr.f32.mxu0 0.0
        %923 = vmatmul.mubr.f32.gmra.mrb[0].mxu0 %v739
        %v924 = vpop.f32.mrb[0].mxu0
        %v925 = vadd.f32 0.0, %v924
        %v926 = vpop.f32.mrb[0].mxu0
        %927 = vmatprep.mubr.f32.mxu0 0.0
        %928 = vmatmul.mubr.f32.gmra.mrb[0].mxu0 %v742
        %v929 = vpop.f32.mrb[0].mxu0
        %v930 = vadd.f32 0.0, %v929
        %v931 = vpop.f32.mrb[0].mxu0
        %932 = vmatprep.mubr.f32.mxu0 0.0
        %933 = vmatmul.mubr.f32.gmra.mrb[0].mxu0 %v745
        %v934 = vpop.f32.mrb[0].mxu0
        %v935 = vadd.f32 0.0, %v934
        %v936 = vpop.f32.mrb[0].mxu0
        %937 = vmatprep.mubr.f32.mxu0 0.0
        %938 = vmatmul.mubr.f32.gmra.mrb[0].mxu0 %v748
        %v939 = vpop.f32.mrb[0].mxu0
        %v940 = vadd.f32 0.0, %v939
        %v941 = vpop.f32.mrb[0].mxu0
        %942 = vmatprep.mubr.f32.mxu0 0.0
        %943 = vmatmul.mubr.f32.gmra.mrb[0].mxu0 %v751
        %v944 = vpop.f32.mrb[0].mxu0
        %v945 = vadd.f32 0.0, %v944
        %v946 = vpop.f32.mrb[0].mxu0
        %947 = vmatprep.mubr.f32.mxu0 0.0
        %948 = vmatmul.mubr.f32.gmra.mrb[0].mxu0 %v754
        %v949 = vpop.f32.mrb[0].mxu0
        %v950 = vadd.f32 0.0, %v949
        %v951 = vpop.f32.mrb[0].mxu0
        %952 = vmatprep.mubr.f32.mxu0 0.0
        %953 = vmatmul.mubr.f32.gmra.mrb[0].mxu0 %v757
        %v954 = vpop.f32.mrb[0].mxu0
        %v955 = vadd.f32 0.0, %v954
        %v956 = vpop.f32.mrb[0].mxu0
        %957 = vmatprep.mubr.f32.mxu0 0.0
        %958 = vmatmul.mubr.f32.gmra.mrb[0].mxu0 %v760
        %v959 = vpop.f32.mrb[0].mxu0
        %v960 = vadd.f32 0.0, %v959
        %v961 = vpop.f32.mrb[0].mxu0
        %962 = vmatprep.mubr.f32.mxu0 0.0
        %963 = vmatmul.mubr.f32.gmra.mrb[0].mxu0 %v763
        %v964 = vpop.f32.mrb[0].mxu0
        %v965 = vadd.f32 0.0, %v964
        %v966 = vpop.f32.mrb[0].mxu0
        %967 = vmatprep.mubr.f32.mxu0 0.0
        %968 = vmatmul.mubr.f32.gmra.mrb[0].mxu0 %v766
        %v969 = vpop.f32.mrb[0].mxu0
        %v970 = vadd.f32 0.0, %v969
        %v971 = vpop.f32.mrb[0].mxu0
        %972 = vmatprep.mubr.f32.mxu0 0.0
        %973 = vmatmul.mubr.f32.gmra.mrb[0].mxu0 %v769
        %v974 = vpop.f32.mrb[0].mxu0
        %v975 = vadd.f32 0.0, %v974
        %v976 = vpop.f32.mrb[0].mxu0
        %977 = vmatprep.mubr.f32.mxu0 0.0
        %978 = vmatmul.mubr.f32.gmra.mrb[0].mxu0 %v772
        %v979 = vpop.f32.mrb[0].mxu0
        %v980 = vadd.f32 0.0, %v979
        %v981 = vpop.f32.mrb[0].mxu0
        %982 = vmatprep.mubr.f32.mxu0 0.0
        %983 = vmatmul.mubr.f32.gmra.mrb[0].mxu0 %v775
        %v984 = vpop.f32.mrb[0].mxu0
        %v985 = vadd.f32 0.0, %v984
        %v986 = vpop.f32.mrb[0].mxu0
        %987 = vmatprep.mubr.f32.mxu0 0.0
        %988 = vmatmul.mubr.f32.gmra.mrb[0].mxu0 %v778
        %v989 = vpop.f32.mrb[0].mxu0
        %v990 = vadd.f32 0.0, %v989
        %v991 = vpop.f32.mrb[0].mxu0
        %992 = vmatprep.mubr.f32.mxu0 0.0
        %993 = vmatmul.mubr.f32.gmra.mrb[0].mxu0 %v781
        %v994 = vpop.f32.mrb[0].mxu0
        %v995 = vadd.f32 0.0, %v994
        %v996 = vpop.f32.mrb[0].mxu0
        %997 = vmatprep.mubr.f32.mxu0 0.0
        %998 = vmatmul.mubr.f32.gmra.mrb[0].mxu0 %v784
        %v999 = vpop.f32.mrb[0].mxu0
        %v1000 = vadd.f32 0.0, %v999
        %v1001 = vpop.f32.mrb[0].mxu0
        %1002 = vmatprep.mubr.f32.mxu0 0.0
        %1003 = vmatmul.mubr.f32.gmra.mrb[0].mxu0 %v787
        %v1004 = vpop.f32.mrb[0].mxu0
        %v1005 = vadd.f32 0.0, %v1004
        %v1006 = vpop.f32.mrb[0].mxu0
        %1007 = vmatprep.mubr.f32.mxu0 0.0
        %1008 = vmatmul.mubr.f32.gmra.mrb[0].mxu0 %v790
        %v1009 = vpop.f32.mrb[0].mxu0
        %v1010 = vadd.f32 0.0, %v1009
        %v1011 = vpop.f32.mrb[0].mxu0
        %1012 = vmatprep.mubr.f32.mxu0 0.0
        %1013 = vmatmul.mubr.f32.gmra.mrb[0].mxu0 %v793
        %v1014 = vpop.f32.mrb[0].mxu0
        %v1015 = vadd.f32 0.0, %v1014
        %v1016 = vpop.f32.mrb[0].mxu0
        %1017 = vmatprep.mubr.f32.mxu0 0.0
        %1018 = vmatmul.mubr.f32.gmra.mrb[0].mxu0 %v796
        %v1019 = vpop.f32.mrb[0].mxu0
        %v1020 = vadd.f32 0.0, %v1019
        %v1021 = vpop.f32.mrb[0].mxu0
        %1022 = vmatprep.mubr.f32.mxu0 0.0
        %1023 = vmatmul.mubr.f32.gmra.mrb[0].mxu0 %v799
        %v1024 = vpop.f32.mrb[0].mxu0
        %v1025 = vadd.f32 0.0, %v1024
        %v1026 = vpop.f32.mrb[0].mxu0
        %1027 = vmatprep.mubr.f32.mxu0 0.0
        %1028 = vmatmul.mubr.f32.gmra.mrb[0].mxu0 %v802
        %v1029 = vpop.f32.mrb[0].mxu0
        %v1030 = vadd.f32 0.0, %v1029
        %v1031 = vpop.f32.mrb[0].mxu0
        %1032 = vdwg.mxu0
        %s1033 = scalar_lea.vmem [#allocation2], 32
        %1034 = vst.msk [vmem:[%s1033 + $0x8] sm:$0xff] %vm304, %v875
        %1035 = vst.msk [vmem:[%s1033 + $0x10] sm:$0xff] %vm304, %v880
        %1036 = vst.msk [vmem:[%s1033 + $0x28] sm:$0xff] %vm304, %v885
        %1037 = vst.msk [vmem:[%s1033 + $0x30] sm:$0xff] %vm304, %v890
        %1038 = vst.msk [vmem:[%s1033 + $0x48] sm:$0xff] %vm304, %v895
        %1039 = vst.msk [vmem:[%s1033 + $0x50] sm:$0xff] %vm304, %v900
        %1040 = vst.msk [vmem:[%s1033 + $0x68] sm:$0xff] %vm304, %v905
        %1041 = vst.msk [vmem:[%s1033 + $0x70] sm:$0xff] %vm304, %v910
        %1042 = vst.msk [vmem:[%s1033 + $0x88] sm:$0xff] %vm304, %v915
        %1043 = vst.msk [vmem:[%s1033 + $0x90] sm:$0xff] %vm304, %v920
        %1044 = vst.msk [vmem:[%s1033 + $0xa8] sm:$0xff] %vm304, %v925
        %1045 = vst.msk [vmem:[%s1033 + $0xb0] sm:$0xff] %vm304, %v930
        %1046 = vst.msk [vmem:[%s1033 + $0xc8] sm:$0xff] %vm304, %v935
        %1047 = vst.msk [vmem:[%s1033 + $0xd0] sm:$0xff] %vm304, %v940
        %1048 = vst.msk [vmem:[%s1033 + $0xe8] sm:$0xff] %vm304, %v945
        %1049 = vst.msk [vmem:[%s1033 + $0xf0] sm:$0xff] %vm304, %v950
        %1050 = vst.msk [vmem:[%s1033 + $0x108] sm:$0xff] %vm304, %v955
        %1051 = vst.msk [vmem:[%s1033 + $0x110] sm:$0xff] %vm304, %v960
        %1052 = vst.msk [vmem:[%s1033 + $0x128] sm:$0xff] %vm304, %v965
        %1053 = vst.msk [vmem:[%s1033 + $0x130] sm:$0xff] %vm304, %v970
        %1054 = vst.msk [vmem:[%s1033 + $0x148] sm:$0xff] %vm304, %v975
        %1055 = vst.msk [vmem:[%s1033 + $0x150] sm:$0xff] %vm304, %v980
        %1056 = vst.msk [vmem:[%s1033 + $0x168] sm:$0xff] %vm304, %v985
        %1057 = vst.msk [vmem:[%s1033 + $0x170] sm:$0xff] %vm304, %v990
        %1058 = vst.msk [vmem:[%s1033 + $0x188] sm:$0xff] %vm304, %v995
        %1059 = vst.msk [vmem:[%s1033 + $0x190] sm:$0xff] %vm304, %v1000
        %1060 = vst.msk [vmem:[%s1033 + $0x1a8] sm:$0xff] %vm304, %v1005
        %1061 = vst.msk [vmem:[%s1033 + $0x1b0] sm:$0xff] %vm304, %v1010
        %1062 = vst.msk [vmem:[%s1033 + $0x1c8] sm:$0xff] %vm304, %v1015
        %1063 = vst.msk [vmem:[%s1033 + $0x1d0] sm:$0xff] %vm304, %v1020
        %1064 = vst.msk [vmem:[%s1033 + $0x1e8] sm:$0xff] %vm304, %v1025
        %1065 = vst.msk [vmem:[%s1033 + $0x1f0] sm:$0xff] %vm304, %v1030
        %v1066 = vld [vmem:[#allocation2 + $0x7] sm:$0xff]
        %v1067 = vld [vmem:[#allocation2 + $0xf] sm:$0xff]
        %v1068 = vld [vmem:[#allocation2 + $0x27] sm:$0xff]
        %v1069 = vld [vmem:[#allocation2 + $0x2f] sm:$0xff]
        %v1070 = vld [vmem:[#allocation2 + $0x47] sm:$0xff]
        %v1071 = vld [vmem:[#allocation2 + $0x4f] sm:$0xff]
        %v1072 = vld [vmem:[#allocation2 + $0x67] sm:$0xff]
        %v1073 = vld [vmem:[#allocation2 + $0x6f] sm:$0xff]
        %v1074 = vld [vmem:[#allocation2 + $0x87] sm:$0xff]
        %v1075 = vld [vmem:[#allocation2 + $0x8f] sm:$0xff]
        %v1076 = vld [vmem:[#allocation2 + $0xa7] sm:$0xff]
        %v1077 = vld [vmem:[#allocation2 + $0xaf] sm:$0xff]
        %v1078 = vld [vmem:[#allocation2 + $0xc7] sm:$0xff]
        %v1079 = vld [vmem:[#allocation2 + $0xcf] sm:$0xff]
        %v1080 = vld [vmem:[#allocation2 + $0xe7] sm:$0xff]
        %v1081 = vld [vmem:[#allocation2 + $0xef] sm:$0xff]
        %v1082 = vld [vmem:[#allocation2 + $0x107] sm:$0xff]
        %v1083 = vld [vmem:[#allocation2 + $0x10f] sm:$0xff]
        %v1084 = vld [vmem:[#allocation2 + $0x127] sm:$0xff]
        %v1085 = vld [vmem:[#allocation2 + $0x12f] sm:$0xff]
        %v1086 = vld [vmem:[#allocation2 + $0x147] sm:$0xff]
        %v1087 = vld [vmem:[#allocation2 + $0x14f] sm:$0xff]
        %v1088 = vld [vmem:[#allocation2 + $0x167] sm:$0xff]
        %v1089 = vld [vmem:[#allocation2 + $0x16f] sm:$0xff]
        %v1090 = vld [vmem:[#allocation2 + $0x187] sm:$0xff]
        %v1091 = vld [vmem:[#allocation2 + $0x18f] sm:$0xff]
        %v1092 = vld [vmem:[#allocation2 + $0x1a7] sm:$0xff]
        %v1093 = vld [vmem:[#allocation2 + $0x1af] sm:$0xff]
        %v1094 = vld [vmem:[#allocation2 + $0x1c7] sm:$0xff]
        %v1095 = vld [vmem:[#allocation2 + $0x1cf] sm:$0xff]
        %v1096 = vld [vmem:[#allocation2 + $0x1e7] sm:$0xff]
        %v1097 = vld [vmem:[#allocation2 + $0x1ef] sm:$0xff]
        %1098 = vst.msk [vmem:[#allocation3] sm:$0xff] %vm304, %v1066
        %1099 = vst.msk [vmem:[#allocation3 + $0x48] sm:$0xff] %vm304, %v1067
        %1100 = vst.msk [vmem:[#allocation3 + $0x90] sm:$0xff] %vm304, %v1068
        %1101 = vst.msk [vmem:[#allocation3 + $0xd8] sm:$0xff] %vm304, %v1069
        %1102 = vst.msk [vmem:[#allocation3 + $0x120] sm:$0xff] %vm304, %v1070
        %1103 = vst.msk [vmem:[#allocation3 + $0x168] sm:$0xff] %vm304, %v1071
        %1104 = vst.msk [vmem:[#allocation3 + $0x1b0] sm:$0xff] %vm304, %v1072
        %1105 = vst.msk [vmem:[#allocation3 + $0x1f8] sm:$0xff] %vm304, %v1073
        %1106 = vst.msk [vmem:[#allocation3 + $0x240] sm:$0xff] %vm304, %v1074
        %1107 = vst.msk [vmem:[#allocation3 + $0x288] sm:$0xff] %vm304, %v1075
        %1108 = vst.msk [vmem:[#allocation3 + $0x2d0] sm:$0xff] %vm304, %v1076
        %1109 = vst.msk [vmem:[#allocation3 + $0x318] sm:$0xff] %vm304, %v1077
        %1110 = vst.msk [vmem:[#allocation3 + $0x360] sm:$0xff] %vm304, %v1078
        %1111 = vst.msk [vmem:[#allocation3 + $0x3a8] sm:$0xff] %vm304, %v1079
        %1112 = vst.msk [vmem:[#allocation3 + $0x3f0] sm:$0xff] %vm304, %v1080
        %1113 = vst.msk [vmem:[#allocation3 + $0x438] sm:$0xff] %vm304, %v1081
        %1114 = vst.msk [vmem:[#allocation3 + $0x480] sm:$0xff] %vm304, %v1082
        %1115 = vst.msk [vmem:[#allocation3 + $0x4c8] sm:$0xff] %vm304, %v1083
        %1116 = vst.msk [vmem:[#allocation3 + $0x510] sm:$0xff] %vm304, %v1084
        %1117 = vst.msk [vmem:[#allocation3 + $0x558] sm:$0xff] %vm304, %v1085
        %1118 = vst.msk [vmem:[#allocation3 + $0x5a0] sm:$0xff] %vm304, %v1086
        %1119 = vst.msk [vmem:[#allocation3 + $0x5e8] sm:$0xff] %vm304, %v1087
        %1120 = vst.msk [vmem:[#allocation3 + $0x630] sm:$0xff] %vm304, %v1088
        %1121 = vst.msk [vmem:[#allocation3 + $0x678] sm:$0xff] %vm304, %v1089
        %1122 = vst.msk [vmem:[#allocation3 + $0x6c0] sm:$0xff] %vm304, %v1090
        %1123 = vst.msk [vmem:[#allocation3 + $0x708] sm:$0xff] %vm304, %v1091
        %1124 = vst.msk [vmem:[#allocation3 + $0x750] sm:$0xff] %vm304, %v1092
        %1125 = vst.msk [vmem:[#allocation3 + $0x798] sm:$0xff] %vm304, %v1093
        %1126 = vst.msk [vmem:[#allocation3 + $0x7e0] sm:$0xff] %vm304, %v1094
        %1127 = vst.msk [vmem:[#allocation3 + $0x828] sm:$0xff] %vm304, %v1095
        %1128 = vst.msk [vmem:[#allocation3 + $0x870] sm:$0xff] %vm304, %v1096
        %1129 = vst.msk [vmem:[#allocation3 + $0x8b8] sm:$0xff] %vm304, %v1097
        %v1130 = vld [vmem:[#allocation2 + $0x8] sm:$0xff]
        %v1131 = vld [vmem:[#allocation2 + $0x10] sm:$0xff]
        %v1132 = vld [vmem:[#allocation2 + $0x28] sm:$0xff]
        %v1133 = vld [vmem:[#allocation2 + $0x30] sm:$0xff]
        %v1134 = vld [vmem:[#allocation2 + $0x48] sm:$0xff]
        %v1135 = vld [vmem:[#allocation2 + $0x50] sm:$0xff]
        %v1136 = vld [vmem:[#allocation2 + $0x68] sm:$0xff]
        %v1137 = vld [vmem:[#allocation2 + $0x70] sm:$0xff]
        %v1138 = vld [vmem:[#allocation2 + $0x88] sm:$0xff]
        %v1139 = vld [vmem:[#allocation2 + $0x90] sm:$0xff]
        %v1140 = vld [vmem:[#allocation2 + $0xa8] sm:$0xff]
        %v1141 = vld [vmem:[#allocation2 + $0xb0] sm:$0xff]
        %v1142 = vld [vmem:[#allocation2 + $0xc8] sm:$0xff]
        %v1143 = vld [vmem:[#allocation2 + $0xd0] sm:$0xff]
        %v1144 = vld [vmem:[#allocation2 + $0xe8] sm:$0xff]
        %v1145 = vld [vmem:[#allocation2 + $0xf0] sm:$0xff]
        %v1146 = vld [vmem:[#allocation2 + $0x108] sm:$0xff]
        %v1147 = vld [vmem:[#allocation2 + $0x110] sm:$0xff]
        %v1148 = vld [vmem:[#allocation2 + $0x128] sm:$0xff]
        %v1149 = vld [vmem:[#allocation2 + $0x130] sm:$0xff]
        %v1150 = vld [vmem:[#allocation2 + $0x148] sm:$0xff]
        %v1151 = vld [vmem:[#allocation2 + $0x150] sm:$0xff]
        %v1152 = vld [vmem:[#allocation2 + $0x168] sm:$0xff]
        %v1153 = vld [vmem:[#allocation2 + $0x170] sm:$0xff]
        %v1154 = vld [vmem:[#allocation2 + $0x188] sm:$0xff]
        %v1155 = vld [vmem:[#allocation2 + $0x190] sm:$0xff]
        %v1156 = vld [vmem:[#allocation2 + $0x1a8] sm:$0xff]
        %v1157 = vld [vmem:[#allocation2 + $0x1b0] sm:$0xff]
        %v1158 = vld [vmem:[#allocation2 + $0x1c8] sm:$0xff]
        %v1159 = vld [vmem:[#allocation2 + $0x1d0] sm:$0xff]
        %v1160 = vld [vmem:[#allocation2 + $0x1e8] sm:$0xff]
        %v1161 = vld [vmem:[#allocation2 + $0x1f0] sm:$0xff]
        %1162 = vst.msk [vmem:[#allocation3 + $0x8] sm:$0xff] %vm304, %v1130
        %1163 = vst.msk [vmem:[#allocation3 + $0x50] sm:$0xff] %vm304, %v1131
        %1164 = vst.msk [vmem:[#allocation3 + $0x98] sm:$0xff] %vm304, %v1132
        %1165 = vst.msk [vmem:[#allocation3 + $0xe0] sm:$0xff] %vm304, %v1133
        %1166 = vst.msk [vmem:[#allocation3 + $0x128] sm:$0xff] %vm304, %v1134
        %1167 = vst.msk [vmem:[#allocation3 + $0x170] sm:$0xff] %vm304, %v1135
        %1168 = vst.msk [vmem:[#allocation3 + $0x1b8] sm:$0xff] %vm304, %v1136
        %1169 = vst.msk [vmem:[#allocation3 + $0x200] sm:$0xff] %vm304, %v1137
        %1170 = vst.msk [vmem:[#allocation3 + $0x248] sm:$0xff] %vm304, %v1138
        %1171 = vst.msk [vmem:[#allocation3 + $0x290] sm:$0xff] %vm304, %v1139
        %1172 = vst.msk [vmem:[#allocation3 + $0x2d8] sm:$0xff] %vm304, %v1140
        %1173 = vst.msk [vmem:[#allocation3 + $0x320] sm:$0xff] %vm304, %v1141
        %1174 = vst.msk [vmem:[#allocation3 + $0x368] sm:$0xff] %vm304, %v1142
        %1175 = vst.msk [vmem:[#allocation3 + $0x3b0] sm:$0xff] %vm304, %v1143
        %1176 = vst.msk [vmem:[#allocation3 + $0x3f8] sm:$0xff] %vm304, %v1144
        %1177 = vst.msk [vmem:[#allocation3 + $0x440] sm:$0xff] %vm304, %v1145
        %1178 = vst.msk [vmem:[#allocation3 + $0x488] sm:$0xff] %vm304, %v1146
        %1179 = vst.msk [vmem:[#allocation3 + $0x4d0] sm:$0xff] %vm304, %v1147
        %1180 = vst.msk [vmem:[#allocation3 + $0x518] sm:$0xff] %vm304, %v1148
        %1181 = vst.msk [vmem:[#allocation3 + $0x560] sm:$0xff] %vm304, %v1149
        %1182 = vst.msk [vmem:[#allocation3 + $0x5a8] sm:$0xff] %vm304, %v1150
        %1183 = vst.msk [vmem:[#allocation3 + $0x5f0] sm:$0xff] %vm304, %v1151
        %1184 = vst.msk [vmem:[#allocation3 + $0x638] sm:$0xff] %vm304, %v1152
        %1185 = vst.msk [vmem:[#allocation3 + $0x680] sm:$0xff] %vm304, %v1153
        %1186 = vst.msk [vmem:[#allocation3 + $0x6c8] sm:$0xff] %vm304, %v1154
        %1187 = vst.msk [vmem:[#allocation3 + $0x710] sm:$0xff] %vm304, %v1155
        %1188 = vst.msk [vmem:[#allocation3 + $0x758] sm:$0xff] %vm304, %v1156
        %1189 = vst.msk [vmem:[#allocation3 + $0x7a0] sm:$0xff] %vm304, %v1157
        %1190 = vst.msk [vmem:[#allocation3 + $0x7e8] sm:$0xff] %vm304, %v1158
        %1191 = vst.msk [vmem:[#allocation3 + $0x830] sm:$0xff] %vm304, %v1159
        %1192 = vst.msk [vmem:[#allocation3 + $0x878] sm:$0xff] %vm304, %v1160
        %1193 = vst.msk [vmem:[#allocation3 + $0x8c0] sm:$0xff] %vm304, %v1161
        %v1194 = vld [vmem:[#allocation2 + $0x9] sm:$0xff]
        %v1195 = vld [vmem:[#allocation2 + $0x11] sm:$0xff]
        %v1196 = vld [vmem:[#allocation2 + $0x29] sm:$0xff]
        %v1197 = vld [vmem:[#allocation2 + $0x31] sm:$0xff]
        %v1198 = vld [vmem:[#allocation2 + $0x49] sm:$0xff]
        %v1199 = vld [vmem:[#allocation2 + $0x51] sm:$0xff]
        %v1200 = vld [vmem:[#allocation2 + $0x69] sm:$0xff]
        %v1201 = vld [vmem:[#allocation2 + $0x71] sm:$0xff]
        %v1202 = vld [vmem:[#allocation2 + $0x89] sm:$0xff]
        %v1203 = vld [vmem:[#allocation2 + $0x91] sm:$0xff]
        %v1204 = vld [vmem:[#allocation2 + $0xa9] sm:$0xff]
        %v1205 = vld [vmem:[#allocation2 + $0xb1] sm:$0xff]
        %v1206 = vld [vmem:[#allocation2 + $0xc9] sm:$0xff]
        %v1207 = vld [vmem:[#allocation2 + $0xd1] sm:$0xff]
        %v1208 = vld [vmem:[#allocation2 + $0xe9] sm:$0xff]
        %v1209 = vld [vmem:[#allocation2 + $0xf1] sm:$0xff]
        %v1210 = vld [vmem:[#allocation2 + $0x109] sm:$0xff]
        %v1211 = vld [vmem:[#allocation2 + $0x111] sm:$0xff]
        %v1212 = vld [vmem:[#allocation2 + $0x129] sm:$0xff]
        %v1213 = vld [vmem:[#allocation2 + $0x131] sm:$0xff]
        %v1214 = vld [vmem:[#allocation2 + $0x149] sm:$0xff]
        %v1215 = vld [vmem:[#allocation2 + $0x151] sm:$0xff]
        %v1216 = vld [vmem:[#allocation2 + $0x169] sm:$0xff]
        %v1217 = vld [vmem:[#allocation2 + $0x171] sm:$0xff]
        %v1218 = vld [vmem:[#allocation2 + $0x189] sm:$0xff]
        %v1219 = vld [vmem:[#allocation2 + $0x191] sm:$0xff]
        %v1220 = vld [vmem:[#allocation2 + $0x1a9] sm:$0xff]
        %v1221 = vld [vmem:[#allocation2 + $0x1b1] sm:$0xff]
        %v1222 = vld [vmem:[#allocation2 + $0x1c9] sm:$0xff]
        %v1223 = vld [vmem:[#allocation2 + $0x1d1] sm:$0xff]
        %v1224 = vld [vmem:[#allocation2 + $0x1e9] sm:$0xff]
        %v1225 = vld [vmem:[#allocation2 + $0x1f1] sm:$0xff]
        %1226 = vst.msk [vmem:[#allocation3 + $0x10] sm:$0xff] %vm304, %v1194
        %1227 = vst.msk [vmem:[#allocation3 + $0x58] sm:$0xff] %vm304, %v1195
        %1228 = vst.msk [vmem:[#allocation3 + $0xa0] sm:$0xff] %vm304, %v1196
        %1229 = vst.msk [vmem:[#allocation3 + $0xe8] sm:$0xff] %vm304, %v1197
        %1230 = vst.msk [vmem:[#allocation3 + $0x130] sm:$0xff] %vm304, %v1198
        %1231 = vst.msk [vmem:[#allocation3 + $0x178] sm:$0xff] %vm304, %v1199
        %1232 = vst.msk [vmem:[#allocation3 + $0x1c0] sm:$0xff] %vm304, %v1200
        %1233 = vst.msk [vmem:[#allocation3 + $0x208] sm:$0xff] %vm304, %v1201
        %1234 = vst.msk [vmem:[#allocation3 + $0x250] sm:$0xff] %vm304, %v1202
        %1235 = vst.msk [vmem:[#allocation3 + $0x298] sm:$0xff] %vm304, %v1203
        %1236 = vst.msk [vmem:[#allocation3 + $0x2e0] sm:$0xff] %vm304, %v1204
        %1237 = vst.msk [vmem:[#allocation3 + $0x328] sm:$0xff] %vm304, %v1205
        %1238 = vst.msk [vmem:[#allocation3 + $0x370] sm:$0xff] %vm304, %v1206
        %1239 = vst.msk [vmem:[#allocation3 + $0x3b8] sm:$0xff] %vm304, %v1207
        %1240 = vst.msk [vmem:[#allocation3 + $0x400] sm:$0xff] %vm304, %v1208
        %1241 = vst.msk [vmem:[#allocation3 + $0x448] sm:$0xff] %vm304, %v1209
        %1242 = vst.msk [vmem:[#allocation3 + $0x490] sm:$0xff] %vm304, %v1210
        %1243 = vst.msk [vmem:[#allocation3 + $0x4d8] sm:$0xff] %vm304, %v1211
        %1244 = vst.msk [vmem:[#allocation3 + $0x520] sm:$0xff] %vm304, %v1212
        %1245 = vst.msk [vmem:[#allocation3 + $0x568] sm:$0xff] %vm304, %v1213
        %1246 = vst.msk [vmem:[#allocation3 + $0x5b0] sm:$0xff] %vm304, %v1214
        %1247 = vst.msk [vmem:[#allocation3 + $0x5f8] sm:$0xff] %vm304, %v1215
        %1248 = vst.msk [vmem:[#allocation3 + $0x640] sm:$0xff] %vm304, %v1216
        %1249 = vst.msk [vmem:[#allocation3 + $0x688] sm:$0xff] %vm304, %v1217
        %1250 = vst.msk [vmem:[#allocation3 + $0x6d0] sm:$0xff] %vm304, %v1218
        %1251 = vst.msk [vmem:[#allocation3 + $0x718] sm:$0xff] %vm304, %v1219
        %1252 = vst.msk [vmem:[#allocation3 + $0x760] sm:$0xff] %vm304, %v1220
        %1253 = vst.msk [vmem:[#allocation3 + $0x7a8] sm:$0xff] %vm304, %v1221
        %1254 = vst.msk [vmem:[#allocation3 + $0x7f0] sm:$0xff] %vm304, %v1222
        %1255 = vst.msk [vmem:[#allocation3 + $0x838] sm:$0xff] %vm304, %v1223
        %1256 = vst.msk [vmem:[#allocation3 + $0x880] sm:$0xff] %vm304, %v1224
        %1257 = vst.msk [vmem:[#allocation3 + $0x8c8] sm:$0xff] %vm304, %v1225
        %v1258 = vld [vmem:[%s1033 + $0x7] sm:$0xff]
        %v1259 = vld [vmem:[%s1033 + $0xf] sm:$0xff]
        %v1260 = vld [vmem:[%s1033 + $0x27] sm:$0xff]
        %v1261 = vld [vmem:[%s1033 + $0x2f] sm:$0xff]
        %v1262 = vld [vmem:[%s1033 + $0x47] sm:$0xff]
        %v1263 = vld [vmem:[%s1033 + $0x4f] sm:$0xff]
        %v1264 = vld [vmem:[%s1033 + $0x67] sm:$0xff]
        %v1265 = vld [vmem:[%s1033 + $0x6f] sm:$0xff]
        %v1266 = vld [vmem:[%s1033 + $0x87] sm:$0xff]
        %v1267 = vld [vmem:[%s1033 + $0x8f] sm:$0xff]
        %v1268 = vld [vmem:[%s1033 + $0xa7] sm:$0xff]
        %v1269 = vld [vmem:[%s1033 + $0xaf] sm:$0xff]
        %v1270 = vld [vmem:[%s1033 + $0xc7] sm:$0xff]
        %v1271 = vld [vmem:[%s1033 + $0xcf] sm:$0xff]
        %v1272 = vld [vmem:[%s1033 + $0xe7] sm:$0xff]
        %v1273 = vld [vmem:[%s1033 + $0xef] sm:$0xff]
        %v1274 = vld [vmem:[%s1033 + $0x107] sm:$0xff]
        %v1275 = vld [vmem:[%s1033 + $0x10f] sm:$0xff]
        %v1276 = vld [vmem:[%s1033 + $0x127] sm:$0xff]
        %v1277 = vld [vmem:[%s1033 + $0x12f] sm:$0xff]
        %v1278 = vld [vmem:[%s1033 + $0x147] sm:$0xff]
        %v1279 = vld [vmem:[%s1033 + $0x14f] sm:$0xff]
        %v1280 = vld [vmem:[%s1033 + $0x167] sm:$0xff]
        %v1281 = vld [vmem:[%s1033 + $0x16f] sm:$0xff]
        %v1282 = vld [vmem:[%s1033 + $0x187] sm:$0xff]
        %v1283 = vld [vmem:[%s1033 + $0x18f] sm:$0xff]
        %v1284 = vld [vmem:[%s1033 + $0x1a7] sm:$0xff]
        %v1285 = vld [vmem:[%s1033 + $0x1af] sm:$0xff]
        %v1286 = vld [vmem:[%s1033 + $0x1c7] sm:$0xff]
        %v1287 = vld [vmem:[%s1033 + $0x1cf] sm:$0xff]
        %v1288 = vld [vmem:[%s1033 + $0x1e7] sm:$0xff]
        %v1289 = vld [vmem:[%s1033 + $0x1ef] sm:$0xff]
        %1290 = vst.msk [vmem:[#allocation3 + $0x18] sm:$0xff] %vm304, %v1258
        %1291 = vst.msk [vmem:[#allocation3 + $0x60] sm:$0xff] %vm304, %v1259
        %1292 = vst.msk [vmem:[#allocation3 + $0xa8] sm:$0xff] %vm304, %v1260
        %1293 = vst.msk [vmem:[#allocation3 + $0xf0] sm:$0xff] %vm304, %v1261
        %1294 = vst.msk [vmem:[#allocation3 + $0x138] sm:$0xff] %vm304, %v1262
        %1295 = vst.msk [vmem:[#allocation3 + $0x180] sm:$0xff] %vm304, %v1263
        %1296 = vst.msk [vmem:[#allocation3 + $0x1c8] sm:$0xff] %vm304, %v1264
        %1297 = vst.msk [vmem:[#allocation3 + $0x210] sm:$0xff] %vm304, %v1265
        %1298 = vst.msk [vmem:[#allocation3 + $0x258] sm:$0xff] %vm304, %v1266
        %1299 = vst.msk [vmem:[#allocation3 + $0x2a0] sm:$0xff] %vm304, %v1267
        %1300 = vst.msk [vmem:[#allocation3 + $0x2e8] sm:$0xff] %vm304, %v1268
        %1301 = vst.msk [vmem:[#allocation3 + $0x330] sm:$0xff] %vm304, %v1269
        %1302 = vst.msk [vmem:[#allocation3 + $0x378] sm:$0xff] %vm304, %v1270
        %1303 = vst.msk [vmem:[#allocation3 + $0x3c0] sm:$0xff] %vm304, %v1271
        %1304 = vst.msk [vmem:[#allocation3 + $0x408] sm:$0xff] %vm304, %v1272
        %1305 = vst.msk [vmem:[#allocation3 + $0x450] sm:$0xff] %vm304, %v1273
        %1306 = vst.msk [vmem:[#allocation3 + $0x498] sm:$0xff] %vm304, %v1274
        %1307 = vst.msk [vmem:[#allocation3 + $0x4e0] sm:$0xff] %vm304, %v1275
        %1308 = vst.msk [vmem:[#allocation3 + $0x528] sm:$0xff] %vm304, %v1276
        %1309 = vst.msk [vmem:[#allocation3 + $0x570] sm:$0xff] %vm304, %v1277
        %1310 = vst.msk [vmem:[#allocation3 + $0x5b8] sm:$0xff] %vm304, %v1278
        %1311 = vst.msk [vmem:[#allocation3 + $0x600] sm:$0xff] %vm304, %v1279
        %1312 = vst.msk [vmem:[#allocation3 + $0x648] sm:$0xff] %vm304, %v1280
        %1313 = vst.msk [vmem:[#allocation3 + $0x690] sm:$0xff] %vm304, %v1281
        %1314 = vst.msk [vmem:[#allocation3 + $0x6d8] sm:$0xff] %vm304, %v1282
        %1315 = vst.msk [vmem:[#allocation3 + $0x720] sm:$0xff] %vm304, %v1283
        %1316 = vst.msk [vmem:[#allocation3 + $0x768] sm:$0xff] %vm304, %v1284
        %1317 = vst.msk [vmem:[#allocation3 + $0x7b0] sm:$0xff] %vm304, %v1285
        %1318 = vst.msk [vmem:[#allocation3 + $0x7f8] sm:$0xff] %vm304, %v1286
        %1319 = vst.msk [vmem:[#allocation3 + $0x840] sm:$0xff] %vm304, %v1287
        %1320 = vst.msk [vmem:[#allocation3 + $0x888] sm:$0xff] %vm304, %v1288
        %1321 = vst.msk [vmem:[#allocation3 + $0x8d0] sm:$0xff] %vm304, %v1289
        %v1322 = vld [vmem:[%s1033 + $0x8] sm:$0xff]
        %v1323 = vld [vmem:[%s1033 + $0x10] sm:$0xff]
        %v1324 = vld [vmem:[%s1033 + $0x28] sm:$0xff]
        %v1325 = vld [vmem:[%s1033 + $0x30] sm:$0xff]
        %v1326 = vld [vmem:[%s1033 + $0x48] sm:$0xff]
        %v1327 = vld [vmem:[%s1033 + $0x50] sm:$0xff]
        %v1328 = vld [vmem:[%s1033 + $0x68] sm:$0xff]
        %v1329 = vld [vmem:[%s1033 + $0x70] sm:$0xff]
        %v1330 = vld [vmem:[%s1033 + $0x88] sm:$0xff]
        %v1331 = vld [vmem:[%s1033 + $0x90] sm:$0xff]
        %v1332 = vld [vmem:[%s1033 + $0xa8] sm:$0xff]
        %v1333 = vld [vmem:[%s1033 + $0xb0] sm:$0xff]
        %v1334 = vld [vmem:[%s1033 + $0xc8] sm:$0xff]
        %v1335 = vld [vmem:[%s1033 + $0xd0] sm:$0xff]
        %v1336 = vld [vmem:[%s1033 + $0xe8] sm:$0xff]
        %v1337 = vld [vmem:[%s1033 + $0xf0] sm:$0xff]
        %v1338 = vld [vmem:[%s1033 + $0x108] sm:$0xff]
        %v1339 = vld [vmem:[%s1033 + $0x110] sm:$0xff]
        %v1340 = vld [vmem:[%s1033 + $0x128] sm:$0xff]
        %v1341 = vld [vmem:[%s1033 + $0x130] sm:$0xff]
        %v1342 = vld [vmem:[%s1033 + $0x148] sm:$0xff]
        %v1343 = vld [vmem:[%s1033 + $0x150] sm:$0xff]
        %v1344 = vld [vmem:[%s1033 + $0x168] sm:$0xff]
        %v1345 = vld [vmem:[%s1033 + $0x170] sm:$0xff]
        %v1346 = vld [vmem:[%s1033 + $0x188] sm:$0xff]
        %v1347 = vld [vmem:[%s1033 + $0x190] sm:$0xff]
        %v1348 = vld [vmem:[%s1033 + $0x1a8] sm:$0xff]
        %v1349 = vld [vmem:[%s1033 + $0x1b0] sm:$0xff]
        %v1350 = vld [vmem:[%s1033 + $0x1c8] sm:$0xff]
        %v1351 = vld [vmem:[%s1033 + $0x1d0] sm:$0xff]
        %v1352 = vld [vmem:[%s1033 + $0x1e8] sm:$0xff]
        %v1353 = vld [vmem:[%s1033 + $0x1f0] sm:$0xff]
        %1354 = vst.msk [vmem:[#allocation3 + $0x20] sm:$0xff] %vm304, %v1322
        %1355 = vst.msk [vmem:[#allocation3 + $0x68] sm:$0xff] %vm304, %v1323
        %1356 = vst.msk [vmem:[#allocation3 + $0xb0] sm:$0xff] %vm304, %v1324
        %1357 = vst.msk [vmem:[#allocation3 + $0xf8] sm:$0xff] %vm304, %v1325
        %1358 = vst.msk [vmem:[#allocation3 + $0x140] sm:$0xff] %vm304, %v1326
        %1359 = vst.msk [vmem:[#allocation3 + $0x188] sm:$0xff] %vm304, %v1327
        %1360 = vst.msk [vmem:[#allocation3 + $0x1d0] sm:$0xff] %vm304, %v1328
        %1361 = vst.msk [vmem:[#allocation3 + $0x218] sm:$0xff] %vm304, %v1329
        %1362 = vst.msk [vmem:[#allocation3 + $0x260] sm:$0xff] %vm304, %v1330
        %1363 = vst.msk [vmem:[#allocation3 + $0x2a8] sm:$0xff] %vm304, %v1331
        %1364 = vst.msk [vmem:[#allocation3 + $0x2f0] sm:$0xff] %vm304, %v1332
        %1365 = vst.msk [vmem:[#allocation3 + $0x338] sm:$0xff] %vm304, %v1333
        %1366 = vst.msk [vmem:[#allocation3 + $0x380] sm:$0xff] %vm304, %v1334
        %1367 = vst.msk [vmem:[#allocation3 + $0x3c8] sm:$0xff] %vm304, %v1335
        %1368 = vst.msk [vmem:[#allocation3 + $0x410] sm:$0xff] %vm304, %v1336
        %1369 = vst.msk [vmem:[#allocation3 + $0x458] sm:$0xff] %vm304, %v1337
        %1370 = vst.msk [vmem:[#allocation3 + $0x4a0] sm:$0xff] %vm304, %v1338
        %1371 = vst.msk [vmem:[#allocation3 + $0x4e8] sm:$0xff] %vm304, %v1339
        %1372 = vst.msk [vmem:[#allocation3 + $0x530] sm:$0xff] %vm304, %v1340
        %1373 = vst.msk [vmem:[#allocation3 + $0x578] sm:$0xff] %vm304, %v1341
        %1374 = vst.msk [vmem:[#allocation3 + $0x5c0] sm:$0xff] %vm304, %v1342
        %1375 = vst.msk [vmem:[#allocation3 + $0x608] sm:$0xff] %vm304, %v1343
        %1376 = vst.msk [vmem:[#allocation3 + $0x650] sm:$0xff] %vm304, %v1344
        %1377 = vst.msk [vmem:[#allocation3 + $0x698] sm:$0xff] %vm304, %v1345
        %1378 = vst.msk [vmem:[#allocation3 + $0x6e0] sm:$0xff] %vm304, %v1346
        %1379 = vst.msk [vmem:[#allocation3 + $0x728] sm:$0xff] %vm304, %v1347
        %1380 = vst.msk [vmem:[#allocation3 + $0x770] sm:$0xff] %vm304, %v1348
        %1381 = vst.msk [vmem:[#allocation3 + $0x7b8] sm:$0xff] %vm304, %v1349
        %1382 = vst.msk [vmem:[#allocation3 + $0x800] sm:$0xff] %vm304, %v1350
        %1383 = vst.msk [vmem:[#allocation3 + $0x848] sm:$0xff] %vm304, %v1351
        %1384 = vst.msk [vmem:[#allocation3 + $0x890] sm:$0xff] %vm304, %v1352
        %1385 = vst.msk [vmem:[#allocation3 + $0x8d8] sm:$0xff] %vm304, %v1353
        %v1386 = vld [vmem:[%s1033 + $0x9] sm:$0xff]
        %v1387 = vld [vmem:[%s1033 + $0x11] sm:$0xff]
        %v1388 = vld [vmem:[%s1033 + $0x29] sm:$0xff]
        %v1389 = vld [vmem:[%s1033 + $0x31] sm:$0xff]
        %v1390 = vld [vmem:[%s1033 + $0x49] sm:$0xff]
        %v1391 = vld [vmem:[%s1033 + $0x51] sm:$0xff]
        %v1392 = vld [vmem:[%s1033 + $0x69] sm:$0xff]
        %v1393 = vld [vmem:[%s1033 + $0x71] sm:$0xff]
        %v1394 = vld [vmem:[%s1033 + $0x89] sm:$0xff]
        %v1395 = vld [vmem:[%s1033 + $0x91] sm:$0xff]
        %v1396 = vld [vmem:[%s1033 + $0xa9] sm:$0xff]
        %v1397 = vld [vmem:[%s1033 + $0xb1] sm:$0xff]
        %v1398 = vld [vmem:[%s1033 + $0xc9] sm:$0xff]
        %v1399 = vld [vmem:[%s1033 + $0xd1] sm:$0xff]
        %v1400 = vld [vmem:[%s1033 + $0xe9] sm:$0xff]
        %v1401 = vld [vmem:[%s1033 + $0xf1] sm:$0xff]
        %v1402 = vld [vmem:[%s1033 + $0x109] sm:$0xff]
        %v1403 = vld [vmem:[%s1033 + $0x111] sm:$0xff]
        %v1404 = vld [vmem:[%s1033 + $0x129] sm:$0xff]
        %v1405 = vld [vmem:[%s1033 + $0x131] sm:$0xff]
        %v1406 = vld [vmem:[%s1033 + $0x149] sm:$0xff]
        %v1407 = vld [vmem:[%s1033 + $0x151] sm:$0xff]
        %v1408 = vld [vmem:[%s1033 + $0x169] sm:$0xff]
        %v1409 = vld [vmem:[%s1033 + $0x171] sm:$0xff]
        %v1410 = vld [vmem:[%s1033 + $0x189] sm:$0xff]
        %v1411 = vld [vmem:[%s1033 + $0x191] sm:$0xff]
        %v1412 = vld [vmem:[%s1033 + $0x1a9] sm:$0xff]
        %v1413 = vld [vmem:[%s1033 + $0x1b1] sm:$0xff]
        %v1414 = vld [vmem:[%s1033 + $0x1c9] sm:$0xff]
        %v1415 = vld [vmem:[%s1033 + $0x1d1] sm:$0xff]
        %v1416 = vld [vmem:[%s1033 + $0x1e9] sm:$0xff]
        %v1417 = vld [vmem:[%s1033 + $0x1f1] sm:$0xff]
        %1418 = vst.msk [vmem:[#allocation3 + $0x28] sm:$0xff] %vm304, %v1386
        %1419 = vst.msk [vmem:[#allocation3 + $0x70] sm:$0xff] %vm304, %v1387
        %1420 = vst.msk [vmem:[#allocation3 + $0xb8] sm:$0xff] %vm304, %v1388
        %1421 = vst.msk [vmem:[#allocation3 + $0x100] sm:$0xff] %vm304, %v1389
        %1422 = vst.msk [vmem:[#allocation3 + $0x148] sm:$0xff] %vm304, %v1390
        %1423 = vst.msk [vmem:[#allocation3 + $0x190] sm:$0xff] %vm304, %v1391
        %1424 = vst.msk [vmem:[#allocation3 + $0x1d8] sm:$0xff] %vm304, %v1392
        %1425 = vst.msk [vmem:[#allocation3 + $0x220] sm:$0xff] %vm304, %v1393
        %1426 = vst.msk [vmem:[#allocation3 + $0x268] sm:$0xff] %vm304, %v1394
        %1427 = vst.msk [vmem:[#allocation3 + $0x2b0] sm:$0xff] %vm304, %v1395
        %1428 = vst.msk [vmem:[#allocation3 + $0x2f8] sm:$0xff] %vm304, %v1396
        %1429 = vst.msk [vmem:[#allocation3 + $0x340] sm:$0xff] %vm304, %v1397
        %1430 = vst.msk [vmem:[#allocation3 + $0x388] sm:$0xff] %vm304, %v1398
        %1431 = vst.msk [vmem:[#allocation3 + $0x3d0] sm:$0xff] %vm304, %v1399
        %1432 = vst.msk [vmem:[#allocation3 + $0x418] sm:$0xff] %vm304, %v1400
        %1433 = vst.msk [vmem:[#allocation3 + $0x460] sm:$0xff] %vm304, %v1401
        %1434 = vst.msk [vmem:[#allocation3 + $0x4a8] sm:$0xff] %vm304, %v1402
        %1435 = vst.msk [vmem:[#allocation3 + $0x4f0] sm:$0xff] %vm304, %v1403
        %1436 = vst.msk [vmem:[#allocation3 + $0x538] sm:$0xff] %vm304, %v1404
        %1437 = vst.msk [vmem:[#allocation3 + $0x580] sm:$0xff] %vm304, %v1405
        %1438 = vst.msk [vmem:[#allocation3 + $0x5c8] sm:$0xff] %vm304, %v1406
        %1439 = vst.msk [vmem:[#allocation3 + $0x610] sm:$0xff] %vm304, %v1407
        %1440 = vst.msk [vmem:[#allocation3 + $0x658] sm:$0xff] %vm304, %v1408
        %1441 = vst.msk [vmem:[#allocation3 + $0x6a0] sm:$0xff] %vm304, %v1409
        %1442 = vst.msk [vmem:[#allocation3 + $0x6e8] sm:$0xff] %vm304, %v1410
        %1443 = vst.msk [vmem:[#allocation3 + $0x730] sm:$0xff] %vm304, %v1411
        %1444 = vst.msk [vmem:[#allocation3 + $0x778] sm:$0xff] %vm304, %v1412
        %1445 = vst.msk [vmem:[#allocation3 + $0x7c0] sm:$0xff] %vm304, %v1413
        %1446 = vst.msk [vmem:[#allocation3 + $0x808] sm:$0xff] %vm304, %v1414
        %1447 = vst.msk [vmem:[#allocation3 + $0x850] sm:$0xff] %vm304, %v1415
        %1448 = vst.msk [vmem:[#allocation3 + $0x898] sm:$0xff] %vm304, %v1416
        %1449 = vst.msk [vmem:[#allocation3 + $0x8e0] sm:$0xff] %vm304, %v1417
        %s1450 = scalar_lea.vmem [#allocation2], 64
        %v1451 = vld [vmem:[%s1450 + $0x7] sm:$0xff]
        %v1452 = vld [vmem:[%s1450 + $0xf] sm:$0xff]
        %v1453 = vld [vmem:[%s1450 + $0x27] sm:$0xff]
        %v1454 = vld [vmem:[%s1450 + $0x2f] sm:$0xff]
        %v1455 = vld [vmem:[%s1450 + $0x47] sm:$0xff]
        %v1456 = vld [vmem:[%s1450 + $0x4f] sm:$0xff]
        %v1457 = vld [vmem:[%s1450 + $0x67] sm:$0xff]
        %v1458 = vld [vmem:[%s1450 + $0x6f] sm:$0xff]
        %v1459 = vld [vmem:[%s1450 + $0x87] sm:$0xff]
        %v1460 = vld [vmem:[%s1450 + $0x8f] sm:$0xff]
        %v1461 = vld [vmem:[%s1450 + $0xa7] sm:$0xff]
        %v1462 = vld [vmem:[%s1450 + $0xaf] sm:$0xff]
        %v1463 = vld [vmem:[%s1450 + $0xc7] sm:$0xff]
        %v1464 = vld [vmem:[%s1450 + $0xcf] sm:$0xff]
        %v1465 = vld [vmem:[%s1450 + $0xe7] sm:$0xff]
        %v1466 = vld [vmem:[%s1450 + $0xef] sm:$0xff]
        %v1467 = vld [vmem:[%s1450 + $0x107] sm:$0xff]
        %v1468 = vld [vmem:[%s1450 + $0x10f] sm:$0xff]
        %v1469 = vld [vmem:[%s1450 + $0x127] sm:$0xff]
        %v1470 = vld [vmem:[%s1450 + $0x12f] sm:$0xff]
        %v1471 = vld [vmem:[%s1450 + $0x147] sm:$0xff]
        %v1472 = vld [vmem:[%s1450 + $0x14f] sm:$0xff]
        %v1473 = vld [vmem:[%s1450 + $0x167] sm:$0xff]
        %v1474 = vld [vmem:[%s1450 + $0x16f] sm:$0xff]
        %v1475 = vld [vmem:[%s1450 + $0x187] sm:$0xff]
        %v1476 = vld [vmem:[%s1450 + $0x18f] sm:$0xff]
        %v1477 = vld [vmem:[%s1450 + $0x1a7] sm:$0xff]
        %v1478 = vld [vmem:[%s1450 + $0x1af] sm:$0xff]
        %v1479 = vld [vmem:[%s1450 + $0x1c7] sm:$0xff]
        %v1480 = vld [vmem:[%s1450 + $0x1cf] sm:$0xff]
        %v1481 = vld [vmem:[%s1450 + $0x1e7] sm:$0xff]
        %v1482 = vld [vmem:[%s1450 + $0x1ef] sm:$0xff]
        %1483 = vst.msk [vmem:[#allocation3 + $0x30] sm:$0xff] %vm304, %v1451
        %1484 = vst.msk [vmem:[#allocation3 + $0x78] sm:$0xff] %vm304, %v1452
        %1485 = vst.msk [vmem:[#allocation3 + $0xc0] sm:$0xff] %vm304, %v1453
        %1486 = vst.msk [vmem:[#allocation3 + $0x108] sm:$0xff] %vm304, %v1454
        %1487 = vst.msk [vmem:[#allocation3 + $0x150] sm:$0xff] %vm304, %v1455
        %1488 = vst.msk [vmem:[#allocation3 + $0x198] sm:$0xff] %vm304, %v1456
        %1489 = vst.msk [vmem:[#allocation3 + $0x1e0] sm:$0xff] %vm304, %v1457
        %1490 = vst.msk [vmem:[#allocation3 + $0x228] sm:$0xff] %vm304, %v1458
        %1491 = vst.msk [vmem:[#allocation3 + $0x270] sm:$0xff] %vm304, %v1459
        %1492 = vst.msk [vmem:[#allocation3 + $0x2b8] sm:$0xff] %vm304, %v1460
        %1493 = vst.msk [vmem:[#allocation3 + $0x300] sm:$0xff] %vm304, %v1461
        %1494 = vst.msk [vmem:[#allocation3 + $0x348] sm:$0xff] %vm304, %v1462
        %1495 = vst.msk [vmem:[#allocation3 + $0x390] sm:$0xff] %vm304, %v1463
        %1496 = vst.msk [vmem:[#allocation3 + $0x3d8] sm:$0xff] %vm304, %v1464
        %1497 = vst.msk [vmem:[#allocation3 + $0x420] sm:$0xff] %vm304, %v1465
        %1498 = vst.msk [vmem:[#allocation3 + $0x468] sm:$0xff] %vm304, %v1466
        %1499 = vst.msk [vmem:[#allocation3 + $0x4b0] sm:$0xff] %vm304, %v1467
        %1500 = vst.msk [vmem:[#allocation3 + $0x4f8] sm:$0xff] %vm304, %v1468
        %1501 = vst.msk [vmem:[#allocation3 + $0x540] sm:$0xff] %vm304, %v1469
        %1502 = vst.msk [vmem:[#allocation3 + $0x588] sm:$0xff] %vm304, %v1470
        %1503 = vst.msk [vmem:[#allocation3 + $0x5d0] sm:$0xff] %vm304, %v1471
        %1504 = vst.msk [vmem:[#allocation3 + $0x618] sm:$0xff] %vm304, %v1472
        %1505 = vst.msk [vmem:[#allocation3 + $0x660] sm:$0xff] %vm304, %v1473
        %1506 = vst.msk [vmem:[#allocation3 + $0x6a8] sm:$0xff] %vm304, %v1474
        %1507 = vst.msk [vmem:[#allocation3 + $0x6f0] sm:$0xff] %vm304, %v1475
        %1508 = vst.msk [vmem:[#allocation3 + $0x738] sm:$0xff] %vm304, %v1476
        %1509 = vst.msk [vmem:[#allocation3 + $0x780] sm:$0xff] %vm304, %v1477
        %1510 = vst.msk [vmem:[#allocation3 + $0x7c8] sm:$0xff] %vm304, %v1478
        %1511 = vst.msk [vmem:[#allocation3 + $0x810] sm:$0xff] %vm304, %v1479
        %1512 = vst.msk [vmem:[#allocation3 + $0x858] sm:$0xff] %vm304, %v1480
        %1513 = vst.msk [vmem:[#allocation3 + $0x8a0] sm:$0xff] %vm304, %v1481
        %1514 = vst.msk [vmem:[#allocation3 + $0x8e8] sm:$0xff] %vm304, %v1482
        %v1515 = vld [vmem:[%s1450 + $0x8] sm:$0xff]
        %v1516 = vld [vmem:[%s1450 + $0x10] sm:$0xff]
        %v1517 = vld [vmem:[%s1450 + $0x28] sm:$0xff]
        %v1518 = vld [vmem:[%s1450 + $0x30] sm:$0xff]
        %v1519 = vld [vmem:[%s1450 + $0x48] sm:$0xff]
        %v1520 = vld [vmem:[%s1450 + $0x50] sm:$0xff]
        %v1521 = vld [vmem:[%s1450 + $0x68] sm:$0xff]
        %v1522 = vld [vmem:[%s1450 + $0x70] sm:$0xff]
        %v1523 = vld [vmem:[%s1450 + $0x88] sm:$0xff]
        %v1524 = vld [vmem:[%s1450 + $0x90] sm:$0xff]
        %v1525 = vld [vmem:[%s1450 + $0xa8] sm:$0xff]
        %v1526 = vld [vmem:[%s1450 + $0xb0] sm:$0xff]
        %v1527 = vld [vmem:[%s1450 + $0xc8] sm:$0xff]
        %v1528 = vld [vmem:[%s1450 + $0xd0] sm:$0xff]
        %v1529 = vld [vmem:[%s1450 + $0xe8] sm:$0xff]
        %v1530 = vld [vmem:[%s1450 + $0xf0] sm:$0xff]
        %v1531 = vld [vmem:[%s1450 + $0x108] sm:$0xff]
        %v1532 = vld [vmem:[%s1450 + $0x110] sm:$0xff]
        %v1533 = vld [vmem:[%s1450 + $0x128] sm:$0xff]
        %v1534 = vld [vmem:[%s1450 + $0x130] sm:$0xff]
        %v1535 = vld [vmem:[%s1450 + $0x148] sm:$0xff]
        %v1536 = vld [vmem:[%s1450 + $0x150] sm:$0xff]
        %v1537 = vld [vmem:[%s1450 + $0x168] sm:$0xff]
        %v1538 = vld [vmem:[%s1450 + $0x170] sm:$0xff]
        %v1539 = vld [vmem:[%s1450 + $0x188] sm:$0xff]
        %v1540 = vld [vmem:[%s1450 + $0x190] sm:$0xff]
        %v1541 = vld [vmem:[%s1450 + $0x1a8] sm:$0xff]
        %v1542 = vld [vmem:[%s1450 + $0x1b0] sm:$0xff]
        %v1543 = vld [vmem:[%s1450 + $0x1c8] sm:$0xff]
        %v1544 = vld [vmem:[%s1450 + $0x1d0] sm:$0xff]
        %v1545 = vld [vmem:[%s1450 + $0x1e8] sm:$0xff]
        %v1546 = vld [vmem:[%s1450 + $0x1f0] sm:$0xff]
        %1547 = vst.msk [vmem:[#allocation3 + $0x38] sm:$0xff] %vm304, %v1515
        %1548 = vst.msk [vmem:[#allocation3 + $0x80] sm:$0xff] %vm304, %v1516
        %1549 = vst.msk [vmem:[#allocation3 + $0xc8] sm:$0xff] %vm304, %v1517
        %1550 = vst.msk [vmem:[#allocation3 + $0x110] sm:$0xff] %vm304, %v1518
        %1551 = vst.msk [vmem:[#allocation3 + $0x158] sm:$0xff] %vm304, %v1519
        %1552 = vst.msk [vmem:[#allocation3 + $0x1a0] sm:$0xff] %vm304, %v1520
        %1553 = vst.msk [vmem:[#allocation3 + $0x1e8] sm:$0xff] %vm304, %v1521
        %1554 = vst.msk [vmem:[#allocation3 + $0x230] sm:$0xff] %vm304, %v1522
        %1555 = vst.msk [vmem:[#allocation3 + $0x278] sm:$0xff] %vm304, %v1523
        %1556 = vst.msk [vmem:[#allocation3 + $0x2c0] sm:$0xff] %vm304, %v1524
        %1557 = vst.msk [vmem:[#allocation3 + $0x308] sm:$0xff] %vm304, %v1525
        %1558 = vst.msk [vmem:[#allocation3 + $0x350] sm:$0xff] %vm304, %v1526
        %1559 = vst.msk [vmem:[#allocation3 + $0x398] sm:$0xff] %vm304, %v1527
        %1560 = vst.msk [vmem:[#allocation3 + $0x3e0] sm:$0xff] %vm304, %v1528
        %1561 = vst.msk [vmem:[#allocation3 + $0x428] sm:$0xff] %vm304, %v1529
        %1562 = vst.msk [vmem:[#allocation3 + $0x470] sm:$0xff] %vm304, %v1530
        %1563 = vst.msk [vmem:[#allocation3 + $0x4b8] sm:$0xff] %vm304, %v1531
        %1564 = vst.msk [vmem:[#allocation3 + $0x500] sm:$0xff] %vm304, %v1532
        %1565 = vst.msk [vmem:[#allocation3 + $0x548] sm:$0xff] %vm304, %v1533
        %1566 = vst.msk [vmem:[#allocation3 + $0x590] sm:$0xff] %vm304, %v1534
        %1567 = vst.msk [vmem:[#allocation3 + $0x5d8] sm:$0xff] %vm304, %v1535
        %1568 = vst.msk [vmem:[#allocation3 + $0x620] sm:$0xff] %vm304, %v1536
        %1569 = vst.msk [vmem:[#allocation3 + $0x668] sm:$0xff] %vm304, %v1537
        %1570 = vst.msk [vmem:[#allocation3 + $0x6b0] sm:$0xff] %vm304, %v1538
        %1571 = vst.msk [vmem:[#allocation3 + $0x6f8] sm:$0xff] %vm304, %v1539
        %1572 = vst.msk [vmem:[#allocation3 + $0x740] sm:$0xff] %vm304, %v1540
        %1573 = vst.msk [vmem:[#allocation3 + $0x788] sm:$0xff] %vm304, %v1541
        %1574 = vst.msk [vmem:[#allocation3 + $0x7d0] sm:$0xff] %vm304, %v1542
        %1575 = vst.msk [vmem:[#allocation3 + $0x818] sm:$0xff] %vm304, %v1543
        %1576 = vst.msk [vmem:[#allocation3 + $0x860] sm:$0xff] %vm304, %v1544
        %1577 = vst.msk [vmem:[#allocation3 + $0x8a8] sm:$0xff] %vm304, %v1545
        %1578 = vst.msk [vmem:[#allocation3 + $0x8f0] sm:$0xff] %vm304, %v1546
        %v1579 = vld [vmem:[%s1450 + $0x9] sm:$0xff]
        %v1580 = vld [vmem:[%s1450 + $0x11] sm:$0xff]
        %v1581 = vld [vmem:[%s1450 + $0x29] sm:$0xff]
        %v1582 = vld [vmem:[%s1450 + $0x31] sm:$0xff]
        %v1583 = vld [vmem:[%s1450 + $0x49] sm:$0xff]
        %v1584 = vld [vmem:[%s1450 + $0x51] sm:$0xff]
        %v1585 = vld [vmem:[%s1450 + $0x69] sm:$0xff]
        %v1586 = vld [vmem:[%s1450 + $0x71] sm:$0xff]
        %v1587 = vld [vmem:[%s1450 + $0x89] sm:$0xff]
        %v1588 = vld [vmem:[%s1450 + $0x91] sm:$0xff]
        %v1589 = vld [vmem:[%s1450 + $0xa9] sm:$0xff]
        %v1590 = vld [vmem:[%s1450 + $0xb1] sm:$0xff]
        %v1591 = vld [vmem:[%s1450 + $0xc9] sm:$0xff]
        %v1592 = vld [vmem:[%s1450 + $0xd1] sm:$0xff]
        %v1593 = vld [vmem:[%s1450 + $0xe9] sm:$0xff]
        %v1594 = vld [vmem:[%s1450 + $0xf1] sm:$0xff]
        %v1595 = vld [vmem:[%s1450 + $0x109] sm:$0xff]
        %v1596 = vld [vmem:[%s1450 + $0x111] sm:$0xff]
        %v1597 = vld [vmem:[%s1450 + $0x129] sm:$0xff]
        %v1598 = vld [vmem:[%s1450 + $0x131] sm:$0xff]
        %v1599 = vld [vmem:[%s1450 + $0x149] sm:$0xff]
        %v1600 = vld [vmem:[%s1450 + $0x151] sm:$0xff]
        %v1601 = vld [vmem:[%s1450 + $0x169] sm:$0xff]
        %v1602 = vld [vmem:[%s1450 + $0x171] sm:$0xff]
        %v1603 = vld [vmem:[%s1450 + $0x189] sm:$0xff]
        %v1604 = vld [vmem:[%s1450 + $0x191] sm:$0xff]
        %v1605 = vld [vmem:[%s1450 + $0x1a9] sm:$0xff]
        %v1606 = vld [vmem:[%s1450 + $0x1b1] sm:$0xff]
        %v1607 = vld [vmem:[%s1450 + $0x1c9] sm:$0xff]
        %v1608 = vld [vmem:[%s1450 + $0x1d1] sm:$0xff]
        %v1609 = vld [vmem:[%s1450 + $0x1e9] sm:$0xff]
        %v1610 = vld [vmem:[%s1450 + $0x1f1] sm:$0xff]
        %1611 = vst.msk [vmem:[#allocation3 + $0x40] sm:$0xff] %vm304, %v1579
        %1612 = vst.msk [vmem:[#allocation3 + $0x88] sm:$0xff] %vm304, %v1580
        %1613 = vst.msk [vmem:[#allocation3 + $0xd0] sm:$0xff] %vm304, %v1581
        %1614 = vst.msk [vmem:[#allocation3 + $0x118] sm:$0xff] %vm304, %v1582
        %1615 = vst.msk [vmem:[#allocation3 + $0x160] sm:$0xff] %vm304, %v1583
        %1616 = vst.msk [vmem:[#allocation3 + $0x1a8] sm:$0xff] %vm304, %v1584
        %1617 = vst.msk [vmem:[#allocation3 + $0x1f0] sm:$0xff] %vm304, %v1585
        %1618 = vst.msk [vmem:[#allocation3 + $0x238] sm:$0xff] %vm304, %v1586
        %1619 = vst.msk [vmem:[#allocation3 + $0x280] sm:$0xff] %vm304, %v1587
        %1620 = vst.msk [vmem:[#allocation3 + $0x2c8] sm:$0xff] %vm304, %v1588
        %1621 = vst.msk [vmem:[#allocation3 + $0x310] sm:$0xff] %vm304, %v1589
        %1622 = vst.msk [vmem:[#allocation3 + $0x358] sm:$0xff] %vm304, %v1590
        %1623 = vst.msk [vmem:[#allocation3 + $0x3a0] sm:$0xff] %vm304, %v1591
        %1624 = vst.msk [vmem:[#allocation3 + $0x3e8] sm:$0xff] %vm304, %v1592
        %1625 = vst.msk [vmem:[#allocation3 + $0x430] sm:$0xff] %vm304, %v1593
        %1626 = vst.msk [vmem:[#allocation3 + $0x478] sm:$0xff] %vm304, %v1594
        %1627 = vst.msk [vmem:[#allocation3 + $0x4c0] sm:$0xff] %vm304, %v1595
        %1628 = vst.msk [vmem:[#allocation3 + $0x508] sm:$0xff] %vm304, %v1596
        %1629 = vst.msk [vmem:[#allocation3 + $0x550] sm:$0xff] %vm304, %v1597
        %1630 = vst.msk [vmem:[#allocation3 + $0x598] sm:$0xff] %vm304, %v1598
        %1631 = vst.msk [vmem:[#allocation3 + $0x5e0] sm:$0xff] %vm304, %v1599
        %1632 = vst.msk [vmem:[#allocation3 + $0x628] sm:$0xff] %vm304, %v1600
        %1633 = vst.msk [vmem:[#allocation3 + $0x670] sm:$0xff] %vm304, %v1601
        %1634 = vst.msk [vmem:[#allocation3 + $0x6b8] sm:$0xff] %vm304, %v1602
        %1635 = vst.msk [vmem:[#allocation3 + $0x700] sm:$0xff] %vm304, %v1603
        %1636 = vst.msk [vmem:[#allocation3 + $0x748] sm:$0xff] %vm304, %v1604
        %1637 = vst.msk [vmem:[#allocation3 + $0x790] sm:$0xff] %vm304, %v1605
        %1638 = vst.msk [vmem:[#allocation3 + $0x7d8] sm:$0xff] %vm304, %v1606
        %1639 = vst.msk [vmem:[#allocation3 + $0x820] sm:$0xff] %vm304, %v1607
        %1640 = vst.msk [vmem:[#allocation3 + $0x868] sm:$0xff] %vm304, %v1608
        %1641 = vst.msk [vmem:[#allocation3 + $0x8b0] sm:$0xff] %vm304, %v1609
        %1642 = vst.msk [vmem:[#allocation3 + $0x8f8] sm:$0xff] %vm304, %v1610
        %v1643 = vld [vmem:[#allocation3] sm:$0xff]
        %v1644 = vld [vmem:[#allocation3 + $0x8] sm:$0xff]
        %v1645 = vld [vmem:[#allocation3 + $0x10] sm:$0xff]
        %v1646 = vld [vmem:[#allocation3 + $0x18] sm:$0xff]
        %v1647 = vld [vmem:[#allocation3 + $0x20] sm:$0xff]
        %v1648 = vld [vmem:[#allocation3 + $0x28] sm:$0xff]
        %v1649 = vld [vmem:[#allocation3 + $0x30] sm:$0xff]
        %v1650 = vld [vmem:[#allocation3 + $0x38] sm:$0xff]
        %v1651 = vld [vmem:[#allocation3 + $0x40] sm:$0xff]
        %v1652 = vld [vmem:[#allocation3 + $0x48] sm:$0xff]
        %v1653 = vld [vmem:[#allocation3 + $0x50] sm:$0xff]
        %v1654 = vld [vmem:[#allocation3 + $0x58] sm:$0xff]
        %v1655 = vld [vmem:[#allocation3 + $0x60] sm:$0xff]
        %v1656 = vld [vmem:[#allocation3 + $0x68] sm:$0xff]
        %v1657 = vld [vmem:[#allocation3 + $0x70] sm:$0xff]
        %v1658 = vld [vmem:[#allocation3 + $0x78] sm:$0xff]
        %v1659 = vld [vmem:[#allocation3 + $0x80] sm:$0xff]
        %v1660 = vld [vmem:[#allocation3 + $0x88] sm:$0xff]
        %v1661 = vld [vmem:[#allocation3 + $0x90] sm:$0xff]
        %v1662 = vld [vmem:[#allocation3 + $0x98] sm:$0xff]
        %v1663 = vld [vmem:[#allocation3 + $0xa0] sm:$0xff]
        %v1664 = vld [vmem:[#allocation3 + $0xa8] sm:$0xff]
        %v1665 = vld [vmem:[#allocation3 + $0xb0] sm:$0xff]
        %v1666 = vld [vmem:[#allocation3 + $0xb8] sm:$0xff]
        %v1667 = vld [vmem:[#allocation3 + $0xc0] sm:$0xff]
        %v1668 = vld [vmem:[#allocation3 + $0xc8] sm:$0xff]
        %v1669 = vld [vmem:[#allocation3 + $0xd0] sm:$0xff]
        %v1670 = vld [vmem:[#allocation3 + $0xd8] sm:$0xff]
        %v1671 = vld [vmem:[#allocation3 + $0xe0] sm:$0xff]
        %v1672 = vld [vmem:[#allocation3 + $0xe8] sm:$0xff]
        %v1673 = vld [vmem:[#allocation3 + $0xf0] sm:$0xff]
        %v1674 = vld [vmem:[#allocation3 + $0xf8] sm:$0xff]
        %v1675 = vld [vmem:[#allocation3 + $0x100] sm:$0xff]
        %v1676 = vld [vmem:[#allocation3 + $0x108] sm:$0xff]
        %v1677 = vld [vmem:[#allocation3 + $0x110] sm:$0xff]
        %v1678 = vld [vmem:[#allocation3 + $0x118] sm:$0xff]
        %v1679 = vld [vmem:[#allocation3 + $0x120] sm:$0xff]
        %v1680 = vld [vmem:[#allocation3 + $0x128] sm:$0xff]
        %v1681 = vld [vmem:[#allocation3 + $0x130] sm:$0xff]
        %v1682 = vld [vmem:[#allocation3 + $0x138] sm:$0xff]
        %v1683 = vld [vmem:[#allocation3 + $0x140] sm:$0xff]
        %v1684 = vld [vmem:[#allocation3 + $0x148] sm:$0xff]
        %v1685 = vld [vmem:[#allocation3 + $0x150] sm:$0xff]
        %v1686 = vld [vmem:[#allocation3 + $0x158] sm:$0xff]
        %v1687 = vld [vmem:[#allocation3 + $0x160] sm:$0xff]
        %v1688 = vld [vmem:[#allocation3 + $0x168] sm:$0xff]
        %v1689 = vld [vmem:[#allocation3 + $0x170] sm:$0xff]
        %v1690 = vld [vmem:[#allocation3 + $0x178] sm:$0xff]
        %v1691 = vld [vmem:[#allocation3 + $0x180] sm:$0xff]
        %v1692 = vld [vmem:[#allocation3 + $0x188] sm:$0xff]
        %v1693 = vld [vmem:[#allocation3 + $0x190] sm:$0xff]
        %v1694 = vld [vmem:[#allocation3 + $0x198] sm:$0xff]
        %v1695 = vld [vmem:[#allocation3 + $0x1a0] sm:$0xff]
        %v1696 = vld [vmem:[#allocation3 + $0x1a8] sm:$0xff]
        %v1697 = vld [vmem:[#allocation3 + $0x1b0] sm:$0xff]
        %v1698 = vld [vmem:[#allocation3 + $0x1b8] sm:$0xff]
        %v1699 = vld [vmem:[#allocation3 + $0x1c0] sm:$0xff]
        %v1700 = vld [vmem:[#allocation3 + $0x1c8] sm:$0xff]
        %v1701 = vld [vmem:[#allocation3 + $0x1d0] sm:$0xff]
        %v1702 = vld [vmem:[#allocation3 + $0x1d8] sm:$0xff]
        %v1703 = vld [vmem:[#allocation3 + $0x1e0] sm:$0xff]
        %v1704 = vld [vmem:[#allocation3 + $0x1e8] sm:$0xff]
        %v1705 = vld [vmem:[#allocation3 + $0x1f0] sm:$0xff]
        %v1706 = vld [vmem:[#allocation3 + $0x1f8] sm:$0xff]
        %v1707 = vld [vmem:[#allocation3 + $0x200] sm:$0xff]
        %v1708 = vld [vmem:[#allocation3 + $0x208] sm:$0xff]
        %v1709 = vld [vmem:[#allocation3 + $0x210] sm:$0xff]
        %v1710 = vld [vmem:[#allocation3 + $0x218] sm:$0xff]
        %v1711 = vld [vmem:[#allocation3 + $0x220] sm:$0xff]
        %v1712 = vld [vmem:[#allocation3 + $0x228] sm:$0xff]
        %v1713 = vld [vmem:[#allocation3 + $0x230] sm:$0xff]
        %v1714 = vld [vmem:[#allocation3 + $0x238] sm:$0xff]
        %v1715 = vld [vmem:[#allocation3 + $0x240] sm:$0xff]
        %v1716 = vld [vmem:[#allocation3 + $0x248] sm:$0xff]
        %v1717 = vld [vmem:[#allocation3 + $0x250] sm:$0xff]
        %v1718 = vld [vmem:[#allocation3 + $0x258] sm:$0xff]
        %v1719 = vld [vmem:[#allocation3 + $0x260] sm:$0xff]
        %v1720 = vld [vmem:[#allocation3 + $0x268] sm:$0xff]
        %v1721 = vld [vmem:[#allocation3 + $0x270] sm:$0xff]
        %v1722 = vld [vmem:[#allocation3 + $0x278] sm:$0xff]
        %v1723 = vld [vmem:[#allocation3 + $0x280] sm:$0xff]
        %v1724 = vld [vmem:[#allocation3 + $0x288] sm:$0xff]
        %v1725 = vld [vmem:[#allocation3 + $0x290] sm:$0xff]
        %v1726 = vld [vmem:[#allocation3 + $0x298] sm:$0xff]
        %v1727 = vld [vmem:[#allocation3 + $0x2a0] sm:$0xff]
        %v1728 = vld [vmem:[#allocation3 + $0x2a8] sm:$0xff]
        %v1729 = vld [vmem:[#allocation3 + $0x2b0] sm:$0xff]
        %v1730 = vld [vmem:[#allocation3 + $0x2b8] sm:$0xff]
        %v1731 = vld [vmem:[#allocation3 + $0x2c0] sm:$0xff]
        %v1732 = vld [vmem:[#allocation3 + $0x2c8] sm:$0xff]
        %v1733 = vld [vmem:[#allocation3 + $0x2d0] sm:$0xff]
        %v1734 = vld [vmem:[#allocation3 + $0x2d8] sm:$0xff]
        %v1735 = vld [vmem:[#allocation3 + $0x2e0] sm:$0xff]
        %v1736 = vld [vmem:[#allocation3 + $0x2e8] sm:$0xff]
        %v1737 = vld [vmem:[#allocation3 + $0x2f0] sm:$0xff]
        %v1738 = vld [vmem:[#allocation3 + $0x2f8] sm:$0xff]
        %v1739 = vld [vmem:[#allocation3 + $0x300] sm:$0xff]
        %v1740 = vld [vmem:[#allocation3 + $0x308] sm:$0xff]
        %v1741 = vld [vmem:[#allocation3 + $0x310] sm:$0xff]
        %v1742 = vld [vmem:[#allocation3 + $0x318] sm:$0xff]
        %v1743 = vld [vmem:[#allocation3 + $0x320] sm:$0xff]
        %v1744 = vld [vmem:[#allocation3 + $0x328] sm:$0xff]
        %v1745 = vld [vmem:[#allocation3 + $0x330] sm:$0xff]
        %v1746 = vld [vmem:[#allocation3 + $0x338] sm:$0xff]
        %v1747 = vld [vmem:[#allocation3 + $0x340] sm:$0xff]
        %v1748 = vld [vmem:[#allocation3 + $0x348] sm:$0xff]
        %v1749 = vld [vmem:[#allocation3 + $0x350] sm:$0xff]
        %v1750 = vld [vmem:[#allocation3 + $0x358] sm:$0xff]
        %v1751 = vld [vmem:[#allocation3 + $0x360] sm:$0xff]
        %v1752 = vld [vmem:[#allocation3 + $0x368] sm:$0xff]
        %v1753 = vld [vmem:[#allocation3 + $0x370] sm:$0xff]
        %v1754 = vld [vmem:[#allocation3 + $0x378] sm:$0xff]
        %v1755 = vld [vmem:[#allocation3 + $0x380] sm:$0xff]
        %v1756 = vld [vmem:[#allocation3 + $0x388] sm:$0xff]
        %v1757 = vld [vmem:[#allocation3 + $0x390] sm:$0xff]
        %v1758 = vld [vmem:[#allocation3 + $0x398] sm:$0xff]
        %v1759 = vld [vmem:[#allocation3 + $0x3a0] sm:$0xff]
        %v1760 = vld [vmem:[#allocation3 + $0x3a8] sm:$0xff]
        %v1761 = vld [vmem:[#allocation3 + $0x3b0] sm:$0xff]
        %v1762 = vld [vmem:[#allocation3 + $0x3b8] sm:$0xff]
        %v1763 = vld [vmem:[#allocation3 + $0x3c0] sm:$0xff]
        %v1764 = vld [vmem:[#allocation3 + $0x3c8] sm:$0xff]
        %v1765 = vld [vmem:[#allocation3 + $0x3d0] sm:$0xff]
        %v1766 = vld [vmem:[#allocation3 + $0x3d8] sm:$0xff]
        %v1767 = vld [vmem:[#allocation3 + $0x3e0] sm:$0xff]
        %v1768 = vld [vmem:[#allocation3 + $0x3e8] sm:$0xff]
        %v1769 = vld [vmem:[#allocation3 + $0x3f0] sm:$0xff]
        %v1770 = vld [vmem:[#allocation3 + $0x3f8] sm:$0xff]
        %v1771 = vld [vmem:[#allocation3 + $0x400] sm:$0xff]
        %v1772 = vld [vmem:[#allocation3 + $0x408] sm:$0xff]
        %v1773 = vld [vmem:[#allocation3 + $0x410] sm:$0xff]
        %v1774 = vld [vmem:[#allocation3 + $0x418] sm:$0xff]
        %v1775 = vld [vmem:[#allocation3 + $0x420] sm:$0xff]
        %v1776 = vld [vmem:[#allocation3 + $0x428] sm:$0xff]
        %v1777 = vld [vmem:[#allocation3 + $0x430] sm:$0xff]
        %v1778 = vld [vmem:[#allocation3 + $0x438] sm:$0xff]
        %v1779 = vld [vmem:[#allocation3 + $0x440] sm:$0xff]
        %v1780 = vld [vmem:[#allocation3 + $0x448] sm:$0xff]
        %v1781 = vld [vmem:[#allocation3 + $0x450] sm:$0xff]
        %v1782 = vld [vmem:[#allocation3 + $0x458] sm:$0xff]
        %v1783 = vld [vmem:[#allocation3 + $0x460] sm:$0xff]
        %v1784 = vld [vmem:[#allocation3 + $0x468] sm:$0xff]
        %v1785 = vld [vmem:[#allocation3 + $0x470] sm:$0xff]
        %v1786 = vld [vmem:[#allocation3 + $0x478] sm:$0xff]
        %v1787 = vld [vmem:[#allocation3 + $0x480] sm:$0xff]
        %v1788 = vld [vmem:[#allocation3 + $0x488] sm:$0xff]
        %v1789 = vld [vmem:[#allocation3 + $0x490] sm:$0xff]
        %v1790 = vld [vmem:[#allocation3 + $0x498] sm:$0xff]
        %v1791 = vld [vmem:[#allocation3 + $0x4a0] sm:$0xff]
        %v1792 = vld [vmem:[#allocation3 + $0x4a8] sm:$0xff]
        %v1793 = vld [vmem:[#allocation3 + $0x4b0] sm:$0xff]
        %v1794 = vld [vmem:[#allocation3 + $0x4b8] sm:$0xff]
        %v1795 = vld [vmem:[#allocation3 + $0x4c0] sm:$0xff]
        %v1796 = vld [vmem:[#allocation3 + $0x4c8] sm:$0xff]
        %v1797 = vld [vmem:[#allocation3 + $0x4d0] sm:$0xff]
        %v1798 = vld [vmem:[#allocation3 + $0x4d8] sm:$0xff]
        %v1799 = vld [vmem:[#allocation3 + $0x4e0] sm:$0xff]
        %v1800 = vld [vmem:[#allocation3 + $0x4e8] sm:$0xff]
        %v1801 = vld [vmem:[#allocation3 + $0x4f0] sm:$0xff]
        %v1802 = vld [vmem:[#allocation3 + $0x4f8] sm:$0xff]
        %v1803 = vld [vmem:[#allocation3 + $0x500] sm:$0xff]
        %v1804 = vld [vmem:[#allocation3 + $0x508] sm:$0xff]
        %v1805 = vld [vmem:[#allocation3 + $0x510] sm:$0xff]
        %v1806 = vld [vmem:[#allocation3 + $0x518] sm:$0xff]
        %v1807 = vld [vmem:[#allocation3 + $0x520] sm:$0xff]
        %v1808 = vld [vmem:[#allocation3 + $0x528] sm:$0xff]
        %v1809 = vld [vmem:[#allocation3 + $0x530] sm:$0xff]
        %v1810 = vld [vmem:[#allocation3 + $0x538] sm:$0xff]
        %v1811 = vld [vmem:[#allocation3 + $0x540] sm:$0xff]
        %v1812 = vld [vmem:[#allocation3 + $0x548] sm:$0xff]
        %v1813 = vld [vmem:[#allocation3 + $0x550] sm:$0xff]
        %v1814 = vld [vmem:[#allocation3 + $0x558] sm:$0xff]
        %v1815 = vld [vmem:[#allocation3 + $0x560] sm:$0xff]
        %v1816 = vld [vmem:[#allocation3 + $0x568] sm:$0xff]
        %v1817 = vld [vmem:[#allocation3 + $0x570] sm:$0xff]
        %v1818 = vld [vmem:[#allocation3 + $0x578] sm:$0xff]
        %v1819 = vld [vmem:[#allocation3 + $0x580] sm:$0xff]
        %v1820 = vld [vmem:[#allocation3 + $0x588] sm:$0xff]
        %v1821 = vld [vmem:[#allocation3 + $0x590] sm:$0xff]
        %v1822 = vld [vmem:[#allocation3 + $0x598] sm:$0xff]
        %v1823 = vld [vmem:[#allocation3 + $0x5a0] sm:$0xff]
        %v1824 = vld [vmem:[#allocation3 + $0x5a8] sm:$0xff]
        %v1825 = vld [vmem:[#allocation3 + $0x5b0] sm:$0xff]
        %v1826 = vld [vmem:[#allocation3 + $0x5b8] sm:$0xff]
        %v1827 = vld [vmem:[#allocation3 + $0x5c0] sm:$0xff]
        %v1828 = vld [vmem:[#allocation3 + $0x5c8] sm:$0xff]
        %v1829 = vld [vmem:[#allocation3 + $0x5d0] sm:$0xff]
        %v1830 = vld [vmem:[#allocation3 + $0x5d8] sm:$0xff]
        %v1831 = vld [vmem:[#allocation3 + $0x5e0] sm:$0xff]
        %v1832 = vld [vmem:[#allocation3 + $0x5e8] sm:$0xff]
        %v1833 = vld [vmem:[#allocation3 + $0x5f0] sm:$0xff]
        %v1834 = vld [vmem:[#allocation3 + $0x5f8] sm:$0xff]
        %v1835 = vld [vmem:[#allocation3 + $0x600] sm:$0xff]
        %v1836 = vld [vmem:[#allocation3 + $0x608] sm:$0xff]
        %v1837 = vld [vmem:[#allocation3 + $0x610] sm:$0xff]
        %v1838 = vld [vmem:[#allocation3 + $0x618] sm:$0xff]
        %v1839 = vld [vmem:[#allocation3 + $0x620] sm:$0xff]
        %v1840 = vld [vmem:[#allocation3 + $0x628] sm:$0xff]
        %v1841 = vld [vmem:[#allocation3 + $0x630] sm:$0xff]
        %v1842 = vld [vmem:[#allocation3 + $0x638] sm:$0xff]
        %v1843 = vld [vmem:[#allocation3 + $0x640] sm:$0xff]
        %v1844 = vld [vmem:[#allocation3 + $0x648] sm:$0xff]
        %v1845 = vld [vmem:[#allocation3 + $0x650] sm:$0xff]
        %v1846 = vld [vmem:[#allocation3 + $0x658] sm:$0xff]
        %v1847 = vld [vmem:[#allocation3 + $0x660] sm:$0xff]
        %v1848 = vld [vmem:[#allocation3 + $0x668] sm:$0xff]
        %v1849 = vld [vmem:[#allocation3 + $0x670] sm:$0xff]
        %v1850 = vld [vmem:[#allocation3 + $0x678] sm:$0xff]
        %v1851 = vld [vmem:[#allocation3 + $0x680] sm:$0xff]
        %v1852 = vld [vmem:[#allocation3 + $0x688] sm:$0xff]
        %v1853 = vld [vmem:[#allocation3 + $0x690] sm:$0xff]
        %v1854 = vld [vmem:[#allocation3 + $0x698] sm:$0xff]
        %v1855 = vld [vmem:[#allocation3 + $0x6a0] sm:$0xff]
        %v1856 = vld [vmem:[#allocation3 + $0x6a8] sm:$0xff]
        %v1857 = vld [vmem:[#allocation3 + $0x6b0] sm:$0xff]
        %v1858 = vld [vmem:[#allocation3 + $0x6b8] sm:$0xff]
        %v1859 = vld [vmem:[#allocation3 + $0x6c0] sm:$0xff]
        %v1860 = vld [vmem:[#allocation3 + $0x6c8] sm:$0xff]
        %v1861 = vld [vmem:[#allocation3 + $0x6d0] sm:$0xff]
        %v1862 = vld [vmem:[#allocation3 + $0x6d8] sm:$0xff]
        %v1863 = vld [vmem:[#allocation3 + $0x6e0] sm:$0xff]
        %v1864 = vld [vmem:[#allocation3 + $0x6e8] sm:$0xff]
        %v1865 = vld [vmem:[#allocation3 + $0x6f0] sm:$0xff]
        %v1866 = vld [vmem:[#allocation3 + $0x6f8] sm:$0xff]
        %v1867 = vld [vmem:[#allocation3 + $0x700] sm:$0xff]
        %v1868 = vld [vmem:[#allocation3 + $0x708] sm:$0xff]
        %v1869 = vld [vmem:[#allocation3 + $0x710] sm:$0xff]
        %v1870 = vld [vmem:[#allocation3 + $0x718] sm:$0xff]
        %v1871 = vld [vmem:[#allocation3 + $0x720] sm:$0xff]
        %v1872 = vld [vmem:[#allocation3 + $0x728] sm:$0xff]
        %v1873 = vld [vmem:[#allocation3 + $0x730] sm:$0xff]
        %v1874 = vld [vmem:[#allocation3 + $0x738] sm:$0xff]
        %v1875 = vld [vmem:[#allocation3 + $0x740] sm:$0xff]
        %v1876 = vld [vmem:[#allocation3 + $0x748] sm:$0xff]
        %v1877 = vld [vmem:[#allocation3 + $0x750] sm:$0xff]
        %v1878 = vld [vmem:[#allocation3 + $0x758] sm:$0xff]
        %v1879 = vld [vmem:[#allocation3 + $0x760] sm:$0xff]
        %v1880 = vld [vmem:[#allocation3 + $0x768] sm:$0xff]
        %v1881 = vld [vmem:[#allocation3 + $0x770] sm:$0xff]
        %v1882 = vld [vmem:[#allocation3 + $0x778] sm:$0xff]
        %v1883 = vld [vmem:[#allocation3 + $0x780] sm:$0xff]
        %v1884 = vld [vmem:[#allocation3 + $0x788] sm:$0xff]
        %v1885 = vld [vmem:[#allocation3 + $0x790] sm:$0xff]
        %v1886 = vld [vmem:[#allocation3 + $0x798] sm:$0xff]
        %v1887 = vld [vmem:[#allocation3 + $0x7a0] sm:$0xff]
        %v1888 = vld [vmem:[#allocation3 + $0x7a8] sm:$0xff]
        %v1889 = vld [vmem:[#allocation3 + $0x7b0] sm:$0xff]
        %v1890 = vld [vmem:[#allocation3 + $0x7b8] sm:$0xff]
        %v1891 = vld [vmem:[#allocation3 + $0x7c0] sm:$0xff]
        %v1892 = vld [vmem:[#allocation3 + $0x7c8] sm:$0xff]
        %v1893 = vld [vmem:[#allocation3 + $0x7d0] sm:$0xff]
        %v1894 = vld [vmem:[#allocation3 + $0x7d8] sm:$0xff]
        %v1895 = vld [vmem:[#allocation3 + $0x7e0] sm:$0xff]
        %v1896 = vld [vmem:[#allocation3 + $0x7e8] sm:$0xff]
        %v1897 = vld [vmem:[#allocation3 + $0x7f0] sm:$0xff]
        %v1898 = vld [vmem:[#allocation3 + $0x7f8] sm:$0xff]
        %v1899 = vld [vmem:[#allocation3 + $0x800] sm:$0xff]
        %v1900 = vld [vmem:[#allocation3 + $0x808] sm:$0xff]
        %v1901 = vld [vmem:[#allocation3 + $0x810] sm:$0xff]
        %v1902 = vld [vmem:[#allocation3 + $0x818] sm:$0xff]
        %v1903 = vld [vmem:[#allocation3 + $0x820] sm:$0xff]
        %v1904 = vld [vmem:[#allocation3 + $0x828] sm:$0xff]
        %v1905 = vld [vmem:[#allocation3 + $0x830] sm:$0xff]
        %v1906 = vld [vmem:[#allocation3 + $0x838] sm:$0xff]
        %v1907 = vld [vmem:[#allocation3 + $0x840] sm:$0xff]
        %v1908 = vld [vmem:[#allocation3 + $0x848] sm:$0xff]
        %v1909 = vld [vmem:[#allocation3 + $0x850] sm:$0xff]
        %v1910 = vld [vmem:[#allocation3 + $0x858] sm:$0xff]
        %v1911 = vld [vmem:[#allocation3 + $0x860] sm:$0xff]
        %v1912 = vld [vmem:[#allocation3 + $0x868] sm:$0xff]
        %v1913 = vld [vmem:[#allocation3 + $0x870] sm:$0xff]
        %v1914 = vld [vmem:[#allocation3 + $0x878] sm:$0xff]
        %v1915 = vld [vmem:[#allocation3 + $0x880] sm:$0xff]
        %v1916 = vld [vmem:[#allocation3 + $0x888] sm:$0xff]
        %v1917 = vld [vmem:[#allocation3 + $0x890] sm:$0xff]
        %v1918 = vld [vmem:[#allocation3 + $0x898] sm:$0xff]
        %v1919 = vld [vmem:[#allocation3 + $0x8a0] sm:$0xff]
        %v1920 = vld [vmem:[#allocation3 + $0x8a8] sm:$0xff]
        %v1921 = vld [vmem:[#allocation3 + $0x8b0] sm:$0xff]
        %v1922 = vld [vmem:[#allocation3 + $0x8b8] sm:$0xff]
        %v1923 = vld [vmem:[#allocation3 + $0x8c0] sm:$0xff]
        %v1924 = vld [vmem:[#allocation3 + $0x8c8] sm:$0xff]
        %v1925 = vld [vmem:[#allocation3 + $0x8d0] sm:$0xff]
        %v1926 = vld [vmem:[#allocation3 + $0x8d8] sm:$0xff]
        %v1927 = vld [vmem:[#allocation3 + $0x8e0] sm:$0xff]
        %v1928 = vld [vmem:[#allocation3 + $0x8e8] sm:$0xff]
        %v1929 = vld [vmem:[#allocation3 + $0x8f0] sm:$0xff]
        %v1930 = vld [vmem:[#allocation3 + $0x8f8] sm:$0xff]
        %v1931 = vld [vmem:[%s2] sm:$0xff]
        %v1932 = vld [vmem:[%s2 + $0x8] sm:$0xff]
        %v1933 = vld [vmem:[%s2 + $0x10] sm:$0xff]
        %v1934 = vld [vmem:[%s2 + $0x18] sm:$0xff]
        %v1935 = vld [vmem:[%s2 + $0x20] sm:$0xff]
        %v1936 = vld [vmem:[%s2 + $0x28] sm:$0xff]
        %v1937 = vld [vmem:[%s2 + $0x30] sm:$0xff]
        %v1938 = vld [vmem:[%s2 + $0x38] sm:$0xff]
        %v1939 = vld [vmem:[%s2 + $0x40] sm:$0xff]
        %v1940 = vld [vmem:[%s2 + $0x48] sm:$0xff]
        %v1941 = vld [vmem:[%s2 + $0x50] sm:$0xff]
        %v1942 = vld [vmem:[%s2 + $0x58] sm:$0xff]
        %v1943 = vld [vmem:[%s2 + $0x60] sm:$0xff]
        %v1944 = vld [vmem:[%s2 + $0x68] sm:$0xff]
        %v1945 = vld [vmem:[%s2 + $0x70] sm:$0xff]
        %v1946 = vld [vmem:[%s2 + $0x78] sm:$0xff]
        %v1947 = vld [vmem:[%s2 + $0x80] sm:$0xff]
        %v1948 = vld [vmem:[%s2 + $0x88] sm:$0xff]
        %v1949 = vld [vmem:[%s2 + $0x90] sm:$0xff]
        %v1950 = vld [vmem:[%s2 + $0x98] sm:$0xff]
        %v1951 = vld [vmem:[%s2 + $0xa0] sm:$0xff]
        %v1952 = vld [vmem:[%s2 + $0xa8] sm:$0xff]
        %v1953 = vld [vmem:[%s2 + $0xb0] sm:$0xff]
        %v1954 = vld [vmem:[%s2 + $0xb8] sm:$0xff]
        %v1955 = vld [vmem:[%s2 + $0xc0] sm:$0xff]
        %v1956 = vld [vmem:[%s2 + $0xc8] sm:$0xff]
        %v1957 = vld [vmem:[%s2 + $0xd0] sm:$0xff]
        %v1958 = vld [vmem:[%s2 + $0xd8] sm:$0xff]
        %v1959 = vld [vmem:[%s2 + $0xe0] sm:$0xff]
        %v1960 = vld [vmem:[%s2 + $0xe8] sm:$0xff]
        %v1961 = vld [vmem:[%s2 + $0xf0] sm:$0xff]
        %v1962 = vld [vmem:[%s2 + $0xf8] sm:$0xff]
        %v1963 = vld [vmem:[%s2 + $0x100] sm:$0xff]
        %v1964 = vld [vmem:[%s2 + $0x108] sm:$0xff]
        %v1965 = vld [vmem:[%s2 + $0x110] sm:$0xff]
        %v1966 = vld [vmem:[%s2 + $0x118] sm:$0xff]
        %v1967 = vld [vmem:[%s2 + $0x120] sm:$0xff]
        %v1968 = vld [vmem:[%s2 + $0x128] sm:$0xff]
        %v1969 = vld [vmem:[%s2 + $0x130] sm:$0xff]
        %v1970 = vld [vmem:[%s2 + $0x138] sm:$0xff]
        %v1971 = vld [vmem:[%s2 + $0x140] sm:$0xff]
        %v1972 = vld [vmem:[%s2 + $0x148] sm:$0xff]
        %v1973 = vld [vmem:[%s2 + $0x150] sm:$0xff]
        %v1974 = vld [vmem:[%s2 + $0x158] sm:$0xff]
        %v1975 = vld [vmem:[%s2 + $0x160] sm:$0xff]
        %v1976 = vld [vmem:[%s2 + $0x168] sm:$0xff]
        %v1977 = vld [vmem:[%s2 + $0x170] sm:$0xff]
        %v1978 = vld [vmem:[%s2 + $0x178] sm:$0xff]
        %v1979 = vld [vmem:[%s2 + $0x180] sm:$0xff]
        %v1980 = vld [vmem:[%s2 + $0x188] sm:$0xff]
        %v1981 = vld [vmem:[%s2 + $0x190] sm:$0xff]
        %v1982 = vld [vmem:[%s2 + $0x198] sm:$0xff]
        %v1983 = vld [vmem:[%s2 + $0x1a0] sm:$0xff]
        %v1984 = vld [vmem:[%s2 + $0x1a8] sm:$0xff]
        %v1985 = vld [vmem:[%s2 + $0x1b0] sm:$0xff]
        %v1986 = vld [vmem:[%s2 + $0x1b8] sm:$0xff]
        %v1987 = vld [vmem:[%s2 + $0x1c0] sm:$0xff]
        %v1988 = vld [vmem:[%s2 + $0x1c8] sm:$0xff]
        %v1989 = vld [vmem:[%s2 + $0x1d0] sm:$0xff]
        %v1990 = vld [vmem:[%s2 + $0x1d8] sm:$0xff]
        %v1991 = vld [vmem:[%s2 + $0x1e0] sm:$0xff]
        %v1992 = vld [vmem:[%s2 + $0x1e8] sm:$0xff]
        %v1993 = vld [vmem:[%s2 + $0x1f0] sm:$0xff]
        %v1994 = vld [vmem:[%s2 + $0x1f8] sm:$0xff]
        %v1995 = vld [vmem:[%s2 + $0x200] sm:$0xff]
        %v1996 = vld [vmem:[%s2 + $0x208] sm:$0xff]
        %v1997 = vld [vmem:[%s2 + $0x210] sm:$0xff]
        %v1998 = vld [vmem:[%s2 + $0x218] sm:$0xff]
        %v1999 = vld [vmem:[%s2 + $0x220] sm:$0xff]
        %v2000 = vld [vmem:[%s2 + $0x228] sm:$0xff]
        %v2001 = vld [vmem:[%s2 + $0x230] sm:$0xff]
        %v2002 = vld [vmem:[%s2 + $0x238] sm:$0xff]
        %v2003 = vld [vmem:[%s2 + $0x240] sm:$0xff]
        %v2004 = vld [vmem:[%s2 + $0x248] sm:$0xff]
        %v2005 = vld [vmem:[%s2 + $0x250] sm:$0xff]
        %v2006 = vld [vmem:[%s2 + $0x258] sm:$0xff]
        %v2007 = vld [vmem:[%s2 + $0x260] sm:$0xff]
        %v2008 = vld [vmem:[%s2 + $0x268] sm:$0xff]
        %v2009 = vld [vmem:[%s2 + $0x270] sm:$0xff]
        %v2010 = vld [vmem:[%s2 + $0x278] sm:$0xff]
        %v2011 = vld [vmem:[%s2 + $0x280] sm:$0xff]
        %v2012 = vld [vmem:[%s2 + $0x288] sm:$0xff]
        %v2013 = vld [vmem:[%s2 + $0x290] sm:$0xff]
        %v2014 = vld [vmem:[%s2 + $0x298] sm:$0xff]
        %v2015 = vld [vmem:[%s2 + $0x2a0] sm:$0xff]
        %v2016 = vld [vmem:[%s2 + $0x2a8] sm:$0xff]
        %v2017 = vld [vmem:[%s2 + $0x2b0] sm:$0xff]
        %v2018 = vld [vmem:[%s2 + $0x2b8] sm:$0xff]
        %v2019 = vld [vmem:[%s2 + $0x2c0] sm:$0xff]
        %v2020 = vld [vmem:[%s2 + $0x2c8] sm:$0xff]
        %v2021 = vld [vmem:[%s2 + $0x2d0] sm:$0xff]
        %v2022 = vld [vmem:[%s2 + $0x2d8] sm:$0xff]
        %v2023 = vld [vmem:[%s2 + $0x2e0] sm:$0xff]
        %v2024 = vld [vmem:[%s2 + $0x2e8] sm:$0xff]
        %v2025 = vld [vmem:[%s2 + $0x2f0] sm:$0xff]
        %v2026 = vld [vmem:[%s2 + $0x2f8] sm:$0xff]
        %v2027 = vld [vmem:[%s2 + $0x300] sm:$0xff]
        %v2028 = vld [vmem:[%s2 + $0x308] sm:$0xff]
        %v2029 = vld [vmem:[%s2 + $0x310] sm:$0xff]
        %v2030 = vld [vmem:[%s2 + $0x318] sm:$0xff]
        %v2031 = vld [vmem:[%s2 + $0x320] sm:$0xff]
        %v2032 = vld [vmem:[%s2 + $0x328] sm:$0xff]
        %v2033 = vld [vmem:[%s2 + $0x330] sm:$0xff]
        %v2034 = vld [vmem:[%s2 + $0x338] sm:$0xff]
        %v2035 = vld [vmem:[%s2 + $0x340] sm:$0xff]
        %v2036 = vld [vmem:[%s2 + $0x348] sm:$0xff]
        %v2037 = vld [vmem:[%s2 + $0x350] sm:$0xff]
        %v2038 = vld [vmem:[%s2 + $0x358] sm:$0xff]
        %v2039 = vld [vmem:[%s2 + $0x360] sm:$0xff]
        %v2040 = vld [vmem:[%s2 + $0x368] sm:$0xff]
        %v2041 = vld [vmem:[%s2 + $0x370] sm:$0xff]
        %v2042 = vld [vmem:[%s2 + $0x378] sm:$0xff]
        %v2043 = vld [vmem:[%s2 + $0x380] sm:$0xff]
        %v2044 = vld [vmem:[%s2 + $0x388] sm:$0xff]
        %v2045 = vld [vmem:[%s2 + $0x390] sm:$0xff]
        %v2046 = vld [vmem:[%s2 + $0x398] sm:$0xff]
        %v2047 = vld [vmem:[%s2 + $0x3a0] sm:$0xff]
        %v2048 = vld [vmem:[%s2 + $0x3a8] sm:$0xff]
        %v2049 = vld [vmem:[%s2 + $0x3b0] sm:$0xff]
        %v2050 = vld [vmem:[%s2 + $0x3b8] sm:$0xff]
        %v2051 = vld [vmem:[%s2 + $0x3c0] sm:$0xff]
        %v2052 = vld [vmem:[%s2 + $0x3c8] sm:$0xff]
        %v2053 = vld [vmem:[%s2 + $0x3d0] sm:$0xff]
        %v2054 = vld [vmem:[%s2 + $0x3d8] sm:$0xff]
        %v2055 = vld [vmem:[%s2 + $0x3e0] sm:$0xff]
        %v2056 = vld [vmem:[%s2 + $0x3e8] sm:$0xff]
        %v2057 = vld [vmem:[%s2 + $0x3f0] sm:$0xff]
        %v2058 = vld [vmem:[%s2 + $0x3f8] sm:$0xff]
        %v2059 = vld [vmem:[%s2 + $0x400] sm:$0xff]
        %v2060 = vld [vmem:[%s2 + $0x408] sm:$0xff]
        %v2061 = vld [vmem:[%s2 + $0x410] sm:$0xff]
        %v2062 = vld [vmem:[%s2 + $0x418] sm:$0xff]
        %v2063 = vld [vmem:[%s2 + $0x420] sm:$0xff]
        %v2064 = vld [vmem:[%s2 + $0x428] sm:$0xff]
        %v2065 = vld [vmem:[%s2 + $0x430] sm:$0xff]
        %v2066 = vld [vmem:[%s2 + $0x438] sm:$0xff]
        %v2067 = vld [vmem:[%s2 + $0x440] sm:$0xff]
        %v2068 = vld [vmem:[%s2 + $0x448] sm:$0xff]
        %v2069 = vld [vmem:[%s2 + $0x450] sm:$0xff]
        %v2070 = vld [vmem:[%s2 + $0x458] sm:$0xff]
        %v2071 = vld [vmem:[%s2 + $0x460] sm:$0xff]
        %v2072 = vld [vmem:[%s2 + $0x468] sm:$0xff]
        %v2073 = vld [vmem:[%s2 + $0x470] sm:$0xff]
        %v2074 = vld [vmem:[%s2 + $0x478] sm:$0xff]
        %v2075 = vld [vmem:[%s3] sm:$0x1]
        %v2077 = vlaneseq
        %v2078 = vshrl.u32 %v2077, 7
        %v2079 = vsub.s32 0, %v2078
        %v2080 = vrot.slane %v2075, %v2079
        %2082 = vmatprep.subr.mxu0 0.0
        %2083 = vmatpush1.msra.mxu0 %v1931
        %2084 = vmatprep.subr.mxu0 0.0
        %2085 = vmatpush1.msra.mxu0 %v1932
        %2086 = vmatprep.subr.mxu0 0.0
        %2087 = vmatpush1.msra.mxu0 %v1933
        %2088 = vmatprep.subr.mxu0 0.0
        %2089 = vmatpush1.msra.mxu0 %v1934
        %2090 = vmatprep.subr.mxu0 0.0
        %2091 = vmatpush1.msra.mxu0 %v1935
        %2092 = vmatprep.subr.mxu0 0.0
        %2093 = vmatpush1.msra.mxu0 %v1936
        %2094 = vmatprep.subr.mxu0 0.0
        %2095 = vmatpush1.msra.mxu0 %v1937
        %2096 = vmatprep.subr.mxu0 0.0
        %2097 = vmatpush1.msra.mxu0 %v1938
        %2098 = vmatprep.subr.mxu0 0.0
        %2099 = vmatpush1.msra.mxu0 %v1939
        %2100 = vmatprep.subr.mxu0 0.0
        %2101 = vmatpush1.msra.mxu0 %v1940
        %2102 = vmatprep.subr.mxu0 0.0
        %2103 = vmatpush1.msra.mxu0 %v1941
        %2104 = vmatprep.subr.mxu0 0.0
        %2105 = vmatpush1.msra.mxu0 %v1942
        %2106 = vmatprep.subr.mxu0 0.0
        %2107 = vmatpush1.msra.mxu0 %v1943
        %2108 = vmatprep.subr.mxu0 0.0
        %2109 = vmatpush1.msra.mxu0 %v1944
        %2110 = vmatprep.subr.mxu0 0.0
        %2111 = vmatpush1.msra.mxu0 %v1945
        %2112 = vmatprep.subr.mxu0 0.0
        %2113 = vmatpush1.msra.mxu0 %v1946
        %2114 = vmatprep.subr.mxu0 0.0
        %2115 = vmatpush1.msra.mxu0 %v1947
        %2116 = vmatprep.subr.mxu0 0.0
        %2117 = vmatpush1.msra.mxu0 %v1948
        %2118 = vmatprep.subr.mxu0 0.0
        %2119 = vmatpush1.msra.mxu0 %v1949
        %2120 = vmatprep.subr.mxu0 0.0
        %2121 = vmatpush1.msra.mxu0 %v1950
        %2122 = vmatprep.subr.mxu0 0.0
        %2123 = vmatpush1.msra.mxu0 %v1951
        %2124 = vmatprep.subr.mxu0 0.0
        %2125 = vmatpush1.msra.mxu0 %v1952
        %2126 = vmatprep.subr.mxu0 0.0
        %2127 = vmatpush1.msra.mxu0 %v1953
        %2128 = vmatprep.subr.mxu0 0.0
        %2129 = vmatpush1.msra.mxu0 %v1954
        %2130 = vmatprep.subr.mxu0 0.0
        %2131 = vmatpush1.msra.mxu0 %v1955
        %2132 = vmatprep.subr.mxu0 0.0
        %2133 = vmatpush1.msra.mxu0 %v1956
        %2134 = vmatprep.subr.mxu0 0.0
        %2135 = vmatpush1.msra.mxu0 %v1957
        %2136 = vmatprep.subr.mxu0 0.0
        %2137 = vmatpush1.msra.mxu0 %v1958
        %2138 = vmatprep.subr.mxu0 0.0
        %2139 = vmatpush1.msra.mxu0 %v1959
        %2140 = vmatprep.subr.mxu0 0.0
        %2141 = vmatpush1.msra.mxu0 %v1960
        %2142 = vmatprep.subr.mxu0 0.0
        %2143 = vmatpush1.msra.mxu0 %v1961
        %2144 = vmatprep.subr.mxu0 0.0
        %2145 = vmatpush1.msra.mxu0 %v1962
        %2146 = vmatprep.mubr.f32.mxu0 %v1644
        %2147 = vmatmul.mubr.f32.gmra.mrb[0].mxu0 %v1643
        %v2148 = vpop.f32.mrb[0].mxu0
        %v2149 = vadd.f32 %v2080, %v2148
        %v2150 = vpop.f32.mrb[0].mxu0
        %2151 = vmatprep.mubr.f32.mxu0 %v1653
        %2152 = vmatmul.mubr.f32.gmra.mrb[0].mxu0 %v1652
        %v2153 = vpop.f32.mrb[0].mxu0
        %v2154 = vadd.f32 %v2080, %v2153
        %v2155 = vpop.f32.mrb[0].mxu0
        %2156 = vmatprep.mubr.f32.mxu0 %v1662
        %2157 = vmatmul.mubr.f32.gmra.mrb[0].mxu0 %v1661
        %v2158 = vpop.f32.mrb[0].mxu0
        %v2159 = vadd.f32 %v2080, %v2158
        %v2160 = vpop.f32.mrb[0].mxu0
        %2161 = vmatprep.mubr.f32.mxu0 %v1671
        %2162 = vmatmul.mubr.f32.gmra.mrb[0].mxu0 %v1670
        %v2163 = vpop.f32.mrb[0].mxu0
        %v2164 = vadd.f32 %v2080, %v2163
        %v2165 = vpop.f32.mrb[0].mxu0
        %2166 = vmatprep.mubr.f32.mxu0 %v1680
        %2167 = vmatmul.mubr.f32.gmra.mrb[0].mxu0 %v1679
        %v2168 = vpop.f32.mrb[0].mxu0
        %v2169 = vadd.f32 %v2080, %v2168
        %v2170 = vpop.f32.mrb[0].mxu0
        %2171 = vmatprep.mubr.f32.mxu0 %v1689
        %2172 = vmatmul.mubr.f32.gmra.mrb[0].mxu0 %v1688
        %v2173 = vpop.f32.mrb[0].mxu0
        %v2174 = vadd.f32 %v2080, %v2173
        %v2175 = vpop.f32.mrb[0].mxu0
        %2176 = vmatprep.mubr.f32.mxu0 %v1698
        %2177 = vmatmul.mubr.f32.gmra.mrb[0].mxu0 %v1697
        %v2178 = vpop.f32.mrb[0].mxu0
        %v2179 = vadd.f32 %v2080, %v2178
        %v2180 = vpop.f32.mrb[0].mxu0
        %2181 = vmatprep.mubr.f32.mxu0 %v1707
        %2182 = vmatmul.mubr.f32.gmra.mrb[0].mxu0 %v1706
        %v2183 = vpop.f32.mrb[0].mxu0
        %v2184 = vadd.f32 %v2080, %v2183
        %v2185 = vpop.f32.mrb[0].mxu0
        %2186 = vmatprep.mubr.f32.mxu0 %v1716
        %2187 = vmatmul.mubr.f32.gmra.mrb[0].mxu0 %v1715
        %v2188 = vpop.f32.mrb[0].mxu0
        %v2189 = vadd.f32 %v2080, %v2188
        %v2190 = vpop.f32.mrb[0].mxu0
        %2191 = vmatprep.mubr.f32.mxu0 %v1725
        %2192 = vmatmul.mubr.f32.gmra.mrb[0].mxu0 %v1724
        %v2193 = vpop.f32.mrb[0].mxu0
        %v2194 = vadd.f32 %v2080, %v2193
        %v2195 = vpop.f32.mrb[0].mxu0
        %2196 = vmatprep.mubr.f32.mxu0 %v1734
        %2197 = vmatmul.mubr.f32.gmra.mrb[0].mxu0 %v1733
        %v2198 = vpop.f32.mrb[0].mxu0
        %v2199 = vadd.f32 %v2080, %v2198
        %v2200 = vpop.f32.mrb[0].mxu0
        %2201 = vmatprep.mubr.f32.mxu0 %v1743
        %2202 = vmatmul.mubr.f32.gmra.mrb[0].mxu0 %v1742
        %v2203 = vpop.f32.mrb[0].mxu0
        %v2204 = vadd.f32 %v2080, %v2203
        %v2205 = vpop.f32.mrb[0].mxu0
        %2206 = vmatprep.mubr.f32.mxu0 %v1752
        %2207 = vmatmul.mubr.f32.gmra.mrb[0].mxu0 %v1751
        %v2208 = vpop.f32.mrb[0].mxu0
        %v2209 = vadd.f32 %v2080, %v2208
        %v2210 = vpop.f32.mrb[0].mxu0
        %2211 = vmatprep.mubr.f32.mxu0 %v1761
        %2212 = vmatmul.mubr.f32.gmra.mrb[0].mxu0 %v1760
        %v2213 = vpop.f32.mrb[0].mxu0
        %v2214 = vadd.f32 %v2080, %v2213
        %v2215 = vpop.f32.mrb[0].mxu0
        %2216 = vmatprep.mubr.f32.mxu0 %v1770
        %2217 = vmatmul.mubr.f32.gmra.mrb[0].mxu0 %v1769
        %v2218 = vpop.f32.mrb[0].mxu0
        %v2219 = vadd.f32 %v2080, %v2218
        %v2220 = vpop.f32.mrb[0].mxu0
        %2221 = vmatprep.mubr.f32.mxu0 %v1779
        %2222 = vmatmul.mubr.f32.gmra.mrb[0].mxu0 %v1778
        %v2223 = vpop.f32.mrb[0].mxu0
        %v2224 = vadd.f32 %v2080, %v2223
        %v2225 = vpop.f32.mrb[0].mxu0
        %2226 = vmatprep.mubr.f32.mxu0 %v1788
        %2227 = vmatmul.mubr.f32.gmra.mrb[0].mxu0 %v1787
        %v2228 = vpop.f32.mrb[0].mxu0
        %v2229 = vadd.f32 %v2080, %v2228
        %v2230 = vpop.f32.mrb[0].mxu0
        %2231 = vmatprep.mubr.f32.mxu0 %v1797
        %2232 = vmatmul.mubr.f32.gmra.mrb[0].mxu0 %v1796
        %v2233 = vpop.f32.mrb[0].mxu0
        %v2234 = vadd.f32 %v2080, %v2233
        %v2235 = vpop.f32.mrb[0].mxu0
        %2236 = vmatprep.mubr.f32.mxu0 %v1806
        %2237 = vmatmul.mubr.f32.gmra.mrb[0].mxu0 %v1805
        %v2238 = vpop.f32.mrb[0].mxu0
        %v2239 = vadd.f32 %v2080, %v2238
        %v2240 = vpop.f32.mrb[0].mxu0
        %2241 = vmatprep.mubr.f32.mxu0 %v1815
        %2242 = vmatmul.mubr.f32.gmra.mrb[0].mxu0 %v1814
        %v2243 = vpop.f32.mrb[0].mxu0
        %v2244 = vadd.f32 %v2080, %v2243
        %v2245 = vpop.f32.mrb[0].mxu0
        %2246 = vmatprep.mubr.f32.mxu0 %v1824
        %2247 = vmatmul.mubr.f32.gmra.mrb[0].mxu0 %v1823
        %v2248 = vpop.f32.mrb[0].mxu0
        %v2249 = vadd.f32 %v2080, %v2248
        %v2250 = vpop.f32.mrb[0].mxu0
        %2251 = vmatprep.mubr.f32.mxu0 %v1833
        %2252 = vmatmul.mubr.f32.gmra.mrb[0].mxu0 %v1832
        %v2253 = vpop.f32.mrb[0].mxu0
        %v2254 = vadd.f32 %v2080, %v2253
        %v2255 = vpop.f32.mrb[0].mxu0
        %2256 = vmatprep.mubr.f32.mxu0 %v1842
        %2257 = vmatmul.mubr.f32.gmra.mrb[0].mxu0 %v1841
        %v2258 = vpop.f32.mrb[0].mxu0
        %v2259 = vadd.f32 %v2080, %v2258
        %v2260 = vpop.f32.mrb[0].mxu0
        %2261 = vmatprep.mubr.f32.mxu0 %v1851
        %2262 = vmatmul.mubr.f32.gmra.mrb[0].mxu0 %v1850
        %v2263 = vpop.f32.mrb[0].mxu0
        %v2264 = vadd.f32 %v2080, %v2263
        %v2265 = vpop.f32.mrb[0].mxu0
        %2266 = vmatprep.mubr.f32.mxu0 %v1860
        %2267 = vmatmul.mubr.f32.gmra.mrb[0].mxu0 %v1859
        %v2268 = vpop.f32.mrb[0].mxu0
        %v2269 = vadd.f32 %v2080, %v2268
        %v2270 = vpop.f32.mrb[0].mxu0
        %2271 = vmatprep.mubr.f32.mxu0 %v1869
        %2272 = vmatmul.mubr.f32.gmra.mrb[0].mxu0 %v1868
        %v2273 = vpop.f32.mrb[0].mxu0
        %v2274 = vadd.f32 %v2080, %v2273
        %v2275 = vpop.f32.mrb[0].mxu0
        %2276 = vmatprep.mubr.f32.mxu0 %v1878
        %2277 = vmatmul.mubr.f32.gmra.mrb[0].mxu0 %v1877
        %v2278 = vpop.f32.mrb[0].mxu0
        %v2279 = vadd.f32 %v2080, %v2278
        %v2280 = vpop.f32.mrb[0].mxu0
        %2281 = vmatprep.mubr.f32.mxu0 %v1887
        %2282 = vmatmul.mubr.f32.gmra.mrb[0].mxu0 %v1886
        %v2283 = vpop.f32.mrb[0].mxu0
        %v2284 = vadd.f32 %v2080, %v2283
        %v2285 = vpop.f32.mrb[0].mxu0
        %2286 = vmatprep.mubr.f32.mxu0 %v1896
        %2287 = vmatmul.mubr.f32.gmra.mrb[0].mxu0 %v1895
        %v2288 = vpop.f32.mrb[0].mxu0
        %v2289 = vadd.f32 %v2080, %v2288
        %v2290 = vpop.f32.mrb[0].mxu0
        %2291 = vmatprep.mubr.f32.mxu0 %v1905
        %2292 = vmatmul.mubr.f32.gmra.mrb[0].mxu0 %v1904
        %v2293 = vpop.f32.mrb[0].mxu0
        %v2294 = vadd.f32 %v2080, %v2293
        %v2295 = vpop.f32.mrb[0].mxu0
        %2296 = vmatprep.mubr.f32.mxu0 %v1914
        %2297 = vmatmul.mubr.f32.gmra.mrb[0].mxu0 %v1913
        %v2298 = vpop.f32.mrb[0].mxu0
        %v2299 = vadd.f32 %v2080, %v2298
        %v2300 = vpop.f32.mrb[0].mxu0
        %2301 = vmatprep.mubr.f32.mxu0 %v1923
        %2302 = vmatmul.mubr.f32.gmra.mrb[0].mxu0 %v1922
        %v2303 = vpop.f32.mrb[0].mxu0
        %v2304 = vadd.f32 %v2080, %v2303
        %v2305 = vpop.f32.mrb[0].mxu0
        %2306 = vdwg.mxu0
        %2307 = vmatprep.subr.mxu0 0.0
        %2308 = vmatpush1.msra.mxu0 %v1963
        %2309 = vmatprep.subr.mxu0 0.0
        %2310 = vmatpush1.msra.mxu0 %v1964
        %2311 = vmatprep.subr.mxu0 0.0
        %2312 = vmatpush1.msra.mxu0 %v1965
        %2313 = vmatprep.subr.mxu0 0.0
        %2314 = vmatpush1.msra.mxu0 %v1966
        %2315 = vmatprep.subr.mxu0 0.0
        %2316 = vmatpush1.msra.mxu0 %v1967
        %2317 = vmatprep.subr.mxu0 0.0
        %2318 = vmatpush1.msra.mxu0 %v1968
        %2319 = vmatprep.subr.mxu0 0.0
        %2320 = vmatpush1.msra.mxu0 %v1969
        %2321 = vmatprep.subr.mxu0 0.0
        %2322 = vmatpush1.msra.mxu0 %v1970
        %2323 = vmatprep.subr.mxu0 0.0
        %2324 = vmatpush1.msra.mxu0 %v1971
        %2325 = vmatprep.subr.mxu0 0.0
        %2326 = vmatpush1.msra.mxu0 %v1972
        %2327 = vmatprep.subr.mxu0 0.0
        %2328 = vmatpush1.msra.mxu0 %v1973
        %2329 = vmatprep.subr.mxu0 0.0
        %2330 = vmatpush1.msra.mxu0 %v1974
        %2331 = vmatprep.subr.mxu0 0.0
        %2332 = vmatpush1.msra.mxu0 %v1975
        %2333 = vmatprep.subr.mxu0 0.0
        %2334 = vmatpush1.msra.mxu0 %v1976
        %2335 = vmatprep.subr.mxu0 0.0
        %2336 = vmatpush1.msra.mxu0 %v1977
        %2337 = vmatprep.subr.mxu0 0.0
        %2338 = vmatpush1.msra.mxu0 %v1978
        %2339 = vmatprep.subr.mxu0 0.0
        %2340 = vmatpush1.msra.mxu0 %v1979
        %2341 = vmatprep.subr.mxu0 0.0
        %2342 = vmatpush1.msra.mxu0 %v1980
        %2343 = vmatprep.subr.mxu0 0.0
        %2344 = vmatpush1.msra.mxu0 %v1981
        %2345 = vmatprep.subr.mxu0 0.0
        %2346 = vmatpush1.msra.mxu0 %v1982
        %2347 = vmatprep.subr.mxu0 0.0
        %2348 = vmatpush1.msra.mxu0 %v1983
        %2349 = vmatprep.subr.mxu0 0.0
        %2350 = vmatpush1.msra.mxu0 %v1984
        %2351 = vmatprep.subr.mxu0 0.0
        %2352 = vmatpush1.msra.mxu0 %v1985
        %2353 = vmatprep.subr.mxu0 0.0
        %2354 = vmatpush1.msra.mxu0 %v1986
        %2355 = vmatprep.subr.mxu0 0.0
        %2356 = vmatpush1.msra.mxu0 %v1987
        %2357 = vmatprep.subr.mxu0 0.0
        %2358 = vmatpush1.msra.mxu0 %v1988
        %2359 = vmatprep.subr.mxu0 0.0
        %2360 = vmatpush1.msra.mxu0 %v1989
        %2361 = vmatprep.subr.mxu0 0.0
        %2362 = vmatpush1.msra.mxu0 %v1990
        %2363 = vmatprep.subr.mxu0 0.0
        %2364 = vmatpush1.msra.mxu0 %v1991
        %2365 = vmatprep.subr.mxu0 0.0
        %2366 = vmatpush1.msra.mxu0 %v1992
        %2367 = vmatprep.subr.mxu0 0.0
        %2368 = vmatpush1.msra.mxu0 %v1993
        %2369 = vmatprep.subr.mxu0 0.0
        %2370 = vmatpush1.msra.mxu0 %v1994
        %2371 = vmatprep.mubr.f32.mxu0 %v1646
        %2372 = vmatmul.mubr.f32.gmra.mrb[0].mxu0 %v1645
        %v2373 = vpop.f32.mrb[0].mxu0
        %v2374 = vadd.f32 %v2149, %v2373
        %v2375 = vpop.f32.mrb[0].mxu0
        %2376 = vmatprep.mubr.f32.mxu0 %v1655
        %2377 = vmatmul.mubr.f32.gmra.mrb[0].mxu0 %v1654
        %v2378 = vpop.f32.mrb[0].mxu0
        %v2379 = vadd.f32 %v2154, %v2378
        %v2380 = vpop.f32.mrb[0].mxu0
        %2381 = vmatprep.mubr.f32.mxu0 %v1664
        %2382 = vmatmul.mubr.f32.gmra.mrb[0].mxu0 %v1663
        %v2383 = vpop.f32.mrb[0].mxu0
        %v2384 = vadd.f32 %v2159, %v2383
        %v2385 = vpop.f32.mrb[0].mxu0
        %2386 = vmatprep.mubr.f32.mxu0 %v1673
        %2387 = vmatmul.mubr.f32.gmra.mrb[0].mxu0 %v1672
        %v2388 = vpop.f32.mrb[0].mxu0
        %v2389 = vadd.f32 %v2164, %v2388
        %v2390 = vpop.f32.mrb[0].mxu0
        %2391 = vmatprep.mubr.f32.mxu0 %v1682
        %2392 = vmatmul.mubr.f32.gmra.mrb[0].mxu0 %v1681
        %v2393 = vpop.f32.mrb[0].mxu0
        %v2394 = vadd.f32 %v2169, %v2393
        %v2395 = vpop.f32.mrb[0].mxu0
        %2396 = vmatprep.mubr.f32.mxu0 %v1691
        %2397 = vmatmul.mubr.f32.gmra.mrb[0].mxu0 %v1690
        %v2398 = vpop.f32.mrb[0].mxu0
        %v2399 = vadd.f32 %v2174, %v2398
        %v2400 = vpop.f32.mrb[0].mxu0
        %2401 = vmatprep.mubr.f32.mxu0 %v1700
        %2402 = vmatmul.mubr.f32.gmra.mrb[0].mxu0 %v1699
        %v2403 = vpop.f32.mrb[0].mxu0
        %v2404 = vadd.f32 %v2179, %v2403
        %v2405 = vpop.f32.mrb[0].mxu0
        %2406 = vmatprep.mubr.f32.mxu0 %v1709
        %2407 = vmatmul.mubr.f32.gmra.mrb[0].mxu0 %v1708
        %v2408 = vpop.f32.mrb[0].mxu0
        %v2409 = vadd.f32 %v2184, %v2408
        %v2410 = vpop.f32.mrb[0].mxu0
        %2411 = vmatprep.mubr.f32.mxu0 %v1718
        %2412 = vmatmul.mubr.f32.gmra.mrb[0].mxu0 %v1717
        %v2413 = vpop.f32.mrb[0].mxu0
        %v2414 = vadd.f32 %v2189, %v2413
        %v2415 = vpop.f32.mrb[0].mxu0
        %2416 = vmatprep.mubr.f32.mxu0 %v1727
        %2417 = vmatmul.mubr.f32.gmra.mrb[0].mxu0 %v1726
        %v2418 = vpop.f32.mrb[0].mxu0
        %v2419 = vadd.f32 %v2194, %v2418
        %v2420 = vpop.f32.mrb[0].mxu0
        %2421 = vmatprep.mubr.f32.mxu0 %v1736
        %2422 = vmatmul.mubr.f32.gmra.mrb[0].mxu0 %v1735
        %v2423 = vpop.f32.mrb[0].mxu0
        %v2424 = vadd.f32 %v2199, %v2423
        %v2425 = vpop.f32.mrb[0].mxu0
        %2426 = vmatprep.mubr.f32.mxu0 %v1745
        %2427 = vmatmul.mubr.f32.gmra.mrb[0].mxu0 %v1744
        %v2428 = vpop.f32.mrb[0].mxu0
        %v2429 = vadd.f32 %v2204, %v2428
        %v2430 = vpop.f32.mrb[0].mxu0
        %2431 = vmatprep.mubr.f32.mxu0 %v1754
        %2432 = vmatmul.mubr.f32.gmra.mrb[0].mxu0 %v1753
        %v2433 = vpop.f32.mrb[0].mxu0
        %v2434 = vadd.f32 %v2209, %v2433
        %v2435 = vpop.f32.mrb[0].mxu0
        %2436 = vmatprep.mubr.f32.mxu0 %v1763
        %2437 = vmatmul.mubr.f32.gmra.mrb[0].mxu0 %v1762
        %v2438 = vpop.f32.mrb[0].mxu0
        %v2439 = vadd.f32 %v2214, %v2438
        %v2440 = vpop.f32.mrb[0].mxu0
        %2441 = vmatprep.mubr.f32.mxu0 %v1772
        %2442 = vmatmul.mubr.f32.gmra.mrb[0].mxu0 %v1771
        %v2443 = vpop.f32.mrb[0].mxu0
        %v2444 = vadd.f32 %v2219, %v2443
        %v2445 = vpop.f32.mrb[0].mxu0
        %2446 = vmatprep.mubr.f32.mxu0 %v1781
        %2447 = vmatmul.mubr.f32.gmra.mrb[0].mxu0 %v1780
        %v2448 = vpop.f32.mrb[0].mxu0
        %v2449 = vadd.f32 %v2224, %v2448
        %v2450 = vpop.f32.mrb[0].mxu0
        %2451 = vmatprep.mubr.f32.mxu0 %v1790
        %2452 = vmatmul.mubr.f32.gmra.mrb[0].mxu0 %v1789
        %v2453 = vpop.f32.mrb[0].mxu0
        %v2454 = vadd.f32 %v2229, %v2453
        %v2455 = vpop.f32.mrb[0].mxu0
        %2456 = vmatprep.mubr.f32.mxu0 %v1799
        %2457 = vmatmul.mubr.f32.gmra.mrb[0].mxu0 %v1798
        %v2458 = vpop.f32.mrb[0].mxu0
        %v2459 = vadd.f32 %v2234, %v2458
        %v2460 = vpop.f32.mrb[0].mxu0
        %2461 = vmatprep.mubr.f32.mxu0 %v1808
        %2462 = vmatmul.mubr.f32.gmra.mrb[0].mxu0 %v1807
        %v2463 = vpop.f32.mrb[0].mxu0
        %v2464 = vadd.f32 %v2239, %v2463
        %v2465 = vpop.f32.mrb[0].mxu0
        %2466 = vmatprep.mubr.f32.mxu0 %v1817
        %2467 = vmatmul.mubr.f32.gmra.mrb[0].mxu0 %v1816
        %v2468 = vpop.f32.mrb[0].mxu0
        %v2469 = vadd.f32 %v2244, %v2468
        %v2470 = vpop.f32.mrb[0].mxu0
        %2471 = vmatprep.mubr.f32.mxu0 %v1826
        %2472 = vmatmul.mubr.f32.gmra.mrb[0].mxu0 %v1825
        %v2473 = vpop.f32.mrb[0].mxu0
        %v2474 = vadd.f32 %v2249, %v2473
        %v2475 = vpop.f32.mrb[0].mxu0
        %2476 = vmatprep.mubr.f32.mxu0 %v1835
        %2477 = vmatmul.mubr.f32.gmra.mrb[0].mxu0 %v1834
        %v2478 = vpop.f32.mrb[0].mxu0
        %v2479 = vadd.f32 %v2254, %v2478
        %v2480 = vpop.f32.mrb[0].mxu0
        %2481 = vmatprep.mubr.f32.mxu0 %v1844
        %2482 = vmatmul.mubr.f32.gmra.mrb[0].mxu0 %v1843
        %v2483 = vpop.f32.mrb[0].mxu0
        %v2484 = vadd.f32 %v2259, %v2483
        %v2485 = vpop.f32.mrb[0].mxu0
        %2486 = vmatprep.mubr.f32.mxu0 %v1853
        %2487 = vmatmul.mubr.f32.gmra.mrb[0].mxu0 %v1852
        %v2488 = vpop.f32.mrb[0].mxu0
        %v2489 = vadd.f32 %v2264, %v2488
        %v2490 = vpop.f32.mrb[0].mxu0
        %2491 = vmatprep.mubr.f32.mxu0 %v1862
        %2492 = vmatmul.mubr.f32.gmra.mrb[0].mxu0 %v1861
        %v2493 = vpop.f32.mrb[0].mxu0
        %v2494 = vadd.f32 %v2269, %v2493
        %v2495 = vpop.f32.mrb[0].mxu0
        %2496 = vmatprep.mubr.f32.mxu0 %v1871
        %2497 = vmatmul.mubr.f32.gmra.mrb[0].mxu0 %v1870
        %v2498 = vpop.f32.mrb[0].mxu0
        %v2499 = vadd.f32 %v2274, %v2498
        %v2500 = vpop.f32.mrb[0].mxu0
        %2501 = vmatprep.mubr.f32.mxu0 %v1880
        %2502 = vmatmul.mubr.f32.gmra.mrb[0].mxu0 %v1879
        %v2503 = vpop.f32.mrb[0].mxu0
        %v2504 = vadd.f32 %v2279, %v2503
        %v2505 = vpop.f32.mrb[0].mxu0
        %2506 = vmatprep.mubr.f32.mxu0 %v1889
        %2507 = vmatmul.mubr.f32.gmra.mrb[0].mxu0 %v1888
        %v2508 = vpop.f32.mrb[0].mxu0
        %v2509 = vadd.f32 %v2284, %v2508
        %v2510 = vpop.f32.mrb[0].mxu0
        %2511 = vmatprep.mubr.f32.mxu0 %v1898
        %2512 = vmatmul.mubr.f32.gmra.mrb[0].mxu0 %v1897
        %v2513 = vpop.f32.mrb[0].mxu0
        %v2514 = vadd.f32 %v2289, %v2513
        %v2515 = vpop.f32.mrb[0].mxu0
        %2516 = vmatprep.mubr.f32.mxu0 %v1907
        %2517 = vmatmul.mubr.f32.gmra.mrb[0].mxu0 %v1906
        %v2518 = vpop.f32.mrb[0].mxu0
        %v2519 = vadd.f32 %v2294, %v2518
        %v2520 = vpop.f32.mrb[0].mxu0
        %2521 = vmatprep.mubr.f32.mxu0 %v1916
        %2522 = vmatmul.mubr.f32.gmra.mrb[0].mxu0 %v1915
        %v2523 = vpop.f32.mrb[0].mxu0
        %v2524 = vadd.f32 %v2299, %v2523
        %v2525 = vpop.f32.mrb[0].mxu0
        %2526 = vmatprep.mubr.f32.mxu0 %v1925
        %2527 = vmatmul.mubr.f32.gmra.mrb[0].mxu0 %v1924
        %v2528 = vpop.f32.mrb[0].mxu0
        %v2529 = vadd.f32 %v2304, %v2528
        %v2530 = vpop.f32.mrb[0].mxu0
        %2531 = vdwg.mxu0
        %2532 = vmatprep.subr.mxu0 0.0
        %2533 = vmatpush1.msra.mxu0 %v1995
        %2534 = vmatprep.subr.mxu0 0.0
        %2535 = vmatpush1.msra.mxu0 %v1996
        %2536 = vmatprep.subr.mxu0 0.0
        %2537 = vmatpush1.msra.mxu0 %v1997
        %2538 = vmatprep.subr.mxu0 0.0
        %2539 = vmatpush1.msra.mxu0 %v1998
        %2540 = vmatprep.subr.mxu0 0.0
        %2541 = vmatpush1.msra.mxu0 %v1999
        %2542 = vmatprep.subr.mxu0 0.0
        %2543 = vmatpush1.msra.mxu0 %v2000
        %2544 = vmatprep.subr.mxu0 0.0
        %2545 = vmatpush1.msra.mxu0 %v2001
        %2546 = vmatprep.subr.mxu0 0.0
        %2547 = vmatpush1.msra.mxu0 %v2002
        %2548 = vmatprep.subr.mxu0 0.0
        %2549 = vmatpush1.msra.mxu0 %v2003
        %2550 = vmatprep.subr.mxu0 0.0
        %2551 = vmatpush1.msra.mxu0 %v2004
        %2552 = vmatprep.subr.mxu0 0.0
        %2553 = vmatpush1.msra.mxu0 %v2005
        %2554 = vmatprep.subr.mxu0 0.0
        %2555 = vmatpush1.msra.mxu0 %v2006
        %2556 = vmatprep.subr.mxu0 0.0
        %2557 = vmatpush1.msra.mxu0 %v2007
        %2558 = vmatprep.subr.mxu0 0.0
        %2559 = vmatpush1.msra.mxu0 %v2008
        %2560 = vmatprep.subr.mxu0 0.0
        %2561 = vmatpush1.msra.mxu0 %v2009
        %2562 = vmatprep.subr.mxu0 0.0
        %2563 = vmatpush1.msra.mxu0 %v2010
        %2564 = vmatprep.subr.mxu0 0.0
        %2565 = vmatpush1.msra.mxu0 %v2011
        %2566 = vmatprep.subr.mxu0 0.0
        %2567 = vmatpush1.msra.mxu0 %v2012
        %2568 = vmatprep.subr.mxu0 0.0
        %2569 = vmatpush1.msra.mxu0 %v2013
        %2570 = vmatprep.subr.mxu0 0.0
        %2571 = vmatpush1.msra.mxu0 %v2014
        %2572 = vmatprep.subr.mxu0 0.0
        %2573 = vmatpush1.msra.mxu0 %v2015
        %2574 = vmatprep.subr.mxu0 0.0
        %2575 = vmatpush1.msra.mxu0 %v2016
        %2576 = vmatprep.subr.mxu0 0.0
        %2577 = vmatpush1.msra.mxu0 %v2017
        %2578 = vmatprep.subr.mxu0 0.0
        %2579 = vmatpush1.msra.mxu0 %v2018
        %2580 = vmatprep.subr.mxu0 0.0
        %2581 = vmatpush1.msra.mxu0 %v2019
        %2582 = vmatprep.subr.mxu0 0.0
        %2583 = vmatpush1.msra.mxu0 %v2020
        %2584 = vmatprep.subr.mxu0 0.0
        %2585 = vmatpush1.msra.mxu0 %v2021
        %2586 = vmatprep.subr.mxu0 0.0
        %2587 = vmatpush1.msra.mxu0 %v2022
        %2588 = vmatprep.subr.mxu0 0.0
        %2589 = vmatpush1.msra.mxu0 %v2023
        %2590 = vmatprep.subr.mxu0 0.0
        %2591 = vmatpush1.msra.mxu0 %v2024
        %2592 = vmatprep.subr.mxu0 0.0
        %2593 = vmatpush1.msra.mxu0 %v2025
        %2594 = vmatprep.subr.mxu0 0.0
        %2595 = vmatpush1.msra.mxu0 %v2026
        %2596 = vmatprep.mubr.f32.mxu0 %v1648
        %2597 = vmatmul.mubr.f32.gmra.mrb[0].mxu0 %v1647
        %v2598 = vpop.f32.mrb[0].mxu0
        %v2599 = vadd.f32 %v2374, %v2598
        %v2600 = vpop.f32.mrb[0].mxu0
        %2601 = vmatprep.mubr.f32.mxu0 %v1657
        %2602 = vmatmul.mubr.f32.gmra.mrb[0].mxu0 %v1656
        %v2603 = vpop.f32.mrb[0].mxu0
        %v2604 = vadd.f32 %v2379, %v2603
        %v2605 = vpop.f32.mrb[0].mxu0
        %2606 = vmatprep.mubr.f32.mxu0 %v1666
        %2607 = vmatmul.mubr.f32.gmra.mrb[0].mxu0 %v1665
        %v2608 = vpop.f32.mrb[0].mxu0
        %v2609 = vadd.f32 %v2384, %v2608
        %v2610 = vpop.f32.mrb[0].mxu0
        %2611 = vmatprep.mubr.f32.mxu0 %v1675
        %2612 = vmatmul.mubr.f32.gmra.mrb[0].mxu0 %v1674
        %v2613 = vpop.f32.mrb[0].mxu0
        %v2614 = vadd.f32 %v2389, %v2613
        %v2615 = vpop.f32.mrb[0].mxu0
        %2616 = vmatprep.mubr.f32.mxu0 %v1684
        %2617 = vmatmul.mubr.f32.gmra.mrb[0].mxu0 %v1683
        %v2618 = vpop.f32.mrb[0].mxu0
        %v2619 = vadd.f32 %v2394, %v2618
        %v2620 = vpop.f32.mrb[0].mxu0
        %2621 = vmatprep.mubr.f32.mxu0 %v1693
        %2622 = vmatmul.mubr.f32.gmra.mrb[0].mxu0 %v1692
        %v2623 = vpop.f32.mrb[0].mxu0
        %v2624 = vadd.f32 %v2399, %v2623
        %v2625 = vpop.f32.mrb[0].mxu0
        %2626 = vmatprep.mubr.f32.mxu0 %v1702
        %2627 = vmatmul.mubr.f32.gmra.mrb[0].mxu0 %v1701
        %v2628 = vpop.f32.mrb[0].mxu0
        %v2629 = vadd.f32 %v2404, %v2628
        %v2630 = vpop.f32.mrb[0].mxu0
        %2631 = vmatprep.mubr.f32.mxu0 %v1711
        %2632 = vmatmul.mubr.f32.gmra.mrb[0].mxu0 %v1710
        %v2633 = vpop.f32.mrb[0].mxu0
        %v2634 = vadd.f32 %v2409, %v2633
        %v2635 = vpop.f32.mrb[0].mxu0
        %2636 = vmatprep.mubr.f32.mxu0 %v1720
        %2637 = vmatmul.mubr.f32.gmra.mrb[0].mxu0 %v1719
        %v2638 = vpop.f32.mrb[0].mxu0
        %v2639 = vadd.f32 %v2414, %v2638
        %v2640 = vpop.f32.mrb[0].mxu0
        %2641 = vmatprep.mubr.f32.mxu0 %v1729
        %2642 = vmatmul.mubr.f32.gmra.mrb[0].mxu0 %v1728
        %v2643 = vpop.f32.mrb[0].mxu0
        %v2644 = vadd.f32 %v2419, %v2643
        %v2645 = vpop.f32.mrb[0].mxu0
        %2646 = vmatprep.mubr.f32.mxu0 %v1738
        %2647 = vmatmul.mubr.f32.gmra.mrb[0].mxu0 %v1737
        %v2648 = vpop.f32.mrb[0].mxu0
        %v2649 = vadd.f32 %v2424, %v2648
        %v2650 = vpop.f32.mrb[0].mxu0
        %2651 = vmatprep.mubr.f32.mxu0 %v1747
        %2652 = vmatmul.mubr.f32.gmra.mrb[0].mxu0 %v1746
        %v2653 = vpop.f32.mrb[0].mxu0
        %v2654 = vadd.f32 %v2429, %v2653
        %v2655 = vpop.f32.mrb[0].mxu0
        %2656 = vmatprep.mubr.f32.mxu0 %v1756
        %2657 = vmatmul.mubr.f32.gmra.mrb[0].mxu0 %v1755
        %v2658 = vpop.f32.mrb[0].mxu0
        %v2659 = vadd.f32 %v2434, %v2658
        %v2660 = vpop.f32.mrb[0].mxu0
        %2661 = vmatprep.mubr.f32.mxu0 %v1765
        %2662 = vmatmul.mubr.f32.gmra.mrb[0].mxu0 %v1764
        %v2663 = vpop.f32.mrb[0].mxu0
        %v2664 = vadd.f32 %v2439, %v2663
        %v2665 = vpop.f32.mrb[0].mxu0
        %2666 = vmatprep.mubr.f32.mxu0 %v1774
        %2667 = vmatmul.mubr.f32.gmra.mrb[0].mxu0 %v1773
        %v2668 = vpop.f32.mrb[0].mxu0
        %v2669 = vadd.f32 %v2444, %v2668
        %v2670 = vpop.f32.mrb[0].mxu0
        %2671 = vmatprep.mubr.f32.mxu0 %v1783
        %2672 = vmatmul.mubr.f32.gmra.mrb[0].mxu0 %v1782
        %v2673 = vpop.f32.mrb[0].mxu0
        %v2674 = vadd.f32 %v2449, %v2673
        %v2675 = vpop.f32.mrb[0].mxu0
        %2676 = vmatprep.mubr.f32.mxu0 %v1792
        %2677 = vmatmul.mubr.f32.gmra.mrb[0].mxu0 %v1791
        %v2678 = vpop.f32.mrb[0].mxu0
        %v2679 = vadd.f32 %v2454, %v2678
        %v2680 = vpop.f32.mrb[0].mxu0
        %2681 = vmatprep.mubr.f32.mxu0 %v1801
        %2682 = vmatmul.mubr.f32.gmra.mrb[0].mxu0 %v1800
        %v2683 = vpop.f32.mrb[0].mxu0
        %v2684 = vadd.f32 %v2459, %v2683
        %v2685 = vpop.f32.mrb[0].mxu0
        %2686 = vmatprep.mubr.f32.mxu0 %v1810
        %2687 = vmatmul.mubr.f32.gmra.mrb[0].mxu0 %v1809
        %v2688 = vpop.f32.mrb[0].mxu0
        %v2689 = vadd.f32 %v2464, %v2688
        %v2690 = vpop.f32.mrb[0].mxu0
        %2691 = vmatprep.mubr.f32.mxu0 %v1819
        %2692 = vmatmul.mubr.f32.gmra.mrb[0].mxu0 %v1818
        %v2693 = vpop.f32.mrb[0].mxu0
        %v2694 = vadd.f32 %v2469, %v2693
        %v2695 = vpop.f32.mrb[0].mxu0
        %2696 = vmatprep.mubr.f32.mxu0 %v1828
        %2697 = vmatmul.mubr.f32.gmra.mrb[0].mxu0 %v1827
        %v2698 = vpop.f32.mrb[0].mxu0
        %v2699 = vadd.f32 %v2474, %v2698
        %v2700 = vpop.f32.mrb[0].mxu0
        %2701 = vmatprep.mubr.f32.mxu0 %v1837
        %2702 = vmatmul.mubr.f32.gmra.mrb[0].mxu0 %v1836
        %v2703 = vpop.f32.mrb[0].mxu0
        %v2704 = vadd.f32 %v2479, %v2703
        %v2705 = vpop.f32.mrb[0].mxu0
        %2706 = vmatprep.mubr.f32.mxu0 %v1846
        %2707 = vmatmul.mubr.f32.gmra.mrb[0].mxu0 %v1845
        %v2708 = vpop.f32.mrb[0].mxu0
        %v2709 = vadd.f32 %v2484, %v2708
        %v2710 = vpop.f32.mrb[0].mxu0
        %2711 = vmatprep.mubr.f32.mxu0 %v1855
        %2712 = vmatmul.mubr.f32.gmra.mrb[0].mxu0 %v1854
        %v2713 = vpop.f32.mrb[0].mxu0
        %v2714 = vadd.f32 %v2489, %v2713
        %v2715 = vpop.f32.mrb[0].mxu0
        %2716 = vmatprep.mubr.f32.mxu0 %v1864
        %2717 = vmatmul.mubr.f32.gmra.mrb[0].mxu0 %v1863
        %v2718 = vpop.f32.mrb[0].mxu0
        %v2719 = vadd.f32 %v2494, %v2718
        %v2720 = vpop.f32.mrb[0].mxu0
        %2721 = vmatprep.mubr.f32.mxu0 %v1873
        %2722 = vmatmul.mubr.f32.gmra.mrb[0].mxu0 %v1872
        %v2723 = vpop.f32.mrb[0].mxu0
        %v2724 = vadd.f32 %v2499, %v2723
        %v2725 = vpop.f32.mrb[0].mxu0
        %2726 = vmatprep.mubr.f32.mxu0 %v1882
        %2727 = vmatmul.mubr.f32.gmra.mrb[0].mxu0 %v1881
        %v2728 = vpop.f32.mrb[0].mxu0
        %v2729 = vadd.f32 %v2504, %v2728
        %v2730 = vpop.f32.mrb[0].mxu0
        %2731 = vmatprep.mubr.f32.mxu0 %v1891
        %2732 = vmatmul.mubr.f32.gmra.mrb[0].mxu0 %v1890
        %v2733 = vpop.f32.mrb[0].mxu0
        %v2734 = vadd.f32 %v2509, %v2733
        %v2735 = vpop.f32.mrb[0].mxu0
        %2736 = vmatprep.mubr.f32.mxu0 %v1900
        %2737 = vmatmul.mubr.f32.gmra.mrb[0].mxu0 %v1899
        %v2738 = vpop.f32.mrb[0].mxu0
        %v2739 = vadd.f32 %v2514, %v2738
        %v2740 = vpop.f32.mrb[0].mxu0
        %2741 = vmatprep.mubr.f32.mxu0 %v1909
        %2742 = vmatmul.mubr.f32.gmra.mrb[0].mxu0 %v1908
        %v2743 = vpop.f32.mrb[0].mxu0
        %v2744 = vadd.f32 %v2519, %v2743
        %v2745 = vpop.f32.mrb[0].mxu0
        %2746 = vmatprep.mubr.f32.mxu0 %v1918
        %2747 = vmatmul.mubr.f32.gmra.mrb[0].mxu0 %v1917
        %v2748 = vpop.f32.mrb[0].mxu0
        %v2749 = vadd.f32 %v2524, %v2748
        %v2750 = vpop.f32.mrb[0].mxu0
        %2751 = vmatprep.mubr.f32.mxu0 %v1927
        %2752 = vmatmul.mubr.f32.gmra.mrb[0].mxu0 %v1926
        %v2753 = vpop.f32.mrb[0].mxu0
        %v2754 = vadd.f32 %v2529, %v2753
        %v2755 = vpop.f32.mrb[0].mxu0
        %2756 = vdwg.mxu0
        %2757 = vmatprep.subr.mxu0 0.0
        %2758 = vmatpush1.msra.mxu0 %v2027
        %2759 = vmatprep.subr.mxu0 0.0
        %2760 = vmatpush1.msra.mxu0 %v2028
        %2761 = vmatprep.subr.mxu0 0.0
        %2762 = vmatpush1.msra.mxu0 %v2029
        %2763 = vmatprep.subr.mxu0 0.0
        %2764 = vmatpush1.msra.mxu0 %v2030
        %2765 = vmatprep.subr.mxu0 0.0
        %2766 = vmatpush1.msra.mxu0 %v2031
        %2767 = vmatprep.subr.mxu0 0.0
        %2768 = vmatpush1.msra.mxu0 %v2032
        %2769 = vmatprep.subr.mxu0 0.0
        %2770 = vmatpush1.msra.mxu0 %v2033
        %2771 = vmatprep.subr.mxu0 0.0
        %2772 = vmatpush1.msra.mxu0 %v2034
        %2773 = vmatprep.subr.mxu0 0.0
        %2774 = vmatpush1.msra.mxu0 %v2035
        %2775 = vmatprep.subr.mxu0 0.0
        %2776 = vmatpush1.msra.mxu0 %v2036
        %2777 = vmatprep.subr.mxu0 0.0
        %2778 = vmatpush1.msra.mxu0 %v2037
        %2779 = vmatprep.subr.mxu0 0.0
        %2780 = vmatpush1.msra.mxu0 %v2038
        %2781 = vmatprep.subr.mxu0 0.0
        %2782 = vmatpush1.msra.mxu0 %v2039
        %2783 = vmatprep.subr.mxu0 0.0
        %2784 = vmatpush1.msra.mxu0 %v2040
        %2785 = vmatprep.subr.mxu0 0.0
        %2786 = vmatpush1.msra.mxu0 %v2041
        %2787 = vmatprep.subr.mxu0 0.0
        %2788 = vmatpush1.msra.mxu0 %v2042
        %2789 = vmatprep.subr.mxu0 0.0
        %2790 = vmatpush1.msra.mxu0 %v2043
        %2791 = vmatprep.subr.mxu0 0.0
        %2792 = vmatpush1.msra.mxu0 %v2044
        %2793 = vmatprep.subr.mxu0 0.0
        %2794 = vmatpush1.msra.mxu0 %v2045
        %2795 = vmatprep.subr.mxu0 0.0
        %2796 = vmatpush1.msra.mxu0 %v2046
        %2797 = vmatprep.subr.mxu0 0.0
        %2798 = vmatpush1.msra.mxu0 %v2047
        %2799 = vmatprep.subr.mxu0 0.0
        %2800 = vmatpush1.msra.mxu0 %v2048
        %2801 = vmatprep.subr.mxu0 0.0
        %2802 = vmatpush1.msra.mxu0 %v2049
        %2803 = vmatprep.subr.mxu0 0.0
        %2804 = vmatpush1.msra.mxu0 %v2050
        %2805 = vmatprep.subr.mxu0 0.0
        %2806 = vmatpush1.msra.mxu0 %v2051
        %2807 = vmatprep.subr.mxu0 0.0
        %2808 = vmatpush1.msra.mxu0 %v2052
        %2809 = vmatprep.subr.mxu0 0.0
        %2810 = vmatpush1.msra.mxu0 %v2053
        %2811 = vmatprep.subr.mxu0 0.0
        %2812 = vmatpush1.msra.mxu0 %v2054
        %2813 = vmatprep.subr.mxu0 0.0
        %2814 = vmatpush1.msra.mxu0 %v2055
        %2815 = vmatprep.subr.mxu0 0.0
        %2816 = vmatpush1.msra.mxu0 %v2056
        %2817 = vmatprep.subr.mxu0 0.0
        %2818 = vmatpush1.msra.mxu0 %v2057
        %2819 = vmatprep.subr.mxu0 0.0
        %2820 = vmatpush1.msra.mxu0 %v2058
        %2821 = vmatprep.mubr.f32.mxu0 %v1650
        %2822 = vmatmul.mubr.f32.gmra.mrb[0].mxu0 %v1649
        %v2823 = vpop.f32.mrb[0].mxu0
        %v2824 = vadd.f32 %v2599, %v2823
        %v2825 = vpop.f32.mrb[0].mxu0
        %2826 = vmatprep.mubr.f32.mxu0 %v1659
        %2827 = vmatmul.mubr.f32.gmra.mrb[0].mxu0 %v1658
        %v2828 = vpop.f32.mrb[0].mxu0
        %v2829 = vadd.f32 %v2604, %v2828
        %v2830 = vpop.f32.mrb[0].mxu0
        %2831 = vmatprep.mubr.f32.mxu0 %v1668
        %2832 = vmatmul.mubr.f32.gmra.mrb[0].mxu0 %v1667
        %v2833 = vpop.f32.mrb[0].mxu0
        %v2834 = vadd.f32 %v2609, %v2833
        %v2835 = vpop.f32.mrb[0].mxu0
        %2836 = vmatprep.mubr.f32.mxu0 %v1677
        %2837 = vmatmul.mubr.f32.gmra.mrb[0].mxu0 %v1676
        %v2838 = vpop.f32.mrb[0].mxu0
        %v2839 = vadd.f32 %v2614, %v2838
        %v2840 = vpop.f32.mrb[0].mxu0
        %2841 = vmatprep.mubr.f32.mxu0 %v1686
        %2842 = vmatmul.mubr.f32.gmra.mrb[0].mxu0 %v1685
        %v2843 = vpop.f32.mrb[0].mxu0
        %v2844 = vadd.f32 %v2619, %v2843
        %v2845 = vpop.f32.mrb[0].mxu0
        %2846 = vmatprep.mubr.f32.mxu0 %v1695
        %2847 = vmatmul.mubr.f32.gmra.mrb[0].mxu0 %v1694
        %v2848 = vpop.f32.mrb[0].mxu0
        %v2849 = vadd.f32 %v2624, %v2848
        %v2850 = vpop.f32.mrb[0].mxu0
        %2851 = vmatprep.mubr.f32.mxu0 %v1704
        %2852 = vmatmul.mubr.f32.gmra.mrb[0].mxu0 %v1703
        %v2853 = vpop.f32.mrb[0].mxu0
        %v2854 = vadd.f32 %v2629, %v2853
        %v2855 = vpop.f32.mrb[0].mxu0
        %2856 = vmatprep.mubr.f32.mxu0 %v1713
        %2857 = vmatmul.mubr.f32.gmra.mrb[0].mxu0 %v1712
        %v2858 = vpop.f32.mrb[0].mxu0
        %v2859 = vadd.f32 %v2634, %v2858
        %v2860 = vpop.f32.mrb[0].mxu0
        %2861 = vmatprep.mubr.f32.mxu0 %v1722
        %2862 = vmatmul.mubr.f32.gmra.mrb[0].mxu0 %v1721
        %v2863 = vpop.f32.mrb[0].mxu0
        %v2864 = vadd.f32 %v2639, %v2863
        %v2865 = vpop.f32.mrb[0].mxu0
        %2866 = vmatprep.mubr.f32.mxu0 %v1731
        %2867 = vmatmul.mubr.f32.gmra.mrb[0].mxu0 %v1730
        %v2868 = vpop.f32.mrb[0].mxu0
        %v2869 = vadd.f32 %v2644, %v2868
        %v2870 = vpop.f32.mrb[0].mxu0
        %2871 = vmatprep.mubr.f32.mxu0 %v1740
        %2872 = vmatmul.mubr.f32.gmra.mrb[0].mxu0 %v1739
        %v2873 = vpop.f32.mrb[0].mxu0
        %v2874 = vadd.f32 %v2649, %v2873
        %v2875 = vpop.f32.mrb[0].mxu0
        %2876 = vmatprep.mubr.f32.mxu0 %v1749
        %2877 = vmatmul.mubr.f32.gmra.mrb[0].mxu0 %v1748
        %v2878 = vpop.f32.mrb[0].mxu0
        %v2879 = vadd.f32 %v2654, %v2878
        %v2880 = vpop.f32.mrb[0].mxu0
        %2881 = vmatprep.mubr.f32.mxu0 %v1758
        %2882 = vmatmul.mubr.f32.gmra.mrb[0].mxu0 %v1757
        %v2883 = vpop.f32.mrb[0].mxu0
        %v2884 = vadd.f32 %v2659, %v2883
        %v2885 = vpop.f32.mrb[0].mxu0
        %2886 = vmatprep.mubr.f32.mxu0 %v1767
        %2887 = vmatmul.mubr.f32.gmra.mrb[0].mxu0 %v1766
        %v2888 = vpop.f32.mrb[0].mxu0
        %v2889 = vadd.f32 %v2664, %v2888
        %v2890 = vpop.f32.mrb[0].mxu0
        %2891 = vmatprep.mubr.f32.mxu0 %v1776
        %2892 = vmatmul.mubr.f32.gmra.mrb[0].mxu0 %v1775
        %v2893 = vpop.f32.mrb[0].mxu0
        %v2894 = vadd.f32 %v2669, %v2893
        %v2895 = vpop.f32.mrb[0].mxu0
        %2896 = vmatprep.mubr.f32.mxu0 %v1785
        %2897 = vmatmul.mubr.f32.gmra.mrb[0].mxu0 %v1784
        %v2898 = vpop.f32.mrb[0].mxu0
        %v2899 = vadd.f32 %v2674, %v2898
        %v2900 = vpop.f32.mrb[0].mxu0
        %2901 = vmatprep.mubr.f32.mxu0 %v1794
        %2902 = vmatmul.mubr.f32.gmra.mrb[0].mxu0 %v1793
        %v2903 = vpop.f32.mrb[0].mxu0
        %v2904 = vadd.f32 %v2679, %v2903
        %v2905 = vpop.f32.mrb[0].mxu0
        %2906 = vmatprep.mubr.f32.mxu0 %v1803
        %2907 = vmatmul.mubr.f32.gmra.mrb[0].mxu0 %v1802
        %v2908 = vpop.f32.mrb[0].mxu0
        %v2909 = vadd.f32 %v2684, %v2908
        %v2910 = vpop.f32.mrb[0].mxu0
        %2911 = vmatprep.mubr.f32.mxu0 %v1812
        %2912 = vmatmul.mubr.f32.gmra.mrb[0].mxu0 %v1811
        %v2913 = vpop.f32.mrb[0].mxu0
        %v2914 = vadd.f32 %v2689, %v2913
        %v2915 = vpop.f32.mrb[0].mxu0
        %2916 = vmatprep.mubr.f32.mxu0 %v1821
        %2917 = vmatmul.mubr.f32.gmra.mrb[0].mxu0 %v1820
        %v2918 = vpop.f32.mrb[0].mxu0
        %v2919 = vadd.f32 %v2694, %v2918
        %v2920 = vpop.f32.mrb[0].mxu0
        %2921 = vmatprep.mubr.f32.mxu0 %v1830
        %2922 = vmatmul.mubr.f32.gmra.mrb[0].mxu0 %v1829
        %v2923 = vpop.f32.mrb[0].mxu0
        %v2924 = vadd.f32 %v2699, %v2923
        %v2925 = vpop.f32.mrb[0].mxu0
        %2926 = vmatprep.mubr.f32.mxu0 %v1839
        %2927 = vmatmul.mubr.f32.gmra.mrb[0].mxu0 %v1838
        %v2928 = vpop.f32.mrb[0].mxu0
        %v2929 = vadd.f32 %v2704, %v2928
        %v2930 = vpop.f32.mrb[0].mxu0
        %2931 = vmatprep.mubr.f32.mxu0 %v1848
        %2932 = vmatmul.mubr.f32.gmra.mrb[0].mxu0 %v1847
        %v2933 = vpop.f32.mrb[0].mxu0
        %v2934 = vadd.f32 %v2709, %v2933
        %v2935 = vpop.f32.mrb[0].mxu0
        %2936 = vmatprep.mubr.f32.mxu0 %v1857
        %2937 = vmatmul.mubr.f32.gmra.mrb[0].mxu0 %v1856
        %v2938 = vpop.f32.mrb[0].mxu0
        %v2939 = vadd.f32 %v2714, %v2938
        %v2940 = vpop.f32.mrb[0].mxu0
        %2941 = vmatprep.mubr.f32.mxu0 %v1866
        %2942 = vmatmul.mubr.f32.gmra.mrb[0].mxu0 %v1865
        %v2943 = vpop.f32.mrb[0].mxu0
        %v2944 = vadd.f32 %v2719, %v2943
        %v2945 = vpop.f32.mrb[0].mxu0
        %2946 = vmatprep.mubr.f32.mxu0 %v1875
        %2947 = vmatmul.mubr.f32.gmra.mrb[0].mxu0 %v1874
        %v2948 = vpop.f32.mrb[0].mxu0
        %v2949 = vadd.f32 %v2724, %v2948
        %v2950 = vpop.f32.mrb[0].mxu0
        %2951 = vmatprep.mubr.f32.mxu0 %v1884
        %2952 = vmatmul.mubr.f32.gmra.mrb[0].mxu0 %v1883
        %v2953 = vpop.f32.mrb[0].mxu0
        %v2954 = vadd.f32 %v2729, %v2953
        %v2955 = vpop.f32.mrb[0].mxu0
        %2956 = vmatprep.mubr.f32.mxu0 %v1893
        %2957 = vmatmul.mubr.f32.gmra.mrb[0].mxu0 %v1892
        %v2958 = vpop.f32.mrb[0].mxu0
        %v2959 = vadd.f32 %v2734, %v2958
        %v2960 = vpop.f32.mrb[0].mxu0
        %2961 = vmatprep.mubr.f32.mxu0 %v1902
        %2962 = vmatmul.mubr.f32.gmra.mrb[0].mxu0 %v1901
        %v2963 = vpop.f32.mrb[0].mxu0
        %v2964 = vadd.f32 %v2739, %v2963
        %v2965 = vpop.f32.mrb[0].mxu0
        %2966 = vmatprep.mubr.f32.mxu0 %v1911
        %2967 = vmatmul.mubr.f32.gmra.mrb[0].mxu0 %v1910
        %v2968 = vpop.f32.mrb[0].mxu0
        %v2969 = vadd.f32 %v2744, %v2968
        %v2970 = vpop.f32.mrb[0].mxu0
        %2971 = vmatprep.mubr.f32.mxu0 %v1920
        %2972 = vmatmul.mubr.f32.gmra.mrb[0].mxu0 %v1919
        %v2973 = vpop.f32.mrb[0].mxu0
        %v2974 = vadd.f32 %v2749, %v2973
        %v2975 = vpop.f32.mrb[0].mxu0
        %2976 = vmatprep.mubr.f32.mxu0 %v1929
        %2977 = vmatmul.mubr.f32.gmra.mrb[0].mxu0 %v1928
        %v2978 = vpop.f32.mrb[0].mxu0
        %v2979 = vadd.f32 %v2754, %v2978
        %v2980 = vpop.f32.mrb[0].mxu0
        %2981 = vdwg.mxu0
        %2982 = vmatprep.subr.mxu0 0.0
        %2983 = vmatpush1.msra.mxu0 %v2059
        %2984 = vmatprep.subr.mxu0 0.0
        %2985 = vmatpush1.msra.mxu0 %v2060
        %2986 = vmatprep.subr.mxu0 0.0
        %2987 = vmatpush1.msra.mxu0 %v2061
        %2988 = vmatprep.subr.mxu0 0.0
        %2989 = vmatpush1.msra.mxu0 %v2062
        %2990 = vmatprep.subr.mxu0 0.0
        %2991 = vmatpush1.msra.mxu0 %v2063
        %2992 = vmatprep.subr.mxu0 0.0
        %2993 = vmatpush1.msra.mxu0 %v2064
        %2994 = vmatprep.subr.mxu0 0.0
        %2995 = vmatpush1.msra.mxu0 %v2065
        %2996 = vmatprep.subr.mxu0 0.0
        %2997 = vmatpush1.msra.mxu0 %v2066
        %2998 = vmatprep.subr.mxu0 0.0
        %2999 = vmatpush1.msra.mxu0 %v2067
        %3000 = vmatprep.subr.mxu0 0.0
        %3001 = vmatpush1.msra.mxu0 %v2068
        %3002 = vmatprep.subr.mxu0 0.0
        %3003 = vmatpush1.msra.mxu0 %v2069
        %3004 = vmatprep.subr.mxu0 0.0
        %3005 = vmatpush1.msra.mxu0 %v2070
        %3006 = vmatprep.subr.mxu0 0.0
        %3007 = vmatpush1.msra.mxu0 %v2071
        %3008 = vmatprep.subr.mxu0 0.0
        %3009 = vmatpush1.msra.mxu0 %v2072
        %3010 = vmatprep.subr.mxu0 0.0
        %3011 = vmatpush1.msra.mxu0 %v2073
        %3012 = vmatprep.subr.mxu0 0.0
        %3013 = vmatpush1.msra.mxu0 %v2074
        %3014 = vmatprep.subr.mxu0 0.0
        %3015 = vmatpush1.msra.mxu0 0.0
        %3016 = vmatprep.subr.mxu0 0.0
        %3017 = vmatpush1.msra.mxu0 0.0
        %3018 = vmatprep.subr.mxu0 0.0
        %3019 = vmatpush1.msra.mxu0 0.0
        %3020 = vmatprep.subr.mxu0 0.0
        %3021 = vmatpush1.msra.mxu0 0.0
        %3022 = vmatprep.subr.mxu0 0.0
        %3023 = vmatpush1.msra.mxu0 0.0
        %3024 = vmatprep.subr.mxu0 0.0
        %3025 = vmatpush1.msra.mxu0 0.0
        %3026 = vmatprep.subr.mxu0 0.0
        %3027 = vmatpush1.msra.mxu0 0.0
        %3028 = vmatprep.subr.mxu0 0.0
        %3029 = vmatpush1.msra.mxu0 0.0
        %3030 = vmatprep.subr.mxu0 0.0
        %3031 = vmatpush1.msra.mxu0 0.0
        %3032 = vmatprep.subr.mxu0 0.0
        %3033 = vmatpush1.msra.mxu0 0.0
        %3034 = vmatprep.subr.mxu0 0.0
        %3035 = vmatpush1.msra.mxu0 0.0
        %3036 = vmatprep.subr.mxu0 0.0
        %3037 = vmatpush1.msra.mxu0 0.0
        %3038 = vmatprep.subr.mxu0 0.0
        %3039 = vmatpush1.msra.mxu0 0.0
        %3040 = vmatprep.subr.mxu0 0.0
        %3041 = vmatpush1.msra.mxu0 0.0
        %3042 = vmatprep.subr.mxu0 0.0
        %3043 = vmatpush1.msra.mxu0 0.0
        %3044 = vmatprep.subr.mxu0 0.0
        %3045 = vmatpush1.msra.mxu0 0.0
        %3046 = vmatprep.mubr.f32.mxu0 0.0
        %3047 = vmatmul.mubr.f32.gmra.mrb[0].mxu0 %v1651
        %v3048 = vpop.f32.mrb[0].mxu0
        %v3049 = vadd.f32 %v2824, %v3048
        %v3050 = vpop.f32.mrb[0].mxu0
        %3051 = vmatprep.mubr.f32.mxu0 0.0
        %3052 = vmatmul.mubr.f32.gmra.mrb[0].mxu0 %v1660
        %v3053 = vpop.f32.mrb[0].mxu0
        %v3054 = vadd.f32 %v2829, %v3053
        %v3055 = vpop.f32.mrb[0].mxu0
        %3056 = vmatprep.mubr.f32.mxu0 0.0
        %3057 = vmatmul.mubr.f32.gmra.mrb[0].mxu0 %v1669
        %v3058 = vpop.f32.mrb[0].mxu0
        %v3059 = vadd.f32 %v2834, %v3058
        %v3060 = vpop.f32.mrb[0].mxu0
        %3061 = vmatprep.mubr.f32.mxu0 0.0
        %3062 = vmatmul.mubr.f32.gmra.mrb[0].mxu0 %v1678
        %v3063 = vpop.f32.mrb[0].mxu0
        %v3064 = vadd.f32 %v2839, %v3063
        %v3065 = vpop.f32.mrb[0].mxu0
        %3066 = vmatprep.mubr.f32.mxu0 0.0
        %3067 = vmatmul.mubr.f32.gmra.mrb[0].mxu0 %v1687
        %v3068 = vpop.f32.mrb[0].mxu0
        %v3069 = vadd.f32 %v2844, %v3068
        %v3070 = vpop.f32.mrb[0].mxu0
        %3071 = vmatprep.mubr.f32.mxu0 0.0
        %3072 = vmatmul.mubr.f32.gmra.mrb[0].mxu0 %v1696
        %v3073 = vpop.f32.mrb[0].mxu0
        %v3074 = vadd.f32 %v2849, %v3073
        %v3075 = vpop.f32.mrb[0].mxu0
        %3076 = vmatprep.mubr.f32.mxu0 0.0
        %3077 = vmatmul.mubr.f32.gmra.mrb[0].mxu0 %v1705
        %v3078 = vpop.f32.mrb[0].mxu0
        %v3079 = vadd.f32 %v2854, %v3078
        %v3080 = vpop.f32.mrb[0].mxu0
        %3081 = vmatprep.mubr.f32.mxu0 0.0
        %3082 = vmatmul.mubr.f32.gmra.mrb[0].mxu0 %v1714
        %v3083 = vpop.f32.mrb[0].mxu0
        %v3084 = vadd.f32 %v2859, %v3083
        %v3085 = vpop.f32.mrb[0].mxu0
        %3086 = vmatprep.mubr.f32.mxu0 0.0
        %3087 = vmatmul.mubr.f32.gmra.mrb[0].mxu0 %v1723
        %v3088 = vpop.f32.mrb[0].mxu0
        %v3089 = vadd.f32 %v2864, %v3088
        %v3090 = vpop.f32.mrb[0].mxu0
        %3091 = vmatprep.mubr.f32.mxu0 0.0
        %3092 = vmatmul.mubr.f32.gmra.mrb[0].mxu0 %v1732
        %v3093 = vpop.f32.mrb[0].mxu0
        %v3094 = vadd.f32 %v2869, %v3093
        %v3095 = vpop.f32.mrb[0].mxu0
        %3096 = vmatprep.mubr.f32.mxu0 0.0
        %3097 = vmatmul.mubr.f32.gmra.mrb[0].mxu0 %v1741
        %v3098 = vpop.f32.mrb[0].mxu0
        %v3099 = vadd.f32 %v2874, %v3098
        %v3100 = vpop.f32.mrb[0].mxu0
        %3101 = vmatprep.mubr.f32.mxu0 0.0
        %3102 = vmatmul.mubr.f32.gmra.mrb[0].mxu0 %v1750
        %v3103 = vpop.f32.mrb[0].mxu0
        %v3104 = vadd.f32 %v2879, %v3103
        %v3105 = vpop.f32.mrb[0].mxu0
        %3106 = vmatprep.mubr.f32.mxu0 0.0
        %3107 = vmatmul.mubr.f32.gmra.mrb[0].mxu0 %v1759
        %v3108 = vpop.f32.mrb[0].mxu0
        %v3109 = vadd.f32 %v2884, %v3108
        %v3110 = vpop.f32.mrb[0].mxu0
        %3111 = vmatprep.mubr.f32.mxu0 0.0
        %3112 = vmatmul.mubr.f32.gmra.mrb[0].mxu0 %v1768
        %v3113 = vpop.f32.mrb[0].mxu0
        %v3114 = vadd.f32 %v2889, %v3113
        %v3115 = vpop.f32.mrb[0].mxu0
        %3116 = vmatprep.mubr.f32.mxu0 0.0
        %3117 = vmatmul.mubr.f32.gmra.mrb[0].mxu0 %v1777
        %v3118 = vpop.f32.mrb[0].mxu0
        %v3119 = vadd.f32 %v2894, %v3118
        %v3120 = vpop.f32.mrb[0].mxu0
        %3121 = vmatprep.mubr.f32.mxu0 0.0
        %3122 = vmatmul.mubr.f32.gmra.mrb[0].mxu0 %v1786
        %v3123 = vpop.f32.mrb[0].mxu0
        %v3124 = vadd.f32 %v2899, %v3123
        %v3125 = vpop.f32.mrb[0].mxu0
        %3126 = vmatprep.mubr.f32.mxu0 0.0
        %3127 = vmatmul.mubr.f32.gmra.mrb[0].mxu0 %v1795
        %v3128 = vpop.f32.mrb[0].mxu0
        %v3129 = vadd.f32 %v2904, %v3128
        %v3130 = vpop.f32.mrb[0].mxu0
        %3131 = vmatprep.mubr.f32.mxu0 0.0
        %3132 = vmatmul.mubr.f32.gmra.mrb[0].mxu0 %v1804
        %v3133 = vpop.f32.mrb[0].mxu0
        %v3134 = vadd.f32 %v2909, %v3133
        %v3135 = vpop.f32.mrb[0].mxu0
        %3136 = vmatprep.mubr.f32.mxu0 0.0
        %3137 = vmatmul.mubr.f32.gmra.mrb[0].mxu0 %v1813
        %v3138 = vpop.f32.mrb[0].mxu0
        %v3139 = vadd.f32 %v2914, %v3138
        %v3140 = vpop.f32.mrb[0].mxu0
        %3141 = vmatprep.mubr.f32.mxu0 0.0
        %3142 = vmatmul.mubr.f32.gmra.mrb[0].mxu0 %v1822
        %v3143 = vpop.f32.mrb[0].mxu0
        %v3144 = vadd.f32 %v2919, %v3143
        %v3145 = vpop.f32.mrb[0].mxu0
        %3146 = vmatprep.mubr.f32.mxu0 0.0
        %3147 = vmatmul.mubr.f32.gmra.mrb[0].mxu0 %v1831
        %v3148 = vpop.f32.mrb[0].mxu0
        %v3149 = vadd.f32 %v2924, %v3148
        %v3150 = vpop.f32.mrb[0].mxu0
        %3151 = vmatprep.mubr.f32.mxu0 0.0
        %3152 = vmatmul.mubr.f32.gmra.mrb[0].mxu0 %v1840
        %v3153 = vpop.f32.mrb[0].mxu0
        %v3154 = vadd.f32 %v2929, %v3153
        %v3155 = vpop.f32.mrb[0].mxu0
        %3156 = vmatprep.mubr.f32.mxu0 0.0
        %3157 = vmatmul.mubr.f32.gmra.mrb[0].mxu0 %v1849
        %v3158 = vpop.f32.mrb[0].mxu0
        %v3159 = vadd.f32 %v2934, %v3158
        %v3160 = vpop.f32.mrb[0].mxu0
        %3161 = vmatprep.mubr.f32.mxu0 0.0
        %3162 = vmatmul.mubr.f32.gmra.mrb[0].mxu0 %v1858
        %v3163 = vpop.f32.mrb[0].mxu0
        %v3164 = vadd.f32 %v2939, %v3163
        %v3165 = vpop.f32.mrb[0].mxu0
        %3166 = vmatprep.mubr.f32.mxu0 0.0
        %3167 = vmatmul.mubr.f32.gmra.mrb[0].mxu0 %v1867
        %v3168 = vpop.f32.mrb[0].mxu0
        %v3169 = vadd.f32 %v2944, %v3168
        %v3170 = vpop.f32.mrb[0].mxu0
        %3171 = vmatprep.mubr.f32.mxu0 0.0
        %3172 = vmatmul.mubr.f32.gmra.mrb[0].mxu0 %v1876
        %v3173 = vpop.f32.mrb[0].mxu0
        %v3174 = vadd.f32 %v2949, %v3173
        %v3175 = vpop.f32.mrb[0].mxu0
        %3176 = vmatprep.mubr.f32.mxu0 0.0
        %3177 = vmatmul.mubr.f32.gmra.mrb[0].mxu0 %v1885
        %v3178 = vpop.f32.mrb[0].mxu0
        %v3179 = vadd.f32 %v2954, %v3178
        %v3180 = vpop.f32.mrb[0].mxu0
        %3181 = vmatprep.mubr.f32.mxu0 0.0
        %3182 = vmatmul.mubr.f32.gmra.mrb[0].mxu0 %v1894
        %v3183 = vpop.f32.mrb[0].mxu0
        %v3184 = vadd.f32 %v2959, %v3183
        %v3185 = vpop.f32.mrb[0].mxu0
        %3186 = vmatprep.mubr.f32.mxu0 0.0
        %3187 = vmatmul.mubr.f32.gmra.mrb[0].mxu0 %v1903
        %v3188 = vpop.f32.mrb[0].mxu0
        %v3189 = vadd.f32 %v2964, %v3188
        %v3190 = vpop.f32.mrb[0].mxu0
        %3191 = vmatprep.mubr.f32.mxu0 0.0
        %3192 = vmatmul.mubr.f32.gmra.mrb[0].mxu0 %v1912
        %v3193 = vpop.f32.mrb[0].mxu0
        %v3194 = vadd.f32 %v2969, %v3193
        %v3195 = vpop.f32.mrb[0].mxu0
        %3196 = vmatprep.mubr.f32.mxu0 0.0
        %3197 = vmatmul.mubr.f32.gmra.mrb[0].mxu0 %v1921
        %v3198 = vpop.f32.mrb[0].mxu0
        %v3199 = vadd.f32 %v2974, %v3198
        %v3200 = vpop.f32.mrb[0].mxu0
        %3201 = vmatprep.mubr.f32.mxu0 0.0
        %3202 = vmatmul.mubr.f32.gmra.mrb[0].mxu0 %v1930
        %v3203 = vpop.f32.mrb[0].mxu0
        %v3204 = vadd.f32 %v2979, %v3203
        %v3205 = vpop.f32.mrb[0].mxu0
        %3206 = vdwg.mxu0
        %v3207 = vmax.f32 %v3049, 0.0
        %v3208 = vmax.f32 %v3054, 0.0
        %v3209 = vmax.f32 %v3059, 0.0
        %v3210 = vmax.f32 %v3064, 0.0
        %v3211 = vmax.f32 %v3069, 0.0
        %v3212 = vmax.f32 %v3074, 0.0
        %v3213 = vmax.f32 %v3079, 0.0
        %v3214 = vmax.f32 %v3084, 0.0
        %v3215 = vmax.f32 %v3089, 0.0
        %v3216 = vmax.f32 %v3094, 0.0
        %v3217 = vmax.f32 %v3099, 0.0
        %v3218 = vmax.f32 %v3104, 0.0
        %v3219 = vmax.f32 %v3109, 0.0
        %v3220 = vmax.f32 %v3114, 0.0
        %v3221 = vmax.f32 %v3119, 0.0
        %v3222 = vmax.f32 %v3124, 0.0
        %v3223 = vmax.f32 %v3129, 0.0
        %v3224 = vmax.f32 %v3134, 0.0
        %v3225 = vmax.f32 %v3139, 0.0
        %v3226 = vmax.f32 %v3144, 0.0
        %v3227 = vmax.f32 %v3149, 0.0
        %v3228 = vmax.f32 %v3154, 0.0
        %v3229 = vmax.f32 %v3159, 0.0
        %v3230 = vmax.f32 %v3164, 0.0
        %v3231 = vmax.f32 %v3169, 0.0
        %v3232 = vmax.f32 %v3174, 0.0
        %v3233 = vmax.f32 %v3179, 0.0
        %v3234 = vmax.f32 %v3184, 0.0
        %v3235 = vmax.f32 %v3189, 0.0
        %v3236 = vmax.f32 %v3194, 0.0
        %v3237 = vmax.f32 %v3199, 0.0
        %v3238 = vmax.f32 %v3204, 0.0
        %3239 = vst.msk [vmem:[%s1033 + $0x8] sm:$0xff] %vm304, %v3207
        %3240 = vst.msk [vmem:[%s1033 + $0x10] sm:$0xff] %vm304, %v3208
        %3241 = vst.msk [vmem:[%s1033 + $0x28] sm:$0xff] %vm304, %v3209
        %3242 = vst.msk [vmem:[%s1033 + $0x30] sm:$0xff] %vm304, %v3210
        %3243 = vst.msk [vmem:[%s1033 + $0x48] sm:$0xff] %vm304, %v3211
        %3244 = vst.msk [vmem:[%s1033 + $0x50] sm:$0xff] %vm304, %v3212
        %3245 = vst.msk [vmem:[%s1033 + $0x68] sm:$0xff] %vm304, %v3213
        %3246 = vst.msk [vmem:[%s1033 + $0x70] sm:$0xff] %vm304, %v3214
        %3247 = vst.msk [vmem:[%s1033 + $0x88] sm:$0xff] %vm304, %v3215
        %3248 = vst.msk [vmem:[%s1033 + $0x90] sm:$0xff] %vm304, %v3216
        %3249 = vst.msk [vmem:[%s1033 + $0xa8] sm:$0xff] %vm304, %v3217
        %3250 = vst.msk [vmem:[%s1033 + $0xb0] sm:$0xff] %vm304, %v3218
        %3251 = vst.msk [vmem:[%s1033 + $0xc8] sm:$0xff] %vm304, %v3219
        %3252 = vst.msk [vmem:[%s1033 + $0xd0] sm:$0xff] %vm304, %v3220
        %3253 = vst.msk [vmem:[%s1033 + $0xe8] sm:$0xff] %vm304, %v3221
        %3254 = vst.msk [vmem:[%s1033 + $0xf0] sm:$0xff] %vm304, %v3222
        %3255 = vst.msk [vmem:[%s1033 + $0x108] sm:$0xff] %vm304, %v3223
        %3256 = vst.msk [vmem:[%s1033 + $0x110] sm:$0xff] %vm304, %v3224
        %3257 = vst.msk [vmem:[%s1033 + $0x128] sm:$0xff] %vm304, %v3225
        %3258 = vst.msk [vmem:[%s1033 + $0x130] sm:$0xff] %vm304, %v3226
        %3259 = vst.msk [vmem:[%s1033 + $0x148] sm:$0xff] %vm304, %v3227
        %3260 = vst.msk [vmem:[%s1033 + $0x150] sm:$0xff] %vm304, %v3228
        %3261 = vst.msk [vmem:[%s1033 + $0x168] sm:$0xff] %vm304, %v3229
        %3262 = vst.msk [vmem:[%s1033 + $0x170] sm:$0xff] %vm304, %v3230
        %3263 = vst.msk [vmem:[%s1033 + $0x188] sm:$0xff] %vm304, %v3231
        %3264 = vst.msk [vmem:[%s1033 + $0x190] sm:$0xff] %vm304, %v3232
        %3265 = vst.msk [vmem:[%s1033 + $0x1a8] sm:$0xff] %vm304, %v3233
        %3266 = vst.msk [vmem:[%s1033 + $0x1b0] sm:$0xff] %vm304, %v3234
        %3267 = vst.msk [vmem:[%s1033 + $0x1c8] sm:$0xff] %vm304, %v3235
        %3268 = vst.msk [vmem:[%s1033 + $0x1d0] sm:$0xff] %vm304, %v3236
        %3269 = vst.msk [vmem:[%s1033 + $0x1e8] sm:$0xff] %vm304, %v3237
        %3270 = vst.msk [vmem:[%s1033 + $0x1f0] sm:$0xff] %vm304, %v3238
        %v3271 = vld [vmem:[#allocation2 + $0x7] sm:$0xff]
        %v3272 = vld [vmem:[#allocation2 + $0xf] sm:$0xff]
        %v3273 = vld [vmem:[#allocation2 + $0x27] sm:$0xff]
        %v3274 = vld [vmem:[#allocation2 + $0x2f] sm:$0xff]
        %v3275 = vld [vmem:[#allocation2 + $0x47] sm:$0xff]
        %v3276 = vld [vmem:[#allocation2 + $0x4f] sm:$0xff]
        %v3277 = vld [vmem:[#allocation2 + $0x67] sm:$0xff]
        %v3278 = vld [vmem:[#allocation2 + $0x6f] sm:$0xff]
        %v3279 = vld [vmem:[#allocation2 + $0x87] sm:$0xff]
        %v3280 = vld [vmem:[#allocation2 + $0x8f] sm:$0xff]
        %v3281 = vld [vmem:[#allocation2 + $0xa7] sm:$0xff]
        %v3282 = vld [vmem:[#allocation2 + $0xaf] sm:$0xff]
        %v3283 = vld [vmem:[#allocation2 + $0xc7] sm:$0xff]
        %v3284 = vld [vmem:[#allocation2 + $0xcf] sm:$0xff]
        %v3285 = vld [vmem:[#allocation2 + $0xe7] sm:$0xff]
        %v3286 = vld [vmem:[#allocation2 + $0xef] sm:$0xff]
        %v3287 = vld [vmem:[#allocation2 + $0x107] sm:$0xff]
        %v3288 = vld [vmem:[#allocation2 + $0x10f] sm:$0xff]
        %v3289 = vld [vmem:[#allocation2 + $0x127] sm:$0xff]
        %v3290 = vld [vmem:[#allocation2 + $0x12f] sm:$0xff]
        %v3291 = vld [vmem:[#allocation2 + $0x147] sm:$0xff]
        %v3292 = vld [vmem:[#allocation2 + $0x14f] sm:$0xff]
        %v3293 = vld [vmem:[#allocation2 + $0x167] sm:$0xff]
        %v3294 = vld [vmem:[#allocation2 + $0x16f] sm:$0xff]
        %v3295 = vld [vmem:[#allocation2 + $0x187] sm:$0xff]
        %v3296 = vld [vmem:[#allocation2 + $0x18f] sm:$0xff]
        %v3297 = vld [vmem:[#allocation2 + $0x1a7] sm:$0xff]
        %v3298 = vld [vmem:[#allocation2 + $0x1af] sm:$0xff]
        %v3299 = vld [vmem:[#allocation2 + $0x1c7] sm:$0xff]
        %v3300 = vld [vmem:[#allocation2 + $0x1cf] sm:$0xff]
        %v3301 = vld [vmem:[#allocation2 + $0x1e7] sm:$0xff]
        %v3302 = vld [vmem:[#allocation2 + $0x1ef] sm:$0xff]
        %3303 = vst.msk [vmem:[#allocation3] sm:$0xff] %vm304, %v3271
        %3304 = vst.msk [vmem:[#allocation3 + $0x48] sm:$0xff] %vm304, %v3272
        %3305 = vst.msk [vmem:[#allocation3 + $0x90] sm:$0xff] %vm304, %v3273
        %3306 = vst.msk [vmem:[#allocation3 + $0xd8] sm:$0xff] %vm304, %v3274
        %3307 = vst.msk [vmem:[#allocation3 + $0x120] sm:$0xff] %vm304, %v3275
        %3308 = vst.msk [vmem:[#allocation3 + $0x168] sm:$0xff] %vm304, %v3276
        %3309 = vst.msk [vmem:[#allocation3 + $0x1b0] sm:$0xff] %vm304, %v3277
        %3310 = vst.msk [vmem:[#allocation3 + $0x1f8] sm:$0xff] %vm304, %v3278
        %3311 = vst.msk [vmem:[#allocation3 + $0x240] sm:$0xff] %vm304, %v3279
        %3312 = vst.msk [vmem:[#allocation3 + $0x288] sm:$0xff] %vm304, %v3280
        %3313 = vst.msk [vmem:[#allocation3 + $0x2d0] sm:$0xff] %vm304, %v3281
        %3314 = vst.msk [vmem:[#allocation3 + $0x318] sm:$0xff] %vm304, %v3282
        %3315 = vst.msk [vmem:[#allocation3 + $0x360] sm:$0xff] %vm304, %v3283
        %3316 = vst.msk [vmem:[#allocation3 + $0x3a8] sm:$0xff] %vm304, %v3284
        %3317 = vst.msk [vmem:[#allocation3 + $0x3f0] sm:$0xff] %vm304, %v3285
        %3318 = vst.msk [vmem:[#allocation3 + $0x438] sm:$0xff] %vm304, %v3286
        %3319 = vst.msk [vmem:[#allocation3 + $0x480] sm:$0xff] %vm304, %v3287
        %3320 = vst.msk [vmem:[#allocation3 + $0x4c8] sm:$0xff] %vm304, %v3288
        %3321 = vst.msk [vmem:[#allocation3 + $0x510] sm:$0xff] %vm304, %v3289
        %3322 = vst.msk [vmem:[#allocation3 + $0x558] sm:$0xff] %vm304, %v3290
        %3323 = vst.msk [vmem:[#allocation3 + $0x5a0] sm:$0xff] %vm304, %v3291
        %3324 = vst.msk [vmem:[#allocation3 + $0x5e8] sm:$0xff] %vm304, %v3292
        %3325 = vst.msk [vmem:[#allocation3 + $0x630] sm:$0xff] %vm304, %v3293
        %3326 = vst.msk [vmem:[#allocation3 + $0x678] sm:$0xff] %vm304, %v3294
        %3327 = vst.msk [vmem:[#allocation3 + $0x6c0] sm:$0xff] %vm304, %v3295
        %3328 = vst.msk [vmem:[#allocation3 + $0x708] sm:$0xff] %vm304, %v3296
        %3329 = vst.msk [vmem:[#allocation3 + $0x750] sm:$0xff] %vm304, %v3297
        %3330 = vst.msk [vmem:[#allocation3 + $0x798] sm:$0xff] %vm304, %v3298
        %3331 = vst.msk [vmem:[#allocation3 + $0x7e0] sm:$0xff] %vm304, %v3299
        %3332 = vst.msk [vmem:[#allocation3 + $0x828] sm:$0xff] %vm304, %v3300
        %3333 = vst.msk [vmem:[#allocation3 + $0x870] sm:$0xff] %vm304, %v3301
        %3334 = vst.msk [vmem:[#allocation3 + $0x8b8] sm:$0xff] %vm304, %v3302
        %v3335 = vld [vmem:[#allocation2 + $0x8] sm:$0xff]
        %v3336 = vld [vmem:[#allocation2 + $0x10] sm:$0xff]
        %v3337 = vld [vmem:[#allocation2 + $0x28] sm:$0xff]
        %v3338 = vld [vmem:[#allocation2 + $0x30] sm:$0xff]
        %v3339 = vld [vmem:[#allocation2 + $0x48] sm:$0xff]
        %v3340 = vld [vmem:[#allocation2 + $0x50] sm:$0xff]
        %v3341 = vld [vmem:[#allocation2 + $0x68] sm:$0xff]
        %v3342 = vld [vmem:[#allocation2 + $0x70] sm:$0xff]
        %v3343 = vld [vmem:[#allocation2 + $0x88] sm:$0xff]
        %v3344 = vld [vmem:[#allocation2 + $0x90] sm:$0xff]
        %v3345 = vld [vmem:[#allocation2 + $0xa8] sm:$0xff]
        %v3346 = vld [vmem:[#allocation2 + $0xb0] sm:$0xff]
        %v3347 = vld [vmem:[#allocation2 + $0xc8] sm:$0xff]
        %v3348 = vld [vmem:[#allocation2 + $0xd0] sm:$0xff]
        %v3349 = vld [vmem:[#allocation2 + $0xe8] sm:$0xff]
        %v3350 = vld [vmem:[#allocation2 + $0xf0] sm:$0xff]
        %v3351 = vld [vmem:[#allocation2 + $0x108] sm:$0xff]
        %v3352 = vld [vmem:[#allocation2 + $0x110] sm:$0xff]
        %v3353 = vld [vmem:[#allocation2 + $0x128] sm:$0xff]
        %v3354 = vld [vmem:[#allocation2 + $0x130] sm:$0xff]
        %v3355 = vld [vmem:[#allocation2 + $0x148] sm:$0xff]
        %v3356 = vld [vmem:[#allocation2 + $0x150] sm:$0xff]
        %v3357 = vld [vmem:[#allocation2 + $0x168] sm:$0xff]
        %v3358 = vld [vmem:[#allocation2 + $0x170] sm:$0xff]
        %v3359 = vld [vmem:[#allocation2 + $0x188] sm:$0xff]
        %v3360 = vld [vmem:[#allocation2 + $0x190] sm:$0xff]
        %v3361 = vld [vmem:[#allocation2 + $0x1a8] sm:$0xff]
        %v3362 = vld [vmem:[#allocation2 + $0x1b0] sm:$0xff]
        %v3363 = vld [vmem:[#allocation2 + $0x1c8] sm:$0xff]
        %v3364 = vld [vmem:[#allocation2 + $0x1d0] sm:$0xff]
        %v3365 = vld [vmem:[#allocation2 + $0x1e8] sm:$0xff]
        %v3366 = vld [vmem:[#allocation2 + $0x1f0] sm:$0xff]
        %3367 = vst.msk [vmem:[#allocation3 + $0x8] sm:$0xff] %vm304, %v3335
        %3368 = vst.msk [vmem:[#allocation3 + $0x50] sm:$0xff] %vm304, %v3336
        %3369 = vst.msk [vmem:[#allocation3 + $0x98] sm:$0xff] %vm304, %v3337
        %3370 = vst.msk [vmem:[#allocation3 + $0xe0] sm:$0xff] %vm304, %v3338
        %3371 = vst.msk [vmem:[#allocation3 + $0x128] sm:$0xff] %vm304, %v3339
        %3372 = vst.msk [vmem:[#allocation3 + $0x170] sm:$0xff] %vm304, %v3340
        %3373 = vst.msk [vmem:[#allocation3 + $0x1b8] sm:$0xff] %vm304, %v3341
        %3374 = vst.msk [vmem:[#allocation3 + $0x200] sm:$0xff] %vm304, %v3342
        %3375 = vst.msk [vmem:[#allocation3 + $0x248] sm:$0xff] %vm304, %v3343
        %3376 = vst.msk [vmem:[#allocation3 + $0x290] sm:$0xff] %vm304, %v3344
        %3377 = vst.msk [vmem:[#allocation3 + $0x2d8] sm:$0xff] %vm304, %v3345
        %3378 = vst.msk [vmem:[#allocation3 + $0x320] sm:$0xff] %vm304, %v3346
        %3379 = vst.msk [vmem:[#allocation3 + $0x368] sm:$0xff] %vm304, %v3347
        %3380 = vst.msk [vmem:[#allocation3 + $0x3b0] sm:$0xff] %vm304, %v3348
        %3381 = vst.msk [vmem:[#allocation3 + $0x3f8] sm:$0xff] %vm304, %v3349
        %3382 = vst.msk [vmem:[#allocation3 + $0x440] sm:$0xff] %vm304, %v3350
        %3383 = vst.msk [vmem:[#allocation3 + $0x488] sm:$0xff] %vm304, %v3351
        %3384 = vst.msk [vmem:[#allocation3 + $0x4d0] sm:$0xff] %vm304, %v3352
        %3385 = vst.msk [vmem:[#allocation3 + $0x518] sm:$0xff] %vm304, %v3353
        %3386 = vst.msk [vmem:[#allocation3 + $0x560] sm:$0xff] %vm304, %v3354
        %3387 = vst.msk [vmem:[#allocation3 + $0x5a8] sm:$0xff] %vm304, %v3355
        %3388 = vst.msk [vmem:[#allocation3 + $0x5f0] sm:$0xff] %vm304, %v3356
        %3389 = vst.msk [vmem:[#allocation3 + $0x638] sm:$0xff] %vm304, %v3357
        %3390 = vst.msk [vmem:[#allocation3 + $0x680] sm:$0xff] %vm304, %v3358
        %3391 = vst.msk [vmem:[#allocation3 + $0x6c8] sm:$0xff] %vm304, %v3359
        %3392 = vst.msk [vmem:[#allocation3 + $0x710] sm:$0xff] %vm304, %v3360
        %3393 = vst.msk [vmem:[#allocation3 + $0x758] sm:$0xff] %vm304, %v3361
        %3394 = vst.msk [vmem:[#allocation3 + $0x7a0] sm:$0xff] %vm304, %v3362
        %3395 = vst.msk [vmem:[#allocation3 + $0x7e8] sm:$0xff] %vm304, %v3363
        %3396 = vst.msk [vmem:[#allocation3 + $0x830] sm:$0xff] %vm304, %v3364
        %3397 = vst.msk [vmem:[#allocation3 + $0x878] sm:$0xff] %vm304, %v3365
        %3398 = vst.msk [vmem:[#allocation3 + $0x8c0] sm:$0xff] %vm304, %v3366
        %v3399 = vld [vmem:[#allocation2 + $0x9] sm:$0xff]
        %v3400 = vld [vmem:[#allocation2 + $0x11] sm:$0xff]
        %v3401 = vld [vmem:[#allocation2 + $0x29] sm:$0xff]
        %v3402 = vld [vmem:[#allocation2 + $0x31] sm:$0xff]
        %v3403 = vld [vmem:[#allocation2 + $0x49] sm:$0xff]
        %v3404 = vld [vmem:[#allocation2 + $0x51] sm:$0xff]
        %v3405 = vld [vmem:[#allocation2 + $0x69] sm:$0xff]
        %v3406 = vld [vmem:[#allocation2 + $0x71] sm:$0xff]
        %v3407 = vld [vmem:[#allocation2 + $0x89] sm:$0xff]
        %v3408 = vld [vmem:[#allocation2 + $0x91] sm:$0xff]
        %v3409 = vld [vmem:[#allocation2 + $0xa9] sm:$0xff]
        %v3410 = vld [vmem:[#allocation2 + $0xb1] sm:$0xff]
        %v3411 = vld [vmem:[#allocation2 + $0xc9] sm:$0xff]
        %v3412 = vld [vmem:[#allocation2 + $0xd1] sm:$0xff]
        %v3413 = vld [vmem:[#allocation2 + $0xe9] sm:$0xff]
        %v3414 = vld [vmem:[#allocation2 + $0xf1] sm:$0xff]
        %v3415 = vld [vmem:[#allocation2 + $0x109] sm:$0xff]
        %v3416 = vld [vmem:[#allocation2 + $0x111] sm:$0xff]
        %v3417 = vld [vmem:[#allocation2 + $0x129] sm:$0xff]
        %v3418 = vld [vmem:[#allocation2 + $0x131] sm:$0xff]
        %v3419 = vld [vmem:[#allocation2 + $0x149] sm:$0xff]
        %v3420 = vld [vmem:[#allocation2 + $0x151] sm:$0xff]
        %v3421 = vld [vmem:[#allocation2 + $0x169] sm:$0xff]
        %v3422 = vld [vmem:[#allocation2 + $0x171] sm:$0xff]
        %v3423 = vld [vmem:[#allocation2 + $0x189] sm:$0xff]
        %v3424 = vld [vmem:[#allocation2 + $0x191] sm:$0xff]
        %v3425 = vld [vmem:[#allocation2 + $0x1a9] sm:$0xff]
        %v3426 = vld [vmem:[#allocation2 + $0x1b1] sm:$0xff]
        %v3427 = vld [vmem:[#allocation2 + $0x1c9] sm:$0xff]
        %v3428 = vld [vmem:[#allocation2 + $0x1d1] sm:$0xff]
        %v3429 = vld [vmem:[#allocation2 + $0x1e9] sm:$0xff]
        %v3430 = vld [vmem:[#allocation2 + $0x1f1] sm:$0xff]
        %3431 = vst.msk [vmem:[#allocation3 + $0x10] sm:$0xff] %vm304, %v3399
        %3432 = vst.msk [vmem:[#allocation3 + $0x58] sm:$0xff] %vm304, %v3400
        %3433 = vst.msk [vmem:[#allocation3 + $0xa0] sm:$0xff] %vm304, %v3401
        %3434 = vst.msk [vmem:[#allocation3 + $0xe8] sm:$0xff] %vm304, %v3402
        %3435 = vst.msk [vmem:[#allocation3 + $0x130] sm:$0xff] %vm304, %v3403
        %3436 = vst.msk [vmem:[#allocation3 + $0x178] sm:$0xff] %vm304, %v3404
        %3437 = vst.msk [vmem:[#allocation3 + $0x1c0] sm:$0xff] %vm304, %v3405
        %3438 = vst.msk [vmem:[#allocation3 + $0x208] sm:$0xff] %vm304, %v3406
        %3439 = vst.msk [vmem:[#allocation3 + $0x250] sm:$0xff] %vm304, %v3407
        %3440 = vst.msk [vmem:[#allocation3 + $0x298] sm:$0xff] %vm304, %v3408
        %3441 = vst.msk [vmem:[#allocation3 + $0x2e0] sm:$0xff] %vm304, %v3409
        %3442 = vst.msk [vmem:[#allocation3 + $0x328] sm:$0xff] %vm304, %v3410
        %3443 = vst.msk [vmem:[#allocation3 + $0x370] sm:$0xff] %vm304, %v3411
        %3444 = vst.msk [vmem:[#allocation3 + $0x3b8] sm:$0xff] %vm304, %v3412
        %3445 = vst.msk [vmem:[#allocation3 + $0x400] sm:$0xff] %vm304, %v3413
        %3446 = vst.msk [vmem:[#allocation3 + $0x448] sm:$0xff] %vm304, %v3414
        %3447 = vst.msk [vmem:[#allocation3 + $0x490] sm:$0xff] %vm304, %v3415
        %3448 = vst.msk [vmem:[#allocation3 + $0x4d8] sm:$0xff] %vm304, %v3416
        %3449 = vst.msk [vmem:[#allocation3 + $0x520] sm:$0xff] %vm304, %v3417
        %3450 = vst.msk [vmem:[#allocation3 + $0x568] sm:$0xff] %vm304, %v3418
        %3451 = vst.msk [vmem:[#allocation3 + $0x5b0] sm:$0xff] %vm304, %v3419
        %3452 = vst.msk [vmem:[#allocation3 + $0x5f8] sm:$0xff] %vm304, %v3420
        %3453 = vst.msk [vmem:[#allocation3 + $0x640] sm:$0xff] %vm304, %v3421
        %3454 = vst.msk [vmem:[#allocation3 + $0x688] sm:$0xff] %vm304, %v3422
        %3455 = vst.msk [vmem:[#allocation3 + $0x6d0] sm:$0xff] %vm304, %v3423
        %3456 = vst.msk [vmem:[#allocation3 + $0x718] sm:$0xff] %vm304, %v3424
        %3457 = vst.msk [vmem:[#allocation3 + $0x760] sm:$0xff] %vm304, %v3425
        %3458 = vst.msk [vmem:[#allocation3 + $0x7a8] sm:$0xff] %vm304, %v3426
        %3459 = vst.msk [vmem:[#allocation3 + $0x7f0] sm:$0xff] %vm304, %v3427
        %3460 = vst.msk [vmem:[#allocation3 + $0x838] sm:$0xff] %vm304, %v3428
        %3461 = vst.msk [vmem:[#allocation3 + $0x880] sm:$0xff] %vm304, %v3429
        %3462 = vst.msk [vmem:[#allocation3 + $0x8c8] sm:$0xff] %vm304, %v3430
        %v3463 = vld [vmem:[%s1033 + $0x7] sm:$0xff]
        %v3464 = vld [vmem:[%s1033 + $0xf] sm:$0xff]
        %v3465 = vld [vmem:[%s1033 + $0x27] sm:$0xff]
        %v3466 = vld [vmem:[%s1033 + $0x2f] sm:$0xff]
        %v3467 = vld [vmem:[%s1033 + $0x47] sm:$0xff]
        %v3468 = vld [vmem:[%s1033 + $0x4f] sm:$0xff]
        %v3469 = vld [vmem:[%s1033 + $0x67] sm:$0xff]
        %v3470 = vld [vmem:[%s1033 + $0x6f] sm:$0xff]
        %v3471 = vld [vmem:[%s1033 + $0x87] sm:$0xff]
        %v3472 = vld [vmem:[%s1033 + $0x8f] sm:$0xff]
        %v3473 = vld [vmem:[%s1033 + $0xa7] sm:$0xff]
        %v3474 = vld [vmem:[%s1033 + $0xaf] sm:$0xff]
        %v3475 = vld [vmem:[%s1033 + $0xc7] sm:$0xff]
        %v3476 = vld [vmem:[%s1033 + $0xcf] sm:$0xff]
        %v3477 = vld [vmem:[%s1033 + $0xe7] sm:$0xff]
        %v3478 = vld [vmem:[%s1033 + $0xef] sm:$0xff]
        %v3479 = vld [vmem:[%s1033 + $0x107] sm:$0xff]
        %v3480 = vld [vmem:[%s1033 + $0x10f] sm:$0xff]
        %v3481 = vld [vmem:[%s1033 + $0x127] sm:$0xff]
        %v3482 = vld [vmem:[%s1033 + $0x12f] sm:$0xff]
        %v3483 = vld [vmem:[%s1033 + $0x147] sm:$0xff]
        %v3484 = vld [vmem:[%s1033 + $0x14f] sm:$0xff]
        %v3485 = vld [vmem:[%s1033 + $0x167] sm:$0xff]
        %v3486 = vld [vmem:[%s1033 + $0x16f] sm:$0xff]
        %v3487 = vld [vmem:[%s1033 + $0x187] sm:$0xff]
        %v3488 = vld [vmem:[%s1033 + $0x18f] sm:$0xff]
        %v3489 = vld [vmem:[%s1033 + $0x1a7] sm:$0xff]
        %v3490 = vld [vmem:[%s1033 + $0x1af] sm:$0xff]
        %v3491 = vld [vmem:[%s1033 + $0x1c7] sm:$0xff]
        %v3492 = vld [vmem:[%s1033 + $0x1cf] sm:$0xff]
        %v3493 = vld [vmem:[%s1033 + $0x1e7] sm:$0xff]
        %v3494 = vld [vmem:[%s1033 + $0x1ef] sm:$0xff]
        %3495 = vst.msk [vmem:[#allocation3 + $0x18] sm:$0xff] %vm304, %v3463
        %3496 = vst.msk [vmem:[#allocation3 + $0x60] sm:$0xff] %vm304, %v3464
        %3497 = vst.msk [vmem:[#allocation3 + $0xa8] sm:$0xff] %vm304, %v3465
        %3498 = vst.msk [vmem:[#allocation3 + $0xf0] sm:$0xff] %vm304, %v3466
        %3499 = vst.msk [vmem:[#allocation3 + $0x138] sm:$0xff] %vm304, %v3467
        %3500 = vst.msk [vmem:[#allocation3 + $0x180] sm:$0xff] %vm304, %v3468
        %3501 = vst.msk [vmem:[#allocation3 + $0x1c8] sm:$0xff] %vm304, %v3469
        %3502 = vst.msk [vmem:[#allocation3 + $0x210] sm:$0xff] %vm304, %v3470
        %3503 = vst.msk [vmem:[#allocation3 + $0x258] sm:$0xff] %vm304, %v3471
        %3504 = vst.msk [vmem:[#allocation3 + $0x2a0] sm:$0xff] %vm304, %v3472
        %3505 = vst.msk [vmem:[#allocation3 + $0x2e8] sm:$0xff] %vm304, %v3473
        %3506 = vst.msk [vmem:[#allocation3 + $0x330] sm:$0xff] %vm304, %v3474
        %3507 = vst.msk [vmem:[#allocation3 + $0x378] sm:$0xff] %vm304, %v3475
        %3508 = vst.msk [vmem:[#allocation3 + $0x3c0] sm:$0xff] %vm304, %v3476
        %3509 = vst.msk [vmem:[#allocation3 + $0x408] sm:$0xff] %vm304, %v3477
        %3510 = vst.msk [vmem:[#allocation3 + $0x450] sm:$0xff] %vm304, %v3478
        %3511 = vst.msk [vmem:[#allocation3 + $0x498] sm:$0xff] %vm304, %v3479
        %3512 = vst.msk [vmem:[#allocation3 + $0x4e0] sm:$0xff] %vm304, %v3480
        %3513 = vst.msk [vmem:[#allocation3 + $0x528] sm:$0xff] %vm304, %v3481
        %3514 = vst.msk [vmem:[#allocation3 + $0x570] sm:$0xff] %vm304, %v3482
        %3515 = vst.msk [vmem:[#allocation3 + $0x5b8] sm:$0xff] %vm304, %v3483
        %3516 = vst.msk [vmem:[#allocation3 + $0x600] sm:$0xff] %vm304, %v3484
        %3517 = vst.msk [vmem:[#allocation3 + $0x648] sm:$0xff] %vm304, %v3485
        %3518 = vst.msk [vmem:[#allocation3 + $0x690] sm:$0xff] %vm304, %v3486
        %3519 = vst.msk [vmem:[#allocation3 + $0x6d8] sm:$0xff] %vm304, %v3487
        %3520 = vst.msk [vmem:[#allocation3 + $0x720] sm:$0xff] %vm304, %v3488
        %3521 = vst.msk [vmem:[#allocation3 + $0x768] sm:$0xff] %vm304, %v3489
        %3522 = vst.msk [vmem:[#allocation3 + $0x7b0] sm:$0xff] %vm304, %v3490
        %3523 = vst.msk [vmem:[#allocation3 + $0x7f8] sm:$0xff] %vm304, %v3491
        %3524 = vst.msk [vmem:[#allocation3 + $0x840] sm:$0xff] %vm304, %v3492
        %3525 = vst.msk [vmem:[#allocation3 + $0x888] sm:$0xff] %vm304, %v3493
        %3526 = vst.msk [vmem:[#allocation3 + $0x8d0] sm:$0xff] %vm304, %v3494
        %v3527 = vld [vmem:[%s1033 + $0x8] sm:$0xff]
        %v3528 = vld [vmem:[%s1033 + $0x10] sm:$0xff]
        %v3529 = vld [vmem:[%s1033 + $0x28] sm:$0xff]
        %v3530 = vld [vmem:[%s1033 + $0x30] sm:$0xff]
        %v3531 = vld [vmem:[%s1033 + $0x48] sm:$0xff]
        %v3532 = vld [vmem:[%s1033 + $0x50] sm:$0xff]
        %v3533 = vld [vmem:[%s1033 + $0x68] sm:$0xff]
        %v3534 = vld [vmem:[%s1033 + $0x70] sm:$0xff]
        %v3535 = vld [vmem:[%s1033 + $0x88] sm:$0xff]
        %v3536 = vld [vmem:[%s1033 + $0x90] sm:$0xff]
        %v3537 = vld [vmem:[%s1033 + $0xa8] sm:$0xff]
        %v3538 = vld [vmem:[%s1033 + $0xb0] sm:$0xff]
        %v3539 = vld [vmem:[%s1033 + $0xc8] sm:$0xff]
        %v3540 = vld [vmem:[%s1033 + $0xd0] sm:$0xff]
        %v3541 = vld [vmem:[%s1033 + $0xe8] sm:$0xff]
        %v3542 = vld [vmem:[%s1033 + $0xf0] sm:$0xff]
        %v3543 = vld [vmem:[%s1033 + $0x108] sm:$0xff]
        %v3544 = vld [vmem:[%s1033 + $0x110] sm:$0xff]
        %v3545 = vld [vmem:[%s1033 + $0x128] sm:$0xff]
        %v3546 = vld [vmem:[%s1033 + $0x130] sm:$0xff]
        %v3547 = vld [vmem:[%s1033 + $0x148] sm:$0xff]
        %v3548 = vld [vmem:[%s1033 + $0x150] sm:$0xff]
        %v3549 = vld [vmem:[%s1033 + $0x168] sm:$0xff]
        %v3550 = vld [vmem:[%s1033 + $0x170] sm:$0xff]
        %v3551 = vld [vmem:[%s1033 + $0x188] sm:$0xff]
        %v3552 = vld [vmem:[%s1033 + $0x190] sm:$0xff]
        %v3553 = vld [vmem:[%s1033 + $0x1a8] sm:$0xff]
        %v3554 = vld [vmem:[%s1033 + $0x1b0] sm:$0xff]
        %v3555 = vld [vmem:[%s1033 + $0x1c8] sm:$0xff]
        %v3556 = vld [vmem:[%s1033 + $0x1d0] sm:$0xff]
        %v3557 = vld [vmem:[%s1033 + $0x1e8] sm:$0xff]
        %v3558 = vld [vmem:[%s1033 + $0x1f0] sm:$0xff]
        %3559 = vst.msk [vmem:[#allocation3 + $0x20] sm:$0xff] %vm304, %v3527
        %3560 = vst.msk [vmem:[#allocation3 + $0x68] sm:$0xff] %vm304, %v3528
        %3561 = vst.msk [vmem:[#allocation3 + $0xb0] sm:$0xff] %vm304, %v3529
        %3562 = vst.msk [vmem:[#allocation3 + $0xf8] sm:$0xff] %vm304, %v3530
        %3563 = vst.msk [vmem:[#allocation3 + $0x140] sm:$0xff] %vm304, %v3531
        %3564 = vst.msk [vmem:[#allocation3 + $0x188] sm:$0xff] %vm304, %v3532
        %3565 = vst.msk [vmem:[#allocation3 + $0x1d0] sm:$0xff] %vm304, %v3533
        %3566 = vst.msk [vmem:[#allocation3 + $0x218] sm:$0xff] %vm304, %v3534
        %3567 = vst.msk [vmem:[#allocation3 + $0x260] sm:$0xff] %vm304, %v3535
        %3568 = vst.msk [vmem:[#allocation3 + $0x2a8] sm:$0xff] %vm304, %v3536
        %3569 = vst.msk [vmem:[#allocation3 + $0x2f0] sm:$0xff] %vm304, %v3537
        %3570 = vst.msk [vmem:[#allocation3 + $0x338] sm:$0xff] %vm304, %v3538
        %3571 = vst.msk [vmem:[#allocation3 + $0x380] sm:$0xff] %vm304, %v3539
        %3572 = vst.msk [vmem:[#allocation3 + $0x3c8] sm:$0xff] %vm304, %v3540
        %3573 = vst.msk [vmem:[#allocation3 + $0x410] sm:$0xff] %vm304, %v3541
        %3574 = vst.msk [vmem:[#allocation3 + $0x458] sm:$0xff] %vm304, %v3542
        %3575 = vst.msk [vmem:[#allocation3 + $0x4a0] sm:$0xff] %vm304, %v3543
        %3576 = vst.msk [vmem:[#allocation3 + $0x4e8] sm:$0xff] %vm304, %v3544
        %3577 = vst.msk [vmem:[#allocation3 + $0x530] sm:$0xff] %vm304, %v3545
        %3578 = vst.msk [vmem:[#allocation3 + $0x578] sm:$0xff] %vm304, %v3546
        %3579 = vst.msk [vmem:[#allocation3 + $0x5c0] sm:$0xff] %vm304, %v3547
        %3580 = vst.msk [vmem:[#allocation3 + $0x608] sm:$0xff] %vm304, %v3548
        %3581 = vst.msk [vmem:[#allocation3 + $0x650] sm:$0xff] %vm304, %v3549
        %3582 = vst.msk [vmem:[#allocation3 + $0x698] sm:$0xff] %vm304, %v3550
        %3583 = vst.msk [vmem:[#allocation3 + $0x6e0] sm:$0xff] %vm304, %v3551
        %3584 = vst.msk [vmem:[#allocation3 + $0x728] sm:$0xff] %vm304, %v3552
        %3585 = vst.msk [vmem:[#allocation3 + $0x770] sm:$0xff] %vm304, %v3553
        %3586 = vst.msk [vmem:[#allocation3 + $0x7b8] sm:$0xff] %vm304, %v3554
        %3587 = vst.msk [vmem:[#allocation3 + $0x800] sm:$0xff] %vm304, %v3555
        %3588 = vst.msk [vmem:[#allocation3 + $0x848] sm:$0xff] %vm304, %v3556
        %3589 = vst.msk [vmem:[#allocation3 + $0x890] sm:$0xff] %vm304, %v3557
        %3590 = vst.msk [vmem:[#allocation3 + $0x8d8] sm:$0xff] %vm304, %v3558
        %v3591 = vld [vmem:[%s1033 + $0x9] sm:$0xff]
        %v3592 = vld [vmem:[%s1033 + $0x11] sm:$0xff]
        %v3593 = vld [vmem:[%s1033 + $0x29] sm:$0xff]
        %v3594 = vld [vmem:[%s1033 + $0x31] sm:$0xff]
        %v3595 = vld [vmem:[%s1033 + $0x49] sm:$0xff]
        %v3596 = vld [vmem:[%s1033 + $0x51] sm:$0xff]
        %v3597 = vld [vmem:[%s1033 + $0x69] sm:$0xff]
        %v3598 = vld [vmem:[%s1033 + $0x71] sm:$0xff]
        %v3599 = vld [vmem:[%s1033 + $0x89] sm:$0xff]
        %v3600 = vld [vmem:[%s1033 + $0x91] sm:$0xff]
        %v3601 = vld [vmem:[%s1033 + $0xa9] sm:$0xff]
        %v3602 = vld [vmem:[%s1033 + $0xb1] sm:$0xff]
        %v3603 = vld [vmem:[%s1033 + $0xc9] sm:$0xff]
        %v3604 = vld [vmem:[%s1033 + $0xd1] sm:$0xff]
        %v3605 = vld [vmem:[%s1033 + $0xe9] sm:$0xff]
        %v3606 = vld [vmem:[%s1033 + $0xf1] sm:$0xff]
        %v3607 = vld [vmem:[%s1033 + $0x109] sm:$0xff]
        %v3608 = vld [vmem:[%s1033 + $0x111] sm:$0xff]
        %v3609 = vld [vmem:[%s1033 + $0x129] sm:$0xff]
        %v3610 = vld [vmem:[%s1033 + $0x131] sm:$0xff]
        %v3611 = vld [vmem:[%s1033 + $0x149] sm:$0xff]
        %v3612 = vld [vmem:[%s1033 + $0x151] sm:$0xff]
        %v3613 = vld [vmem:[%s1033 + $0x169] sm:$0xff]
        %v3614 = vld [vmem:[%s1033 + $0x171] sm:$0xff]
        %v3615 = vld [vmem:[%s1033 + $0x189] sm:$0xff]
        %v3616 = vld [vmem:[%s1033 + $0x191] sm:$0xff]
        %v3617 = vld [vmem:[%s1033 + $0x1a9] sm:$0xff]
        %v3618 = vld [vmem:[%s1033 + $0x1b1] sm:$0xff]
        %v3619 = vld [vmem:[%s1033 + $0x1c9] sm:$0xff]
        %v3620 = vld [vmem:[%s1033 + $0x1d1] sm:$0xff]
        %v3621 = vld [vmem:[%s1033 + $0x1e9] sm:$0xff]
        %v3622 = vld [vmem:[%s1033 + $0x1f1] sm:$0xff]
        %3623 = vst.msk [vmem:[#allocation3 + $0x28] sm:$0xff] %vm304, %v3591
        %3624 = vst.msk [vmem:[#allocation3 + $0x70] sm:$0xff] %vm304, %v3592
        %3625 = vst.msk [vmem:[#allocation3 + $0xb8] sm:$0xff] %vm304, %v3593
        %3626 = vst.msk [vmem:[#allocation3 + $0x100] sm:$0xff] %vm304, %v3594
        %3627 = vst.msk [vmem:[#allocation3 + $0x148] sm:$0xff] %vm304, %v3595
        %3628 = vst.msk [vmem:[#allocation3 + $0x190] sm:$0xff] %vm304, %v3596
        %3629 = vst.msk [vmem:[#allocation3 + $0x1d8] sm:$0xff] %vm304, %v3597
        %3630 = vst.msk [vmem:[#allocation3 + $0x220] sm:$0xff] %vm304, %v3598
        %3631 = vst.msk [vmem:[#allocation3 + $0x268] sm:$0xff] %vm304, %v3599
        %3632 = vst.msk [vmem:[#allocation3 + $0x2b0] sm:$0xff] %vm304, %v3600
        %3633 = vst.msk [vmem:[#allocation3 + $0x2f8] sm:$0xff] %vm304, %v3601
        %3634 = vst.msk [vmem:[#allocation3 + $0x340] sm:$0xff] %vm304, %v3602
        %3635 = vst.msk [vmem:[#allocation3 + $0x388] sm:$0xff] %vm304, %v3603
        %3636 = vst.msk [vmem:[#allocation3 + $0x3d0] sm:$0xff] %vm304, %v3604
        %3637 = vst.msk [vmem:[#allocation3 + $0x418] sm:$0xff] %vm304, %v3605
        %3638 = vst.msk [vmem:[#allocation3 + $0x460] sm:$0xff] %vm304, %v3606
        %3639 = vst.msk [vmem:[#allocation3 + $0x4a8] sm:$0xff] %vm304, %v3607
        %3640 = vst.msk [vmem:[#allocation3 + $0x4f0] sm:$0xff] %vm304, %v3608
        %3641 = vst.msk [vmem:[#allocation3 + $0x538] sm:$0xff] %vm304, %v3609
        %3642 = vst.msk [vmem:[#allocation3 + $0x580] sm:$0xff] %vm304, %v3610
        %3643 = vst.msk [vmem:[#allocation3 + $0x5c8] sm:$0xff] %vm304, %v3611
        %3644 = vst.msk [vmem:[#allocation3 + $0x610] sm:$0xff] %vm304, %v3612
        %3645 = vst.msk [vmem:[#allocation3 + $0x658] sm:$0xff] %vm304, %v3613
        %3646 = vst.msk [vmem:[#allocation3 + $0x6a0] sm:$0xff] %vm304, %v3614
        %3647 = vst.msk [vmem:[#allocation3 + $0x6e8] sm:$0xff] %vm304, %v3615
        %3648 = vst.msk [vmem:[#allocation3 + $0x730] sm:$0xff] %vm304, %v3616
        %3649 = vst.msk [vmem:[#allocation3 + $0x778] sm:$0xff] %vm304, %v3617
        %3650 = vst.msk [vmem:[#allocation3 + $0x7c0] sm:$0xff] %vm304, %v3618
        %3651 = vst.msk [vmem:[#allocation3 + $0x808] sm:$0xff] %vm304, %v3619
        %3652 = vst.msk [vmem:[#allocation3 + $0x850] sm:$0xff] %vm304, %v3620
        %3653 = vst.msk [vmem:[#allocation3 + $0x898] sm:$0xff] %vm304, %v3621
        %3654 = vst.msk [vmem:[#allocation3 + $0x8e0] sm:$0xff] %vm304, %v3622
        %v3655 = vld [vmem:[%s1450 + $0x7] sm:$0xff]
        %v3656 = vld [vmem:[%s1450 + $0xf] sm:$0xff]
        %v3657 = vld [vmem:[%s1450 + $0x27] sm:$0xff]
        %v3658 = vld [vmem:[%s1450 + $0x2f] sm:$0xff]
        %v3659 = vld [vmem:[%s1450 + $0x47] sm:$0xff]
        %v3660 = vld [vmem:[%s1450 + $0x4f] sm:$0xff]
        %v3661 = vld [vmem:[%s1450 + $0x67] sm:$0xff]
        %v3662 = vld [vmem:[%s1450 + $0x6f] sm:$0xff]
        %v3663 = vld [vmem:[%s1450 + $0x87] sm:$0xff]
        %v3664 = vld [vmem:[%s1450 + $0x8f] sm:$0xff]
        %v3665 = vld [vmem:[%s1450 + $0xa7] sm:$0xff]
        %v3666 = vld [vmem:[%s1450 + $0xaf] sm:$0xff]
        %v3667 = vld [vmem:[%s1450 + $0xc7] sm:$0xff]
        %v3668 = vld [vmem:[%s1450 + $0xcf] sm:$0xff]
        %v3669 = vld [vmem:[%s1450 + $0xe7] sm:$0xff]
        %v3670 = vld [vmem:[%s1450 + $0xef] sm:$0xff]
        %v3671 = vld [vmem:[%s1450 + $0x107] sm:$0xff]
        %v3672 = vld [vmem:[%s1450 + $0x10f] sm:$0xff]
        %v3673 = vld [vmem:[%s1450 + $0x127] sm:$0xff]
        %v3674 = vld [vmem:[%s1450 + $0x12f] sm:$0xff]
        %v3675 = vld [vmem:[%s1450 + $0x147] sm:$0xff]
        %v3676 = vld [vmem:[%s1450 + $0x14f] sm:$0xff]
        %v3677 = vld [vmem:[%s1450 + $0x167] sm:$0xff]
        %v3678 = vld [vmem:[%s1450 + $0x16f] sm:$0xff]
        %v3679 = vld [vmem:[%s1450 + $0x187] sm:$0xff]
        %v3680 = vld [vmem:[%s1450 + $0x18f] sm:$0xff]
        %v3681 = vld [vmem:[%s1450 + $0x1a7] sm:$0xff]
        %v3682 = vld [vmem:[%s1450 + $0x1af] sm:$0xff]
        %v3683 = vld [vmem:[%s1450 + $0x1c7] sm:$0xff]
        %v3684 = vld [vmem:[%s1450 + $0x1cf] sm:$0xff]
        %v3685 = vld [vmem:[%s1450 + $0x1e7] sm:$0xff]
        %v3686 = vld [vmem:[%s1450 + $0x1ef] sm:$0xff]
        %3687 = vst.msk [vmem:[#allocation3 + $0x30] sm:$0xff] %vm304, %v3655
        %3688 = vst.msk [vmem:[#allocation3 + $0x78] sm:$0xff] %vm304, %v3656
        %3689 = vst.msk [vmem:[#allocation3 + $0xc0] sm:$0xff] %vm304, %v3657
        %3690 = vst.msk [vmem:[#allocation3 + $0x108] sm:$0xff] %vm304, %v3658
        %3691 = vst.msk [vmem:[#allocation3 + $0x150] sm:$0xff] %vm304, %v3659
        %3692 = vst.msk [vmem:[#allocation3 + $0x198] sm:$0xff] %vm304, %v3660
        %3693 = vst.msk [vmem:[#allocation3 + $0x1e0] sm:$0xff] %vm304, %v3661
        %3694 = vst.msk [vmem:[#allocation3 + $0x228] sm:$0xff] %vm304, %v3662
        %3695 = vst.msk [vmem:[#allocation3 + $0x270] sm:$0xff] %vm304, %v3663
        %3696 = vst.msk [vmem:[#allocation3 + $0x2b8] sm:$0xff] %vm304, %v3664
        %3697 = vst.msk [vmem:[#allocation3 + $0x300] sm:$0xff] %vm304, %v3665
        %3698 = vst.msk [vmem:[#allocation3 + $0x348] sm:$0xff] %vm304, %v3666
        %3699 = vst.msk [vmem:[#allocation3 + $0x390] sm:$0xff] %vm304, %v3667
        %3700 = vst.msk [vmem:[#allocation3 + $0x3d8] sm:$0xff] %vm304, %v3668
        %3701 = vst.msk [vmem:[#allocation3 + $0x420] sm:$0xff] %vm304, %v3669
        %3702 = vst.msk [vmem:[#allocation3 + $0x468] sm:$0xff] %vm304, %v3670
        %3703 = vst.msk [vmem:[#allocation3 + $0x4b0] sm:$0xff] %vm304, %v3671
        %3704 = vst.msk [vmem:[#allocation3 + $0x4f8] sm:$0xff] %vm304, %v3672
        %3705 = vst.msk [vmem:[#allocation3 + $0x540] sm:$0xff] %vm304, %v3673
        %3706 = vst.msk [vmem:[#allocation3 + $0x588] sm:$0xff] %vm304, %v3674
        %3707 = vst.msk [vmem:[#allocation3 + $0x5d0] sm:$0xff] %vm304, %v3675
        %3708 = vst.msk [vmem:[#allocation3 + $0x618] sm:$0xff] %vm304, %v3676
        %3709 = vst.msk [vmem:[#allocation3 + $0x660] sm:$0xff] %vm304, %v3677
        %3710 = vst.msk [vmem:[#allocation3 + $0x6a8] sm:$0xff] %vm304, %v3678
        %3711 = vst.msk [vmem:[#allocation3 + $0x6f0] sm:$0xff] %vm304, %v3679
        %3712 = vst.msk [vmem:[#allocation3 + $0x738] sm:$0xff] %vm304, %v3680
        %3713 = vst.msk [vmem:[#allocation3 + $0x780] sm:$0xff] %vm304, %v3681
        %3714 = vst.msk [vmem:[#allocation3 + $0x7c8] sm:$0xff] %vm304, %v3682
        %3715 = vst.msk [vmem:[#allocation3 + $0x810] sm:$0xff] %vm304, %v3683
        %3716 = vst.msk [vmem:[#allocation3 + $0x858] sm:$0xff] %vm304, %v3684
        %3717 = vst.msk [vmem:[#allocation3 + $0x8a0] sm:$0xff] %vm304, %v3685
        %3718 = vst.msk [vmem:[#allocation3 + $0x8e8] sm:$0xff] %vm304, %v3686
        %v3719 = vld [vmem:[%s1450 + $0x8] sm:$0xff]
        %v3720 = vld [vmem:[%s1450 + $0x10] sm:$0xff]
        %v3721 = vld [vmem:[%s1450 + $0x28] sm:$0xff]
        %v3722 = vld [vmem:[%s1450 + $0x30] sm:$0xff]
        %v3723 = vld [vmem:[%s1450 + $0x48] sm:$0xff]
        %v3724 = vld [vmem:[%s1450 + $0x50] sm:$0xff]
        %v3725 = vld [vmem:[%s1450 + $0x68] sm:$0xff]
        %v3726 = vld [vmem:[%s1450 + $0x70] sm:$0xff]
        %v3727 = vld [vmem:[%s1450 + $0x88] sm:$0xff]
        %v3728 = vld [vmem:[%s1450 + $0x90] sm:$0xff]
        %v3729 = vld [vmem:[%s1450 + $0xa8] sm:$0xff]
        %v3730 = vld [vmem:[%s1450 + $0xb0] sm:$0xff]
        %v3731 = vld [vmem:[%s1450 + $0xc8] sm:$0xff]
        %v3732 = vld [vmem:[%s1450 + $0xd0] sm:$0xff]
        %v3733 = vld [vmem:[%s1450 + $0xe8] sm:$0xff]
        %v3734 = vld [vmem:[%s1450 + $0xf0] sm:$0xff]
        %v3735 = vld [vmem:[%s1450 + $0x108] sm:$0xff]
        %v3736 = vld [vmem:[%s1450 + $0x110] sm:$0xff]
        %v3737 = vld [vmem:[%s1450 + $0x128] sm:$0xff]
        %v3738 = vld [vmem:[%s1450 + $0x130] sm:$0xff]
        %v3739 = vld [vmem:[%s1450 + $0x148] sm:$0xff]
        %v3740 = vld [vmem:[%s1450 + $0x150] sm:$0xff]
        %v3741 = vld [vmem:[%s1450 + $0x168] sm:$0xff]
        %v3742 = vld [vmem:[%s1450 + $0x170] sm:$0xff]
        %v3743 = vld [vmem:[%s1450 + $0x188] sm:$0xff]
        %v3744 = vld [vmem:[%s1450 + $0x190] sm:$0xff]
        %v3745 = vld [vmem:[%s1450 + $0x1a8] sm:$0xff]
        %v3746 = vld [vmem:[%s1450 + $0x1b0] sm:$0xff]
        %v3747 = vld [vmem:[%s1450 + $0x1c8] sm:$0xff]
        %v3748 = vld [vmem:[%s1450 + $0x1d0] sm:$0xff]
        %v3749 = vld [vmem:[%s1450 + $0x1e8] sm:$0xff]
        %v3750 = vld [vmem:[%s1450 + $0x1f0] sm:$0xff]
        %3751 = vst.msk [vmem:[#allocation3 + $0x38] sm:$0xff] %vm304, %v3719
        %3752 = vst.msk [vmem:[#allocation3 + $0x80] sm:$0xff] %vm304, %v3720
        %3753 = vst.msk [vmem:[#allocation3 + $0xc8] sm:$0xff] %vm304, %v3721
        %3754 = vst.msk [vmem:[#allocation3 + $0x110] sm:$0xff] %vm304, %v3722
        %3755 = vst.msk [vmem:[#allocation3 + $0x158] sm:$0xff] %vm304, %v3723
        %3756 = vst.msk [vmem:[#allocation3 + $0x1a0] sm:$0xff] %vm304, %v3724
        %3757 = vst.msk [vmem:[#allocation3 + $0x1e8] sm:$0xff] %vm304, %v3725
        %3758 = vst.msk [vmem:[#allocation3 + $0x230] sm:$0xff] %vm304, %v3726
        %3759 = vst.msk [vmem:[#allocation3 + $0x278] sm:$0xff] %vm304, %v3727
        %3760 = vst.msk [vmem:[#allocation3 + $0x2c0] sm:$0xff] %vm304, %v3728
        %3761 = vst.msk [vmem:[#allocation3 + $0x308] sm:$0xff] %vm304, %v3729
        %3762 = vst.msk [vmem:[#allocation3 + $0x350] sm:$0xff] %vm304, %v3730
        %3763 = vst.msk [vmem:[#allocation3 + $0x398] sm:$0xff] %vm304, %v3731
        %3764 = vst.msk [vmem:[#allocation3 + $0x3e0] sm:$0xff] %vm304, %v3732
        %3765 = vst.msk [vmem:[#allocation3 + $0x428] sm:$0xff] %vm304, %v3733
        %3766 = vst.msk [vmem:[#allocation3 + $0x470] sm:$0xff] %vm304, %v3734
        %3767 = vst.msk [vmem:[#allocation3 + $0x4b8] sm:$0xff] %vm304, %v3735
        %3768 = vst.msk [vmem:[#allocation3 + $0x500] sm:$0xff] %vm304, %v3736
        %3769 = vst.msk [vmem:[#allocation3 + $0x548] sm:$0xff] %vm304, %v3737
        %3770 = vst.msk [vmem:[#allocation3 + $0x590] sm:$0xff] %vm304, %v3738
        %3771 = vst.msk [vmem:[#allocation3 + $0x5d8] sm:$0xff] %vm304, %v3739
        %3772 = vst.msk [vmem:[#allocation3 + $0x620] sm:$0xff] %vm304, %v3740
        %3773 = vst.msk [vmem:[#allocation3 + $0x668] sm:$0xff] %vm304, %v3741
        %3774 = vst.msk [vmem:[#allocation3 + $0x6b0] sm:$0xff] %vm304, %v3742
        %3775 = vst.msk [vmem:[#allocation3 + $0x6f8] sm:$0xff] %vm304, %v3743
        %3776 = vst.msk [vmem:[#allocation3 + $0x740] sm:$0xff] %vm304, %v3744
        %3777 = vst.msk [vmem:[#allocation3 + $0x788] sm:$0xff] %vm304, %v3745
        %3778 = vst.msk [vmem:[#allocation3 + $0x7d0] sm:$0xff] %vm304, %v3746
        %3779 = vst.msk [vmem:[#allocation3 + $0x818] sm:$0xff] %vm304, %v3747
        %3780 = vst.msk [vmem:[#allocation3 + $0x860] sm:$0xff] %vm304, %v3748
        %3781 = vst.msk [vmem:[#allocation3 + $0x8a8] sm:$0xff] %vm304, %v3749
        %3782 = vst.msk [vmem:[#allocation3 + $0x8f0] sm:$0xff] %vm304, %v3750
        %v3783 = vld [vmem:[%s1450 + $0x9] sm:$0xff]
        %v3784 = vld [vmem:[%s1450 + $0x11] sm:$0xff]
        %v3785 = vld [vmem:[%s1450 + $0x29] sm:$0xff]
        %v3786 = vld [vmem:[%s1450 + $0x31] sm:$0xff]
        %v3787 = vld [vmem:[%s1450 + $0x49] sm:$0xff]
        %v3788 = vld [vmem:[%s1450 + $0x51] sm:$0xff]
        %v3789 = vld [vmem:[%s1450 + $0x69] sm:$0xff]
        %v3790 = vld [vmem:[%s1450 + $0x71] sm:$0xff]
        %v3791 = vld [vmem:[%s1450 + $0x89] sm:$0xff]
        %v3792 = vld [vmem:[%s1450 + $0x91] sm:$0xff]
        %v3793 = vld [vmem:[%s1450 + $0xa9] sm:$0xff]
        %v3794 = vld [vmem:[%s1450 + $0xb1] sm:$0xff]
        %v3795 = vld [vmem:[%s1450 + $0xc9] sm:$0xff]
        %v3796 = vld [vmem:[%s1450 + $0xd1] sm:$0xff]
        %v3797 = vld [vmem:[%s1450 + $0xe9] sm:$0xff]
        %v3798 = vld [vmem:[%s1450 + $0xf1] sm:$0xff]
        %v3799 = vld [vmem:[%s1450 + $0x109] sm:$0xff]
        %v3800 = vld [vmem:[%s1450 + $0x111] sm:$0xff]
        %v3801 = vld [vmem:[%s1450 + $0x129] sm:$0xff]
        %v3802 = vld [vmem:[%s1450 + $0x131] sm:$0xff]
        %v3803 = vld [vmem:[%s1450 + $0x149] sm:$0xff]
        %v3804 = vld [vmem:[%s1450 + $0x151] sm:$0xff]
        %v3805 = vld [vmem:[%s1450 + $0x169] sm:$0xff]
        %v3806 = vld [vmem:[%s1450 + $0x171] sm:$0xff]
        %v3807 = vld [vmem:[%s1450 + $0x189] sm:$0xff]
        %v3808 = vld [vmem:[%s1450 + $0x191] sm:$0xff]
        %v3809 = vld [vmem:[%s1450 + $0x1a9] sm:$0xff]
        %v3810 = vld [vmem:[%s1450 + $0x1b1] sm:$0xff]
        %v3811 = vld [vmem:[%s1450 + $0x1c9] sm:$0xff]
        %v3812 = vld [vmem:[%s1450 + $0x1d1] sm:$0xff]
        %v3813 = vld [vmem:[%s1450 + $0x1e9] sm:$0xff]
        %v3814 = vld [vmem:[%s1450 + $0x1f1] sm:$0xff]
        %3815 = vst.msk [vmem:[#allocation3 + $0x40] sm:$0xff] %vm304, %v3783
        %3816 = vst.msk [vmem:[#allocation3 + $0x88] sm:$0xff] %vm304, %v3784
        %3817 = vst.msk [vmem:[#allocation3 + $0xd0] sm:$0xff] %vm304, %v3785
        %3818 = vst.msk [vmem:[#allocation3 + $0x118] sm:$0xff] %vm304, %v3786
        %3819 = vst.msk [vmem:[#allocation3 + $0x160] sm:$0xff] %vm304, %v3787
        %3820 = vst.msk [vmem:[#allocation3 + $0x1a8] sm:$0xff] %vm304, %v3788
        %3821 = vst.msk [vmem:[#allocation3 + $0x1f0] sm:$0xff] %vm304, %v3789
        %3822 = vst.msk [vmem:[#allocation3 + $0x238] sm:$0xff] %vm304, %v3790
        %3823 = vst.msk [vmem:[#allocation3 + $0x280] sm:$0xff] %vm304, %v3791
        %3824 = vst.msk [vmem:[#allocation3 + $0x2c8] sm:$0xff] %vm304, %v3792
        %3825 = vst.msk [vmem:[#allocation3 + $0x310] sm:$0xff] %vm304, %v3793
        %3826 = vst.msk [vmem:[#allocation3 + $0x358] sm:$0xff] %vm304, %v3794
        %3827 = vst.msk [vmem:[#allocation3 + $0x3a0] sm:$0xff] %vm304, %v3795
        %3828 = vst.msk [vmem:[#allocation3 + $0x3e8] sm:$0xff] %vm304, %v3796
        %3829 = vst.msk [vmem:[#allocation3 + $0x430] sm:$0xff] %vm304, %v3797
        %3830 = vst.msk [vmem:[#allocation3 + $0x478] sm:$0xff] %vm304, %v3798
        %3831 = vst.msk [vmem:[#allocation3 + $0x4c0] sm:$0xff] %vm304, %v3799
        %3832 = vst.msk [vmem:[#allocation3 + $0x508] sm:$0xff] %vm304, %v3800
        %3833 = vst.msk [vmem:[#allocation3 + $0x550] sm:$0xff] %vm304, %v3801
        %3834 = vst.msk [vmem:[#allocation3 + $0x598] sm:$0xff] %vm304, %v3802
        %3835 = vst.msk [vmem:[#allocation3 + $0x5e0] sm:$0xff] %vm304, %v3803
        %3836 = vst.msk [vmem:[#allocation3 + $0x628] sm:$0xff] %vm304, %v3804
        %3837 = vst.msk [vmem:[#allocation3 + $0x670] sm:$0xff] %vm304, %v3805
        %3838 = vst.msk [vmem:[#allocation3 + $0x6b8] sm:$0xff] %vm304, %v3806
        %3839 = vst.msk [vmem:[#allocation3 + $0x700] sm:$0xff] %vm304, %v3807
        %3840 = vst.msk [vmem:[#allocation3 + $0x748] sm:$0xff] %vm304, %v3808
        %3841 = vst.msk [vmem:[#allocation3 + $0x790] sm:$0xff] %vm304, %v3809
        %3842 = vst.msk [vmem:[#allocation3 + $0x7d8] sm:$0xff] %vm304, %v3810
        %3843 = vst.msk [vmem:[#allocation3 + $0x820] sm:$0xff] %vm304, %v3811
        %3844 = vst.msk [vmem:[#allocation3 + $0x868] sm:$0xff] %vm304, %v3812
        %3845 = vst.msk [vmem:[#allocation3 + $0x8b0] sm:$0xff] %vm304, %v3813
        %3846 = vst.msk [vmem:[#allocation3 + $0x8f8] sm:$0xff] %vm304, %v3814
        %v3847 = vld [vmem:[#allocation3] sm:$0xff]
        %v3848 = vld [vmem:[#allocation3 + $0x8] sm:$0xff]
        %v3849 = vld [vmem:[#allocation3 + $0x10] sm:$0xff]
        %v3850 = vld [vmem:[#allocation3 + $0x18] sm:$0xff]
        %v3851 = vld [vmem:[#allocation3 + $0x20] sm:$0xff]
        %v3852 = vld [vmem:[#allocation3 + $0x28] sm:$0xff]
        %v3853 = vld [vmem:[#allocation3 + $0x30] sm:$0xff]
        %v3854 = vld [vmem:[#allocation3 + $0x38] sm:$0xff]
        %v3855 = vld [vmem:[#allocation3 + $0x40] sm:$0xff]
        %v3856 = vld [vmem:[#allocation3 + $0x48] sm:$0xff]
        %v3857 = vld [vmem:[#allocation3 + $0x50] sm:$0xff]
        %v3858 = vld [vmem:[#allocation3 + $0x58] sm:$0xff]
        %v3859 = vld [vmem:[#allocation3 + $0x60] sm:$0xff]
        %v3860 = vld [vmem:[#allocation3 + $0x68] sm:$0xff]
        %v3861 = vld [vmem:[#allocation3 + $0x70] sm:$0xff]
        %v3862 = vld [vmem:[#allocation3 + $0x78] sm:$0xff]
        %v3863 = vld [vmem:[#allocation3 + $0x80] sm:$0xff]
        %v3864 = vld [vmem:[#allocation3 + $0x88] sm:$0xff]
        %v3865 = vld [vmem:[#allocation3 + $0x90] sm:$0xff]
        %v3866 = vld [vmem:[#allocation3 + $0x98] sm:$0xff]
        %v3867 = vld [vmem:[#allocation3 + $0xa0] sm:$0xff]
        %v3868 = vld [vmem:[#allocation3 + $0xa8] sm:$0xff]
        %v3869 = vld [vmem:[#allocation3 + $0xb0] sm:$0xff]
        %v3870 = vld [vmem:[#allocation3 + $0xb8] sm:$0xff]
        %v3871 = vld [vmem:[#allocation3 + $0xc0] sm:$0xff]
        %v3872 = vld [vmem:[#allocation3 + $0xc8] sm:$0xff]
        %v3873 = vld [vmem:[#allocation3 + $0xd0] sm:$0xff]
        %v3874 = vld [vmem:[#allocation3 + $0xd8] sm:$0xff]
        %v3875 = vld [vmem:[#allocation3 + $0xe0] sm:$0xff]
        %v3876 = vld [vmem:[#allocation3 + $0xe8] sm:$0xff]
        %v3877 = vld [vmem:[#allocation3 + $0xf0] sm:$0xff]
        %v3878 = vld [vmem:[#allocation3 + $0xf8] sm:$0xff]
        %v3879 = vld [vmem:[#allocation3 + $0x100] sm:$0xff]
        %v3880 = vld [vmem:[#allocation3 + $0x108] sm:$0xff]
        %v3881 = vld [vmem:[#allocation3 + $0x110] sm:$0xff]
        %v3882 = vld [vmem:[#allocation3 + $0x118] sm:$0xff]
        %v3883 = vld [vmem:[#allocation3 + $0x120] sm:$0xff]
        %v3884 = vld [vmem:[#allocation3 + $0x128] sm:$0xff]
        %v3885 = vld [vmem:[#allocation3 + $0x130] sm:$0xff]
        %v3886 = vld [vmem:[#allocation3 + $0x138] sm:$0xff]
        %v3887 = vld [vmem:[#allocation3 + $0x140] sm:$0xff]
        %v3888 = vld [vmem:[#allocation3 + $0x148] sm:$0xff]
        %v3889 = vld [vmem:[#allocation3 + $0x150] sm:$0xff]
        %v3890 = vld [vmem:[#allocation3 + $0x158] sm:$0xff]
        %v3891 = vld [vmem:[#allocation3 + $0x160] sm:$0xff]
        %v3892 = vld [vmem:[#allocation3 + $0x168] sm:$0xff]
        %v3893 = vld [vmem:[#allocation3 + $0x170] sm:$0xff]
        %v3894 = vld [vmem:[#allocation3 + $0x178] sm:$0xff]
        %v3895 = vld [vmem:[#allocation3 + $0x180] sm:$0xff]
        %v3896 = vld [vmem:[#allocation3 + $0x188] sm:$0xff]
        %v3897 = vld [vmem:[#allocation3 + $0x190] sm:$0xff]
        %v3898 = vld [vmem:[#allocation3 + $0x198] sm:$0xff]
        %v3899 = vld [vmem:[#allocation3 + $0x1a0] sm:$0xff]
        %v3900 = vld [vmem:[#allocation3 + $0x1a8] sm:$0xff]
        %v3901 = vld [vmem:[#allocation3 + $0x1b0] sm:$0xff]
        %v3902 = vld [vmem:[#allocation3 + $0x1b8] sm:$0xff]
        %v3903 = vld [vmem:[#allocation3 + $0x1c0] sm:$0xff]
        %v3904 = vld [vmem:[#allocation3 + $0x1c8] sm:$0xff]
        %v3905 = vld [vmem:[#allocation3 + $0x1d0] sm:$0xff]
        %v3906 = vld [vmem:[#allocation3 + $0x1d8] sm:$0xff]
        %v3907 = vld [vmem:[#allocation3 + $0x1e0] sm:$0xff]
        %v3908 = vld [vmem:[#allocation3 + $0x1e8] sm:$0xff]
        %v3909 = vld [vmem:[#allocation3 + $0x1f0] sm:$0xff]
        %v3910 = vld [vmem:[#allocation3 + $0x1f8] sm:$0xff]
        %v3911 = vld [vmem:[#allocation3 + $0x200] sm:$0xff]
        %v3912 = vld [vmem:[#allocation3 + $0x208] sm:$0xff]
        %v3913 = vld [vmem:[#allocation3 + $0x210] sm:$0xff]
        %v3914 = vld [vmem:[#allocation3 + $0x218] sm:$0xff]
        %v3915 = vld [vmem:[#allocation3 + $0x220] sm:$0xff]
        %v3916 = vld [vmem:[#allocation3 + $0x228] sm:$0xff]
        %v3917 = vld [vmem:[#allocation3 + $0x230] sm:$0xff]
        %v3918 = vld [vmem:[#allocation3 + $0x238] sm:$0xff]
        %v3919 = vld [vmem:[#allocation3 + $0x240] sm:$0xff]
        %v3920 = vld [vmem:[#allocation3 + $0x248] sm:$0xff]
        %v3921 = vld [vmem:[#allocation3 + $0x250] sm:$0xff]
        %v3922 = vld [vmem:[#allocation3 + $0x258] sm:$0xff]
        %v3923 = vld [vmem:[#allocation3 + $0x260] sm:$0xff]
        %v3924 = vld [vmem:[#allocation3 + $0x268] sm:$0xff]
        %v3925 = vld [vmem:[#allocation3 + $0x270] sm:$0xff]
        %v3926 = vld [vmem:[#allocation3 + $0x278] sm:$0xff]
        %v3927 = vld [vmem:[#allocation3 + $0x280] sm:$0xff]
        %v3928 = vld [vmem:[#allocation3 + $0x288] sm:$0xff]
        %v3929 = vld [vmem:[#allocation3 + $0x290] sm:$0xff]
        %v3930 = vld [vmem:[#allocation3 + $0x298] sm:$0xff]
        %v3931 = vld [vmem:[#allocation3 + $0x2a0] sm:$0xff]
        %v3932 = vld [vmem:[#allocation3 + $0x2a8] sm:$0xff]
        %v3933 = vld [vmem:[#allocation3 + $0x2b0] sm:$0xff]
        %v3934 = vld [vmem:[#allocation3 + $0x2b8] sm:$0xff]
        %v3935 = vld [vmem:[#allocation3 + $0x2c0] sm:$0xff]
        %v3936 = vld [vmem:[#allocation3 + $0x2c8] sm:$0xff]
        %v3937 = vld [vmem:[#allocation3 + $0x2d0] sm:$0xff]
        %v3938 = vld [vmem:[#allocation3 + $0x2d8] sm:$0xff]
        %v3939 = vld [vmem:[#allocation3 + $0x2e0] sm:$0xff]
        %v3940 = vld [vmem:[#allocation3 + $0x2e8] sm:$0xff]
        %v3941 = vld [vmem:[#allocation3 + $0x2f0] sm:$0xff]
        %v3942 = vld [vmem:[#allocation3 + $0x2f8] sm:$0xff]
        %v3943 = vld [vmem:[#allocation3 + $0x300] sm:$0xff]
        %v3944 = vld [vmem:[#allocation3 + $0x308] sm:$0xff]
        %v3945 = vld [vmem:[#allocation3 + $0x310] sm:$0xff]
        %v3946 = vld [vmem:[#allocation3 + $0x318] sm:$0xff]
        %v3947 = vld [vmem:[#allocation3 + $0x320] sm:$0xff]
        %v3948 = vld [vmem:[#allocation3 + $0x328] sm:$0xff]
        %v3949 = vld [vmem:[#allocation3 + $0x330] sm:$0xff]
        %v3950 = vld [vmem:[#allocation3 + $0x338] sm:$0xff]
        %v3951 = vld [vmem:[#allocation3 + $0x340] sm:$0xff]
        %v3952 = vld [vmem:[#allocation3 + $0x348] sm:$0xff]
        %v3953 = vld [vmem:[#allocation3 + $0x350] sm:$0xff]
        %v3954 = vld [vmem:[#allocation3 + $0x358] sm:$0xff]
        %v3955 = vld [vmem:[#allocation3 + $0x360] sm:$0xff]
        %v3956 = vld [vmem:[#allocation3 + $0x368] sm:$0xff]
        %v3957 = vld [vmem:[#allocation3 + $0x370] sm:$0xff]
        %v3958 = vld [vmem:[#allocation3 + $0x378] sm:$0xff]
        %v3959 = vld [vmem:[#allocation3 + $0x380] sm:$0xff]
        %v3960 = vld [vmem:[#allocation3 + $0x388] sm:$0xff]
        %v3961 = vld [vmem:[#allocation3 + $0x390] sm:$0xff]
        %v3962 = vld [vmem:[#allocation3 + $0x398] sm:$0xff]
        %v3963 = vld [vmem:[#allocation3 + $0x3a0] sm:$0xff]
        %v3964 = vld [vmem:[#allocation3 + $0x3a8] sm:$0xff]
        %v3965 = vld [vmem:[#allocation3 + $0x3b0] sm:$0xff]
        %v3966 = vld [vmem:[#allocation3 + $0x3b8] sm:$0xff]
        %v3967 = vld [vmem:[#allocation3 + $0x3c0] sm:$0xff]
        %v3968 = vld [vmem:[#allocation3 + $0x3c8] sm:$0xff]
        %v3969 = vld [vmem:[#allocation3 + $0x3d0] sm:$0xff]
        %v3970 = vld [vmem:[#allocation3 + $0x3d8] sm:$0xff]
        %v3971 = vld [vmem:[#allocation3 + $0x3e0] sm:$0xff]
        %v3972 = vld [vmem:[#allocation3 + $0x3e8] sm:$0xff]
        %v3973 = vld [vmem:[#allocation3 + $0x3f0] sm:$0xff]
        %v3974 = vld [vmem:[#allocation3 + $0x3f8] sm:$0xff]
        %v3975 = vld [vmem:[#allocation3 + $0x400] sm:$0xff]
        %v3976 = vld [vmem:[#allocation3 + $0x408] sm:$0xff]
        %v3977 = vld [vmem:[#allocation3 + $0x410] sm:$0xff]
        %v3978 = vld [vmem:[#allocation3 + $0x418] sm:$0xff]
        %v3979 = vld [vmem:[#allocation3 + $0x420] sm:$0xff]
        %v3980 = vld [vmem:[#allocation3 + $0x428] sm:$0xff]
        %v3981 = vld [vmem:[#allocation3 + $0x430] sm:$0xff]
        %v3982 = vld [vmem:[#allocation3 + $0x438] sm:$0xff]
        %v3983 = vld [vmem:[#allocation3 + $0x440] sm:$0xff]
        %v3984 = vld [vmem:[#allocation3 + $0x448] sm:$0xff]
        %v3985 = vld [vmem:[#allocation3 + $0x450] sm:$0xff]
        %v3986 = vld [vmem:[#allocation3 + $0x458] sm:$0xff]
        %v3987 = vld [vmem:[#allocation3 + $0x460] sm:$0xff]
        %v3988 = vld [vmem:[#allocation3 + $0x468] sm:$0xff]
        %v3989 = vld [vmem:[#allocation3 + $0x470] sm:$0xff]
        %v3990 = vld [vmem:[#allocation3 + $0x478] sm:$0xff]
        %v3991 = vld [vmem:[#allocation3 + $0x480] sm:$0xff]
        %v3992 = vld [vmem:[#allocation3 + $0x488] sm:$0xff]
        %v3993 = vld [vmem:[#allocation3 + $0x490] sm:$0xff]
        %v3994 = vld [vmem:[#allocation3 + $0x498] sm:$0xff]
        %v3995 = vld [vmem:[#allocation3 + $0x4a0] sm:$0xff]
        %v3996 = vld [vmem:[#allocation3 + $0x4a8] sm:$0xff]
        %v3997 = vld [vmem:[#allocation3 + $0x4b0] sm:$0xff]
        %v3998 = vld [vmem:[#allocation3 + $0x4b8] sm:$0xff]
        %v3999 = vld [vmem:[#allocation3 + $0x4c0] sm:$0xff]
        %v4000 = vld [vmem:[#allocation3 + $0x4c8] sm:$0xff]
        %v4001 = vld [vmem:[#allocation3 + $0x4d0] sm:$0xff]
        %v4002 = vld [vmem:[#allocation3 + $0x4d8] sm:$0xff]
        %v4003 = vld [vmem:[#allocation3 + $0x4e0] sm:$0xff]
        %v4004 = vld [vmem:[#allocation3 + $0x4e8] sm:$0xff]
        %v4005 = vld [vmem:[#allocation3 + $0x4f0] sm:$0xff]
        %v4006 = vld [vmem:[#allocation3 + $0x4f8] sm:$0xff]
        %v4007 = vld [vmem:[#allocation3 + $0x500] sm:$0xff]
        %v4008 = vld [vmem:[#allocation3 + $0x508] sm:$0xff]
        %v4009 = vld [vmem:[#allocation3 + $0x510] sm:$0xff]
        %v4010 = vld [vmem:[#allocation3 + $0x518] sm:$0xff]
        %v4011 = vld [vmem:[#allocation3 + $0x520] sm:$0xff]
        %v4012 = vld [vmem:[#allocation3 + $0x528] sm:$0xff]
        %v4013 = vld [vmem:[#allocation3 + $0x530] sm:$0xff]
        %v4014 = vld [vmem:[#allocation3 + $0x538] sm:$0xff]
        %v4015 = vld [vmem:[#allocation3 + $0x540] sm:$0xff]
        %v4016 = vld [vmem:[#allocation3 + $0x548] sm:$0xff]
        %v4017 = vld [vmem:[#allocation3 + $0x550] sm:$0xff]
        %v4018 = vld [vmem:[#allocation3 + $0x558] sm:$0xff]
        %v4019 = vld [vmem:[#allocation3 + $0x560] sm:$0xff]
        %v4020 = vld [vmem:[#allocation3 + $0x568] sm:$0xff]
        %v4021 = vld [vmem:[#allocation3 + $0x570] sm:$0xff]
        %v4022 = vld [vmem:[#allocation3 + $0x578] sm:$0xff]
        %v4023 = vld [vmem:[#allocation3 + $0x580] sm:$0xff]
        %v4024 = vld [vmem:[#allocation3 + $0x588] sm:$0xff]
        %v4025 = vld [vmem:[#allocation3 + $0x590] sm:$0xff]
        %v4026 = vld [vmem:[#allocation3 + $0x598] sm:$0xff]
        %v4027 = vld [vmem:[#allocation3 + $0x5a0] sm:$0xff]
        %v4028 = vld [vmem:[#allocation3 + $0x5a8] sm:$0xff]
        %v4029 = vld [vmem:[#allocation3 + $0x5b0] sm:$0xff]
        %v4030 = vld [vmem:[#allocation3 + $0x5b8] sm:$0xff]
        %v4031 = vld [vmem:[#allocation3 + $0x5c0] sm:$0xff]
        %v4032 = vld [vmem:[#allocation3 + $0x5c8] sm:$0xff]
        %v4033 = vld [vmem:[#allocation3 + $0x5d0] sm:$0xff]
        %v4034 = vld [vmem:[#allocation3 + $0x5d8] sm:$0xff]
        %v4035 = vld [vmem:[#allocation3 + $0x5e0] sm:$0xff]
        %v4036 = vld [vmem:[#allocation3 + $0x5e8] sm:$0xff]
        %v4037 = vld [vmem:[#allocation3 + $0x5f0] sm:$0xff]
        %v4038 = vld [vmem:[#allocation3 + $0x5f8] sm:$0xff]
        %v4039 = vld [vmem:[#allocation3 + $0x600] sm:$0xff]
        %v4040 = vld [vmem:[#allocation3 + $0x608] sm:$0xff]
        %v4041 = vld [vmem:[#allocation3 + $0x610] sm:$0xff]
        %v4042 = vld [vmem:[#allocation3 + $0x618] sm:$0xff]
        %v4043 = vld [vmem:[#allocation3 + $0x620] sm:$0xff]
        %v4044 = vld [vmem:[#allocation3 + $0x628] sm:$0xff]
        %v4045 = vld [vmem:[#allocation3 + $0x630] sm:$0xff]
        %v4046 = vld [vmem:[#allocation3 + $0x638] sm:$0xff]
        %v4047 = vld [vmem:[#allocation3 + $0x640] sm:$0xff]
        %v4048 = vld [vmem:[#allocation3 + $0x648] sm:$0xff]
        %v4049 = vld [vmem:[#allocation3 + $0x650] sm:$0xff]
        %v4050 = vld [vmem:[#allocation3 + $0x658] sm:$0xff]
        %v4051 = vld [vmem:[#allocation3 + $0x660] sm:$0xff]
        %v4052 = vld [vmem:[#allocation3 + $0x668] sm:$0xff]
        %v4053 = vld [vmem:[#allocation3 + $0x670] sm:$0xff]
        %v4054 = vld [vmem:[#allocation3 + $0x678] sm:$0xff]
        %v4055 = vld [vmem:[#allocation3 + $0x680] sm:$0xff]
        %v4056 = vld [vmem:[#allocation3 + $0x688] sm:$0xff]
        %v4057 = vld [vmem:[#allocation3 + $0x690] sm:$0xff]
        %v4058 = vld [vmem:[#allocation3 + $0x698] sm:$0xff]
        %v4059 = vld [vmem:[#allocation3 + $0x6a0] sm:$0xff]
        %v4060 = vld [vmem:[#allocation3 + $0x6a8] sm:$0xff]
        %v4061 = vld [vmem:[#allocation3 + $0x6b0] sm:$0xff]
        %v4062 = vld [vmem:[#allocation3 + $0x6b8] sm:$0xff]
        %v4063 = vld [vmem:[#allocation3 + $0x6c0] sm:$0xff]
        %v4064 = vld [vmem:[#allocation3 + $0x6c8] sm:$0xff]
        %v4065 = vld [vmem:[#allocation3 + $0x6d0] sm:$0xff]
        %v4066 = vld [vmem:[#allocation3 + $0x6d8] sm:$0xff]
        %v4067 = vld [vmem:[#allocation3 + $0x6e0] sm:$0xff]
        %v4068 = vld [vmem:[#allocation3 + $0x6e8] sm:$0xff]
        %v4069 = vld [vmem:[#allocation3 + $0x6f0] sm:$0xff]
        %v4070 = vld [vmem:[#allocation3 + $0x6f8] sm:$0xff]
        %v4071 = vld [vmem:[#allocation3 + $0x700] sm:$0xff]
        %v4072 = vld [vmem:[#allocation3 + $0x708] sm:$0xff]
        %v4073 = vld [vmem:[#allocation3 + $0x710] sm:$0xff]
        %v4074 = vld [vmem:[#allocation3 + $0x718] sm:$0xff]
        %v4075 = vld [vmem:[#allocation3 + $0x720] sm:$0xff]
        %v4076 = vld [vmem:[#allocation3 + $0x728] sm:$0xff]
        %v4077 = vld [vmem:[#allocation3 + $0x730] sm:$0xff]
        %v4078 = vld [vmem:[#allocation3 + $0x738] sm:$0xff]
        %v4079 = vld [vmem:[#allocation3 + $0x740] sm:$0xff]
        %v4080 = vld [vmem:[#allocation3 + $0x748] sm:$0xff]
        %v4081 = vld [vmem:[#allocation3 + $0x750] sm:$0xff]
        %v4082 = vld [vmem:[#allocation3 + $0x758] sm:$0xff]
        %v4083 = vld [vmem:[#allocation3 + $0x760] sm:$0xff]
        %v4084 = vld [vmem:[#allocation3 + $0x768] sm:$0xff]
        %v4085 = vld [vmem:[#allocation3 + $0x770] sm:$0xff]
        %v4086 = vld [vmem:[#allocation3 + $0x778] sm:$0xff]
        %v4087 = vld [vmem:[#allocation3 + $0x780] sm:$0xff]
        %v4088 = vld [vmem:[#allocation3 + $0x788] sm:$0xff]
        %v4089 = vld [vmem:[#allocation3 + $0x790] sm:$0xff]
        %v4090 = vld [vmem:[#allocation3 + $0x798] sm:$0xff]
        %v4091 = vld [vmem:[#allocation3 + $0x7a0] sm:$0xff]
        %v4092 = vld [vmem:[#allocation3 + $0x7a8] sm:$0xff]
        %v4093 = vld [vmem:[#allocation3 + $0x7b0] sm:$0xff]
        %v4094 = vld [vmem:[#allocation3 + $0x7b8] sm:$0xff]
        %v4095 = vld [vmem:[#allocation3 + $0x7c0] sm:$0xff]
        %v4096 = vld [vmem:[#allocation3 + $0x7c8] sm:$0xff]
        %v4097 = vld [vmem:[#allocation3 + $0x7d0] sm:$0xff]
        %v4098 = vld [vmem:[#allocation3 + $0x7d8] sm:$0xff]
        %v4099 = vld [vmem:[#allocation3 + $0x7e0] sm:$0xff]
        %v4100 = vld [vmem:[#allocation3 + $0x7e8] sm:$0xff]
        %v4101 = vld [vmem:[#allocation3 + $0x7f0] sm:$0xff]
        %v4102 = vld [vmem:[#allocation3 + $0x7f8] sm:$0xff]
        %v4103 = vld [vmem:[#allocation3 + $0x800] sm:$0xff]
        %v4104 = vld [vmem:[#allocation3 + $0x808] sm:$0xff]
        %v4105 = vld [vmem:[#allocation3 + $0x810] sm:$0xff]
        %v4106 = vld [vmem:[#allocation3 + $0x818] sm:$0xff]
        %v4107 = vld [vmem:[#allocation3 + $0x820] sm:$0xff]
        %v4108 = vld [vmem:[#allocation3 + $0x828] sm:$0xff]
        %v4109 = vld [vmem:[#allocation3 + $0x830] sm:$0xff]
        %v4110 = vld [vmem:[#allocation3 + $0x838] sm:$0xff]
        %v4111 = vld [vmem:[#allocation3 + $0x840] sm:$0xff]
        %v4112 = vld [vmem:[#allocation3 + $0x848] sm:$0xff]
        %v4113 = vld [vmem:[#allocation3 + $0x850] sm:$0xff]
        %v4114 = vld [vmem:[#allocation3 + $0x858] sm:$0xff]
        %v4115 = vld [vmem:[#allocation3 + $0x860] sm:$0xff]
        %v4116 = vld [vmem:[#allocation3 + $0x868] sm:$0xff]
        %v4117 = vld [vmem:[#allocation3 + $0x870] sm:$0xff]
        %v4118 = vld [vmem:[#allocation3 + $0x878] sm:$0xff]
        %v4119 = vld [vmem:[#allocation3 + $0x880] sm:$0xff]
        %v4120 = vld [vmem:[#allocation3 + $0x888] sm:$0xff]
        %v4121 = vld [vmem:[#allocation3 + $0x890] sm:$0xff]
        %v4122 = vld [vmem:[#allocation3 + $0x898] sm:$0xff]
        %v4123 = vld [vmem:[#allocation3 + $0x8a0] sm:$0xff]
        %v4124 = vld [vmem:[#allocation3 + $0x8a8] sm:$0xff]
        %v4125 = vld [vmem:[#allocation3 + $0x8b0] sm:$0xff]
        %v4126 = vld [vmem:[#allocation3 + $0x8b8] sm:$0xff]
        %v4127 = vld [vmem:[#allocation3 + $0x8c0] sm:$0xff]
        %v4128 = vld [vmem:[#allocation3 + $0x8c8] sm:$0xff]
        %v4129 = vld [vmem:[#allocation3 + $0x8d0] sm:$0xff]
        %v4130 = vld [vmem:[#allocation3 + $0x8d8] sm:$0xff]
        %v4131 = vld [vmem:[#allocation3 + $0x8e0] sm:$0xff]
        %v4132 = vld [vmem:[#allocation3 + $0x8e8] sm:$0xff]
        %v4133 = vld [vmem:[#allocation3 + $0x8f0] sm:$0xff]
        %v4134 = vld [vmem:[#allocation3 + $0x8f8] sm:$0xff]
        %v4135 = vld [vmem:[%s4] sm:$0xff]
        %v4136 = vld [vmem:[%s4 + $0x8] sm:$0xff]
        %v4137 = vld [vmem:[%s4 + $0x10] sm:$0xff]
        %v4138 = vld [vmem:[%s4 + $0x18] sm:$0xff]
        %v4139 = vld [vmem:[%s4 + $0x20] sm:$0xff]
        %v4140 = vld [vmem:[%s4 + $0x28] sm:$0xff]
        %v4141 = vld [vmem:[%s4 + $0x30] sm:$0xff]
        %v4142 = vld [vmem:[%s4 + $0x38] sm:$0xff]
        %v4143 = vld [vmem:[%s4 + $0x40] sm:$0xff]
        %v4144 = vld [vmem:[%s4 + $0x48] sm:$0xff]
        %v4145 = vld [vmem:[%s4 + $0x50] sm:$0xff]
        %v4146 = vld [vmem:[%s4 + $0x58] sm:$0xff]
        %v4147 = vld [vmem:[%s4 + $0x60] sm:$0xff]
        %v4148 = vld [vmem:[%s4 + $0x68] sm:$0xff]
        %v4149 = vld [vmem:[%s4 + $0x70] sm:$0xff]
        %v4150 = vld [vmem:[%s4 + $0x78] sm:$0xff]
        %v4151 = vld [vmem:[%s4 + $0x80] sm:$0xff]
        %v4152 = vld [vmem:[%s4 + $0x88] sm:$0xff]
        %v4153 = vld [vmem:[%s4 + $0x90] sm:$0xff]
        %v4154 = vld [vmem:[%s4 + $0x98] sm:$0xff]
        %v4155 = vld [vmem:[%s4 + $0xa0] sm:$0xff]
        %v4156 = vld [vmem:[%s4 + $0xa8] sm:$0xff]
        %v4157 = vld [vmem:[%s4 + $0xb0] sm:$0xff]
        %v4158 = vld [vmem:[%s4 + $0xb8] sm:$0xff]
        %v4159 = vld [vmem:[%s4 + $0xc0] sm:$0xff]
        %v4160 = vld [vmem:[%s4 + $0xc8] sm:$0xff]
        %v4161 = vld [vmem:[%s4 + $0xd0] sm:$0xff]
        %v4162 = vld [vmem:[%s4 + $0xd8] sm:$0xff]
        %v4163 = vld [vmem:[%s4 + $0xe0] sm:$0xff]
        %v4164 = vld [vmem:[%s4 + $0xe8] sm:$0xff]
        %v4165 = vld [vmem:[%s4 + $0xf0] sm:$0xff]
        %v4166 = vld [vmem:[%s4 + $0xf8] sm:$0xff]
        %v4167 = vld [vmem:[%s4 + $0x100] sm:$0xff]
        %v4168 = vld [vmem:[%s4 + $0x108] sm:$0xff]
        %v4169 = vld [vmem:[%s4 + $0x110] sm:$0xff]
        %v4170 = vld [vmem:[%s4 + $0x118] sm:$0xff]
        %v4171 = vld [vmem:[%s4 + $0x120] sm:$0xff]
        %v4172 = vld [vmem:[%s4 + $0x128] sm:$0xff]
        %v4173 = vld [vmem:[%s4 + $0x130] sm:$0xff]
        %v4174 = vld [vmem:[%s4 + $0x138] sm:$0xff]
        %v4175 = vld [vmem:[%s4 + $0x140] sm:$0xff]
        %v4176 = vld [vmem:[%s4 + $0x148] sm:$0xff]
        %v4177 = vld [vmem:[%s4 + $0x150] sm:$0xff]
        %v4178 = vld [vmem:[%s4 + $0x158] sm:$0xff]
        %v4179 = vld [vmem:[%s4 + $0x160] sm:$0xff]
        %v4180 = vld [vmem:[%s4 + $0x168] sm:$0xff]
        %v4181 = vld [vmem:[%s4 + $0x170] sm:$0xff]
        %v4182 = vld [vmem:[%s4 + $0x178] sm:$0xff]
        %v4183 = vld [vmem:[%s4 + $0x180] sm:$0xff]
        %v4184 = vld [vmem:[%s4 + $0x188] sm:$0xff]
        %v4185 = vld [vmem:[%s4 + $0x190] sm:$0xff]
        %v4186 = vld [vmem:[%s4 + $0x198] sm:$0xff]
        %v4187 = vld [vmem:[%s4 + $0x1a0] sm:$0xff]
        %v4188 = vld [vmem:[%s4 + $0x1a8] sm:$0xff]
        %v4189 = vld [vmem:[%s4 + $0x1b0] sm:$0xff]
        %v4190 = vld [vmem:[%s4 + $0x1b8] sm:$0xff]
        %v4191 = vld [vmem:[%s4 + $0x1c0] sm:$0xff]
        %v4192 = vld [vmem:[%s4 + $0x1c8] sm:$0xff]
        %v4193 = vld [vmem:[%s4 + $0x1d0] sm:$0xff]
        %v4194 = vld [vmem:[%s4 + $0x1d8] sm:$0xff]
        %v4195 = vld [vmem:[%s4 + $0x1e0] sm:$0xff]
        %v4196 = vld [vmem:[%s4 + $0x1e8] sm:$0xff]
        %v4197 = vld [vmem:[%s4 + $0x1f0] sm:$0xff]
        %v4198 = vld [vmem:[%s4 + $0x1f8] sm:$0xff]
        %v4199 = vld [vmem:[%s4 + $0x200] sm:$0xff]
        %v4200 = vld [vmem:[%s4 + $0x208] sm:$0xff]
        %v4201 = vld [vmem:[%s4 + $0x210] sm:$0xff]
        %v4202 = vld [vmem:[%s4 + $0x218] sm:$0xff]
        %v4203 = vld [vmem:[%s4 + $0x220] sm:$0xff]
        %v4204 = vld [vmem:[%s4 + $0x228] sm:$0xff]
        %v4205 = vld [vmem:[%s4 + $0x230] sm:$0xff]
        %v4206 = vld [vmem:[%s4 + $0x238] sm:$0xff]
        %v4207 = vld [vmem:[%s4 + $0x240] sm:$0xff]
        %v4208 = vld [vmem:[%s4 + $0x248] sm:$0xff]
        %v4209 = vld [vmem:[%s4 + $0x250] sm:$0xff]
        %v4210 = vld [vmem:[%s4 + $0x258] sm:$0xff]
        %v4211 = vld [vmem:[%s4 + $0x260] sm:$0xff]
        %v4212 = vld [vmem:[%s4 + $0x268] sm:$0xff]
        %v4213 = vld [vmem:[%s4 + $0x270] sm:$0xff]
        %v4214 = vld [vmem:[%s4 + $0x278] sm:$0xff]
        %v4215 = vld [vmem:[%s4 + $0x280] sm:$0xff]
        %v4216 = vld [vmem:[%s4 + $0x288] sm:$0xff]
        %v4217 = vld [vmem:[%s4 + $0x290] sm:$0xff]
        %v4218 = vld [vmem:[%s4 + $0x298] sm:$0xff]
        %v4219 = vld [vmem:[%s4 + $0x2a0] sm:$0xff]
        %v4220 = vld [vmem:[%s4 + $0x2a8] sm:$0xff]
        %v4221 = vld [vmem:[%s4 + $0x2b0] sm:$0xff]
        %v4222 = vld [vmem:[%s4 + $0x2b8] sm:$0xff]
        %v4223 = vld [vmem:[%s4 + $0x2c0] sm:$0xff]
        %v4224 = vld [vmem:[%s4 + $0x2c8] sm:$0xff]
        %v4225 = vld [vmem:[%s4 + $0x2d0] sm:$0xff]
        %v4226 = vld [vmem:[%s4 + $0x2d8] sm:$0xff]
        %v4227 = vld [vmem:[%s4 + $0x2e0] sm:$0xff]
        %v4228 = vld [vmem:[%s4 + $0x2e8] sm:$0xff]
        %v4229 = vld [vmem:[%s4 + $0x2f0] sm:$0xff]
        %v4230 = vld [vmem:[%s4 + $0x2f8] sm:$0xff]
        %v4231 = vld [vmem:[%s4 + $0x300] sm:$0xff]
        %v4232 = vld [vmem:[%s4 + $0x308] sm:$0xff]
        %v4233 = vld [vmem:[%s4 + $0x310] sm:$0xff]
        %v4234 = vld [vmem:[%s4 + $0x318] sm:$0xff]
        %v4235 = vld [vmem:[%s4 + $0x320] sm:$0xff]
        %v4236 = vld [vmem:[%s4 + $0x328] sm:$0xff]
        %v4237 = vld [vmem:[%s4 + $0x330] sm:$0xff]
        %v4238 = vld [vmem:[%s4 + $0x338] sm:$0xff]
        %v4239 = vld [vmem:[%s4 + $0x340] sm:$0xff]
        %v4240 = vld [vmem:[%s4 + $0x348] sm:$0xff]
        %v4241 = vld [vmem:[%s4 + $0x350] sm:$0xff]
        %v4242 = vld [vmem:[%s4 + $0x358] sm:$0xff]
        %v4243 = vld [vmem:[%s4 + $0x360] sm:$0xff]
        %v4244 = vld [vmem:[%s4 + $0x368] sm:$0xff]
        %v4245 = vld [vmem:[%s4 + $0x370] sm:$0xff]
        %v4246 = vld [vmem:[%s4 + $0x378] sm:$0xff]
        %v4247 = vld [vmem:[%s4 + $0x380] sm:$0xff]
        %v4248 = vld [vmem:[%s4 + $0x388] sm:$0xff]
        %v4249 = vld [vmem:[%s4 + $0x390] sm:$0xff]
        %v4250 = vld [vmem:[%s4 + $0x398] sm:$0xff]
        %v4251 = vld [vmem:[%s4 + $0x3a0] sm:$0xff]
        %v4252 = vld [vmem:[%s4 + $0x3a8] sm:$0xff]
        %v4253 = vld [vmem:[%s4 + $0x3b0] sm:$0xff]
        %v4254 = vld [vmem:[%s4 + $0x3b8] sm:$0xff]
        %v4255 = vld [vmem:[%s4 + $0x3c0] sm:$0xff]
        %v4256 = vld [vmem:[%s4 + $0x3c8] sm:$0xff]
        %v4257 = vld [vmem:[%s4 + $0x3d0] sm:$0xff]
        %v4258 = vld [vmem:[%s4 + $0x3d8] sm:$0xff]
        %v4259 = vld [vmem:[%s4 + $0x3e0] sm:$0xff]
        %v4260 = vld [vmem:[%s4 + $0x3e8] sm:$0xff]
        %v4261 = vld [vmem:[%s4 + $0x3f0] sm:$0xff]
        %v4262 = vld [vmem:[%s4 + $0x3f8] sm:$0xff]
        %v4263 = vld [vmem:[%s4 + $0x400] sm:$0xff]
        %v4264 = vld [vmem:[%s4 + $0x408] sm:$0xff]
        %v4265 = vld [vmem:[%s4 + $0x410] sm:$0xff]
        %v4266 = vld [vmem:[%s4 + $0x418] sm:$0xff]
        %v4267 = vld [vmem:[%s4 + $0x420] sm:$0xff]
        %v4268 = vld [vmem:[%s4 + $0x428] sm:$0xff]
        %v4269 = vld [vmem:[%s4 + $0x430] sm:$0xff]
        %v4270 = vld [vmem:[%s4 + $0x438] sm:$0xff]
        %v4271 = vld [vmem:[%s4 + $0x440] sm:$0xff]
        %v4272 = vld [vmem:[%s4 + $0x448] sm:$0xff]
        %v4273 = vld [vmem:[%s4 + $0x450] sm:$0xff]
        %v4274 = vld [vmem:[%s4 + $0x458] sm:$0xff]
        %v4275 = vld [vmem:[%s4 + $0x460] sm:$0xff]
        %v4276 = vld [vmem:[%s4 + $0x468] sm:$0xff]
        %v4277 = vld [vmem:[%s4 + $0x470] sm:$0xff]
        %v4278 = vld [vmem:[%s4 + $0x478] sm:$0xff]
        %4279 = vmatprep.subr.mxu0 0.0
        %4280 = vmatpush1.msra.mxu0 %v4135
        %4281 = vmatprep.subr.mxu0 0.0
        %4282 = vmatpush1.msra.mxu0 %v4136
        %4283 = vmatprep.subr.mxu0 0.0
        %4284 = vmatpush1.msra.mxu0 %v4137
        %4285 = vmatprep.subr.mxu0 0.0
        %4286 = vmatpush1.msra.mxu0 %v4138
        %4287 = vmatprep.subr.mxu0 0.0
        %4288 = vmatpush1.msra.mxu0 %v4139
        %4289 = vmatprep.subr.mxu0 0.0
        %4290 = vmatpush1.msra.mxu0 %v4140
        %4291 = vmatprep.subr.mxu0 0.0
        %4292 = vmatpush1.msra.mxu0 %v4141
        %4293 = vmatprep.subr.mxu0 0.0
        %4294 = vmatpush1.msra.mxu0 %v4142
        %4295 = vmatprep.subr.mxu0 0.0
        %4296 = vmatpush1.msra.mxu0 %v4143
        %4297 = vmatprep.subr.mxu0 0.0
        %4298 = vmatpush1.msra.mxu0 %v4144
        %4299 = vmatprep.subr.mxu0 0.0
        %4300 = vmatpush1.msra.mxu0 %v4145
        %4301 = vmatprep.subr.mxu0 0.0
        %4302 = vmatpush1.msra.mxu0 %v4146
        %4303 = vmatprep.subr.mxu0 0.0
        %4304 = vmatpush1.msra.mxu0 %v4147
        %4305 = vmatprep.subr.mxu0 0.0
        %4306 = vmatpush1.msra.mxu0 %v4148
        %4307 = vmatprep.subr.mxu0 0.0
        %4308 = vmatpush1.msra.mxu0 %v4149
        %4309 = vmatprep.subr.mxu0 0.0
        %4310 = vmatpush1.msra.mxu0 %v4150
        %4311 = vmatprep.subr.mxu0 0.0
        %4312 = vmatpush1.msra.mxu0 %v4151
        %4313 = vmatprep.subr.mxu0 0.0
        %4314 = vmatpush1.msra.mxu0 %v4152
        %4315 = vmatprep.subr.mxu0 0.0
        %4316 = vmatpush1.msra.mxu0 %v4153
        %4317 = vmatprep.subr.mxu0 0.0
        %4318 = vmatpush1.msra.mxu0 %v4154
        %4319 = vmatprep.subr.mxu0 0.0
        %4320 = vmatpush1.msra.mxu0 %v4155
        %4321 = vmatprep.subr.mxu0 0.0
        %4322 = vmatpush1.msra.mxu0 %v4156
        %4323 = vmatprep.subr.mxu0 0.0
        %4324 = vmatpush1.msra.mxu0 %v4157
        %4325 = vmatprep.subr.mxu0 0.0
        %4326 = vmatpush1.msra.mxu0 %v4158
        %4327 = vmatprep.subr.mxu0 0.0
        %4328 = vmatpush1.msra.mxu0 %v4159
        %4329 = vmatprep.subr.mxu0 0.0
        %4330 = vmatpush1.msra.mxu0 %v4160
        %4331 = vmatprep.subr.mxu0 0.0
        %4332 = vmatpush1.msra.mxu0 %v4161
        %4333 = vmatprep.subr.mxu0 0.0
        %4334 = vmatpush1.msra.mxu0 %v4162
        %4335 = vmatprep.subr.mxu0 0.0
        %4336 = vmatpush1.msra.mxu0 %v4163
        %4337 = vmatprep.subr.mxu0 0.0
        %4338 = vmatpush1.msra.mxu0 %v4164
        %4339 = vmatprep.subr.mxu0 0.0
        %4340 = vmatpush1.msra.mxu0 %v4165
        %4341 = vmatprep.subr.mxu0 0.0
        %4342 = vmatpush1.msra.mxu0 %v4166
        %4343 = vmatprep.mubr.f32.mxu0 %v3848
        %4344 = vmatmul.mubr.f32.gmra.mrb[0].mxu0 %v3847
        %v4345 = vpop.f32.mrb[0].mxu0
        %v4346 = vadd.f32 %v875, %v4345
        %v4347 = vpop.f32.mrb[0].mxu0
        %4348 = vmatprep.mubr.f32.mxu0 %v3857
        %4349 = vmatmul.mubr.f32.gmra.mrb[0].mxu0 %v3856
        %v4350 = vpop.f32.mrb[0].mxu0
        %v4351 = vadd.f32 %v880, %v4350
        %v4352 = vpop.f32.mrb[0].mxu0
        %4353 = vmatprep.mubr.f32.mxu0 %v3866
        %4354 = vmatmul.mubr.f32.gmra.mrb[0].mxu0 %v3865
        %v4355 = vpop.f32.mrb[0].mxu0
        %v4356 = vadd.f32 %v885, %v4355
        %v4357 = vpop.f32.mrb[0].mxu0
        %4358 = vmatprep.mubr.f32.mxu0 %v3875
        %4359 = vmatmul.mubr.f32.gmra.mrb[0].mxu0 %v3874
        %v4360 = vpop.f32.mrb[0].mxu0
        %v4361 = vadd.f32 %v890, %v4360
        %v4362 = vpop.f32.mrb[0].mxu0
        %4363 = vmatprep.mubr.f32.mxu0 %v3884
        %4364 = vmatmul.mubr.f32.gmra.mrb[0].mxu0 %v3883
        %v4365 = vpop.f32.mrb[0].mxu0
        %v4366 = vadd.f32 %v895, %v4365
        %v4367 = vpop.f32.mrb[0].mxu0
        %4368 = vmatprep.mubr.f32.mxu0 %v3893
        %4369 = vmatmul.mubr.f32.gmra.mrb[0].mxu0 %v3892
        %v4370 = vpop.f32.mrb[0].mxu0
        %v4371 = vadd.f32 %v900, %v4370
        %v4372 = vpop.f32.mrb[0].mxu0
        %4373 = vmatprep.mubr.f32.mxu0 %v3902
        %4374 = vmatmul.mubr.f32.gmra.mrb[0].mxu0 %v3901
        %v4375 = vpop.f32.mrb[0].mxu0
        %v4376 = vadd.f32 %v905, %v4375
        %v4377 = vpop.f32.mrb[0].mxu0
        %4378 = vmatprep.mubr.f32.mxu0 %v3911
        %4379 = vmatmul.mubr.f32.gmra.mrb[0].mxu0 %v3910
        %v4380 = vpop.f32.mrb[0].mxu0
        %v4381 = vadd.f32 %v910, %v4380
        %v4382 = vpop.f32.mrb[0].mxu0
        %4383 = vmatprep.mubr.f32.mxu0 %v3920
        %4384 = vmatmul.mubr.f32.gmra.mrb[0].mxu0 %v3919
        %v4385 = vpop.f32.mrb[0].mxu0
        %v4386 = vadd.f32 %v915, %v4385
        %v4387 = vpop.f32.mrb[0].mxu0
        %4388 = vmatprep.mubr.f32.mxu0 %v3929
        %4389 = vmatmul.mubr.f32.gmra.mrb[0].mxu0 %v3928
        %v4390 = vpop.f32.mrb[0].mxu0
        %v4391 = vadd.f32 %v920, %v4390
        %v4392 = vpop.f32.mrb[0].mxu0
        %4393 = vmatprep.mubr.f32.mxu0 %v3938
        %4394 = vmatmul.mubr.f32.gmra.mrb[0].mxu0 %v3937
        %v4395 = vpop.f32.mrb[0].mxu0
        %v4396 = vadd.f32 %v925, %v4395
        %v4397 = vpop.f32.mrb[0].mxu0
        %4398 = vmatprep.mubr.f32.mxu0 %v3947
        %4399 = vmatmul.mubr.f32.gmra.mrb[0].mxu0 %v3946
        %v4400 = vpop.f32.mrb[0].mxu0
        %v4401 = vadd.f32 %v930, %v4400
        %v4402 = vpop.f32.mrb[0].mxu0
        %4403 = vmatprep.mubr.f32.mxu0 %v3956
        %4404 = vmatmul.mubr.f32.gmra.mrb[0].mxu0 %v3955
        %v4405 = vpop.f32.mrb[0].mxu0
        %v4406 = vadd.f32 %v935, %v4405
        %v4407 = vpop.f32.mrb[0].mxu0
        %4408 = vmatprep.mubr.f32.mxu0 %v3965
        %4409 = vmatmul.mubr.f32.gmra.mrb[0].mxu0 %v3964
        %v4410 = vpop.f32.mrb[0].mxu0
        %v4411 = vadd.f32 %v940, %v4410
        %v4412 = vpop.f32.mrb[0].mxu0
        %4413 = vmatprep.mubr.f32.mxu0 %v3974
        %4414 = vmatmul.mubr.f32.gmra.mrb[0].mxu0 %v3973
        %v4415 = vpop.f32.mrb[0].mxu0
        %v4416 = vadd.f32 %v945, %v4415
        %v4417 = vpop.f32.mrb[0].mxu0
        %4418 = vmatprep.mubr.f32.mxu0 %v3983
        %4419 = vmatmul.mubr.f32.gmra.mrb[0].mxu0 %v3982
        %v4420 = vpop.f32.mrb[0].mxu0
        %v4421 = vadd.f32 %v950, %v4420
        %v4422 = vpop.f32.mrb[0].mxu0
        %4423 = vmatprep.mubr.f32.mxu0 %v3992
        %4424 = vmatmul.mubr.f32.gmra.mrb[0].mxu0 %v3991
        %v4425 = vpop.f32.mrb[0].mxu0
        %v4426 = vadd.f32 %v955, %v4425
        %v4427 = vpop.f32.mrb[0].mxu0
        %4428 = vmatprep.mubr.f32.mxu0 %v4001
        %4429 = vmatmul.mubr.f32.gmra.mrb[0].mxu0 %v4000
        %v4430 = vpop.f32.mrb[0].mxu0
        %v4431 = vadd.f32 %v960, %v4430
        %v4432 = vpop.f32.mrb[0].mxu0
        %4433 = vmatprep.mubr.f32.mxu0 %v4010
        %4434 = vmatmul.mubr.f32.gmra.mrb[0].mxu0 %v4009
        %v4435 = vpop.f32.mrb[0].mxu0
        %v4436 = vadd.f32 %v965, %v4435
        %v4437 = vpop.f32.mrb[0].mxu0
        %4438 = vmatprep.mubr.f32.mxu0 %v4019
        %4439 = vmatmul.mubr.f32.gmra.mrb[0].mxu0 %v4018
        %v4440 = vpop.f32.mrb[0].mxu0
        %v4441 = vadd.f32 %v970, %v4440
        %v4442 = vpop.f32.mrb[0].mxu0
        %4443 = vmatprep.mubr.f32.mxu0 %v4028
        %4444 = vmatmul.mubr.f32.gmra.mrb[0].mxu0 %v4027
        %v4445 = vpop.f32.mrb[0].mxu0
        %v4446 = vadd.f32 %v975, %v4445
        %v4447 = vpop.f32.mrb[0].mxu0
        %4448 = vmatprep.mubr.f32.mxu0 %v4037
        %4449 = vmatmul.mubr.f32.gmra.mrb[0].mxu0 %v4036
        %v4450 = vpop.f32.mrb[0].mxu0
        %v4451 = vadd.f32 %v980, %v4450
        %v4452 = vpop.f32.mrb[0].mxu0
        %4453 = vmatprep.mubr.f32.mxu0 %v4046
        %4454 = vmatmul.mubr.f32.gmra.mrb[0].mxu0 %v4045
        %v4455 = vpop.f32.mrb[0].mxu0
        %v4456 = vadd.f32 %v985, %v4455
        %v4457 = vpop.f32.mrb[0].mxu0
        %4458 = vmatprep.mubr.f32.mxu0 %v4055
        %4459 = vmatmul.mubr.f32.gmra.mrb[0].mxu0 %v4054
        %v4460 = vpop.f32.mrb[0].mxu0
        %v4461 = vadd.f32 %v990, %v4460
        %v4462 = vpop.f32.mrb[0].mxu0
        %4463 = vmatprep.mubr.f32.mxu0 %v4064
        %4464 = vmatmul.mubr.f32.gmra.mrb[0].mxu0 %v4063
        %v4465 = vpop.f32.mrb[0].mxu0
        %v4466 = vadd.f32 %v995, %v4465
        %v4467 = vpop.f32.mrb[0].mxu0
        %4468 = vmatprep.mubr.f32.mxu0 %v4073
        %4469 = vmatmul.mubr.f32.gmra.mrb[0].mxu0 %v4072
        %v4470 = vpop.f32.mrb[0].mxu0
        %v4471 = vadd.f32 %v1000, %v4470
        %v4472 = vpop.f32.mrb[0].mxu0
        %4473 = vmatprep.mubr.f32.mxu0 %v4082
        %4474 = vmatmul.mubr.f32.gmra.mrb[0].mxu0 %v4081
        %v4475 = vpop.f32.mrb[0].mxu0
        %v4476 = vadd.f32 %v1005, %v4475
        %v4477 = vpop.f32.mrb[0].mxu0
        %4478 = vmatprep.mubr.f32.mxu0 %v4091
        %4479 = vmatmul.mubr.f32.gmra.mrb[0].mxu0 %v4090
        %v4480 = vpop.f32.mrb[0].mxu0
        %v4481 = vadd.f32 %v1010, %v4480
        %v4482 = vpop.f32.mrb[0].mxu0
        %4483 = vmatprep.mubr.f32.mxu0 %v4100
        %4484 = vmatmul.mubr.f32.gmra.mrb[0].mxu0 %v4099
        %v4485 = vpop.f32.mrb[0].mxu0
        %v4486 = vadd.f32 %v1015, %v4485
        %v4487 = vpop.f32.mrb[0].mxu0
        %4488 = vmatprep.mubr.f32.mxu0 %v4109
        %4489 = vmatmul.mubr.f32.gmra.mrb[0].mxu0 %v4108
        %v4490 = vpop.f32.mrb[0].mxu0
        %v4491 = vadd.f32 %v1020, %v4490
        %v4492 = vpop.f32.mrb[0].mxu0
        %4493 = vmatprep.mubr.f32.mxu0 %v4118
        %4494 = vmatmul.mubr.f32.gmra.mrb[0].mxu0 %v4117
        %v4495 = vpop.f32.mrb[0].mxu0
        %v4496 = vadd.f32 %v1025, %v4495
        %v4497 = vpop.f32.mrb[0].mxu0
        %4498 = vmatprep.mubr.f32.mxu0 %v4127
        %4499 = vmatmul.mubr.f32.gmra.mrb[0].mxu0 %v4126
        %v4500 = vpop.f32.mrb[0].mxu0
        %v4501 = vadd.f32 %v1030, %v4500
        %v4502 = vpop.f32.mrb[0].mxu0
        %4503 = vdwg.mxu0
        %4504 = vmatprep.subr.mxu0 0.0
        %4505 = vmatpush1.msra.mxu0 %v4167
        %4506 = vmatprep.subr.mxu0 0.0
        %4507 = vmatpush1.msra.mxu0 %v4168
        %4508 = vmatprep.subr.mxu0 0.0
        %4509 = vmatpush1.msra.mxu0 %v4169
        %4510 = vmatprep.subr.mxu0 0.0
        %4511 = vmatpush1.msra.mxu0 %v4170
        %4512 = vmatprep.subr.mxu0 0.0
        %4513 = vmatpush1.msra.mxu0 %v4171
        %4514 = vmatprep.subr.mxu0 0.0
        %4515 = vmatpush1.msra.mxu0 %v4172
        %4516 = vmatprep.subr.mxu0 0.0
        %4517 = vmatpush1.msra.mxu0 %v4173
        %4518 = vmatprep.subr.mxu0 0.0
        %4519 = vmatpush1.msra.mxu0 %v4174
        %4520 = vmatprep.subr.mxu0 0.0
        %4521 = vmatpush1.msra.mxu0 %v4175
        %4522 = vmatprep.subr.mxu0 0.0
        %4523 = vmatpush1.msra.mxu0 %v4176
        %4524 = vmatprep.subr.mxu0 0.0
        %4525 = vmatpush1.msra.mxu0 %v4177
        %4526 = vmatprep.subr.mxu0 0.0
        %4527 = vmatpush1.msra.mxu0 %v4178
        %4528 = vmatprep.subr.mxu0 0.0
        %4529 = vmatpush1.msra.mxu0 %v4179
        %4530 = vmatprep.subr.mxu0 0.0
        %4531 = vmatpush1.msra.mxu0 %v4180
        %4532 = vmatprep.subr.mxu0 0.0
        %4533 = vmatpush1.msra.mxu0 %v4181
        %4534 = vmatprep.subr.mxu0 0.0
        %4535 = vmatpush1.msra.mxu0 %v4182
        %4536 = vmatprep.subr.mxu0 0.0
        %4537 = vmatpush1.msra.mxu0 %v4183
        %4538 = vmatprep.subr.mxu0 0.0
        %4539 = vmatpush1.msra.mxu0 %v4184
        %4540 = vmatprep.subr.mxu0 0.0
        %4541 = vmatpush1.msra.mxu0 %v4185
        %4542 = vmatprep.subr.mxu0 0.0
        %4543 = vmatpush1.msra.mxu0 %v4186
        %4544 = vmatprep.subr.mxu0 0.0
        %4545 = vmatpush1.msra.mxu0 %v4187
        %4546 = vmatprep.subr.mxu0 0.0
        %4547 = vmatpush1.msra.mxu0 %v4188
        %4548 = vmatprep.subr.mxu0 0.0
        %4549 = vmatpush1.msra.mxu0 %v4189
        %4550 = vmatprep.subr.mxu0 0.0
        %4551 = vmatpush1.msra.mxu0 %v4190
        %4552 = vmatprep.subr.mxu0 0.0
        %4553 = vmatpush1.msra.mxu0 %v4191
        %4554 = vmatprep.subr.mxu0 0.0
        %4555 = vmatpush1.msra.mxu0 %v4192
        %4556 = vmatprep.subr.mxu0 0.0
        %4557 = vmatpush1.msra.mxu0 %v4193
        %4558 = vmatprep.subr.mxu0 0.0
        %4559 = vmatpush1.msra.mxu0 %v4194
        %4560 = vmatprep.subr.mxu0 0.0
        %4561 = vmatpush1.msra.mxu0 %v4195
        %4562 = vmatprep.subr.mxu0 0.0
        %4563 = vmatpush1.msra.mxu0 %v4196
        %4564 = vmatprep.subr.mxu0 0.0
        %4565 = vmatpush1.msra.mxu0 %v4197
        %4566 = vmatprep.subr.mxu0 0.0
        %4567 = vmatpush1.msra.mxu0 %v4198
        %4568 = vmatprep.mubr.f32.mxu0 %v3850
        %4569 = vmatmul.mubr.f32.gmra.mrb[0].mxu0 %v3849
        %v4570 = vpop.f32.mrb[0].mxu0
        %v4571 = vadd.f32 %v4346, %v4570
        %v4572 = vpop.f32.mrb[0].mxu0
        %4573 = vmatprep.mubr.f32.mxu0 %v3859
        %4574 = vmatmul.mubr.f32.gmra.mrb[0].mxu0 %v3858
        %v4575 = vpop.f32.mrb[0].mxu0
        %v4576 = vadd.f32 %v4351, %v4575
        %v4577 = vpop.f32.mrb[0].mxu0
        %4578 = vmatprep.mubr.f32.mxu0 %v3868
        %4579 = vmatmul.mubr.f32.gmra.mrb[0].mxu0 %v3867
        %v4580 = vpop.f32.mrb[0].mxu0
        %v4581 = vadd.f32 %v4356, %v4580
        %v4582 = vpop.f32.mrb[0].mxu0
        %4583 = vmatprep.mubr.f32.mxu0 %v3877
        %4584 = vmatmul.mubr.f32.gmra.mrb[0].mxu0 %v3876
        %v4585 = vpop.f32.mrb[0].mxu0
        %v4586 = vadd.f32 %v4361, %v4585
        %v4587 = vpop.f32.mrb[0].mxu0
        %4588 = vmatprep.mubr.f32.mxu0 %v3886
        %4589 = vmatmul.mubr.f32.gmra.mrb[0].mxu0 %v3885
        %v4590 = vpop.f32.mrb[0].mxu0
        %v4591 = vadd.f32 %v4366, %v4590
        %v4592 = vpop.f32.mrb[0].mxu0
        %4593 = vmatprep.mubr.f32.mxu0 %v3895
        %4594 = vmatmul.mubr.f32.gmra.mrb[0].mxu0 %v3894
        %v4595 = vpop.f32.mrb[0].mxu0
        %v4596 = vadd.f32 %v4371, %v4595
        %v4597 = vpop.f32.mrb[0].mxu0
        %4598 = vmatprep.mubr.f32.mxu0 %v3904
        %4599 = vmatmul.mubr.f32.gmra.mrb[0].mxu0 %v3903
        %v4600 = vpop.f32.mrb[0].mxu0
        %v4601 = vadd.f32 %v4376, %v4600
        %v4602 = vpop.f32.mrb[0].mxu0
        %4603 = vmatprep.mubr.f32.mxu0 %v3913
        %4604 = vmatmul.mubr.f32.gmra.mrb[0].mxu0 %v3912
        %v4605 = vpop.f32.mrb[0].mxu0
        %v4606 = vadd.f32 %v4381, %v4605
        %v4607 = vpop.f32.mrb[0].mxu0
        %4608 = vmatprep.mubr.f32.mxu0 %v3922
        %4609 = vmatmul.mubr.f32.gmra.mrb[0].mxu0 %v3921
        %v4610 = vpop.f32.mrb[0].mxu0
        %v4611 = vadd.f32 %v4386, %v4610
        %v4612 = vpop.f32.mrb[0].mxu0
        %4613 = vmatprep.mubr.f32.mxu0 %v3931
        %4614 = vmatmul.mubr.f32.gmra.mrb[0].mxu0 %v3930
        %v4615 = vpop.f32.mrb[0].mxu0
        %v4616 = vadd.f32 %v4391, %v4615
        %v4617 = vpop.f32.mrb[0].mxu0
        %4618 = vmatprep.mubr.f32.mxu0 %v3940
        %4619 = vmatmul.mubr.f32.gmra.mrb[0].mxu0 %v3939
        %v4620 = vpop.f32.mrb[0].mxu0
        %v4621 = vadd.f32 %v4396, %v4620
        %v4622 = vpop.f32.mrb[0].mxu0
        %4623 = vmatprep.mubr.f32.mxu0 %v3949
        %4624 = vmatmul.mubr.f32.gmra.mrb[0].mxu0 %v3948
        %v4625 = vpop.f32.mrb[0].mxu0
        %v4626 = vadd.f32 %v4401, %v4625
        %v4627 = vpop.f32.mrb[0].mxu0
        %4628 = vmatprep.mubr.f32.mxu0 %v3958
        %4629 = vmatmul.mubr.f32.gmra.mrb[0].mxu0 %v3957
        %v4630 = vpop.f32.mrb[0].mxu0
        %v4631 = vadd.f32 %v4406, %v4630
        %v4632 = vpop.f32.mrb[0].mxu0
        %4633 = vmatprep.mubr.f32.mxu0 %v3967
        %4634 = vmatmul.mubr.f32.gmra.mrb[0].mxu0 %v3966
        %v4635 = vpop.f32.mrb[0].mxu0
        %v4636 = vadd.f32 %v4411, %v4635
        %v4637 = vpop.f32.mrb[0].mxu0
        %4638 = vmatprep.mubr.f32.mxu0 %v3976
        %4639 = vmatmul.mubr.f32.gmra.mrb[0].mxu0 %v3975
        %v4640 = vpop.f32.mrb[0].mxu0
        %v4641 = vadd.f32 %v4416, %v4640
        %v4642 = vpop.f32.mrb[0].mxu0
        %4643 = vmatprep.mubr.f32.mxu0 %v3985
        %4644 = vmatmul.mubr.f32.gmra.mrb[0].mxu0 %v3984
        %v4645 = vpop.f32.mrb[0].mxu0
        %v4646 = vadd.f32 %v4421, %v4645
        %v4647 = vpop.f32.mrb[0].mxu0
        %4648 = vmatprep.mubr.f32.mxu0 %v3994
        %4649 = vmatmul.mubr.f32.gmra.mrb[0].mxu0 %v3993
        %v4650 = vpop.f32.mrb[0].mxu0
        %v4651 = vadd.f32 %v4426, %v4650
        %v4652 = vpop.f32.mrb[0].mxu0
        %4653 = vmatprep.mubr.f32.mxu0 %v4003
        %4654 = vmatmul.mubr.f32.gmra.mrb[0].mxu0 %v4002
        %v4655 = vpop.f32.mrb[0].mxu0
        %v4656 = vadd.f32 %v4431, %v4655
        %v4657 = vpop.f32.mrb[0].mxu0
        %4658 = vmatprep.mubr.f32.mxu0 %v4012
        %4659 = vmatmul.mubr.f32.gmra.mrb[0].mxu0 %v4011
        %v4660 = vpop.f32.mrb[0].mxu0
        %v4661 = vadd.f32 %v4436, %v4660
        %v4662 = vpop.f32.mrb[0].mxu0
        %4663 = vmatprep.mubr.f32.mxu0 %v4021
        %4664 = vmatmul.mubr.f32.gmra.mrb[0].mxu0 %v4020
        %v4665 = vpop.f32.mrb[0].mxu0
        %v4666 = vadd.f32 %v4441, %v4665
        %v4667 = vpop.f32.mrb[0].mxu0
        %4668 = vmatprep.mubr.f32.mxu0 %v4030
        %4669 = vmatmul.mubr.f32.gmra.mrb[0].mxu0 %v4029
        %v4670 = vpop.f32.mrb[0].mxu0
        %v4671 = vadd.f32 %v4446, %v4670
        %v4672 = vpop.f32.mrb[0].mxu0
        %4673 = vmatprep.mubr.f32.mxu0 %v4039
        %4674 = vmatmul.mubr.f32.gmra.mrb[0].mxu0 %v4038
        %v4675 = vpop.f32.mrb[0].mxu0
        %v4676 = vadd.f32 %v4451, %v4675
        %v4677 = vpop.f32.mrb[0].mxu0
        %4678 = vmatprep.mubr.f32.mxu0 %v4048
        %4679 = vmatmul.mubr.f32.gmra.mrb[0].mxu0 %v4047
        %v4680 = vpop.f32.mrb[0].mxu0
        %v4681 = vadd.f32 %v4456, %v4680
        %v4682 = vpop.f32.mrb[0].mxu0
        %4683 = vmatprep.mubr.f32.mxu0 %v4057
        %4684 = vmatmul.mubr.f32.gmra.mrb[0].mxu0 %v4056
        %v4685 = vpop.f32.mrb[0].mxu0
        %v4686 = vadd.f32 %v4461, %v4685
        %v4687 = vpop.f32.mrb[0].mxu0
        %4688 = vmatprep.mubr.f32.mxu0 %v4066
        %4689 = vmatmul.mubr.f32.gmra.mrb[0].mxu0 %v4065
        %v4690 = vpop.f32.mrb[0].mxu0
        %v4691 = vadd.f32 %v4466, %v4690
        %v4692 = vpop.f32.mrb[0].mxu0
        %4693 = vmatprep.mubr.f32.mxu0 %v4075
        %4694 = vmatmul.mubr.f32.gmra.mrb[0].mxu0 %v4074
        %v4695 = vpop.f32.mrb[0].mxu0
        %v4696 = vadd.f32 %v4471, %v4695
        %v4697 = vpop.f32.mrb[0].mxu0
        %4698 = vmatprep.mubr.f32.mxu0 %v4084
        %4699 = vmatmul.mubr.f32.gmra.mrb[0].mxu0 %v4083
        %v4700 = vpop.f32.mrb[0].mxu0
        %v4701 = vadd.f32 %v4476, %v4700
        %v4702 = vpop.f32.mrb[0].mxu0
        %4703 = vmatprep.mubr.f32.mxu0 %v4093
        %4704 = vmatmul.mubr.f32.gmra.mrb[0].mxu0 %v4092
        %v4705 = vpop.f32.mrb[0].mxu0
        %v4706 = vadd.f32 %v4481, %v4705
        %v4707 = vpop.f32.mrb[0].mxu0
        %4708 = vmatprep.mubr.f32.mxu0 %v4102
        %4709 = vmatmul.mubr.f32.gmra.mrb[0].mxu0 %v4101
        %v4710 = vpop.f32.mrb[0].mxu0
        %v4711 = vadd.f32 %v4486, %v4710
        %v4712 = vpop.f32.mrb[0].mxu0
        %4713 = vmatprep.mubr.f32.mxu0 %v4111
        %4714 = vmatmul.mubr.f32.gmra.mrb[0].mxu0 %v4110
        %v4715 = vpop.f32.mrb[0].mxu0
        %v4716 = vadd.f32 %v4491, %v4715
        %v4717 = vpop.f32.mrb[0].mxu0
        %4718 = vmatprep.mubr.f32.mxu0 %v4120
        %4719 = vmatmul.mubr.f32.gmra.mrb[0].mxu0 %v4119
        %v4720 = vpop.f32.mrb[0].mxu0
        %v4721 = vadd.f32 %v4496, %v4720
        %v4722 = vpop.f32.mrb[0].mxu0
        %4723 = vmatprep.mubr.f32.mxu0 %v4129
        %4724 = vmatmul.mubr.f32.gmra.mrb[0].mxu0 %v4128
        %v4725 = vpop.f32.mrb[0].mxu0
        %v4726 = vadd.f32 %v4501, %v4725
        %v4727 = vpop.f32.mrb[0].mxu0
        %4728 = vdwg.mxu0
        %4729 = vmatprep.subr.mxu0 0.0
        %4730 = vmatpush1.msra.mxu0 %v4199
        %4731 = vmatprep.subr.mxu0 0.0
        %4732 = vmatpush1.msra.mxu0 %v4200
        %4733 = vmatprep.subr.mxu0 0.0
        %4734 = vmatpush1.msra.mxu0 %v4201
        %4735 = vmatprep.subr.mxu0 0.0
        %4736 = vmatpush1.msra.mxu0 %v4202
        %4737 = vmatprep.subr.mxu0 0.0
        %4738 = vmatpush1.msra.mxu0 %v4203
        %4739 = vmatprep.subr.mxu0 0.0
        %4740 = vmatpush1.msra.mxu0 %v4204
        %4741 = vmatprep.subr.mxu0 0.0
        %4742 = vmatpush1.msra.mxu0 %v4205
        %4743 = vmatprep.subr.mxu0 0.0
        %4744 = vmatpush1.msra.mxu0 %v4206
        %4745 = vmatprep.subr.mxu0 0.0
        %4746 = vmatpush1.msra.mxu0 %v4207
        %4747 = vmatprep.subr.mxu0 0.0
        %4748 = vmatpush1.msra.mxu0 %v4208
        %4749 = vmatprep.subr.mxu0 0.0
        %4750 = vmatpush1.msra.mxu0 %v4209
        %4751 = vmatprep.subr.mxu0 0.0
        %4752 = vmatpush1.msra.mxu0 %v4210
        %4753 = vmatprep.subr.mxu0 0.0
        %4754 = vmatpush1.msra.mxu0 %v4211
        %4755 = vmatprep.subr.mxu0 0.0
        %4756 = vmatpush1.msra.mxu0 %v4212
        %4757 = vmatprep.subr.mxu0 0.0
        %4758 = vmatpush1.msra.mxu0 %v4213
        %4759 = vmatprep.subr.mxu0 0.0
        %4760 = vmatpush1.msra.mxu0 %v4214
        %4761 = vmatprep.subr.mxu0 0.0
        %4762 = vmatpush1.msra.mxu0 %v4215
        %4763 = vmatprep.subr.mxu0 0.0
        %4764 = vmatpush1.msra.mxu0 %v4216
        %4765 = vmatprep.subr.mxu0 0.0
        %4766 = vmatpush1.msra.mxu0 %v4217
        %4767 = vmatprep.subr.mxu0 0.0
        %4768 = vmatpush1.msra.mxu0 %v4218
        %4769 = vmatprep.subr.mxu0 0.0
        %4770 = vmatpush1.msra.mxu0 %v4219
        %4771 = vmatprep.subr.mxu0 0.0
        %4772 = vmatpush1.msra.mxu0 %v4220
        %4773 = vmatprep.subr.mxu0 0.0
        %4774 = vmatpush1.msra.mxu0 %v4221
        %4775 = vmatprep.subr.mxu0 0.0
        %4776 = vmatpush1.msra.mxu0 %v4222
        %4777 = vmatprep.subr.mxu0 0.0
        %4778 = vmatpush1.msra.mxu0 %v4223
        %4779 = vmatprep.subr.mxu0 0.0
        %4780 = vmatpush1.msra.mxu0 %v4224
        %4781 = vmatprep.subr.mxu0 0.0
        %4782 = vmatpush1.msra.mxu0 %v4225
        %4783 = vmatprep.subr.mxu0 0.0
        %4784 = vmatpush1.msra.mxu0 %v4226
        %4785 = vmatprep.subr.mxu0 0.0
        %4786 = vmatpush1.msra.mxu0 %v4227
        %4787 = vmatprep.subr.mxu0 0.0
        %4788 = vmatpush1.msra.mxu0 %v4228
        %4789 = vmatprep.subr.mxu0 0.0
        %4790 = vmatpush1.msra.mxu0 %v4229
        %4791 = vmatprep.subr.mxu0 0.0
        %4792 = vmatpush1.msra.mxu0 %v4230
        %4793 = vmatprep.mubr.f32.mxu0 %v3852
        %4794 = vmatmul.mubr.f32.gmra.mrb[0].mxu0 %v3851
        %v4795 = vpop.f32.mrb[0].mxu0
        %v4796 = vadd.f32 %v4571, %v4795
        %v4797 = vpop.f32.mrb[0].mxu0
        %4798 = vmatprep.mubr.f32.mxu0 %v3861
        %4799 = vmatmul.mubr.f32.gmra.mrb[0].mxu0 %v3860
        %v4800 = vpop.f32.mrb[0].mxu0
        %v4801 = vadd.f32 %v4576, %v4800
        %v4802 = vpop.f32.mrb[0].mxu0
        %4803 = vmatprep.mubr.f32.mxu0 %v3870
        %4804 = vmatmul.mubr.f32.gmra.mrb[0].mxu0 %v3869
        %v4805 = vpop.f32.mrb[0].mxu0
        %v4806 = vadd.f32 %v4581, %v4805
        %v4807 = vpop.f32.mrb[0].mxu0
        %4808 = vmatprep.mubr.f32.mxu0 %v3879
        %4809 = vmatmul.mubr.f32.gmra.mrb[0].mxu0 %v3878
        %v4810 = vpop.f32.mrb[0].mxu0
        %v4811 = vadd.f32 %v4586, %v4810
        %v4812 = vpop.f32.mrb[0].mxu0
        %4813 = vmatprep.mubr.f32.mxu0 %v3888
        %4814 = vmatmul.mubr.f32.gmra.mrb[0].mxu0 %v3887
        %v4815 = vpop.f32.mrb[0].mxu0
        %v4816 = vadd.f32 %v4591, %v4815
        %v4817 = vpop.f32.mrb[0].mxu0
        %4818 = vmatprep.mubr.f32.mxu0 %v3897
        %4819 = vmatmul.mubr.f32.gmra.mrb[0].mxu0 %v3896
        %v4820 = vpop.f32.mrb[0].mxu0
        %v4821 = vadd.f32 %v4596, %v4820
        %v4822 = vpop.f32.mrb[0].mxu0
        %4823 = vmatprep.mubr.f32.mxu0 %v3906
        %4824 = vmatmul.mubr.f32.gmra.mrb[0].mxu0 %v3905
        %v4825 = vpop.f32.mrb[0].mxu0
        %v4826 = vadd.f32 %v4601, %v4825
        %v4827 = vpop.f32.mrb[0].mxu0
        %4828 = vmatprep.mubr.f32.mxu0 %v3915
        %4829 = vmatmul.mubr.f32.gmra.mrb[0].mxu0 %v3914
        %v4830 = vpop.f32.mrb[0].mxu0
        %v4831 = vadd.f32 %v4606, %v4830
        %v4832 = vpop.f32.mrb[0].mxu0
        %4833 = vmatprep.mubr.f32.mxu0 %v3924
        %4834 = vmatmul.mubr.f32.gmra.mrb[0].mxu0 %v3923
        %v4835 = vpop.f32.mrb[0].mxu0
        %v4836 = vadd.f32 %v4611, %v4835
        %v4837 = vpop.f32.mrb[0].mxu0
        %4838 = vmatprep.mubr.f32.mxu0 %v3933
        %4839 = vmatmul.mubr.f32.gmra.mrb[0].mxu0 %v3932
        %v4840 = vpop.f32.mrb[0].mxu0
        %v4841 = vadd.f32 %v4616, %v4840
        %v4842 = vpop.f32.mrb[0].mxu0
        %4843 = vmatprep.mubr.f32.mxu0 %v3942
        %4844 = vmatmul.mubr.f32.gmra.mrb[0].mxu0 %v3941
        %v4845 = vpop.f32.mrb[0].mxu0
        %v4846 = vadd.f32 %v4621, %v4845
        %v4847 = vpop.f32.mrb[0].mxu0
        %4848 = vmatprep.mubr.f32.mxu0 %v3951
        %4849 = vmatmul.mubr.f32.gmra.mrb[0].mxu0 %v3950
        %v4850 = vpop.f32.mrb[0].mxu0
        %v4851 = vadd.f32 %v4626, %v4850
        %v4852 = vpop.f32.mrb[0].mxu0
        %4853 = vmatprep.mubr.f32.mxu0 %v3960
        %4854 = vmatmul.mubr.f32.gmra.mrb[0].mxu0 %v3959
        %v4855 = vpop.f32.mrb[0].mxu0
        %v4856 = vadd.f32 %v4631, %v4855
        %v4857 = vpop.f32.mrb[0].mxu0
        %4858 = vmatprep.mubr.f32.mxu0 %v3969
        %4859 = vmatmul.mubr.f32.gmra.mrb[0].mxu0 %v3968
        %v4860 = vpop.f32.mrb[0].mxu0
        %v4861 = vadd.f32 %v4636, %v4860
        %v4862 = vpop.f32.mrb[0].mxu0
        %4863 = vmatprep.mubr.f32.mxu0 %v3978
        %4864 = vmatmul.mubr.f32.gmra.mrb[0].mxu0 %v3977
        %v4865 = vpop.f32.mrb[0].mxu0
        %v4866 = vadd.f32 %v4641, %v4865
        %v4867 = vpop.f32.mrb[0].mxu0
        %4868 = vmatprep.mubr.f32.mxu0 %v3987
        %4869 = vmatmul.mubr.f32.gmra.mrb[0].mxu0 %v3986
        %v4870 = vpop.f32.mrb[0].mxu0
        %v4871 = vadd.f32 %v4646, %v4870
        %v4872 = vpop.f32.mrb[0].mxu0
        %4873 = vmatprep.mubr.f32.mxu0 %v3996
        %4874 = vmatmul.mubr.f32.gmra.mrb[0].mxu0 %v3995
        %v4875 = vpop.f32.mrb[0].mxu0
        %v4876 = vadd.f32 %v4651, %v4875
        %v4877 = vpop.f32.mrb[0].mxu0
        %4878 = vmatprep.mubr.f32.mxu0 %v4005
        %4879 = vmatmul.mubr.f32.gmra.mrb[0].mxu0 %v4004
        %v4880 = vpop.f32.mrb[0].mxu0
        %v4881 = vadd.f32 %v4656, %v4880
        %v4882 = vpop.f32.mrb[0].mxu0
        %4883 = vmatprep.mubr.f32.mxu0 %v4014
        %4884 = vmatmul.mubr.f32.gmra.mrb[0].mxu0 %v4013
        %v4885 = vpop.f32.mrb[0].mxu0
        %v4886 = vadd.f32 %v4661, %v4885
        %v4887 = vpop.f32.mrb[0].mxu0
        %4888 = vmatprep.mubr.f32.mxu0 %v4023
        %4889 = vmatmul.mubr.f32.gmra.mrb[0].mxu0 %v4022
        %v4890 = vpop.f32.mrb[0].mxu0
        %v4891 = vadd.f32 %v4666, %v4890
        %v4892 = vpop.f32.mrb[0].mxu0
        %4893 = vmatprep.mubr.f32.mxu0 %v4032
        %4894 = vmatmul.mubr.f32.gmra.mrb[0].mxu0 %v4031
        %v4895 = vpop.f32.mrb[0].mxu0
        %v4896 = vadd.f32 %v4671, %v4895
        %v4897 = vpop.f32.mrb[0].mxu0
        %4898 = vmatprep.mubr.f32.mxu0 %v4041
        %4899 = vmatmul.mubr.f32.gmra.mrb[0].mxu0 %v4040
        %v4900 = vpop.f32.mrb[0].mxu0
        %v4901 = vadd.f32 %v4676, %v4900
        %v4902 = vpop.f32.mrb[0].mxu0
        %4903 = vmatprep.mubr.f32.mxu0 %v4050
        %4904 = vmatmul.mubr.f32.gmra.mrb[0].mxu0 %v4049
        %v4905 = vpop.f32.mrb[0].mxu0
        %v4906 = vadd.f32 %v4681, %v4905
        %v4907 = vpop.f32.mrb[0].mxu0
        %4908 = vmatprep.mubr.f32.mxu0 %v4059
        %4909 = vmatmul.mubr.f32.gmra.mrb[0].mxu0 %v4058
        %v4910 = vpop.f32.mrb[0].mxu0
        %v4911 = vadd.f32 %v4686, %v4910
        %v4912 = vpop.f32.mrb[0].mxu0
        %4913 = vmatprep.mubr.f32.mxu0 %v4068
        %4914 = vmatmul.mubr.f32.gmra.mrb[0].mxu0 %v4067
        %v4915 = vpop.f32.mrb[0].mxu0
        %v4916 = vadd.f32 %v4691, %v4915
        %v4917 = vpop.f32.mrb[0].mxu0
        %4918 = vmatprep.mubr.f32.mxu0 %v4077
        %4919 = vmatmul.mubr.f32.gmra.mrb[0].mxu0 %v4076
        %v4920 = vpop.f32.mrb[0].mxu0
        %v4921 = vadd.f32 %v4696, %v4920
        %v4922 = vpop.f32.mrb[0].mxu0
        %4923 = vmatprep.mubr.f32.mxu0 %v4086
        %4924 = vmatmul.mubr.f32.gmra.mrb[0].mxu0 %v4085
        %v4925 = vpop.f32.mrb[0].mxu0
        %v4926 = vadd.f32 %v4701, %v4925
        %v4927 = vpop.f32.mrb[0].mxu0
        %4928 = vmatprep.mubr.f32.mxu0 %v4095
        %4929 = vmatmul.mubr.f32.gmra.mrb[0].mxu0 %v4094
        %v4930 = vpop.f32.mrb[0].mxu0
        %v4931 = vadd.f32 %v4706, %v4930
        %v4932 = vpop.f32.mrb[0].mxu0
        %4933 = vmatprep.mubr.f32.mxu0 %v4104
        %4934 = vmatmul.mubr.f32.gmra.mrb[0].mxu0 %v4103
        %v4935 = vpop.f32.mrb[0].mxu0
        %v4936 = vadd.f32 %v4711, %v4935
        %v4937 = vpop.f32.mrb[0].mxu0
        %4938 = vmatprep.mubr.f32.mxu0 %v4113
        %4939 = vmatmul.mubr.f32.gmra.mrb[0].mxu0 %v4112
        %v4940 = vpop.f32.mrb[0].mxu0
        %v4941 = vadd.f32 %v4716, %v4940
        %v4942 = vpop.f32.mrb[0].mxu0
        %4943 = vmatprep.mubr.f32.mxu0 %v4122
        %4944 = vmatmul.mubr.f32.gmra.mrb[0].mxu0 %v4121
        %v4945 = vpop.f32.mrb[0].mxu0
        %v4946 = vadd.f32 %v4721, %v4945
        %v4947 = vpop.f32.mrb[0].mxu0
        %4948 = vmatprep.mubr.f32.mxu0 %v4131
        %4949 = vmatmul.mubr.f32.gmra.mrb[0].mxu0 %v4130
        %v4950 = vpop.f32.mrb[0].mxu0
        %v4951 = vadd.f32 %v4726, %v4950
        %v4952 = vpop.f32.mrb[0].mxu0
        %4953 = vdwg.mxu0
        %4954 = vmatprep.subr.mxu0 0.0
        %4955 = vmatpush1.msra.mxu0 %v4231
        %4956 = vmatprep.subr.mxu0 0.0
        %4957 = vmatpush1.msra.mxu0 %v4232
        %4958 = vmatprep.subr.mxu0 0.0
        %4959 = vmatpush1.msra.mxu0 %v4233
        %4960 = vmatprep.subr.mxu0 0.0
        %4961 = vmatpush1.msra.mxu0 %v4234
        %4962 = vmatprep.subr.mxu0 0.0
        %4963 = vmatpush1.msra.mxu0 %v4235
        %4964 = vmatprep.subr.mxu0 0.0
        %4965 = vmatpush1.msra.mxu0 %v4236
        %4966 = vmatprep.subr.mxu0 0.0
        %4967 = vmatpush1.msra.mxu0 %v4237
        %4968 = vmatprep.subr.mxu0 0.0
        %4969 = vmatpush1.msra.mxu0 %v4238
        %4970 = vmatprep.subr.mxu0 0.0
        %4971 = vmatpush1.msra.mxu0 %v4239
        %4972 = vmatprep.subr.mxu0 0.0
        %4973 = vmatpush1.msra.mxu0 %v4240
        %4974 = vmatprep.subr.mxu0 0.0
        %4975 = vmatpush1.msra.mxu0 %v4241
        %4976 = vmatprep.subr.mxu0 0.0
        %4977 = vmatpush1.msra.mxu0 %v4242
        %4978 = vmatprep.subr.mxu0 0.0
        %4979 = vmatpush1.msra.mxu0 %v4243
        %4980 = vmatprep.subr.mxu0 0.0
        %4981 = vmatpush1.msra.mxu0 %v4244
        %4982 = vmatprep.subr.mxu0 0.0
        %4983 = vmatpush1.msra.mxu0 %v4245
        %4984 = vmatprep.subr.mxu0 0.0
        %4985 = vmatpush1.msra.mxu0 %v4246
        %4986 = vmatprep.subr.mxu0 0.0
        %4987 = vmatpush1.msra.mxu0 %v4247
        %4988 = vmatprep.subr.mxu0 0.0
        %4989 = vmatpush1.msra.mxu0 %v4248
        %4990 = vmatprep.subr.mxu0 0.0
        %4991 = vmatpush1.msra.mxu0 %v4249
        %4992 = vmatprep.subr.mxu0 0.0
        %4993 = vmatpush1.msra.mxu0 %v4250
        %4994 = vmatprep.subr.mxu0 0.0
        %4995 = vmatpush1.msra.mxu0 %v4251
        %4996 = vmatprep.subr.mxu0 0.0
        %4997 = vmatpush1.msra.mxu0 %v4252
        %4998 = vmatprep.subr.mxu0 0.0
        %4999 = vmatpush1.msra.mxu0 %v4253
        %5000 = vmatprep.subr.mxu0 0.0
        %5001 = vmatpush1.msra.mxu0 %v4254
        %5002 = vmatprep.subr.mxu0 0.0
        %5003 = vmatpush1.msra.mxu0 %v4255
        %5004 = vmatprep.subr.mxu0 0.0
        %5005 = vmatpush1.msra.mxu0 %v4256
        %5006 = vmatprep.subr.mxu0 0.0
        %5007 = vmatpush1.msra.mxu0 %v4257
        %5008 = vmatprep.subr.mxu0 0.0
        %5009 = vmatpush1.msra.mxu0 %v4258
        %5010 = vmatprep.subr.mxu0 0.0
        %5011 = vmatpush1.msra.mxu0 %v4259
        %5012 = vmatprep.subr.mxu0 0.0
        %5013 = vmatpush1.msra.mxu0 %v4260
        %5014 = vmatprep.subr.mxu0 0.0
        %5015 = vmatpush1.msra.mxu0 %v4261
        %5016 = vmatprep.subr.mxu0 0.0
        %5017 = vmatpush1.msra.mxu0 %v4262
        %5018 = vmatprep.mubr.f32.mxu0 %v3854
        %5019 = vmatmul.mubr.f32.gmra.mrb[0].mxu0 %v3853
        %v5020 = vpop.f32.mrb[0].mxu0
        %v5021 = vadd.f32 %v4796, %v5020
        %v5022 = vpop.f32.mrb[0].mxu0
        %5023 = vmatprep.mubr.f32.mxu0 %v3863
        %5024 = vmatmul.mubr.f32.gmra.mrb[0].mxu0 %v3862
        %v5025 = vpop.f32.mrb[0].mxu0
        %v5026 = vadd.f32 %v4801, %v5025
        %v5027 = vpop.f32.mrb[0].mxu0
        %5028 = vmatprep.mubr.f32.mxu0 %v3872
        %5029 = vmatmul.mubr.f32.gmra.mrb[0].mxu0 %v3871
        %v5030 = vpop.f32.mrb[0].mxu0
        %v5031 = vadd.f32 %v4806, %v5030
        %v5032 = vpop.f32.mrb[0].mxu0
        %5033 = vmatprep.mubr.f32.mxu0 %v3881
        %5034 = vmatmul.mubr.f32.gmra.mrb[0].mxu0 %v3880
        %v5035 = vpop.f32.mrb[0].mxu0
        %v5036 = vadd.f32 %v4811, %v5035
        %v5037 = vpop.f32.mrb[0].mxu0
        %5038 = vmatprep.mubr.f32.mxu0 %v3890
        %5039 = vmatmul.mubr.f32.gmra.mrb[0].mxu0 %v3889
        %v5040 = vpop.f32.mrb[0].mxu0
        %v5041 = vadd.f32 %v4816, %v5040
        %v5042 = vpop.f32.mrb[0].mxu0
        %5043 = vmatprep.mubr.f32.mxu0 %v3899
        %5044 = vmatmul.mubr.f32.gmra.mrb[0].mxu0 %v3898
        %v5045 = vpop.f32.mrb[0].mxu0
        %v5046 = vadd.f32 %v4821, %v5045
        %v5047 = vpop.f32.mrb[0].mxu0
        %5048 = vmatprep.mubr.f32.mxu0 %v3908
        %5049 = vmatmul.mubr.f32.gmra.mrb[0].mxu0 %v3907
        %v5050 = vpop.f32.mrb[0].mxu0
        %v5051 = vadd.f32 %v4826, %v5050
        %v5052 = vpop.f32.mrb[0].mxu0
        %5053 = vmatprep.mubr.f32.mxu0 %v3917
        %5054 = vmatmul.mubr.f32.gmra.mrb[0].mxu0 %v3916
        %v5055 = vpop.f32.mrb[0].mxu0
        %v5056 = vadd.f32 %v4831, %v5055
        %v5057 = vpop.f32.mrb[0].mxu0
        %5058 = vmatprep.mubr.f32.mxu0 %v3926
        %5059 = vmatmul.mubr.f32.gmra.mrb[0].mxu0 %v3925
        %v5060 = vpop.f32.mrb[0].mxu0
        %v5061 = vadd.f32 %v4836, %v5060
        %v5062 = vpop.f32.mrb[0].mxu0
        %5063 = vmatprep.mubr.f32.mxu0 %v3935
        %5064 = vmatmul.mubr.f32.gmra.mrb[0].mxu0 %v3934
        %v5065 = vpop.f32.mrb[0].mxu0
        %v5066 = vadd.f32 %v4841, %v5065
        %v5067 = vpop.f32.mrb[0].mxu0
        %5068 = vmatprep.mubr.f32.mxu0 %v3944
        %5069 = vmatmul.mubr.f32.gmra.mrb[0].mxu0 %v3943
        %v5070 = vpop.f32.mrb[0].mxu0
        %v5071 = vadd.f32 %v4846, %v5070
        %v5072 = vpop.f32.mrb[0].mxu0
        %5073 = vmatprep.mubr.f32.mxu0 %v3953
        %5074 = vmatmul.mubr.f32.gmra.mrb[0].mxu0 %v3952
        %v5075 = vpop.f32.mrb[0].mxu0
        %v5076 = vadd.f32 %v4851, %v5075
        %v5077 = vpop.f32.mrb[0].mxu0
        %5078 = vmatprep.mubr.f32.mxu0 %v3962
        %5079 = vmatmul.mubr.f32.gmra.mrb[0].mxu0 %v3961
        %v5080 = vpop.f32.mrb[0].mxu0
        %v5081 = vadd.f32 %v4856, %v5080
        %v5082 = vpop.f32.mrb[0].mxu0
        %5083 = vmatprep.mubr.f32.mxu0 %v3971
        %5084 = vmatmul.mubr.f32.gmra.mrb[0].mxu0 %v3970
        %v5085 = vpop.f32.mrb[0].mxu0
        %v5086 = vadd.f32 %v4861, %v5085
        %v5087 = vpop.f32.mrb[0].mxu0
        %5088 = vmatprep.mubr.f32.mxu0 %v3980
        %5089 = vmatmul.mubr.f32.gmra.mrb[0].mxu0 %v3979
        %v5090 = vpop.f32.mrb[0].mxu0
        %v5091 = vadd.f32 %v4866, %v5090
        %v5092 = vpop.f32.mrb[0].mxu0
        %5093 = vmatprep.mubr.f32.mxu0 %v3989
        %5094 = vmatmul.mubr.f32.gmra.mrb[0].mxu0 %v3988
        %v5095 = vpop.f32.mrb[0].mxu0
        %v5096 = vadd.f32 %v4871, %v5095
        %v5097 = vpop.f32.mrb[0].mxu0
        %5098 = vmatprep.mubr.f32.mxu0 %v3998
        %5099 = vmatmul.mubr.f32.gmra.mrb[0].mxu0 %v3997
        %v5100 = vpop.f32.mrb[0].mxu0
        %v5101 = vadd.f32 %v4876, %v5100
        %v5102 = vpop.f32.mrb[0].mxu0
        %5103 = vmatprep.mubr.f32.mxu0 %v4007
        %5104 = vmatmul.mubr.f32.gmra.mrb[0].mxu0 %v4006
        %v5105 = vpop.f32.mrb[0].mxu0
        %v5106 = vadd.f32 %v4881, %v5105
        %v5107 = vpop.f32.mrb[0].mxu0
        %5108 = vmatprep.mubr.f32.mxu0 %v4016
        %5109 = vmatmul.mubr.f32.gmra.mrb[0].mxu0 %v4015
        %v5110 = vpop.f32.mrb[0].mxu0
        %v5111 = vadd.f32 %v4886, %v5110
        %v5112 = vpop.f32.mrb[0].mxu0
        %5113 = vmatprep.mubr.f32.mxu0 %v4025
        %5114 = vmatmul.mubr.f32.gmra.mrb[0].mxu0 %v4024
        %v5115 = vpop.f32.mrb[0].mxu0
        %v5116 = vadd.f32 %v4891, %v5115
        %v5117 = vpop.f32.mrb[0].mxu0
        %5118 = vmatprep.mubr.f32.mxu0 %v4034
        %5119 = vmatmul.mubr.f32.gmra.mrb[0].mxu0 %v4033
        %v5120 = vpop.f32.mrb[0].mxu0
        %v5121 = vadd.f32 %v4896, %v5120
        %v5122 = vpop.f32.mrb[0].mxu0
        %5123 = vmatprep.mubr.f32.mxu0 %v4043
        %5124 = vmatmul.mubr.f32.gmra.mrb[0].mxu0 %v4042
        %v5125 = vpop.f32.mrb[0].mxu0
        %v5126 = vadd.f32 %v4901, %v5125
        %v5127 = vpop.f32.mrb[0].mxu0
        %5128 = vmatprep.mubr.f32.mxu0 %v4052
        %5129 = vmatmul.mubr.f32.gmra.mrb[0].mxu0 %v4051
        %v5130 = vpop.f32.mrb[0].mxu0
        %v5131 = vadd.f32 %v4906, %v5130
        %v5132 = vpop.f32.mrb[0].mxu0
        %5133 = vmatprep.mubr.f32.mxu0 %v4061
        %5134 = vmatmul.mubr.f32.gmra.mrb[0].mxu0 %v4060
        %v5135 = vpop.f32.mrb[0].mxu0
        %v5136 = vadd.f32 %v4911, %v5135
        %v5137 = vpop.f32.mrb[0].mxu0
        %5138 = vmatprep.mubr.f32.mxu0 %v4070
        %5139 = vmatmul.mubr.f32.gmra.mrb[0].mxu0 %v4069
        %v5140 = vpop.f32.mrb[0].mxu0
        %v5141 = vadd.f32 %v4916, %v5140
        %v5142 = vpop.f32.mrb[0].mxu0
        %5143 = vmatprep.mubr.f32.mxu0 %v4079
        %5144 = vmatmul.mubr.f32.gmra.mrb[0].mxu0 %v4078
        %v5145 = vpop.f32.mrb[0].mxu0
        %v5146 = vadd.f32 %v4921, %v5145
        %v5147 = vpop.f32.mrb[0].mxu0
        %5148 = vmatprep.mubr.f32.mxu0 %v4088
        %5149 = vmatmul.mubr.f32.gmra.mrb[0].mxu0 %v4087
        %v5150 = vpop.f32.mrb[0].mxu0
        %v5151 = vadd.f32 %v4926, %v5150
        %v5152 = vpop.f32.mrb[0].mxu0
        %5153 = vmatprep.mubr.f32.mxu0 %v4097
        %5154 = vmatmul.mubr.f32.gmra.mrb[0].mxu0 %v4096
        %v5155 = vpop.f32.mrb[0].mxu0
        %v5156 = vadd.f32 %v4931, %v5155
        %v5157 = vpop.f32.mrb[0].mxu0
        %5158 = vmatprep.mubr.f32.mxu0 %v4106
        %5159 = vmatmul.mubr.f32.gmra.mrb[0].mxu0 %v4105
        %v5160 = vpop.f32.mrb[0].mxu0
        %v5161 = vadd.f32 %v4936, %v5160
        %v5162 = vpop.f32.mrb[0].mxu0
        %5163 = vmatprep.mubr.f32.mxu0 %v4115
        %5164 = vmatmul.mubr.f32.gmra.mrb[0].mxu0 %v4114
        %v5165 = vpop.f32.mrb[0].mxu0
        %v5166 = vadd.f32 %v4941, %v5165
        %v5167 = vpop.f32.mrb[0].mxu0
        %5168 = vmatprep.mubr.f32.mxu0 %v4124
        %5169 = vmatmul.mubr.f32.gmra.mrb[0].mxu0 %v4123
        %v5170 = vpop.f32.mrb[0].mxu0
        %v5171 = vadd.f32 %v4946, %v5170
        %v5172 = vpop.f32.mrb[0].mxu0
        %5173 = vmatprep.mubr.f32.mxu0 %v4133
        %5174 = vmatmul.mubr.f32.gmra.mrb[0].mxu0 %v4132
        %v5175 = vpop.f32.mrb[0].mxu0
        %v5176 = vadd.f32 %v4951, %v5175
        %v5177 = vpop.f32.mrb[0].mxu0
        %5178 = vdwg.mxu0
        %5179 = vmatprep.subr.mxu0 0.0
        %5180 = vmatpush1.msra.mxu0 %v4263
        %5181 = vmatprep.subr.mxu0 0.0
        %5182 = vmatpush1.msra.mxu0 %v4264
        %5183 = vmatprep.subr.mxu0 0.0
        %5184 = vmatpush1.msra.mxu0 %v4265
        %5185 = vmatprep.subr.mxu0 0.0
        %5186 = vmatpush1.msra.mxu0 %v4266
        %5187 = vmatprep.subr.mxu0 0.0
        %5188 = vmatpush1.msra.mxu0 %v4267
        %5189 = vmatprep.subr.mxu0 0.0
        %5190 = vmatpush1.msra.mxu0 %v4268
        %5191 = vmatprep.subr.mxu0 0.0
        %5192 = vmatpush1.msra.mxu0 %v4269
        %5193 = vmatprep.subr.mxu0 0.0
        %5194 = vmatpush1.msra.mxu0 %v4270
        %5195 = vmatprep.subr.mxu0 0.0
        %5196 = vmatpush1.msra.mxu0 %v4271
        %5197 = vmatprep.subr.mxu0 0.0
        %5198 = vmatpush1.msra.mxu0 %v4272
        %5199 = vmatprep.subr.mxu0 0.0
        %5200 = vmatpush1.msra.mxu0 %v4273
        %5201 = vmatprep.subr.mxu0 0.0
        %5202 = vmatpush1.msra.mxu0 %v4274
        %5203 = vmatprep.subr.mxu0 0.0
        %5204 = vmatpush1.msra.mxu0 %v4275
        %5205 = vmatprep.subr.mxu0 0.0
        %5206 = vmatpush1.msra.mxu0 %v4276
        %5207 = vmatprep.subr.mxu0 0.0
        %5208 = vmatpush1.msra.mxu0 %v4277
        %5209 = vmatprep.subr.mxu0 0.0
        %5210 = vmatpush1.msra.mxu0 %v4278
        %5211 = vmatprep.subr.mxu0 0.0
        %5212 = vmatpush1.msra.mxu0 0.0
        %5213 = vmatprep.subr.mxu0 0.0
        %5214 = vmatpush1.msra.mxu0 0.0
        %5215 = vmatprep.subr.mxu0 0.0
        %5216 = vmatpush1.msra.mxu0 0.0
        %5217 = vmatprep.subr.mxu0 0.0
        %5218 = vmatpush1.msra.mxu0 0.0
        %5219 = vmatprep.subr.mxu0 0.0
        %5220 = vmatpush1.msra.mxu0 0.0
        %5221 = vmatprep.subr.mxu0 0.0
        %5222 = vmatpush1.msra.mxu0 0.0
        %5223 = vmatprep.subr.mxu0 0.0
        %5224 = vmatpush1.msra.mxu0 0.0
        %5225 = vmatprep.subr.mxu0 0.0
        %5226 = vmatpush1.msra.mxu0 0.0
        %5227 = vmatprep.subr.mxu0 0.0
        %5228 = vmatpush1.msra.mxu0 0.0
        %5229 = vmatprep.subr.mxu0 0.0
        %5230 = vmatpush1.msra.mxu0 0.0
        %5231 = vmatprep.subr.mxu0 0.0
        %5232 = vmatpush1.msra.mxu0 0.0
        %5233 = vmatprep.subr.mxu0 0.0
        %5234 = vmatpush1.msra.mxu0 0.0
        %5235 = vmatprep.subr.mxu0 0.0
        %5236 = vmatpush1.msra.mxu0 0.0
        %5237 = vmatprep.subr.mxu0 0.0
        %5238 = vmatpush1.msra.mxu0 0.0
        %5239 = vmatprep.subr.mxu0 0.0
        %5240 = vmatpush1.msra.mxu0 0.0
        %5241 = vmatprep.subr.mxu0 0.0
        %5242 = vmatpush1.msra.mxu0 0.0
        %5243 = vmatprep.mubr.f32.mxu0 0.0
        %5244 = vmatmul.mubr.f32.gmra.mrb[0].mxu0 %v3855
        %v5245 = vpop.f32.mrb[0].mxu0
        %v5246 = vadd.f32 %v5021, %v5245
        %v5247 = vpop.f32.mrb[0].mxu0
        %5248 = vmatprep.mubr.f32.mxu0 0.0
        %5249 = vmatmul.mubr.f32.gmra.mrb[0].mxu0 %v3864
        %v5250 = vpop.f32.mrb[0].mxu0
        %v5251 = vadd.f32 %v5026, %v5250
        %v5252 = vpop.f32.mrb[0].mxu0
        %5253 = vmatprep.mubr.f32.mxu0 0.0
        %5254 = vmatmul.mubr.f32.gmra.mrb[0].mxu0 %v3873
        %v5255 = vpop.f32.mrb[0].mxu0
        %v5256 = vadd.f32 %v5031, %v5255
        %v5257 = vpop.f32.mrb[0].mxu0
        %5258 = vmatprep.mubr.f32.mxu0 0.0
        %5259 = vmatmul.mubr.f32.gmra.mrb[0].mxu0 %v3882
        %v5260 = vpop.f32.mrb[0].mxu0
        %v5261 = vadd.f32 %v5036, %v5260
        %v5262 = vpop.f32.mrb[0].mxu0
        %5263 = vmatprep.mubr.f32.mxu0 0.0
        %5264 = vmatmul.mubr.f32.gmra.mrb[0].mxu0 %v3891
        %v5265 = vpop.f32.mrb[0].mxu0
        %v5266 = vadd.f32 %v5041, %v5265
        %v5267 = vpop.f32.mrb[0].mxu0
        %5268 = vmatprep.mubr.f32.mxu0 0.0
        %5269 = vmatmul.mubr.f32.gmra.mrb[0].mxu0 %v3900
        %v5270 = vpop.f32.mrb[0].mxu0
        %v5271 = vadd.f32 %v5046, %v5270
        %v5272 = vpop.f32.mrb[0].mxu0
        %5273 = vmatprep.mubr.f32.mxu0 0.0
        %5274 = vmatmul.mubr.f32.gmra.mrb[0].mxu0 %v3909
        %v5275 = vpop.f32.mrb[0].mxu0
        %v5276 = vadd.f32 %v5051, %v5275
        %v5277 = vpop.f32.mrb[0].mxu0
        %5278 = vmatprep.mubr.f32.mxu0 0.0
        %5279 = vmatmul.mubr.f32.gmra.mrb[0].mxu0 %v3918
        %v5280 = vpop.f32.mrb[0].mxu0
        %v5281 = vadd.f32 %v5056, %v5280
        %v5282 = vpop.f32.mrb[0].mxu0
        %5283 = vmatprep.mubr.f32.mxu0 0.0
        %5284 = vmatmul.mubr.f32.gmra.mrb[0].mxu0 %v3927
        %v5285 = vpop.f32.mrb[0].mxu0
        %v5286 = vadd.f32 %v5061, %v5285
        %v5287 = vpop.f32.mrb[0].mxu0
        %5288 = vmatprep.mubr.f32.mxu0 0.0
        %5289 = vmatmul.mubr.f32.gmra.mrb[0].mxu0 %v3936
        %v5290 = vpop.f32.mrb[0].mxu0
        %v5291 = vadd.f32 %v5066, %v5290
        %v5292 = vpop.f32.mrb[0].mxu0
        %5293 = vmatprep.mubr.f32.mxu0 0.0
        %5294 = vmatmul.mubr.f32.gmra.mrb[0].mxu0 %v3945
        %v5295 = vpop.f32.mrb[0].mxu0
        %v5296 = vadd.f32 %v5071, %v5295
        %v5297 = vpop.f32.mrb[0].mxu0
        %5298 = vmatprep.mubr.f32.mxu0 0.0
        %5299 = vmatmul.mubr.f32.gmra.mrb[0].mxu0 %v3954
        %v5300 = vpop.f32.mrb[0].mxu0
        %v5301 = vadd.f32 %v5076, %v5300
        %v5302 = vpop.f32.mrb[0].mxu0
        %5303 = vmatprep.mubr.f32.mxu0 0.0
        %5304 = vmatmul.mubr.f32.gmra.mrb[0].mxu0 %v3963
        %v5305 = vpop.f32.mrb[0].mxu0
        %v5306 = vadd.f32 %v5081, %v5305
        %v5307 = vpop.f32.mrb[0].mxu0
        %5308 = vmatprep.mubr.f32.mxu0 0.0
        %5309 = vmatmul.mubr.f32.gmra.mrb[0].mxu0 %v3972
        %v5310 = vpop.f32.mrb[0].mxu0
        %v5311 = vadd.f32 %v5086, %v5310
        %v5312 = vpop.f32.mrb[0].mxu0
        %5313 = vmatprep.mubr.f32.mxu0 0.0
        %5314 = vmatmul.mubr.f32.gmra.mrb[0].mxu0 %v3981
        %v5315 = vpop.f32.mrb[0].mxu0
        %v5316 = vadd.f32 %v5091, %v5315
        %v5317 = vpop.f32.mrb[0].mxu0
        %5318 = vmatprep.mubr.f32.mxu0 0.0
        %5319 = vmatmul.mubr.f32.gmra.mrb[0].mxu0 %v3990
        %v5320 = vpop.f32.mrb[0].mxu0
        %v5321 = vadd.f32 %v5096, %v5320
        %v5322 = vpop.f32.mrb[0].mxu0
        %5323 = vmatprep.mubr.f32.mxu0 0.0
        %5324 = vmatmul.mubr.f32.gmra.mrb[0].mxu0 %v3999
        %v5325 = vpop.f32.mrb[0].mxu0
        %v5326 = vadd.f32 %v5101, %v5325
        %v5327 = vpop.f32.mrb[0].mxu0
        %5328 = vmatprep.mubr.f32.mxu0 0.0
        %5329 = vmatmul.mubr.f32.gmra.mrb[0].mxu0 %v4008
        %v5330 = vpop.f32.mrb[0].mxu0
        %v5331 = vadd.f32 %v5106, %v5330
        %v5332 = vpop.f32.mrb[0].mxu0
        %5333 = vmatprep.mubr.f32.mxu0 0.0
        %5334 = vmatmul.mubr.f32.gmra.mrb[0].mxu0 %v4017
        %v5335 = vpop.f32.mrb[0].mxu0
        %v5336 = vadd.f32 %v5111, %v5335
        %v5337 = vpop.f32.mrb[0].mxu0
        %5338 = vmatprep.mubr.f32.mxu0 0.0
        %5339 = vmatmul.mubr.f32.gmra.mrb[0].mxu0 %v4026
        %v5340 = vpop.f32.mrb[0].mxu0
        %v5341 = vadd.f32 %v5116, %v5340
        %v5342 = vpop.f32.mrb[0].mxu0
        %5343 = vmatprep.mubr.f32.mxu0 0.0
        %5344 = vmatmul.mubr.f32.gmra.mrb[0].mxu0 %v4035
        %v5345 = vpop.f32.mrb[0].mxu0
        %v5346 = vadd.f32 %v5121, %v5345
        %v5347 = vpop.f32.mrb[0].mxu0
        %5348 = vmatprep.mubr.f32.mxu0 0.0
        %5349 = vmatmul.mubr.f32.gmra.mrb[0].mxu0 %v4044
        %v5350 = vpop.f32.mrb[0].mxu0
        %v5351 = vadd.f32 %v5126, %v5350
        %v5352 = vpop.f32.mrb[0].mxu0
        %5353 = vmatprep.mubr.f32.mxu0 0.0
        %5354 = vmatmul.mubr.f32.gmra.mrb[0].mxu0 %v4053
        %v5355 = vpop.f32.mrb[0].mxu0
        %v5356 = vadd.f32 %v5131, %v5355
        %v5357 = vpop.f32.mrb[0].mxu0
        %5358 = vmatprep.mubr.f32.mxu0 0.0
        %5359 = vmatmul.mubr.f32.gmra.mrb[0].mxu0 %v4062
        %v5360 = vpop.f32.mrb[0].mxu0
        %v5361 = vadd.f32 %v5136, %v5360
        %v5362 = vpop.f32.mrb[0].mxu0
        %5363 = vmatprep.mubr.f32.mxu0 0.0
        %5364 = vmatmul.mubr.f32.gmra.mrb[0].mxu0 %v4071
        %v5365 = vpop.f32.mrb[0].mxu0
        %v5366 = vadd.f32 %v5141, %v5365
        %v5367 = vpop.f32.mrb[0].mxu0
        %5368 = vmatprep.mubr.f32.mxu0 0.0
        %5369 = vmatmul.mubr.f32.gmra.mrb[0].mxu0 %v4080
        %v5370 = vpop.f32.mrb[0].mxu0
        %v5371 = vadd.f32 %v5146, %v5370
        %v5372 = vpop.f32.mrb[0].mxu0
        %5373 = vmatprep.mubr.f32.mxu0 0.0
        %5374 = vmatmul.mubr.f32.gmra.mrb[0].mxu0 %v4089
        %v5375 = vpop.f32.mrb[0].mxu0
        %v5376 = vadd.f32 %v5151, %v5375
        %v5377 = vpop.f32.mrb[0].mxu0
        %5378 = vmatprep.mubr.f32.mxu0 0.0
        %5379 = vmatmul.mubr.f32.gmra.mrb[0].mxu0 %v4098
        %v5380 = vpop.f32.mrb[0].mxu0
        %v5381 = vadd.f32 %v5156, %v5380
        %v5382 = vpop.f32.mrb[0].mxu0
        %5383 = vmatprep.mubr.f32.mxu0 0.0
        %5384 = vmatmul.mubr.f32.gmra.mrb[0].mxu0 %v4107
        %v5385 = vpop.f32.mrb[0].mxu0
        %v5386 = vadd.f32 %v5161, %v5385
        %v5387 = vpop.f32.mrb[0].mxu0
        %5388 = vmatprep.mubr.f32.mxu0 0.0
        %5389 = vmatmul.mubr.f32.gmra.mrb[0].mxu0 %v4116
        %v5390 = vpop.f32.mrb[0].mxu0
        %v5391 = vadd.f32 %v5166, %v5390
        %v5392 = vpop.f32.mrb[0].mxu0
        %5393 = vmatprep.mubr.f32.mxu0 0.0
        %5394 = vmatmul.mubr.f32.gmra.mrb[0].mxu0 %v4125
        %v5395 = vpop.f32.mrb[0].mxu0
        %v5396 = vadd.f32 %v5171, %v5395
        %v5397 = vpop.f32.mrb[0].mxu0
        %5398 = vmatprep.mubr.f32.mxu0 0.0
        %5399 = vmatmul.mubr.f32.gmra.mrb[0].mxu0 %v4134
        %v5400 = vpop.f32.mrb[0].mxu0
        %v5401 = vadd.f32 %v5176, %v5400
        %v5402 = vpop.f32.mrb[0].mxu0
        %5403 = vdwg.mxu0
        %v5404 = vld [vmem:[%s5] sm:$0xff]
        %v5405 = vld [vmem:[%s5 + $0x8] sm:$0xff]
        %v5406 = vld [vmem:[%s5 + $0x10] sm:$0xff]
        %v5407 = vld [vmem:[%s5 + $0x18] sm:$0xff]
        %v5408 = vld [vmem:[%s5 + $0x20] sm:$0xf]
        %v5409 = vld [vmem:[%s6] sm:$0x1]
        %v5411 = vlaneseq
        %v5412 = vshrl.u32 %v5411, 7
        %v5413 = vsub.s32 0, %v5412
        %v5414 = vrot.slane %v5409, %v5413
        %v5417 = vsel %vm304, %v5246, 0
        %v5420 = vsel %vm304, %v5251, 0
        %v5423 = vsel %vm304, %v5256, 0
        %v5426 = vsel %vm304, %v5261, 0
        %v5429 = vsel %vm304, %v5266, 0
        %v5432 = vsel %vm304, %v5271, 0
        %v5435 = vsel %vm304, %v5276, 0
        %v5438 = vsel %vm304, %v5281, 0
        %v5441 = vsel %vm304, %v5286, 0
        %v5444 = vsel %vm304, %v5291, 0
        %v5447 = vsel %vm304, %v5296, 0
        %v5450 = vsel %vm304, %v5301, 0
        %v5453 = vsel %vm304, %v5306, 0
        %v5456 = vsel %vm304, %v5311, 0
        %v5459 = vsel %vm304, %v5316, 0
        %v5462 = vsel %vm304, %v5321, 0
        %v5465 = vsel %vm304, %v5326, 0
        %v5468 = vsel %vm304, %v5331, 0
        %v5471 = vsel %vm304, %v5336, 0
        %v5474 = vsel %vm304, %v5341, 0
        %v5477 = vsel %vm304, %v5346, 0
        %v5480 = vsel %vm304, %v5351, 0
        %v5483 = vsel %vm304, %v5356, 0
        %v5486 = vsel %vm304, %v5361, 0
        %v5489 = vsel %vm304, %v5366, 0
        %v5492 = vsel %vm304, %v5371, 0
        %v5495 = vsel %vm304, %v5376, 0
        %v5498 = vsel %vm304, %v5381, 0
        %v5501 = vsel %vm304, %v5386, 0
        %v5504 = vsel %vm304, %v5391, 0
        %v5507 = vsel %vm304, %v5396, 0
        %v5510 = vsel %vm304, %v5401, 0
        %v5513 = vsel %vm804, %v5408, 0
        %5515 = vmatprep.subr.mxu0 0.0
        %5516 = vmatpush1.msra.mxu0 %v5404
        %5517 = vmatprep.subr.mxu0 0.0
        %5518 = vmatpush1.msra.mxu0 %v5405
        %5519 = vmatprep.subr.mxu0 0.0
        %5520 = vmatpush1.msra.mxu0 %v5406
        %5521 = vmatprep.subr.mxu0 0.0
        %5522 = vmatpush1.msra.mxu0 %v5407
        %5523 = vmatprep.subr.mxu0 0.0
        %5524 = vmatpush1.msra.mxu0 %v5513
        %5525 = vmatprep.subr.mxu0 0.0
        %5526 = vmatpush1.msra.mxu0 0.0
        %5527 = vmatprep.subr.mxu0 0.0
        %5528 = vmatpush1.msra.mxu0 0.0
        %5529 = vmatprep.subr.mxu0 0.0
        %5530 = vmatpush1.msra.mxu0 0.0
        %5531 = vmatprep.subr.mxu0 0.0
        %5532 = vmatpush1.msra.mxu0 0.0
        %5533 = vmatprep.subr.mxu0 0.0
        %5534 = vmatpush1.msra.mxu0 0.0
        %5535 = vmatprep.subr.mxu0 0.0
        %5536 = vmatpush1.msra.mxu0 0.0
        %5537 = vmatprep.subr.mxu0 0.0
        %5538 = vmatpush1.msra.mxu0 0.0
        %5539 = vmatprep.subr.mxu0 0.0
        %5540 = vmatpush1.msra.mxu0 0.0
        %5541 = vmatprep.subr.mxu0 0.0
        %5542 = vmatpush1.msra.mxu0 0.0
        %5543 = vmatprep.subr.mxu0 0.0
        %5544 = vmatpush1.msra.mxu0 0.0
        %5545 = vmatprep.subr.mxu0 0.0
        %5546 = vmatpush1.msra.mxu0 0.0
        %5547 = vmatprep.subr.mxu0 0.0
        %5548 = vmatpush1.msra.mxu0 0.0
        %5549 = vmatprep.subr.mxu0 0.0
        %5550 = vmatpush1.msra.mxu0 0.0
        %5551 = vmatprep.subr.mxu0 0.0
        %5552 = vmatpush1.msra.mxu0 0.0
        %5553 = vmatprep.subr.mxu0 0.0
        %5554 = vmatpush1.msra.mxu0 0.0
        %5555 = vmatprep.subr.mxu0 0.0
        %5556 = vmatpush1.msra.mxu0 0.0
        %5557 = vmatprep.subr.mxu0 0.0
        %5558 = vmatpush1.msra.mxu0 0.0
        %5559 = vmatprep.subr.mxu0 0.0
        %5560 = vmatpush1.msra.mxu0 0.0
        %5561 = vmatprep.subr.mxu0 0.0
        %5562 = vmatpush1.msra.mxu0 0.0
        %5563 = vmatprep.subr.mxu0 0.0
        %5564 = vmatpush1.msra.mxu0 0.0
        %5565 = vmatprep.subr.mxu0 0.0
        %5566 = vmatpush1.msra.mxu0 0.0
        %5567 = vmatprep.subr.mxu0 0.0
        %5568 = vmatpush1.msra.mxu0 0.0
        %5569 = vmatprep.subr.mxu0 0.0
        %5570 = vmatpush1.msra.mxu0 0.0
        %5571 = vmatprep.subr.mxu0 0.0
        %5572 = vmatpush1.msra.mxu0 0.0
        %5573 = vmatprep.subr.mxu0 0.0
        %5574 = vmatpush1.msra.mxu0 0.0
        %5575 = vmatprep.subr.mxu0 0.0
        %5576 = vmatpush1.msra.mxu0 0.0
        %5577 = vmatprep.subr.mxu0 0.0
        %5578 = vmatpush1.msra.mxu0 0.0
        %5579 = vmatprep.mubr.f32.mxu0 0.0
        %5580 = vmatmul.mubr.f32.gmra.mrb[0].mxu0 %v5417
        %v5581 = vpop.f32.mrb[0].mxu0
        %v5582 = vadd.f32 %v5414, %v5581
        %v5583 = vpop.f32.mrb[0].mxu0
        %5584 = vmatprep.mubr.f32.mxu0 0.0
        %5585 = vmatmul.mubr.f32.gmra.mrb[0].mxu0 %v5420
        %v5586 = vpop.f32.mrb[0].mxu0
        %v5587 = vadd.f32 %v5414, %v5586
        %v5588 = vpop.f32.mrb[0].mxu0
        %5589 = vmatprep.mubr.f32.mxu0 0.0
        %5590 = vmatmul.mubr.f32.gmra.mrb[0].mxu0 %v5423
        %v5591 = vpop.f32.mrb[0].mxu0
        %v5592 = vadd.f32 %v5414, %v5591
        %v5593 = vpop.f32.mrb[0].mxu0
        %5594 = vmatprep.mubr.f32.mxu0 0.0
        %5595 = vmatmul.mubr.f32.gmra.mrb[0].mxu0 %v5426
        %v5596 = vpop.f32.mrb[0].mxu0
        %v5597 = vadd.f32 %v5414, %v5596
        %v5598 = vpop.f32.mrb[0].mxu0
        %5599 = vmatprep.mubr.f32.mxu0 0.0
        %5600 = vmatmul.mubr.f32.gmra.mrb[0].mxu0 %v5429
        %v5601 = vpop.f32.mrb[0].mxu0
        %v5602 = vadd.f32 %v5414, %v5601
        %v5603 = vpop.f32.mrb[0].mxu0
        %5604 = vmatprep.mubr.f32.mxu0 0.0
        %5605 = vmatmul.mubr.f32.gmra.mrb[0].mxu0 %v5432
        %v5606 = vpop.f32.mrb[0].mxu0
        %v5607 = vadd.f32 %v5414, %v5606
        %v5608 = vpop.f32.mrb[0].mxu0
        %5609 = vmatprep.mubr.f32.mxu0 0.0
        %5610 = vmatmul.mubr.f32.gmra.mrb[0].mxu0 %v5435
        %v5611 = vpop.f32.mrb[0].mxu0
        %v5612 = vadd.f32 %v5414, %v5611
        %v5613 = vpop.f32.mrb[0].mxu0
        %5614 = vmatprep.mubr.f32.mxu0 0.0
        %5615 = vmatmul.mubr.f32.gmra.mrb[0].mxu0 %v5438
        %v5616 = vpop.f32.mrb[0].mxu0
        %v5617 = vadd.f32 %v5414, %v5616
        %v5618 = vpop.f32.mrb[0].mxu0
        %5619 = vmatprep.mubr.f32.mxu0 0.0
        %5620 = vmatmul.mubr.f32.gmra.mrb[0].mxu0 %v5441
        %v5621 = vpop.f32.mrb[0].mxu0
        %v5622 = vadd.f32 %v5414, %v5621
        %v5623 = vpop.f32.mrb[0].mxu0
        %5624 = vmatprep.mubr.f32.mxu0 0.0
        %5625 = vmatmul.mubr.f32.gmra.mrb[0].mxu0 %v5444
        %v5626 = vpop.f32.mrb[0].mxu0
        %v5627 = vadd.f32 %v5414, %v5626
        %v5628 = vpop.f32.mrb[0].mxu0
        %5629 = vmatprep.mubr.f32.mxu0 0.0
        %5630 = vmatmul.mubr.f32.gmra.mrb[0].mxu0 %v5447
        %v5631 = vpop.f32.mrb[0].mxu0
        %v5632 = vadd.f32 %v5414, %v5631
        %v5633 = vpop.f32.mrb[0].mxu0
        %5634 = vmatprep.mubr.f32.mxu0 0.0
        %5635 = vmatmul.mubr.f32.gmra.mrb[0].mxu0 %v5450
        %v5636 = vpop.f32.mrb[0].mxu0
        %v5637 = vadd.f32 %v5414, %v5636
        %v5638 = vpop.f32.mrb[0].mxu0
        %5639 = vmatprep.mubr.f32.mxu0 0.0
        %5640 = vmatmul.mubr.f32.gmra.mrb[0].mxu0 %v5453
        %v5641 = vpop.f32.mrb[0].mxu0
        %v5642 = vadd.f32 %v5414, %v5641
        %v5643 = vpop.f32.mrb[0].mxu0
        %5644 = vmatprep.mubr.f32.mxu0 0.0
        %5645 = vmatmul.mubr.f32.gmra.mrb[0].mxu0 %v5456
        %v5646 = vpop.f32.mrb[0].mxu0
        %v5647 = vadd.f32 %v5414, %v5646
        %v5648 = vpop.f32.mrb[0].mxu0
        %5649 = vmatprep.mubr.f32.mxu0 0.0
        %5650 = vmatmul.mubr.f32.gmra.mrb[0].mxu0 %v5459
        %v5651 = vpop.f32.mrb[0].mxu0
        %v5652 = vadd.f32 %v5414, %v5651
        %v5653 = vpop.f32.mrb[0].mxu0
        %5654 = vmatprep.mubr.f32.mxu0 0.0
        %5655 = vmatmul.mubr.f32.gmra.mrb[0].mxu0 %v5462
        %v5656 = vpop.f32.mrb[0].mxu0
        %v5657 = vadd.f32 %v5414, %v5656
        %v5658 = vpop.f32.mrb[0].mxu0
        %5659 = vmatprep.mubr.f32.mxu0 0.0
        %5660 = vmatmul.mubr.f32.gmra.mrb[0].mxu0 %v5465
        %v5661 = vpop.f32.mrb[0].mxu0
        %v5662 = vadd.f32 %v5414, %v5661
        %v5663 = vpop.f32.mrb[0].mxu0
        %5664 = vmatprep.mubr.f32.mxu0 0.0
        %5665 = vmatmul.mubr.f32.gmra.mrb[0].mxu0 %v5468
        %v5666 = vpop.f32.mrb[0].mxu0
        %v5667 = vadd.f32 %v5414, %v5666
        %v5668 = vpop.f32.mrb[0].mxu0
        %5669 = vmatprep.mubr.f32.mxu0 0.0
        %5670 = vmatmul.mubr.f32.gmra.mrb[0].mxu0 %v5471
        %v5671 = vpop.f32.mrb[0].mxu0
        %v5672 = vadd.f32 %v5414, %v5671
        %v5673 = vpop.f32.mrb[0].mxu0
        %5674 = vmatprep.mubr.f32.mxu0 0.0
        %5675 = vmatmul.mubr.f32.gmra.mrb[0].mxu0 %v5474
        %v5676 = vpop.f32.mrb[0].mxu0
        %v5677 = vadd.f32 %v5414, %v5676
        %v5678 = vpop.f32.mrb[0].mxu0
        %5679 = vmatprep.mubr.f32.mxu0 0.0
        %5680 = vmatmul.mubr.f32.gmra.mrb[0].mxu0 %v5477
        %v5681 = vpop.f32.mrb[0].mxu0
        %v5682 = vadd.f32 %v5414, %v5681
        %v5683 = vpop.f32.mrb[0].mxu0
        %5684 = vmatprep.mubr.f32.mxu0 0.0
        %5685 = vmatmul.mubr.f32.gmra.mrb[0].mxu0 %v5480
        %v5686 = vpop.f32.mrb[0].mxu0
        %v5687 = vadd.f32 %v5414, %v5686
        %v5688 = vpop.f32.mrb[0].mxu0
        %5689 = vmatprep.mubr.f32.mxu0 0.0
        %5690 = vmatmul.mubr.f32.gmra.mrb[0].mxu0 %v5483
        %v5691 = vpop.f32.mrb[0].mxu0
        %v5692 = vadd.f32 %v5414, %v5691
        %v5693 = vpop.f32.mrb[0].mxu0
        %5694 = vmatprep.mubr.f32.mxu0 0.0
        %5695 = vmatmul.mubr.f32.gmra.mrb[0].mxu0 %v5486
        %v5696 = vpop.f32.mrb[0].mxu0
        %v5697 = vadd.f32 %v5414, %v5696
        %v5698 = vpop.f32.mrb[0].mxu0
        %5699 = vmatprep.mubr.f32.mxu0 0.0
        %5700 = vmatmul.mubr.f32.gmra.mrb[0].mxu0 %v5489
        %v5701 = vpop.f32.mrb[0].mxu0
        %v5702 = vadd.f32 %v5414, %v5701
        %v5703 = vpop.f32.mrb[0].mxu0
        %5704 = vmatprep.mubr.f32.mxu0 0.0
        %5705 = vmatmul.mubr.f32.gmra.mrb[0].mxu0 %v5492
        %v5706 = vpop.f32.mrb[0].mxu0
        %v5707 = vadd.f32 %v5414, %v5706
        %v5708 = vpop.f32.mrb[0].mxu0
        %5709 = vmatprep.mubr.f32.mxu0 0.0
        %5710 = vmatmul.mubr.f32.gmra.mrb[0].mxu0 %v5495
        %v5711 = vpop.f32.mrb[0].mxu0
        %v5712 = vadd.f32 %v5414, %v5711
        %v5713 = vpop.f32.mrb[0].mxu0
        %5714 = vmatprep.mubr.f32.mxu0 0.0
        %5715 = vmatmul.mubr.f32.gmra.mrb[0].mxu0 %v5498
        %v5716 = vpop.f32.mrb[0].mxu0
        %v5717 = vadd.f32 %v5414, %v5716
        %v5718 = vpop.f32.mrb[0].mxu0
        %5719 = vmatprep.mubr.f32.mxu0 0.0
        %5720 = vmatmul.mubr.f32.gmra.mrb[0].mxu0 %v5501
        %v5721 = vpop.f32.mrb[0].mxu0
        %v5722 = vadd.f32 %v5414, %v5721
        %v5723 = vpop.f32.mrb[0].mxu0
        %5724 = vmatprep.mubr.f32.mxu0 0.0
        %5725 = vmatmul.mubr.f32.gmra.mrb[0].mxu0 %v5504
        %v5726 = vpop.f32.mrb[0].mxu0
        %v5727 = vadd.f32 %v5414, %v5726
        %v5728 = vpop.f32.mrb[0].mxu0
        %5729 = vmatprep.mubr.f32.mxu0 0.0
        %5730 = vmatmul.mubr.f32.gmra.mrb[0].mxu0 %v5507
        %v5731 = vpop.f32.mrb[0].mxu0
        %v5732 = vadd.f32 %v5414, %v5731
        %v5733 = vpop.f32.mrb[0].mxu0
        %5734 = vmatprep.mubr.f32.mxu0 0.0
        %5735 = vmatmul.mubr.f32.gmra.mrb[0].mxu0 %v5510
        %v5736 = vpop.f32.mrb[0].mxu0
        %v5737 = vadd.f32 %v5414, %v5736
        %v5738 = vpop.f32.mrb[0].mxu0
        %5739 = vdwg.mxu0
        %v5740 = vpack.c.bf16 %v5587, %v5582
        %v5741 = vpack.c.bf16 %v5597, %v5592
        %v5742 = vpack.c.bf16 %v5607, %v5602
        %v5743 = vpack.c.bf16 %v5617, %v5612
        %v5744 = vpack.c.bf16 %v5627, %v5622
        %v5745 = vpack.c.bf16 %v5637, %v5632
        %v5746 = vpack.c.bf16 %v5647, %v5642
        %v5747 = vpack.c.bf16 %v5657, %v5652
        %v5748 = vpack.c.bf16 %v5667, %v5662
        %v5749 = vpack.c.bf16 %v5677, %v5672
        %v5750 = vpack.c.bf16 %v5687, %v5682
        %v5751 = vpack.c.bf16 %v5697, %v5692
        %v5752 = vpack.c.bf16 %v5707, %v5702
        %v5753 = vpack.c.bf16 %v5717, %v5712
        %v5754 = vpack.c.bf16 %v5727, %v5722
        %v5755 = vpack.c.bf16 %v5737, %v5732
        %v5756 = vunpack.c.l.bf16 %v5740
        %v5757 = vunpack.c.h.bf16 %v5740
        %v5758 = vunpack.c.l.bf16 %v5741
        %v5759 = vunpack.c.h.bf16 %v5741
        %v5760 = vunpack.c.l.bf16 %v5742
        %v5761 = vunpack.c.h.bf16 %v5742
        %v5762 = vunpack.c.l.bf16 %v5743
        %v5763 = vunpack.c.h.bf16 %v5743
        %v5764 = vunpack.c.l.bf16 %v5744
        %v5765 = vunpack.c.h.bf16 %v5744
        %v5766 = vunpack.c.l.bf16 %v5745
        %v5767 = vunpack.c.h.bf16 %v5745
        %v5768 = vunpack.c.l.bf16 %v5746
        %v5769 = vunpack.c.h.bf16 %v5746
        %v5770 = vunpack.c.l.bf16 %v5747
        %v5771 = vunpack.c.h.bf16 %v5747
        %v5772 = vunpack.c.l.bf16 %v5748
        %v5773 = vunpack.c.h.bf16 %v5748
        %v5774 = vunpack.c.l.bf16 %v5749
        %v5775 = vunpack.c.h.bf16 %v5749
        %v5776 = vunpack.c.l.bf16 %v5750
        %v5777 = vunpack.c.h.bf16 %v5750
        %v5778 = vunpack.c.l.bf16 %v5751
        %v5779 = vunpack.c.h.bf16 %v5751
        %v5780 = vunpack.c.l.bf16 %v5752
        %v5781 = vunpack.c.h.bf16 %v5752
        %v5782 = vunpack.c.l.bf16 %v5753
        %v5783 = vunpack.c.h.bf16 %v5753
        %v5784 = vunpack.c.l.bf16 %v5754
        %v5785 = vunpack.c.h.bf16 %v5754
        %v5786 = vunpack.c.l.bf16 %v5755
        %v5787 = vunpack.c.h.bf16 %v5755
        %v5788 = vsub.f32 %v5582, %v5756
        %v5789 = vsub.f32 %v5587, %v5757
        %v5790 = vsub.f32 %v5592, %v5758
        %v5791 = vsub.f32 %v5597, %v5759
        %v5792 = vsub.f32 %v5602, %v5760
        %v5793 = vsub.f32 %v5607, %v5761
        %v5794 = vsub.f32 %v5612, %v5762
        %v5795 = vsub.f32 %v5617, %v5763
        %v5796 = vsub.f32 %v5622, %v5764
        %v5797 = vsub.f32 %v5627, %v5765
        %v5798 = vsub.f32 %v5632, %v5766
        %v5799 = vsub.f32 %v5637, %v5767
        %v5800 = vsub.f32 %v5642, %v5768
        %v5801 = vsub.f32 %v5647, %v5769
        %v5802 = vsub.f32 %v5652, %v5770
        %v5803 = vsub.f32 %v5657, %v5771
        %v5804 = vsub.f32 %v5662, %v5772
        %v5805 = vsub.f32 %v5667, %v5773
        %v5806 = vsub.f32 %v5672, %v5774
        %v5807 = vsub.f32 %v5677, %v5775
        %v5808 = vsub.f32 %v5682, %v5776
        %v5809 = vsub.f32 %v5687, %v5777
        %v5810 = vsub.f32 %v5692, %v5778
        %v5811 = vsub.f32 %v5697, %v5779
        %v5812 = vsub.f32 %v5702, %v5780
        %v5813 = vsub.f32 %v5707, %v5781
        %v5814 = vsub.f32 %v5712, %v5782
        %v5815 = vsub.f32 %v5717, %v5783
        %v5816 = vsub.f32 %v5722, %v5784
        %v5817 = vsub.f32 %v5727, %v5785
        %v5818 = vsub.f32 %v5732, %v5786
        %v5819 = vsub.f32 %v5737, %v5787
        %v5820 = vpack.c.bf16 %v5789, %v5788
        %v5821 = vpack.c.bf16 %v5791, %v5790
        %v5822 = vpack.c.bf16 %v5793, %v5792
        %v5823 = vpack.c.bf16 %v5795, %v5794
        %v5824 = vpack.c.bf16 %v5797, %v5796
        %v5825 = vpack.c.bf16 %v5799, %v5798
        %v5826 = vpack.c.bf16 %v5801, %v5800
        %v5827 = vpack.c.bf16 %v5803, %v5802
        %v5828 = vpack.c.bf16 %v5805, %v5804
        %v5829 = vpack.c.bf16 %v5807, %v5806
        %v5830 = vpack.c.bf16 %v5809, %v5808
        %v5831 = vpack.c.bf16 %v5811, %v5810
        %v5832 = vpack.c.bf16 %v5813, %v5812
        %v5833 = vpack.c.bf16 %v5815, %v5814
        %v5834 = vpack.c.bf16 %v5817, %v5816
        %v5835 = vpack.c.bf16 %v5819, %v5818
        %v5836 = vld [vmem:[%s7] sm:$0xff]
        %v5837 = vld [vmem:[%s7 + $0x8] sm:$0xff]
        %v5838 = vld [vmem:[%s7 + $0x10] sm:$0xff]
        %v5839 = vld [vmem:[%s7 + $0x18] sm:$0xff]
        %v5840 = vld [vmem:[%s7 + $0x20] sm:$0xff]
        %v5841 = vld [vmem:[%s7 + $0x28] sm:$0xff]
        %v5842 = vld [vmem:[%s7 + $0x30] sm:$0xff]
        %v5843 = vld [vmem:[%s7 + $0x38] sm:$0xff]
        %v5844 = vld [vmem:[%s7 + $0x40] sm:$0xff]
        %v5845 = vld [vmem:[%s7 + $0x48] sm:$0xff]
        %v5846 = vld [vmem:[%s7 + $0x50] sm:$0xff]
        %v5847 = vld [vmem:[%s7 + $0x58] sm:$0xff]
        %v5848 = vld [vmem:[%s7 + $0x60] sm:$0xff]
        %v5849 = vld [vmem:[%s7 + $0x68] sm:$0xff]
        %v5850 = vld [vmem:[%s7 + $0x70] sm:$0xff]
        %v5851 = vld [vmem:[%s7 + $0x78] sm:$0xff]
        %v5852 = vld [vmem:[%s7 + $0x80] sm:$0xff]
        %v5853 = vld [vmem:[%s7 + $0x88] sm:$0xff]
        %v5854 = vld [vmem:[%s7 + $0x90] sm:$0xff]
        %v5855 = vld [vmem:[%s7 + $0x98] sm:$0xff]
        %v5856 = vld [vmem:[%s7 + $0xa0] sm:$0xff]
        %v5857 = vld [vmem:[%s7 + $0xa8] sm:$0xff]
        %v5858 = vld [vmem:[%s7 + $0xb0] sm:$0xff]
        %v5859 = vld [vmem:[%s7 + $0xb8] sm:$0xff]
        %v5860 = vld [vmem:[%s7 + $0xc0] sm:$0xff]
        %v5861 = vld [vmem:[%s7 + $0xc8] sm:$0xff]
        %v5862 = vld [vmem:[%s7 + $0xd0] sm:$0xff]
        %v5863 = vld [vmem:[%s7 + $0xd8] sm:$0xff]
        %v5864 = vld [vmem:[%s7 + $0xe0] sm:$0xff]
        %v5865 = vld [vmem:[%s7 + $0xe8] sm:$0xff]
        %v5866 = vld [vmem:[%s7 + $0xf0] sm:$0xff]
        %v5867 = vld [vmem:[%s7 + $0xf8] sm:$0xff]
        %v5868 = vld [vmem:[%s7 + $0x100] sm:$0xff]
        %v5869 = vld [vmem:[%s7 + $0x108] sm:$0xff]
        %v5870 = vld [vmem:[%s7 + $0x110] sm:$0xff]
        %v5871 = vld [vmem:[%s7 + $0x118] sm:$0xff]
        %v5872 = vld [vmem:[%s7 + $0x120] sm:$0xff]
        %v5873 = vld [vmem:[%s7 + $0x128] sm:$0xff]
        %v5874 = vld [vmem:[%s7 + $0x130] sm:$0xff]
        %v5875 = vld [vmem:[%s7 + $0x138] sm:$0xff]
        %v5876 = vld [vmem:[%s7 + $0x140] sm:$0xff]
        %v5877 = vld [vmem:[%s7 + $0x148] sm:$0xff]
        %v5878 = vld [vmem:[%s7 + $0x150] sm:$0xff]
        %v5879 = vld [vmem:[%s7 + $0x158] sm:$0xff]
        %v5880 = vld [vmem:[%s7 + $0x160] sm:$0xff]
        %v5881 = vld [vmem:[%s7 + $0x168] sm:$0xff]
        %v5882 = vld [vmem:[%s7 + $0x170] sm:$0xff]
        %v5883 = vld [vmem:[%s7 + $0x178] sm:$0xff]
        %v5884 = vld [vmem:[%s7 + $0x180] sm:$0xff]
        %v5885 = vld [vmem:[%s7 + $0x188] sm:$0xff]
        %v5886 = vld [vmem:[%s7 + $0x190] sm:$0xff]
        %v5887 = vld [vmem:[%s7 + $0x198] sm:$0xff]
        %v5888 = vld [vmem:[%s7 + $0x1a0] sm:$0xff]
        %v5889 = vld [vmem:[%s7 + $0x1a8] sm:$0xff]
        %v5890 = vld [vmem:[%s7 + $0x1b0] sm:$0xff]
        %v5891 = vld [vmem:[%s7 + $0x1b8] sm:$0xff]
        %v5892 = vld [vmem:[%s7 + $0x1c0] sm:$0xff]
        %v5893 = vld [vmem:[%s7 + $0x1c8] sm:$0xff]
        %v5894 = vld [vmem:[%s7 + $0x1d0] sm:$0xff]
        %v5895 = vld [vmem:[%s7 + $0x1d8] sm:$0xff]
        %v5896 = vld [vmem:[%s7 + $0x1e0] sm:$0xff]
        %v5897 = vld [vmem:[%s7 + $0x1e8] sm:$0xff]
        %v5898 = vld [vmem:[%s7 + $0x1f0] sm:$0xff]
        %v5899 = vld [vmem:[%s7 + $0x1f8] sm:$0xff]
        %v5900 = vld [vmem:[%s7 + $0x200] sm:$0xff]
        %v5901 = vld [vmem:[%s7 + $0x208] sm:$0xff]
        %v5902 = vld [vmem:[%s7 + $0x210] sm:$0xff]
        %v5903 = vld [vmem:[%s7 + $0x218] sm:$0xff]
        %v5904 = vld [vmem:[%s7 + $0x220] sm:$0xff]
        %v5905 = vld [vmem:[%s7 + $0x228] sm:$0xff]
        %v5906 = vld [vmem:[%s7 + $0x230] sm:$0xff]
        %v5907 = vld [vmem:[%s7 + $0x238] sm:$0xff]
        %v5908 = vld [vmem:[%s7 + $0x240] sm:$0xff]
        %v5909 = vld [vmem:[%s7 + $0x248] sm:$0xff]
        %v5910 = vld [vmem:[%s7 + $0x250] sm:$0xff]
        %v5911 = vld [vmem:[%s7 + $0x258] sm:$0xff]
        %v5912 = vld [vmem:[%s7 + $0x260] sm:$0xff]
        %v5913 = vld [vmem:[%s7 + $0x268] sm:$0xff]
        %v5914 = vld [vmem:[%s7 + $0x270] sm:$0xff]
        %v5915 = vld [vmem:[%s7 + $0x278] sm:$0xff]
        %v5916 = vld [vmem:[%s7 + $0x280] sm:$0xff]
        %v5917 = vld [vmem:[%s7 + $0x288] sm:$0xff]
        %v5918 = vld [vmem:[%s7 + $0x290] sm:$0xff]
        %v5919 = vld [vmem:[%s7 + $0x298] sm:$0xff]
        %v5920 = vld [vmem:[%s7 + $0x2a0] sm:$0xff]
        %v5921 = vld [vmem:[%s7 + $0x2a8] sm:$0xff]
        %v5922 = vld [vmem:[%s7 + $0x2b0] sm:$0xff]
        %v5923 = vld [vmem:[%s7 + $0x2b8] sm:$0xff]
        %v5924 = vld [vmem:[%s7 + $0x2c0] sm:$0xff]
        %v5925 = vld [vmem:[%s7 + $0x2c8] sm:$0xff]
        %v5926 = vld [vmem:[%s7 + $0x2d0] sm:$0xff]
        %v5927 = vld [vmem:[%s7 + $0x2d8] sm:$0xff]
        %v5928 = vld [vmem:[%s7 + $0x2e0] sm:$0xff]
        %v5929 = vld [vmem:[%s7 + $0x2e8] sm:$0xff]
        %v5930 = vld [vmem:[%s7 + $0x2f0] sm:$0xff]
        %v5931 = vld [vmem:[%s7 + $0x2f8] sm:$0xff]
        %v5932 = vld [vmem:[%s7 + $0x300] sm:$0xff]
        %v5933 = vld [vmem:[%s7 + $0x308] sm:$0xff]
        %v5934 = vld [vmem:[%s7 + $0x310] sm:$0xff]
        %v5935 = vld [vmem:[%s7 + $0x318] sm:$0xff]
        %v5936 = vld [vmem:[%s7 + $0x320] sm:$0xff]
        %v5937 = vld [vmem:[%s7 + $0x328] sm:$0xff]
        %v5938 = vld [vmem:[%s7 + $0x330] sm:$0xff]
        %v5939 = vld [vmem:[%s7 + $0x338] sm:$0xff]
        %v5940 = vld [vmem:[%s7 + $0x340] sm:$0xff]
        %v5941 = vld [vmem:[%s7 + $0x348] sm:$0xff]
        %v5942 = vld [vmem:[%s7 + $0x350] sm:$0xff]
        %v5943 = vld [vmem:[%s7 + $0x358] sm:$0xff]
        %v5944 = vld [vmem:[%s7 + $0x360] sm:$0xff]
        %v5945 = vld [vmem:[%s7 + $0x368] sm:$0xff]
        %v5946 = vld [vmem:[%s7 + $0x370] sm:$0xff]
        %v5947 = vld [vmem:[%s7 + $0x378] sm:$0xff]
        %v5948 = vld [vmem:[%s7 + $0x380] sm:$0xff]
        %v5949 = vld [vmem:[%s7 + $0x388] sm:$0xff]
        %v5950 = vld [vmem:[%s7 + $0x390] sm:$0xff]
        %v5951 = vld [vmem:[%s7 + $0x398] sm:$0xff]
        %v5952 = vld [vmem:[%s7 + $0x3a0] sm:$0xff]
        %v5953 = vld [vmem:[%s7 + $0x3a8] sm:$0xff]
        %v5954 = vld [vmem:[%s7 + $0x3b0] sm:$0xff]
        %v5955 = vld [vmem:[%s7 + $0x3b8] sm:$0xff]
        %v5956 = vld [vmem:[%s7 + $0x3c0] sm:$0xff]
        %v5957 = vld [vmem:[%s7 + $0x3c8] sm:$0xff]
        %v5958 = vld [vmem:[%s7 + $0x3d0] sm:$0xff]
        %v5959 = vld [vmem:[%s7 + $0x3d8] sm:$0xff]
        %v5960 = vld [vmem:[%s7 + $0x3e0] sm:$0xff]
        %v5961 = vld [vmem:[%s7 + $0x3e8] sm:$0xff]
        %v5962 = vld [vmem:[%s7 + $0x3f0] sm:$0xff]
        %v5963 = vld [vmem:[%s7 + $0x3f8] sm:$0xff]
        %5964 = vxpose.xlu0.c.b16.start [1/8] %v5820, 128
        %5965 = vxpose.xlu0.c.b16.cont [2/8] %v5821, 128
        %5966 = vxpose.xlu0.c.b16.cont [3/8] %v5822, 128
        %5967 = vxpose.xlu0.c.b16.cont [4/8] %v5823, 128
        %5968 = vxpose.xlu0.c.b16.cont [5/8] %v5824, 128
        %5969 = vxpose.xlu0.c.b16.cont [6/8] %v5825, 128
        %5970 = vxpose.xlu0.c.b16.cont [7/8] %v5826, 128
        %5971 = vxpose.xlu0.c.b16.end [8/8] %v5827, 128
        %v5972 = vpop.trf.xlu0
        %v5973 = vpop.trf.xlu0
        %v5974 = vpop.trf.xlu0
        %v5975 = vpop.trf.xlu0
        %v5976 = vpop.trf.xlu0
        %v5977 = vpop.trf.xlu0
        %v5978 = vpop.trf.xlu0
        %v5979 = vpop.trf.xlu0
        %5980 = vxpose.xlu0.c.b16.start [1/8] %v5828, 128
        %5981 = vxpose.xlu0.c.b16.cont [2/8] %v5829, 128
        %5982 = vxpose.xlu0.c.b16.cont [3/8] %v5830, 128
        %5983 = vxpose.xlu0.c.b16.cont [4/8] %v5831, 128
        %5984 = vxpose.xlu0.c.b16.cont [5/8] %v5832, 128
        %5985 = vxpose.xlu0.c.b16.cont [6/8] %v5833, 128
        %5986 = vxpose.xlu0.c.b16.cont [7/8] %v5834, 128
        %5987 = vxpose.xlu0.c.b16.end [8/8] %v5835, 128
        %v5988 = vpop.trf.xlu0
        %v5989 = vpop.trf.xlu0
        %v5990 = vpop.trf.xlu0
        %v5991 = vpop.trf.xlu0
        %v5992 = vpop.trf.xlu0
        %v5993 = vpop.trf.xlu0
        %v5994 = vpop.trf.xlu0
        %v5995 = vpop.trf.xlu0
        %v6124 = vunpack.c.l.b16 %v5836
        %v6125 = vunpack.c.h.b16 %v5836
        %v6126 = vunpack.c.l.b16 %v5837
        %v6127 = vunpack.c.h.b16 %v5837
        %v6128 = vunpack.c.l.b16 %v5838
        %v6129 = vunpack.c.h.b16 %v5838
        %v6130 = vunpack.c.l.b16 %v5839
        %v6131 = vunpack.c.h.b16 %v5839
        %v6132 = vunpack.c.l.b16 %v5840
        %v6133 = vunpack.c.h.b16 %v5840
        %v6134 = vunpack.c.l.b16 %v5841
        %v6135 = vunpack.c.h.b16 %v5841
        %v6136 = vunpack.c.l.b16 %v5842
        %v6137 = vunpack.c.h.b16 %v5842
        %v6138 = vunpack.c.l.b16 %v5843
        %v6139 = vunpack.c.h.b16 %v5843
        %v6140 = vunpack.c.l.b16 %v5844
        %v6141 = vunpack.c.h.b16 %v5844
        %v6142 = vunpack.c.l.b16 %v5845
        %v6143 = vunpack.c.h.b16 %v5845
        %v6144 = vunpack.c.l.b16 %v5846
        %v6145 = vunpack.c.h.b16 %v5846
        %v6146 = vunpack.c.l.b16 %v5847
        %v6147 = vunpack.c.h.b16 %v5847
        %v6148 = vunpack.c.l.b16 %v5848
        %v6149 = vunpack.c.h.b16 %v5848
        %v6150 = vunpack.c.l.b16 %v5849
        %v6151 = vunpack.c.h.b16 %v5849
        %v6152 = vunpack.c.l.b16 %v5850
        %v6153 = vunpack.c.h.b16 %v5850
        %v6154 = vunpack.c.l.b16 %v5851
        %v6155 = vunpack.c.h.b16 %v5851
        %v6156 = vunpack.c.l.b16 %v5852
        %v6157 = vunpack.c.h.b16 %v5852
        %v6158 = vunpack.c.l.b16 %v5853
        %v6159 = vunpack.c.h.b16 %v5853
        %v6160 = vunpack.c.l.b16 %v5854
        %v6161 = vunpack.c.h.b16 %v5854
        %v6162 = vunpack.c.l.b16 %v5855
        %v6163 = vunpack.c.h.b16 %v5855
        %v6164 = vunpack.c.l.b16 %v5856
        %v6165 = vunpack.c.h.b16 %v5856
        %v6166 = vunpack.c.l.b16 %v5857
        %v6167 = vunpack.c.h.b16 %v5857
        %v6168 = vunpack.c.l.b16 %v5858
        %v6169 = vunpack.c.h.b16 %v5858
        %v6170 = vunpack.c.l.b16 %v5859
        %v6171 = vunpack.c.h.b16 %v5859
        %v6172 = vunpack.c.l.b16 %v5860
        %v6173 = vunpack.c.h.b16 %v5860
        %v6174 = vunpack.c.l.b16 %v5861
        %v6175 = vunpack.c.h.b16 %v5861
        %v6176 = vunpack.c.l.b16 %v5862
        %v6177 = vunpack.c.h.b16 %v5862
        %v6178 = vunpack.c.l.b16 %v5863
        %v6179 = vunpack.c.h.b16 %v5863
        %v6180 = vunpack.c.l.b16 %v5864
        %v6181 = vunpack.c.h.b16 %v5864
        %v6182 = vunpack.c.l.b16 %v5865
        %v6183 = vunpack.c.h.b16 %v5865
        %v6184 = vunpack.c.l.b16 %v5866
        %v6185 = vunpack.c.h.b16 %v5866
        %v6186 = vunpack.c.l.b16 %v5867
        %v6187 = vunpack.c.h.b16 %v5867
        %v6188 = vunpack.c.l.b16 %v5868
        %v6189 = vunpack.c.h.b16 %v5868
        %v6190 = vunpack.c.l.b16 %v5869
        %v6191 = vunpack.c.h.b16 %v5869
        %v6192 = vunpack.c.l.b16 %v5870
        %v6193 = vunpack.c.h.b16 %v5870
        %v6194 = vunpack.c.l.b16 %v5871
        %v6195 = vunpack.c.h.b16 %v5871
        %v6196 = vunpack.c.l.b16 %v5872
        %v6197 = vunpack.c.h.b16 %v5872
        %v6198 = vunpack.c.l.b16 %v5873
        %v6199 = vunpack.c.h.b16 %v5873
        %v6200 = vunpack.c.l.b16 %v5874
        %v6201 = vunpack.c.h.b16 %v5874
        %v6202 = vunpack.c.l.b16 %v5875
        %v6203 = vunpack.c.h.b16 %v5875
        %v6204 = vunpack.c.l.b16 %v5876
        %v6205 = vunpack.c.h.b16 %v5876
        %v6206 = vunpack.c.l.b16 %v5877
        %v6207 = vunpack.c.h.b16 %v5877
        %v6208 = vunpack.c.l.b16 %v5878
        %v6209 = vunpack.c.h.b16 %v5878
        %v6210 = vunpack.c.l.b16 %v5879
        %v6211 = vunpack.c.h.b16 %v5879
        %v6212 = vunpack.c.l.b16 %v5880
        %v6213 = vunpack.c.h.b16 %v5880
        %v6214 = vunpack.c.l.b16 %v5881
        %v6215 = vunpack.c.h.b16 %v5881
        %v6216 = vunpack.c.l.b16 %v5882
        %v6217 = vunpack.c.h.b16 %v5882
        %v6218 = vunpack.c.l.b16 %v5883
        %v6219 = vunpack.c.h.b16 %v5883
        %v6220 = vunpack.c.l.b16 %v5884
        %v6221 = vunpack.c.h.b16 %v5884
        %v6222 = vunpack.c.l.b16 %v5885
        %v6223 = vunpack.c.h.b16 %v5885
        %v6224 = vunpack.c.l.b16 %v5886
        %v6225 = vunpack.c.h.b16 %v5886
        %v6226 = vunpack.c.l.b16 %v5887
        %v6227 = vunpack.c.h.b16 %v5887
        %v6228 = vunpack.c.l.b16 %v5888
        %v6229 = vunpack.c.h.b16 %v5888
        %v6230 = vunpack.c.l.b16 %v5889
        %v6231 = vunpack.c.h.b16 %v5889
        %v6232 = vunpack.c.l.b16 %v5890
        %v6233 = vunpack.c.h.b16 %v5890
        %v6234 = vunpack.c.l.b16 %v5891
        %v6235 = vunpack.c.h.b16 %v5891
        %v6236 = vunpack.c.l.b16 %v5892
        %v6237 = vunpack.c.h.b16 %v5892
        %v6238 = vunpack.c.l.b16 %v5893
        %v6239 = vunpack.c.h.b16 %v5893
        %v6240 = vunpack.c.l.b16 %v5894
        %v6241 = vunpack.c.h.b16 %v5894
        %v6242 = vunpack.c.l.b16 %v5895
        %v6243 = vunpack.c.h.b16 %v5895
        %v6244 = vunpack.c.l.b16 %v5896
        %v6245 = vunpack.c.h.b16 %v5896
        %v6246 = vunpack.c.l.b16 %v5897
        %v6247 = vunpack.c.h.b16 %v5897
        %v6248 = vunpack.c.l.b16 %v5898
        %v6249 = vunpack.c.h.b16 %v5898
        %v6250 = vunpack.c.l.b16 %v5899
        %v6251 = vunpack.c.h.b16 %v5899
        %v6252 = vunpack.c.l.b16 %v5900
        %v6253 = vunpack.c.h.b16 %v5900
        %v6254 = vunpack.c.l.b16 %v5901
        %v6255 = vunpack.c.h.b16 %v5901
        %v6256 = vunpack.c.l.b16 %v5902
        %v6257 = vunpack.c.h.b16 %v5902
        %v6258 = vunpack.c.l.b16 %v5903
        %v6259 = vunpack.c.h.b16 %v5903
        %v6260 = vunpack.c.l.b16 %v5904
        %v6261 = vunpack.c.h.b16 %v5904
        %v6262 = vunpack.c.l.b16 %v5905
        %v6263 = vunpack.c.h.b16 %v5905
        %v6264 = vunpack.c.l.b16 %v5906
        %v6265 = vunpack.c.h.b16 %v5906
        %v6266 = vunpack.c.l.b16 %v5907
        %v6267 = vunpack.c.h.b16 %v5907
        %v6268 = vunpack.c.l.b16 %v5908
        %v6269 = vunpack.c.h.b16 %v5908
        %v6270 = vunpack.c.l.b16 %v5909
        %v6271 = vunpack.c.h.b16 %v5909
        %v6272 = vunpack.c.l.b16 %v5910
        %v6273 = vunpack.c.h.b16 %v5910
        %v6274 = vunpack.c.l.b16 %v5911
        %v6275 = vunpack.c.h.b16 %v5911
        %v6276 = vunpack.c.l.b16 %v5912
        %v6277 = vunpack.c.h.b16 %v5912
        %v6278 = vunpack.c.l.b16 %v5913
        %v6279 = vunpack.c.h.b16 %v5913
        %v6280 = vunpack.c.l.b16 %v5914
        %v6281 = vunpack.c.h.b16 %v5914
        %v6282 = vunpack.c.l.b16 %v5915
        %v6283 = vunpack.c.h.b16 %v5915
        %v6284 = vunpack.c.l.b16 %v5916
        %v6285 = vunpack.c.h.b16 %v5916
        %v6286 = vunpack.c.l.b16 %v5917
        %v6287 = vunpack.c.h.b16 %v5917
        %v6288 = vunpack.c.l.b16 %v5918
        %v6289 = vunpack.c.h.b16 %v5918
        %v6290 = vunpack.c.l.b16 %v5919
        %v6291 = vunpack.c.h.b16 %v5919
        %v6292 = vunpack.c.l.b16 %v5920
        %v6293 = vunpack.c.h.b16 %v5920
        %v6294 = vunpack.c.l.b16 %v5921
        %v6295 = vunpack.c.h.b16 %v5921
        %v6296 = vunpack.c.l.b16 %v5922
        %v6297 = vunpack.c.h.b16 %v5922
        %v6298 = vunpack.c.l.b16 %v5923
        %v6299 = vunpack.c.h.b16 %v5923
        %v6300 = vunpack.c.l.b16 %v5924
        %v6301 = vunpack.c.h.b16 %v5924
        %v6302 = vunpack.c.l.b16 %v5925
        %v6303 = vunpack.c.h.b16 %v5925
        %v6304 = vunpack.c.l.b16 %v5926
        %v6305 = vunpack.c.h.b16 %v5926
        %v6306 = vunpack.c.l.b16 %v5927
        %v6307 = vunpack.c.h.b16 %v5927
        %v6308 = vunpack.c.l.b16 %v5928
        %v6309 = vunpack.c.h.b16 %v5928
        %v6310 = vunpack.c.l.b16 %v5929
        %v6311 = vunpack.c.h.b16 %v5929
        %v6312 = vunpack.c.l.b16 %v5930
        %v6313 = vunpack.c.h.b16 %v5930
        %v6314 = vunpack.c.l.b16 %v5931
        %v6315 = vunpack.c.h.b16 %v5931
        %v6316 = vunpack.c.l.b16 %v5932
        %v6317 = vunpack.c.h.b16 %v5932
        %v6318 = vunpack.c.l.b16 %v5933
        %v6319 = vunpack.c.h.b16 %v5933
        %v6320 = vunpack.c.l.b16 %v5934
        %v6321 = vunpack.c.h.b16 %v5934
        %v6322 = vunpack.c.l.b16 %v5935
        %v6323 = vunpack.c.h.b16 %v5935
        %v6324 = vunpack.c.l.b16 %v5936
        %v6325 = vunpack.c.h.b16 %v5936
        %v6326 = vunpack.c.l.b16 %v5937
        %v6327 = vunpack.c.h.b16 %v5937
        %v6328 = vunpack.c.l.b16 %v5938
        %v6329 = vunpack.c.h.b16 %v5938
        %v6330 = vunpack.c.l.b16 %v5939
        %v6331 = vunpack.c.h.b16 %v5939
        %v6332 = vunpack.c.l.b16 %v5940
        %v6333 = vunpack.c.h.b16 %v5940
        %v6334 = vunpack.c.l.b16 %v5941
        %v6335 = vunpack.c.h.b16 %v5941
        %v6336 = vunpack.c.l.b16 %v5942
        %v6337 = vunpack.c.h.b16 %v5942
        %v6338 = vunpack.c.l.b16 %v5943
        %v6339 = vunpack.c.h.b16 %v5943
        %v6340 = vunpack.c.l.b16 %v5944
        %v6341 = vunpack.c.h.b16 %v5944
        %v6342 = vunpack.c.l.b16 %v5945
        %v6343 = vunpack.c.h.b16 %v5945
        %v6344 = vunpack.c.l.b16 %v5946
        %v6345 = vunpack.c.h.b16 %v5946
        %v6346 = vunpack.c.l.b16 %v5947
        %v6347 = vunpack.c.h.b16 %v5947
        %v6348 = vunpack.c.l.b16 %v5948
        %v6349 = vunpack.c.h.b16 %v5948
        %v6350 = vunpack.c.l.b16 %v5949
        %v6351 = vunpack.c.h.b16 %v5949
        %v6352 = vunpack.c.l.b16 %v5950
        %v6353 = vunpack.c.h.b16 %v5950
        %v6354 = vunpack.c.l.b16 %v5951
        %v6355 = vunpack.c.h.b16 %v5951
        %v6356 = vunpack.c.l.b16 %v5952
        %v6357 = vunpack.c.h.b16 %v5952
        %v6358 = vunpack.c.l.b16 %v5953
        %v6359 = vunpack.c.h.b16 %v5953
        %v6360 = vunpack.c.l.b16 %v5954
        %v6361 = vunpack.c.h.b16 %v5954
        %v6362 = vunpack.c.l.b16 %v5955
        %v6363 = vunpack.c.h.b16 %v5955
        %v6364 = vunpack.c.l.b16 %v5956
        %v6365 = vunpack.c.h.b16 %v5956
        %v6366 = vunpack.c.l.b16 %v5957
        %v6367 = vunpack.c.h.b16 %v5957
        %v6368 = vunpack.c.l.b16 %v5958
        %v6369 = vunpack.c.h.b16 %v5958
        %v6370 = vunpack.c.l.b16 %v5959
        %v6371 = vunpack.c.h.b16 %v5959
        %v6372 = vunpack.c.l.b16 %v5960
        %v6373 = vunpack.c.h.b16 %v5960
        %v6374 = vunpack.c.l.b16 %v5961
        %v6375 = vunpack.c.h.b16 %v5961
        %v6376 = vunpack.c.l.b16 %v5962
        %v6377 = vunpack.c.h.b16 %v5962
        %v6378 = vunpack.c.l.b16 %v5963
        %v6379 = vunpack.c.h.b16 %v5963
        %v6380 = vpack.c.b16 %v6132, %v6124
        %v6381 = vpack.c.b16 %v6133, %v6125
        %v6382 = vpack.c.b16 %v6134, %v6126
        %v6383 = vpack.c.b16 %v6135, %v6127
        %v6384 = vpack.c.b16 %v6136, %v6128
        %v6385 = vpack.c.b16 %v6137, %v6129
        %v6386 = vpack.c.b16 %v6138, %v6130
        %v6387 = vpack.c.b16 %v6139, %v6131
        %v6388 = vpack.c.b16 %v6148, %v6140
        %v6389 = vpack.c.b16 %v6149, %v6141
        %v6390 = vpack.c.b16 %v6150, %v6142
        %v6391 = vpack.c.b16 %v6151, %v6143
        %v6392 = vpack.c.b16 %v6152, %v6144
        %v6393 = vpack.c.b16 %v6153, %v6145
        %v6394 = vpack.c.b16 %v6154, %v6146
        %v6395 = vpack.c.b16 %v6155, %v6147
        %v6396 = vpack.c.b16 %v6164, %v6156
        %v6397 = vpack.c.b16 %v6165, %v6157
        %v6398 = vpack.c.b16 %v6166, %v6158
        %v6399 = vpack.c.b16 %v6167, %v6159
        %v6400 = vpack.c.b16 %v6168, %v6160
        %v6401 = vpack.c.b16 %v6169, %v6161
        %v6402 = vpack.c.b16 %v6170, %v6162
        %v6403 = vpack.c.b16 %v6171, %v6163
        %v6404 = vpack.c.b16 %v6180, %v6172
        %v6405 = vpack.c.b16 %v6181, %v6173
        %v6406 = vpack.c.b16 %v6182, %v6174
        %v6407 = vpack.c.b16 %v6183, %v6175
        %v6408 = vpack.c.b16 %v6184, %v6176
        %v6409 = vpack.c.b16 %v6185, %v6177
        %v6410 = vpack.c.b16 %v6186, %v6178
        %v6411 = vpack.c.b16 %v6187, %v6179
        %v6412 = vpack.c.b16 %v6196, %v6188
        %v6413 = vpack.c.b16 %v6197, %v6189
        %v6414 = vpack.c.b16 %v6198, %v6190
        %v6415 = vpack.c.b16 %v6199, %v6191
        %v6416 = vpack.c.b16 %v6200, %v6192
        %v6417 = vpack.c.b16 %v6201, %v6193
        %v6418 = vpack.c.b16 %v6202, %v6194
        %v6419 = vpack.c.b16 %v6203, %v6195
        %v6420 = vpack.c.b16 %v6212, %v6204
        %v6421 = vpack.c.b16 %v6213, %v6205
        %v6422 = vpack.c.b16 %v6214, %v6206
        %v6423 = vpack.c.b16 %v6215, %v6207
        %v6424 = vpack.c.b16 %v6216, %v6208
        %v6425 = vpack.c.b16 %v6217, %v6209
        %v6426 = vpack.c.b16 %v6218, %v6210
        %v6427 = vpack.c.b16 %v6219, %v6211
        %v6428 = vpack.c.b16 %v6228, %v6220
        %v6429 = vpack.c.b16 %v6229, %v6221
        %v6430 = vpack.c.b16 %v6230, %v6222
        %v6431 = vpack.c.b16 %v6231, %v6223
        %v6432 = vpack.c.b16 %v6232, %v6224
        %v6433 = vpack.c.b16 %v6233, %v6225
        %v6434 = vpack.c.b16 %v6234, %v6226
        %v6435 = vpack.c.b16 %v6235, %v6227
        %v6436 = vpack.c.b16 %v6244, %v6236
        %v6437 = vpack.c.b16 %v6245, %v6237
        %v6438 = vpack.c.b16 %v6246, %v6238
        %v6439 = vpack.c.b16 %v6247, %v6239
        %v6440 = vpack.c.b16 %v6248, %v6240
        %v6441 = vpack.c.b16 %v6249, %v6241
        %v6442 = vpack.c.b16 %v6250, %v6242
        %v6443 = vpack.c.b16 %v6251, %v6243
        %v6444 = vpack.c.b16 %v6260, %v6252
        %v6445 = vpack.c.b16 %v6261, %v6253
        %v6446 = vpack.c.b16 %v6262, %v6254
        %v6447 = vpack.c.b16 %v6263, %v6255
        %v6448 = vpack.c.b16 %v6264, %v6256
        %v6449 = vpack.c.b16 %v6265, %v6257
        %v6450 = vpack.c.b16 %v6266, %v6258
        %v6451 = vpack.c.b16 %v6267, %v6259
        %v6452 = vpack.c.b16 %v6276, %v6268
        %v6453 = vpack.c.b16 %v6277, %v6269
        %v6454 = vpack.c.b16 %v6278, %v6270
        %v6455 = vpack.c.b16 %v6279, %v6271
        %v6456 = vpack.c.b16 %v6280, %v6272
        %v6457 = vpack.c.b16 %v6281, %v6273
        %v6458 = vpack.c.b16 %v6282, %v6274
        %v6459 = vpack.c.b16 %v6283, %v6275
        %v6460 = vpack.c.b16 %v6292, %v6284
        %v6461 = vpack.c.b16 %v6293, %v6285
        %v6462 = vpack.c.b16 %v6294, %v6286
        %v6463 = vpack.c.b16 %v6295, %v6287
        %v6464 = vpack.c.b16 %v6296, %v6288
        %v6465 = vpack.c.b16 %v6297, %v6289
        %v6466 = vpack.c.b16 %v6298, %v6290
        %v6467 = vpack.c.b16 %v6299, %v6291
        %v6468 = vpack.c.b16 %v6308, %v6300
        %v6469 = vpack.c.b16 %v6309, %v6301
        %v6470 = vpack.c.b16 %v6310, %v6302
        %v6471 = vpack.c.b16 %v6311, %v6303
        %v6472 = vpack.c.b16 %v6312, %v6304
        %v6473 = vpack.c.b16 %v6313, %v6305
        %v6474 = vpack.c.b16 %v6314, %v6306
        %v6475 = vpack.c.b16 %v6315, %v6307
        %v6476 = vpack.c.b16 %v6324, %v6316
        %v6477 = vpack.c.b16 %v6325, %v6317
        %v6478 = vpack.c.b16 %v6326, %v6318
        %v6479 = vpack.c.b16 %v6327, %v6319
        %v6480 = vpack.c.b16 %v6328, %v6320
        %v6481 = vpack.c.b16 %v6329, %v6321
        %v6482 = vpack.c.b16 %v6330, %v6322
        %v6483 = vpack.c.b16 %v6331, %v6323
        %v6484 = vpack.c.b16 %v6340, %v6332
        %v6485 = vpack.c.b16 %v6341, %v6333
        %v6486 = vpack.c.b16 %v6342, %v6334
        %v6487 = vpack.c.b16 %v6343, %v6335
        %v6488 = vpack.c.b16 %v6344, %v6336
        %v6489 = vpack.c.b16 %v6345, %v6337
        %v6490 = vpack.c.b16 %v6346, %v6338
        %v6491 = vpack.c.b16 %v6347, %v6339
        %v6492 = vpack.c.b16 %v6356, %v6348
        %v6493 = vpack.c.b16 %v6357, %v6349
        %v6494 = vpack.c.b16 %v6358, %v6350
        %v6495 = vpack.c.b16 %v6359, %v6351
        %v6496 = vpack.c.b16 %v6360, %v6352
        %v6497 = vpack.c.b16 %v6361, %v6353
        %v6498 = vpack.c.b16 %v6362, %v6354
        %v6499 = vpack.c.b16 %v6363, %v6355
        %v6500 = vpack.c.b16 %v6372, %v6364
        %v6501 = vpack.c.b16 %v6373, %v6365
        %v6502 = vpack.c.b16 %v6374, %v6366
        %v6503 = vpack.c.b16 %v6375, %v6367
        %v6504 = vpack.c.b16 %v6376, %v6368
        %v6505 = vpack.c.b16 %v6377, %v6369
        %v6506 = vpack.c.b16 %v6378, %v6370
        %v6507 = vpack.c.b16 %v6379, %v6371
        %6636 = vmatprep.subr.bf16.mxu0 %v6381
        %6637 = vmatpush1.bf16.msra.mxu0 %v6380
        %6638 = vmatprep.subr.bf16.mxu0 %v6389
        %6639 = vmatpush1.bf16.msra.mxu0 %v6388
        %6640 = vmatprep.subr.bf16.mxu0 %v6397
        %6641 = vmatpush1.bf16.msra.mxu0 %v6396
        %6642 = vmatprep.subr.bf16.mxu0 %v6405
        %6643 = vmatpush1.bf16.msra.mxu0 %v6404
        %6644 = vmatprep.subr.bf16.mxu0 %v6413
        %6645 = vmatpush1.bf16.msra.mxu0 %v6412
        %6646 = vmatprep.subr.bf16.mxu0 %v6421
        %6647 = vmatpush1.bf16.msra.mxu0 %v6420
        %6648 = vmatprep.subr.bf16.mxu0 %v6429
        %6649 = vmatpush1.bf16.msra.mxu0 %v6428
        %6650 = vmatprep.subr.bf16.mxu0 %v6437
        %6651 = vmatpush1.bf16.msra.mxu0 %v6436
        %6652 = vmatprep.subr.bf16.mxu0 %v6445
        %6653 = vmatpush1.bf16.msra.mxu0 %v6444
        %6654 = vmatprep.subr.bf16.mxu0 %v6453
        %6655 = vmatpush1.bf16.msra.mxu0 %v6452
        %6656 = vmatprep.subr.bf16.mxu0 %v6461
        %6657 = vmatpush1.bf16.msra.mxu0 %v6460
        %6658 = vmatprep.subr.bf16.mxu0 %v6469
        %6659 = vmatpush1.bf16.msra.mxu0 %v6468
        %6660 = vmatprep.subr.bf16.mxu0 %v6477
        %6661 = vmatpush1.bf16.msra.mxu0 %v6476
        %6662 = vmatprep.subr.bf16.mxu0 %v6485
        %6663 = vmatpush1.bf16.msra.mxu0 %v6484
        %6664 = vmatprep.subr.bf16.mxu0 %v6493
        %6665 = vmatpush1.bf16.msra.mxu0 %v6492
        %6666 = vmatprep.subr.bf16.mxu0 %v6501
        %6667 = vmatpush1.bf16.msra.mxu0 %v6500
        %6668 = vmatprep.mubr.bf16.mxu0 %v5988
        %6669 = vmatmul.mubr.bf16.gmra.mrb[0].mxu0 %v5972
        %v6670 = vpop.f32.mrb[0].mxu0
        %v6671 = vadd.f32 0.0, %v6670
        %v6672 = vpop.f32.mrb[0].mxu0
        %v6673 = vadd.f32 0.0, %v6672
        %v6674 = vpop.f32.mrb[0].mxu0
        %v6675 = vpop.f32.mrb[0].mxu0
        %6676 = vdwg.mxu0
        %6677 = vmatprep.subr.bf16.mxu0 %v6383
        %6678 = vmatpush1.bf16.msra.mxu0 %v6382
        %6679 = vmatprep.subr.bf16.mxu0 %v6391
        %6680 = vmatpush1.bf16.msra.mxu0 %v6390
        %6681 = vmatprep.subr.bf16.mxu0 %v6399
        %6682 = vmatpush1.bf16.msra.mxu0 %v6398
        %6683 = vmatprep.subr.bf16.mxu0 %v6407
        %6684 = vmatpush1.bf16.msra.mxu0 %v6406
        %6685 = vmatprep.subr.bf16.mxu0 %v6415
        %6686 = vmatpush1.bf16.msra.mxu0 %v6414
        %6687 = vmatprep.subr.bf16.mxu0 %v6423
        %6688 = vmatpush1.bf16.msra.mxu0 %v6422
        %6689 = vmatprep.subr.bf16.mxu0 %v6431
        %6690 = vmatpush1.bf16.msra.mxu0 %v6430
        %6691 = vmatprep.subr.bf16.mxu0 %v6439
        %6692 = vmatpush1.bf16.msra.mxu0 %v6438
        %6693 = vmatprep.subr.bf16.mxu0 %v6447
        %6694 = vmatpush1.bf16.msra.mxu0 %v6446
        %6695 = vmatprep.subr.bf16.mxu0 %v6455
        %6696 = vmatpush1.bf16.msra.mxu0 %v6454
        %6697 = vmatprep.subr.bf16.mxu0 %v6463
        %6698 = vmatpush1.bf16.msra.mxu0 %v6462
        %6699 = vmatprep.subr.bf16.mxu0 %v6471
        %6700 = vmatpush1.bf16.msra.mxu0 %v6470
        %6701 = vmatprep.subr.bf16.mxu0 %v6479
        %6702 = vmatpush1.bf16.msra.mxu0 %v6478
        %6703 = vmatprep.subr.bf16.mxu0 %v6487
        %6704 = vmatpush1.bf16.msra.mxu0 %v6486
        %6705 = vmatprep.subr.bf16.mxu0 %v6495
        %6706 = vmatpush1.bf16.msra.mxu0 %v6494
        %6707 = vmatprep.subr.bf16.mxu0 %v6503
        %6708 = vmatpush1.bf16.msra.mxu0 %v6502
        %6709 = vmatprep.mubr.bf16.mxu0 %v5988
        %6710 = vmatmul.mubr.bf16.gmra.mrb[0].mxu0 %v5972
        %v6711 = vpop.f32.mrb[0].mxu0
        %v6712 = vadd.f32 0.0, %v6711
        %v6713 = vpop.f32.mrb[0].mxu0
        %v6714 = vadd.f32 0.0, %v6713
        %v6715 = vpop.f32.mrb[0].mxu0
        %v6716 = vpop.f32.mrb[0].mxu0
        %6717 = vdwg.mxu0
        %6718 = vmatprep.subr.bf16.mxu0 %v6385
        %6719 = vmatpush1.bf16.msra.mxu0 %v6384
        %6720 = vmatprep.subr.bf16.mxu0 %v6393
        %6721 = vmatpush1.bf16.msra.mxu0 %v6392
        %6722 = vmatprep.subr.bf16.mxu0 %v6401
        %6723 = vmatpush1.bf16.msra.mxu0 %v6400
        %6724 = vmatprep.subr.bf16.mxu0 %v6409
        %6725 = vmatpush1.bf16.msra.mxu0 %v6408
        %6726 = vmatprep.subr.bf16.mxu0 %v6417
        %6727 = vmatpush1.bf16.msra.mxu0 %v6416
        %6728 = vmatprep.subr.bf16.mxu0 %v6425
        %6729 = vmatpush1.bf16.msra.mxu0 %v6424
        %6730 = vmatprep.subr.bf16.mxu0 %v6433
        %6731 = vmatpush1.bf16.msra.mxu0 %v6432
        %6732 = vmatprep.subr.bf16.mxu0 %v6441
        %6733 = vmatpush1.bf16.msra.mxu0 %v6440
        %6734 = vmatprep.subr.bf16.mxu0 %v6449
        %6735 = vmatpush1.bf16.msra.mxu0 %v6448
        %6736 = vmatprep.subr.bf16.mxu0 %v6457
        %6737 = vmatpush1.bf16.msra.mxu0 %v6456
        %6738 = vmatprep.subr.bf16.mxu0 %v6465
        %6739 = vmatpush1.bf16.msra.mxu0 %v6464
        %6740 = vmatprep.subr.bf16.mxu0 %v6473
        %6741 = vmatpush1.bf16.msra.mxu0 %v6472
        %6742 = vmatprep.subr.bf16.mxu0 %v6481
        %6743 = vmatpush1.bf16.msra.mxu0 %v6480
        %6744 = vmatprep.subr.bf16.mxu0 %v6489
        %6745 = vmatpush1.bf16.msra.mxu0 %v6488
        %6746 = vmatprep.subr.bf16.mxu0 %v6497
        %6747 = vmatpush1.bf16.msra.mxu0 %v6496
        %6748 = vmatprep.subr.bf16.mxu0 %v6505
        %6749 = vmatpush1.bf16.msra.mxu0 %v6504
        %6750 = vmatprep.mubr.bf16.mxu0 %v5988
        %6751 = vmatmul.mubr.bf16.gmra.mrb[0].mxu0 %v5972
        %v6752 = vpop.f32.mrb[0].mxu0
        %v6753 = vadd.f32 0.0, %v6752
        %v6754 = vpop.f32.mrb[0].mxu0
        %v6755 = vadd.f32 0.0, %v6754
        %v6756 = vpop.f32.mrb[0].mxu0
        %v6757 = vpop.f32.mrb[0].mxu0
        %6758 = vdwg.mxu0
        %6759 = vmatprep.subr.bf16.mxu0 %v6387
        %6760 = vmatpush1.bf16.msra.mxu0 %v6386
        %6761 = vmatprep.subr.bf16.mxu0 %v6395
        %6762 = vmatpush1.bf16.msra.mxu0 %v6394
        %6763 = vmatprep.subr.bf16.mxu0 %v6403
        %6764 = vmatpush1.bf16.msra.mxu0 %v6402
        %6765 = vmatprep.subr.bf16.mxu0 %v6411
        %6766 = vmatpush1.bf16.msra.mxu0 %v6410
        %6767 = vmatprep.subr.bf16.mxu0 %v6419
        %6768 = vmatpush1.bf16.msra.mxu0 %v6418
        %6769 = vmatprep.subr.bf16.mxu0 %v6427
        %6770 = vmatpush1.bf16.msra.mxu0 %v6426
        %6771 = vmatprep.subr.bf16.mxu0 %v6435
        %6772 = vmatpush1.bf16.msra.mxu0 %v6434
        %6773 = vmatprep.subr.bf16.mxu0 %v6443
        %6774 = vmatpush1.bf16.msra.mxu0 %v6442
        %6775 = vmatprep.subr.bf16.mxu0 %v6451
        %6776 = vmatpush1.bf16.msra.mxu0 %v6450
        %6777 = vmatprep.subr.bf16.mxu0 %v6459
        %6778 = vmatpush1.bf16.msra.mxu0 %v6458
        %6779 = vmatprep.subr.bf16.mxu0 %v6467
        %6780 = vmatpush1.bf16.msra.mxu0 %v6466
        %6781 = vmatprep.subr.bf16.mxu0 %v6475
        %6782 = vmatpush1.bf16.msra.mxu0 %v6474
        %6783 = vmatprep.subr.bf16.mxu0 %v6483
        %6784 = vmatpush1.bf16.msra.mxu0 %v6482
        %6785 = vmatprep.subr.bf16.mxu0 %v6491
        %6786 = vmatpush1.bf16.msra.mxu0 %v6490
        %6787 = vmatprep.subr.bf16.mxu0 %v6499
        %6788 = vmatpush1.bf16.msra.mxu0 %v6498
        %6789 = vmatprep.subr.bf16.mxu0 %v6507
        %6790 = vmatpush1.bf16.msra.mxu0 %v6506
        %6791 = vmatprep.mubr.bf16.mxu0 %v5988
        %6792 = vmatmul.mubr.bf16.gmra.mrb[0].mxu0 %v5972
        %v6793 = vpop.f32.mrb[0].mxu0
        %v6794 = vadd.f32 0.0, %v6793
        %v6795 = vpop.f32.mrb[0].mxu0
        %v6796 = vadd.f32 0.0, %v6795
        %v6797 = vpop.f32.mrb[0].mxu0
        %v6798 = vpop.f32.mrb[0].mxu0
        %6799 = vdwg.mxu0
        %6800 = vxpose.xlu0.c.b16.start [1/8] %v5740, 128
        %6801 = vxpose.xlu0.c.b16.cont [2/8] %v5741, 128
        %6802 = vxpose.xlu0.c.b16.cont [3/8] %v5742, 128
        %6803 = vxpose.xlu0.c.b16.cont [4/8] %v5743, 128
        %6804 = vxpose.xlu0.c.b16.cont [5/8] %v5744, 128
        %6805 = vxpose.xlu0.c.b16.cont [6/8] %v5745, 128
        %6806 = vxpose.xlu0.c.b16.cont [7/8] %v5746, 128
        %6807 = vxpose.xlu0.c.b16.end [8/8] %v5747, 128
        %v6808 = vpop.trf.xlu0
        %v6809 = vpop.trf.xlu0
        %v6810 = vpop.trf.xlu0
        %v6811 = vpop.trf.xlu0
        %v6812 = vpop.trf.xlu0
        %v6813 = vpop.trf.xlu0
        %v6814 = vpop.trf.xlu0
        %v6815 = vpop.trf.xlu0
        %6816 = vxpose.xlu0.c.b16.start [1/8] %v5748, 128
        %6817 = vxpose.xlu0.c.b16.cont [2/8] %v5749, 128
        %6818 = vxpose.xlu0.c.b16.cont [3/8] %v5750, 128
        %6819 = vxpose.xlu0.c.b16.cont [4/8] %v5751, 128
        %6820 = vxpose.xlu0.c.b16.cont [5/8] %v5752, 128
        %6821 = vxpose.xlu0.c.b16.cont [6/8] %v5753, 128
        %6822 = vxpose.xlu0.c.b16.cont [7/8] %v5754, 128
        %6823 = vxpose.xlu0.c.b16.end [8/8] %v5755, 128
        %v6824 = vpop.trf.xlu0
        %v6825 = vpop.trf.xlu0
        %v6826 = vpop.trf.xlu0
        %v6827 = vpop.trf.xlu0
        %v6828 = vpop.trf.xlu0
        %v6829 = vpop.trf.xlu0
        %v6830 = vpop.trf.xlu0
        %v6831 = vpop.trf.xlu0
        %6832 = vmatprep.subr.bf16.mxu0 %v6381
        %6833 = vmatpush1.bf16.msra.mxu0 %v6380
        %6834 = vmatprep.subr.bf16.mxu0 %v6389
        %6835 = vmatpush1.bf16.msra.mxu0 %v6388
        %6836 = vmatprep.subr.bf16.mxu0 %v6397
        %6837 = vmatpush1.bf16.msra.mxu0 %v6396
        %6838 = vmatprep.subr.bf16.mxu0 %v6405
        %6839 = vmatpush1.bf16.msra.mxu0 %v6404
        %6840 = vmatprep.subr.bf16.mxu0 %v6413
        %6841 = vmatpush1.bf16.msra.mxu0 %v6412
        %6842 = vmatprep.subr.bf16.mxu0 %v6421
        %6843 = vmatpush1.bf16.msra.mxu0 %v6420
        %6844 = vmatprep.subr.bf16.mxu0 %v6429
        %6845 = vmatpush1.bf16.msra.mxu0 %v6428
        %6846 = vmatprep.subr.bf16.mxu0 %v6437
        %6847 = vmatpush1.bf16.msra.mxu0 %v6436
        %6848 = vmatprep.subr.bf16.mxu0 %v6445
        %6849 = vmatpush1.bf16.msra.mxu0 %v6444
        %6850 = vmatprep.subr.bf16.mxu0 %v6453
        %6851 = vmatpush1.bf16.msra.mxu0 %v6452
        %6852 = vmatprep.subr.bf16.mxu0 %v6461
        %6853 = vmatpush1.bf16.msra.mxu0 %v6460
        %6854 = vmatprep.subr.bf16.mxu0 %v6469
        %6855 = vmatpush1.bf16.msra.mxu0 %v6468
        %6856 = vmatprep.subr.bf16.mxu0 %v6477
        %6857 = vmatpush1.bf16.msra.mxu0 %v6476
        %6858 = vmatprep.subr.bf16.mxu0 %v6485
        %6859 = vmatpush1.bf16.msra.mxu0 %v6484
        %6860 = vmatprep.subr.bf16.mxu0 %v6493
        %6861 = vmatpush1.bf16.msra.mxu0 %v6492
        %6862 = vmatprep.subr.bf16.mxu0 %v6501
        %6863 = vmatpush1.bf16.msra.mxu0 %v6500
        %6864 = vmatprep.mubr.bf16.mxu0 %v6824
        %6865 = vmatmul.mubr.bf16.gmra.mrb[0].mxu0 %v6808
        %v6866 = vpop.f32.mrb[0].mxu0
        %v6867 = vadd.f32 %v6671, %v6866
        %v6868 = vpop.f32.mrb[0].mxu0
        %v6869 = vadd.f32 %v6673, %v6868
        %v6870 = vpop.f32.mrb[0].mxu0
        %v6871 = vpop.f32.mrb[0].mxu0
        %6872 = vdwg.mxu0
        %6873 = vmatprep.subr.bf16.mxu0 %v6383
        %6874 = vmatpush1.bf16.msra.mxu0 %v6382
        %6875 = vmatprep.subr.bf16.mxu0 %v6391
        %6876 = vmatpush1.bf16.msra.mxu0 %v6390
        %6877 = vmatprep.subr.bf16.mxu0 %v6399
        %6878 = vmatpush1.bf16.msra.mxu0 %v6398
        %6879 = vmatprep.subr.bf16.mxu0 %v6407
        %6880 = vmatpush1.bf16.msra.mxu0 %v6406
        %6881 = vmatprep.subr.bf16.mxu0 %v6415
        %6882 = vmatpush1.bf16.msra.mxu0 %v6414
        %6883 = vmatprep.subr.bf16.mxu0 %v6423
        %6884 = vmatpush1.bf16.msra.mxu0 %v6422
        %6885 = vmatprep.subr.bf16.mxu0 %v6431
        %6886 = vmatpush1.bf16.msra.mxu0 %v6430
        %6887 = vmatprep.subr.bf16.mxu0 %v6439
        %6888 = vmatpush1.bf16.msra.mxu0 %v6438
        %6889 = vmatprep.subr.bf16.mxu0 %v6447
        %6890 = vmatpush1.bf16.msra.mxu0 %v6446
        %6891 = vmatprep.subr.bf16.mxu0 %v6455
        %6892 = vmatpush1.bf16.msra.mxu0 %v6454
        %6893 = vmatprep.subr.bf16.mxu0 %v6463
        %6894 = vmatpush1.bf16.msra.mxu0 %v6462
        %6895 = vmatprep.subr.bf16.mxu0 %v6471
        %6896 = vmatpush1.bf16.msra.mxu0 %v6470
        %6897 = vmatprep.subr.bf16.mxu0 %v6479
        %6898 = vmatpush1.bf16.msra.mxu0 %v6478
        %6899 = vmatprep.subr.bf16.mxu0 %v6487
        %6900 = vmatpush1.bf16.msra.mxu0 %v6486
        %6901 = vmatprep.subr.bf16.mxu0 %v6495
        %6902 = vmatpush1.bf16.msra.mxu0 %v6494
        %6903 = vmatprep.subr.bf16.mxu0 %v6503
        %6904 = vmatpush1.bf16.msra.mxu0 %v6502
        %6905 = vmatprep.mubr.bf16.mxu0 %v6824
        %6906 = vmatmul.mubr.bf16.gmra.mrb[0].mxu0 %v6808
        %v6907 = vpop.f32.mrb[0].mxu0
        %v6908 = vadd.f32 %v6712, %v6907
        %v6909 = vpop.f32.mrb[0].mxu0
        %v6910 = vadd.f32 %v6714, %v6909
        %v6911 = vpop.f32.mrb[0].mxu0
        %v6912 = vpop.f32.mrb[0].mxu0
        %6913 = vdwg.mxu0
        %6914 = vmatprep.subr.bf16.mxu0 %v6385
        %6915 = vmatpush1.bf16.msra.mxu0 %v6384
        %6916 = vmatprep.subr.bf16.mxu0 %v6393
        %6917 = vmatpush1.bf16.msra.mxu0 %v6392
        %6918 = vmatprep.subr.bf16.mxu0 %v6401
        %6919 = vmatpush1.bf16.msra.mxu0 %v6400
        %6920 = vmatprep.subr.bf16.mxu0 %v6409
        %6921 = vmatpush1.bf16.msra.mxu0 %v6408
        %6922 = vmatprep.subr.bf16.mxu0 %v6417
        %6923 = vmatpush1.bf16.msra.mxu0 %v6416
        %6924 = vmatprep.subr.bf16.mxu0 %v6425
        %6925 = vmatpush1.bf16.msra.mxu0 %v6424
        %6926 = vmatprep.subr.bf16.mxu0 %v6433
        %6927 = vmatpush1.bf16.msra.mxu0 %v6432
        %6928 = vmatprep.subr.bf16.mxu0 %v6441
        %6929 = vmatpush1.bf16.msra.mxu0 %v6440
        %6930 = vmatprep.subr.bf16.mxu0 %v6449
        %6931 = vmatpush1.bf16.msra.mxu0 %v6448
        %6932 = vmatprep.subr.bf16.mxu0 %v6457
        %6933 = vmatpush1.bf16.msra.mxu0 %v6456
        %6934 = vmatprep.subr.bf16.mxu0 %v6465
        %6935 = vmatpush1.bf16.msra.mxu0 %v6464
        %6936 = vmatprep.subr.bf16.mxu0 %v6473
        %6937 = vmatpush1.bf16.msra.mxu0 %v6472
        %6938 = vmatprep.subr.bf16.mxu0 %v6481
        %6939 = vmatpush1.bf16.msra.mxu0 %v6480
        %6940 = vmatprep.subr.bf16.mxu0 %v6489
        %6941 = vmatpush1.bf16.msra.mxu0 %v6488
        %6942 = vmatprep.subr.bf16.mxu0 %v6497
        %6943 = vmatpush1.bf16.msra.mxu0 %v6496
        %6944 = vmatprep.subr.bf16.mxu0 %v6505
        %6945 = vmatpush1.bf16.msra.mxu0 %v6504
        %6946 = vmatprep.mubr.bf16.mxu0 %v6824
        %6947 = vmatmul.mubr.bf16.gmra.mrb[0].mxu0 %v6808
        %v6948 = vpop.f32.mrb[0].mxu0
        %v6949 = vadd.f32 %v6753, %v6948
        %v6950 = vpop.f32.mrb[0].mxu0
        %v6951 = vadd.f32 %v6755, %v6950
        %v6952 = vpop.f32.mrb[0].mxu0
        %v6953 = vpop.f32.mrb[0].mxu0
        %6954 = vdwg.mxu0
        %6955 = vmatprep.subr.bf16.mxu0 %v6387
        %6956 = vmatpush1.bf16.msra.mxu0 %v6386
        %6957 = vmatprep.subr.bf16.mxu0 %v6395
        %6958 = vmatpush1.bf16.msra.mxu0 %v6394
        %6959 = vmatprep.subr.bf16.mxu0 %v6403
        %6960 = vmatpush1.bf16.msra.mxu0 %v6402
        %6961 = vmatprep.subr.bf16.mxu0 %v6411
        %6962 = vmatpush1.bf16.msra.mxu0 %v6410
        %6963 = vmatprep.subr.bf16.mxu0 %v6419
        %6964 = vmatpush1.bf16.msra.mxu0 %v6418
        %6965 = vmatprep.subr.bf16.mxu0 %v6427
        %6966 = vmatpush1.bf16.msra.mxu0 %v6426
        %6967 = vmatprep.subr.bf16.mxu0 %v6435
        %6968 = vmatpush1.bf16.msra.mxu0 %v6434
        %6969 = vmatprep.subr.bf16.mxu0 %v6443
        %6970 = vmatpush1.bf16.msra.mxu0 %v6442
        %6971 = vmatprep.subr.bf16.mxu0 %v6451
        %6972 = vmatpush1.bf16.msra.mxu0 %v6450
        %6973 = vmatprep.subr.bf16.mxu0 %v6459
        %6974 = vmatpush1.bf16.msra.mxu0 %v6458
        %6975 = vmatprep.subr.bf16.mxu0 %v6467
        %6976 = vmatpush1.bf16.msra.mxu0 %v6466
        %6977 = vmatprep.subr.bf16.mxu0 %v6475
        %6978 = vmatpush1.bf16.msra.mxu0 %v6474
        %6979 = vmatprep.subr.bf16.mxu0 %v6483
        %6980 = vmatpush1.bf16.msra.mxu0 %v6482
        %6981 = vmatprep.subr.bf16.mxu0 %v6491
        %6982 = vmatpush1.bf16.msra.mxu0 %v6490
        %6983 = vmatprep.subr.bf16.mxu0 %v6499
        %6984 = vmatpush1.bf16.msra.mxu0 %v6498
        %6985 = vmatprep.subr.bf16.mxu0 %v6507
        %6986 = vmatpush1.bf16.msra.mxu0 %v6506
        %6987 = vmatprep.mubr.bf16.mxu0 %v6824
        %6988 = vmatmul.mubr.bf16.gmra.mrb[0].mxu0 %v6808
        %v6989 = vpop.f32.mrb[0].mxu0
        %v6990 = vadd.f32 %v6794, %v6989
        %v6991 = vpop.f32.mrb[0].mxu0
        %v6992 = vadd.f32 %v6796, %v6991
        %v6993 = vpop.f32.mrb[0].mxu0
        %v6994 = vpop.f32.mrb[0].mxu0
        %6995 = vdwg.mxu0
        %v7004 = vcombine.low %v6867, %v6869
        %v7005 = vcombine.low %v6908, %v6910
        %v7006 = vcombine.low %v6949, %v6951
        %v7007 = vcombine.low %v6990, %v6992
        %7012 = vst [vmem:[%s298] sm:$0xff] %v7004
        %7013 = vst [vmem:[%s298 + $0x8] sm:$0xff] %v7005
        %7014 = vst [vmem:[%s298 + $0x10] sm:$0xff] %v7006
        %7015 = vst [vmem:[%s298 + $0x18] sm:$0xff] %v7007
        %s7016 = sand.u32 %s203, 1
        %s7017 = scalar_lea.sflag [#allocation5], %s7016
        %s7018 = sand.u32 %s203, 1
        %s7019 = smul.addr %s7018, 32
        %s7020 = scalar_lea.vmem [#allocation4], %s7019
        // Predicated region
        $region53: #{tpu_custom_call.1} parent=51 // pred_check
          %p7021 = pneg %p213
        $region54: #{tpu_custom_call.1} parent=51 // pred_check_branch
          %7023 = sbr.rel (%p7021) target = $region56
        $region55: #{tpu_custom_call.1} parent=51 // pred_region
          %s7025 = ssub.s32 512, 512
          %7026 = vsyncadd %s7017, %s7025
          %s7027 = smul.addr %s22, 8
          %s7028 = smul.addr %s7027, 64
          %s7029 = scalar_lea.hbm %s8, %s7028
          %s7031 = sshll.u32 %s7020, 4
          %s7032 = int_to_ptr.vmem [resolvable:$true] %s7031
          %7034 = dma.vmem_to_hbm [thread:$0]  %s7032, 512, %s7029, %s7017
        $region56: #{tpu_custom_call.1} parent=51 // pred_fallthru
          _
      $region52: #{tpu_custom_call.1} parent=5 // pred_fallthru
        _
      %p7035 = scmp.le.s32.totalorder 2, %s17
      // Predicated region
      $region57: #{tpu_custom_call.1} parent=5 // pred_check
        %p7036 = pneg %p7035
      $region58: #{tpu_custom_call.1} parent=5 // pred_check_branch
        %7038 = sbr.rel (%p7036) target = $region60
      $region59: #{tpu_custom_call.1} parent=5 // pred_region
        %s7039 = ssub.s32 %s17, 2
        // Predicated region
        $region61: #{tpu_custom_call.1} parent=59 // pred_check
          %p7040 = pneg %p219
        $region62: #{tpu_custom_call.1} parent=59 // pred_check_branch
          %7042 = sbr.rel (%p7040) target = $region64
        $region63: #{tpu_custom_call.1} parent=59 // pred_region
          %s7043 = sand.u32 %s204, 1
          %s7044 = scalar_lea.sflag [#allocation5], %s7043
          %s7045 = sand.u32 %s204, 1
          %s7046 = smul.addr %s7045, 32
          %s7047 = scalar_lea.vmem [#allocation4], %s7046
          %7048 = dma.done %s7044, 512
        $region64: #{tpu_custom_call.1} parent=59 // pred_fallthru
          _
      $region60: #{tpu_custom_call.1} parent=5 // pred_fallthru
        _
    $region6: #{tpu_custom_call.1} parent=1 // loop_footer
      %s21 = sadd.s32 1, %s17
    $region7: #{tpu_custom_call.1} parent=1 // loop_footer_branch
      %16 = sbr.rel target = $region3
    $region8: #{tpu_custom_call.1} parent=1 // loop_exit
      _
    %7049 = vsyncpa [#allocation5], 1
    %s7050 = scalar_lea.sflag [#allocation5], 1
    %7051 = vsyncpa %s7050, 1

</llo_original>
